<compile_context>
chip_gen: v6e
topology: v6e:2x2x1
jax: 0.10.0
libtpu: 0.0.40
codegen_flags: <defaults>
</compile_context>

<pallas_src>
import math
import numpy as np

import jax
import jax.numpy as jnp
from jax import lax
from jax.experimental import pallas as pl
from jax.experimental.pallas import tpu as pltpu

# ----------------------------- config ---------------------------------------
D_MODEL  = 32
N_HEADS  = 4
D_K      = D_MODEL // N_HEADS
D_FF     = 64
N_LAYERS = 2
VOCAB    = 16
MAX_LEN  = 64
EPS      = 1e-6
NEG_INF  = -1e9


# ------------------------- in-kernel helpers ---------------------------------
def _ln(x, g, b):
    # Annotated-Transformer LayerNorm: g * (x - mean) / (std + eps) + b
    # (unbiased std, matching torch.Tensor.std default)
    mean = jnp.mean(x, axis=-1, keepdims=True)
    xc = x - mean
    var = jnp.sum(xc * xc, axis=-1, keepdims=True) * (1.0 / (D_MODEL - 1))
    inv = pl.reciprocal(jnp.sqrt(var) + EPS, approx=True)
    return g * xc * inv + b


def _softmax_rows(s):
    s = s - jnp.max(s, axis=-1, keepdims=True)
    p = jnp.exp(s)
    return p * pl.reciprocal(jnp.sum(p, axis=-1, keepdims=True), approx=True)


def _mha_out(q_all, k_all, v_all, mask_add, wo, bo):
    """Multi-head attention + output projection.

    q_all: (Sq, D_MODEL), k_all/v_all: (Sk, D_MODEL); heads are contiguous
    dk-wide lane slices.  1/sqrt(d_k) is already folded into the Q weights.
    Output projection folded per head:
        concat_h(att_h) @ Wo == sum_h att_h @ Wo[h*dk:(h+1)*dk, :]
    which avoids any lane concatenation / transpose in-kernel.
    """
    acc = None
    for h in range(N_HEADS):          # static unrolled loop, H=4
        sl = slice(h * D_K, (h + 1) * D_K)
        q, k, v = q_all[:, sl], k_all[:, sl], v_all[:, sl]
        # scores = q @ k^T without materializing a transpose
        s = lax.dot_general(q, k, (((1,), (1,)), ((), ())),
                            preferred_element_type=jnp.float32)
        p = _softmax_rows(s + mask_add)
        o_h = jnp.dot(p, v, preferred_element_type=jnp.float32)          # (Sq, dk)
        contrib = jnp.dot(o_h, wo[sl, :], preferred_element_type=jnp.float32)
        acc = contrib if acc is None else acc + contrib
    return acc + bo


def _encoder_stack(x, mask,
                   wqkv_ref, bqkv_ref, wo_ref, bo_ref,
                   w1_ref, b1_ref, w2_ref, b2_ref, ln_ref, fln_ref):
    """N_LAYERS pre-norm encoder layers + final LayerNorm.  x: (S_src, D)."""
    for l in range(N_LAYERS):                   # static unrolled
        ln = ln_ref[l]                          # (4, D): [g1, b1, g2, b2]
        # --- self-attention sublayer (pre-norm, residual) ---
        y = _ln(x, ln[0:1], ln[1:2])
        qkv = jnp.dot(y, wqkv_ref[l], preferred_element_type=jnp.float32) + bqkv_ref[l]
        x = x + _mha_out(qkv[:, :D_MODEL],
                         qkv[:, D_MODEL:2 * D_MODEL],
                         qkv[:, 2 * D_MODEL:],
                         mask, wo_ref[l], bo_ref[l])
        # --- feed-forward sublayer ---
        y = _ln(x, ln[2:3], ln[3:4])
        h = jnp.dot(y, w1_ref[l], preferred_element_type=jnp.float32) + b1_ref[l]
        h = jnp.maximum(h, 0.0)
        x = x + jnp.dot(h, w2_ref[l], preferred_element_type=jnp.float32) + b2_ref[l]
    fln = fln_ref[...]
    return _ln(x, fln[0:1], fln[1:2])


def _decoder_stack(x, mem, smask, tmask,
                   s_wqkv_ref, s_bqkv_ref, s_wo_ref, s_bo_ref,
                   c_wq_ref, c_bq_ref, c_wkv_ref, c_bkv_ref, c_wo_ref, c_bo_ref,
                   w1_ref, b1_ref, w2_ref, b2_ref, ln_ref, fln_ref):
    """N_LAYERS decoder layers + final LayerNorm.  x: (S_tgt, D), mem: (S_src, D)."""
    for l in range(N_LAYERS):
        ln = ln_ref[l]                          # (6, D): [g1,b1,g2,b2,g3,b3]
        # --- masked self-attention ---
        y = _ln(x, ln[0:1], ln[1:2])
        qkv = jnp.dot(y, s_wqkv_ref[l], preferred_element_type=jnp.float32) + s_bqkv_ref[l]
        x = x + _mha_out(qkv[:, :D_MODEL],
                         qkv[:, D_MODEL:2 * D_MODEL],
                         qkv[:, 2 * D_MODEL:],
                         tmask, s_wo_ref[l], s_bo_ref[l])
        # --- cross-attention over encoder memory ---
        y = _ln(x, ln[2:3], ln[3:4])
        q = jnp.dot(y, c_wq_ref[l], preferred_element_type=jnp.float32) + c_bq_ref[l]
        kv = jnp.dot(mem, c_wkv_ref[l], preferred_element_type=jnp.float32) + c_bkv_ref[l]
        x = x + _mha_out(q, kv[:, :D_MODEL], kv[:, D_MODEL:],
                         smask, c_wo_ref[l], c_bo_ref[l])
        # --- feed-forward ---
        y = _ln(x, ln[4:5], ln[5:6])
        h = jnp.dot(y, w1_ref[l], preferred_element_type=jnp.float32) + b1_ref[l]
        h = jnp.maximum(h, 0.0)
        x = x + jnp.dot(h, w2_ref[l], preferred_element_type=jnp.float32) + b2_ref[l]
    fln = fln_ref[...]
    return _ln(x, fln[0:1], fln[1:2])


# --------------------------- fused full-model kernel --------------------------
def _transformer_kernel(src_x_ref, tgt_x_ref, smask_ref, tmask_ref,
                        # encoder weights (layer-stacked, VMEM-resident)
                        e_wqkv, e_bqkv, e_wo, e_bo,
                        e_w1, e_b1, e_w2, e_b2, e_ln, e_fln,
                        # decoder weights (layer-stacked, VMEM-resident)
                        d_s_wqkv, d_s_bqkv, d_s_wo, d_s_bo,
                        d_c_wq, d_c_bq, d_c_wkv, d_c_bkv, d_c_wo, d_c_bo,
                        d_w1, d_b1, d_w2, d_b2, d_ln, d_fln,
                        o_ref):
    """Whole model (encoder stack -> decoder stack) for one batch element.
    The encoder memory stays as a VMEM value; it never touches HBM."""
    src_x = src_x_ref[0].astype(jnp.float32)    # (S_src, D)
    tgt_x = tgt_x_ref[0].astype(jnp.float32)    # (S_tgt, D)
    smask = smask_ref[0].astype(jnp.float32)    # (1, S_src) additive, bcast over Sq
    tmask = tmask_ref[0].astype(jnp.float32)    # (S_tgt, S_tgt) additive

    mem = _encoder_stack(src_x, smask,
                         e_wqkv, e_bqkv, e_wo, e_bo,
                         e_w1, e_b1, e_w2, e_b2, e_ln, e_fln)

    out = _decoder_stack(tgt_x, mem, smask, tmask,
                         d_s_wqkv, d_s_bqkv, d_s_wo, d_s_bo,
                         d_c_wq, d_c_bq, d_c_wkv, d_c_bkv, d_c_wo, d_c_bo,
                         d_w1, d_b1, d_w2, d_b2, d_ln, d_fln)

    o_ref[0] = out.astype(o_ref.dtype)


# --------------------------- pallas_call wrapper ------------------------------
def _batch_spec(shape):
    """Per-grid-step block: (1, *shape[1:]) indexed by batch."""
    rest = tuple(int(s) for s in shape[1:])
    nrest = len(rest)
    return pl.BlockSpec((1,) + rest, lambda b, _n=nrest: (b,) + (0,) * _n)


def _resident_spec(arr):
    """Full-array block with constant index map -> weight stays in VMEM."""
    nd = arr.ndim
    return pl.BlockSpec(tuple(int(s) for s in arr.shape),
                        lambda b, _n=nd: (0,) * _n)


def transformer_forward(params, src, tgt, src_mask, tgt_mask):
    """Matches Transformer.forward: decode(encode(src, src_mask), src_mask, tgt, tgt_mask).

    src:      (B, S_src) int32 token ids
    tgt:      (B, S_tgt) int32 token ids
    src_mask: (B, 1, S_src) int32   (broadcast over query positions)
    tgt_mask: (B, S_tgt, S_tgt) int32
    returns:  (B, S_tgt, d_model) float32
    """
    # Embeddings + positional encoding stay in plain JAX (vocab gather).
    src_x = embed(src, params["src_emb"], params["pe"])       # (B, S_src, D)
    tgt_x = embed(tgt, params["tgt_emb"], params["pe"])       # (B, S_tgt, D)

    # Precompute additive float masks (0 keep / -1e9 drop); keep the (B,1,Sk)
    # source mask un-broadcast, it broadcasts over Sq inside the kernel.
    src_add = jnp.where(src_mask != 0, 0.0, NEG_INF).astype(jnp.float32)
    tgt_add = jnp.where(tgt_mask != 0, 0.0, NEG_INF).astype(jnp.float32)

    enc, dec = params["enc"], params["dec"]
    weights = (enc["wqkv"], enc["bqkv"], enc["wo"], enc["bo"],
               enc["w1"], enc["b1"], enc["w2"], enc["b2"], enc["ln"], enc["fln"],
               dec["s_wqkv"], dec["s_bqkv"], dec["s_wo"], dec["s_bo"],
               dec["c_wq"], dec["c_bq"], dec["c_wkv"], dec["c_bkv"],
               dec["c_wo"], dec["c_bo"],
               dec["w1"], dec["b1"], dec["w2"], dec["b2"], dec["ln"], dec["fln"])

    B, S_tgt, _ = tgt_x.shape
    return pl.pallas_call(
        _transformer_kernel,
        out_shape=jax.ShapeDtypeStruct((B, S_tgt, D_MODEL), jnp.float32),
        grid=(B,),
        in_specs=[_batch_spec(src_x.shape), _batch_spec(tgt_x.shape),
                  _batch_spec(src_add.shape), _batch_spec(tgt_add.shape)]
                + [_resident_spec(w) for w in weights],
        out_specs=_batch_spec((B, S_tgt, D_MODEL)),
        compiler_params=pltpu.CompilerParams(dimension_semantics=("parallel",)),
    )(src_x, tgt_x, src_add, tgt_add, *weights)


# --------------------------- plain-JAX glue -----------------------------------
def embed(tokens, table, pe):
    # nn.Embedding * sqrt(d_model) + sinusoidal positional encoding (dropout=0)
    x = jnp.take(table, tokens, axis=0) * math.sqrt(D_MODEL)
    return x + pe[: tokens.shape[1]][None, :, :]


# --------------------------- parameter init -----------------------------------
def _init_w(key, d_in, d_out):
    return jax.random.normal(key, (d_in, d_out), jnp.float32) * (1.0 / math.sqrt(d_in))


def _init_encoder(key):
    scale_q = 1.0 / math.sqrt(D_K)   # folded into Q weights (biases are zero;
                                     # a nonzero Q bias would be scaled too)
    wqkv, wo, w1, w2 = [], [], [], []
    for l in range(N_LAYERS):
        ks = jax.random.split(jax.random.fold_in(key, l), 6)
        wq = _init_w(ks[0], D_MODEL, D_MODEL) * scale_q
        wk = _init_w(ks[1], D_MODEL, D_MODEL)
        wv = _init_w(ks[2], D_MODEL, D_MODEL)
        wqkv.append(jnp.concatenate([wq, wk, wv], axis=1))
        wo.append(_init_w(ks[3], D_MODEL, D_MODEL))
        w1.append(_init_w(ks[4], D_MODEL, D_FF))
        w2.append(_init_w(ks[5], D_FF, D_MODEL))
    ln_layer = jnp.stack([jnp.ones(D_MODEL), jnp.zeros(D_MODEL)] * 2)   # (4, D)
    return {
        "wqkv": jnp.stack(wqkv), "bqkv": jnp.zeros((N_LAYERS, 1, 3 * D_MODEL), jnp.float32),
        "wo": jnp.stack(wo),     "bo": jnp.zeros((N_LAYERS, 1, D_MODEL), jnp.float32),
        "w1": jnp.stack(w1),     "b1": jnp.zeros((N_LAYERS, 1, D_FF), jnp.float32),
        "w2": jnp.stack(w2),     "b2": jnp.zeros((N_LAYERS, 1, D_MODEL), jnp.float32),
        "ln": jnp.tile(ln_layer[None], (N_LAYERS, 1, 1)),
        "fln": jnp.stack([jnp.ones(D_MODEL), jnp.zeros(D_MODEL)]),
    }


def _init_decoder(key):
    scale_q = 1.0 / math.sqrt(D_K)
    s_wqkv, s_wo, c_wq, c_wkv, c_wo, w1, w2 = [], [], [], [], [], [], []
    for l in range(N_LAYERS):
        ks = jax.random.split(jax.random.fold_in(key, l), 10)
        wq = _init_w(ks[0], D_MODEL, D_MODEL) * scale_q
        wk = _init_w(ks[1], D_MODEL, D_MODEL)
        wv = _init_w(ks[2], D_MODEL, D_MODEL)
        s_wqkv.append(jnp.concatenate([wq, wk, wv], axis=1))
        s_wo.append(_init_w(ks[3], D_MODEL, D_MODEL))
        c_wq.append(_init_w(ks[4], D_MODEL, D_MODEL) * scale_q)
        ck = _init_w(ks[5], D_MODEL, D_MODEL)
        cv = _init_w(ks[6], D_MODEL, D_MODEL)
        c_wkv.append(jnp.concatenate([ck, cv], axis=1))
        c_wo.append(_init_w(ks[7], D_MODEL, D_MODEL))
        w1.append(_init_w(ks[8], D_MODEL, D_FF))
        w2.append(_init_w(ks[9], D_FF, D_MODEL))
    ln_layer = jnp.stack([jnp.ones(D_MODEL), jnp.zeros(D_MODEL)] * 3)   # (6, D)
    return {
        "s_wqkv": jnp.stack(s_wqkv), "s_bqkv": jnp.zeros((N_LAYERS, 1, 3 * D_MODEL), jnp.float32),
        "s_wo": jnp.stack(s_wo),     "s_bo": jnp.zeros((N_LAYERS, 1, D_MODEL), jnp.float32),
        "c_wq": jnp.stack(c_wq),     "c_bq": jnp.zeros((N_LAYERS, 1, D_MODEL), jnp.float32),
        "c_wkv": jnp.stack(c_wkv),   "c_bkv": jnp.zeros((N_LAYERS, 1, 2 * D_MODEL), jnp.float32),
        "c_wo": jnp.stack(c_wo),     "c_bo": jnp.zeros((N_LAYERS, 1, D_MODEL), jnp.float32),
        "w1": jnp.stack(w1),         "b1": jnp.zeros((N_LAYERS, 1, D_FF), jnp.float32),
        "w2": jnp.stack(w2),         "b2": jnp.zeros((N_LAYERS, 1, D_MODEL), jnp.float32),
        "ln": jnp.tile(ln_layer[None], (N_LAYERS, 1, 1)),
        "fln": jnp.stack([jnp.ones(D_MODEL), jnp.zeros(D_MODEL)]),
    }


def _positional_encoding():
    pos = np.arange(MAX_LEN)[:, None].astype(np.float32)
    div = np.exp(np.arange(0, D_MODEL, 2).astype(np.float32)
                 * -(math.log(10000.0) / D_MODEL))
    pe = np.zeros((MAX_LEN, D_MODEL), np.float32)
    pe[:, 0::2] = np.sin(pos * div)
    pe[:, 1::2] = np.cos(pos * div)
    return jnp.asarray(pe)


def init_params(key):
    keys = jax.random.split(key, 4)
    return {
        "src_emb": jax.random.normal(keys[0], (VOCAB, D_MODEL), jnp.float32) * 0.02,
        "tgt_emb": jax.random.normal(keys[1], (VOCAB, D_MODEL), jnp.float32) * 0.02,
        "pe": _positional_encoding(),
        "enc": _init_encoder(keys[2]),
        "dec": _init_decoder(keys[3]),
    }
    # NOTE: the generator (Linear + log_softmax) exists in __init__ but is
    # never called in Transformer.forward, so it is intentionally omitted.


# ------------------------------- main ----------------------------------------
if __name__ == "__main__":
    B, S_SRC, S_TGT = 2, 8, 8
    key = jax.random.PRNGKey(0)
    kp, ks, kt = jax.random.split(key, 3)

    params = init_params(kp)

    src = jax.random.randint(ks, (B, S_SRC), 1, VOCAB, dtype=jnp.int32)
    tgt = jax.random.randint(kt, (B, S_TGT), 1, VOCAB, dtype=jnp.int32)
    src_mask = jnp.ones((B, 1, S_SRC), dtype=jnp.int32)
    # causal (subsequent) mask for the decoder self-attention
    tgt_mask = jnp.broadcast_to(
        jnp.tril(jnp.ones((S_TGT, S_TGT), dtype=jnp.int32)), (B, S_TGT, S_TGT))

    fwd = jax.jit(transformer_forward)
    out = jax.block_until_ready(fwd(params, src, tgt, src_mask, tgt_mask))

    assert out.shape == (B, S_TGT, D_MODEL), out.shape
    assert bool(jnp.all(jnp.isfinite(out)))
    print("KERNEL_OK")
</pallas_src>

<mosaic_0001>
module attributes {stable_mosaic.version = 11 : i64} {
  func.func @_transformer_kernel(%arg0: i32, %arg1: memref<1x8x32xf32, #tpu.memory_space<vmem>>, %arg2: memref<1x8x32xf32, #tpu.memory_space<vmem>>, %arg3: memref<1x1x8xf32, #tpu.memory_space<vmem>>, %arg4: memref<1x8x8xf32, #tpu.memory_space<vmem>>, %arg5: memref<2x32x96xf32, #tpu.memory_space<vmem>>, %arg6: memref<2x1x96xf32, #tpu.memory_space<vmem>>, %arg7: memref<2x32x32xf32, #tpu.memory_space<vmem>>, %arg8: memref<2x1x32xf32, #tpu.memory_space<vmem>>, %arg9: memref<2x32x64xf32, #tpu.memory_space<vmem>>, %arg10: memref<2x1x64xf32, #tpu.memory_space<vmem>>, %arg11: memref<2x64x32xf32, #tpu.memory_space<vmem>>, %arg12: memref<2x1x32xf32, #tpu.memory_space<vmem>>, %arg13: memref<2x4x32xf32, #tpu.memory_space<vmem>>, %arg14: memref<2x32xf32, #tpu.memory_space<vmem>>, %arg15: memref<2x32x96xf32, #tpu.memory_space<vmem>>, %arg16: memref<2x1x96xf32, #tpu.memory_space<vmem>>, %arg17: memref<2x32x32xf32, #tpu.memory_space<vmem>>, %arg18: memref<2x1x32xf32, #tpu.memory_space<vmem>>, %arg19: memref<2x32x32xf32, #tpu.memory_space<vmem>>, %arg20: memref<2x1x32xf32, #tpu.memory_space<vmem>>, %arg21: memref<2x32x64xf32, #tpu.memory_space<vmem>>, %arg22: memref<2x1x64xf32, #tpu.memory_space<vmem>>, %arg23: memref<2x32x32xf32, #tpu.memory_space<vmem>>, %arg24: memref<2x1x32xf32, #tpu.memory_space<vmem>>, %arg25: memref<2x32x64xf32, #tpu.memory_space<vmem>>, %arg26: memref<2x1x64xf32, #tpu.memory_space<vmem>>, %arg27: memref<2x64x32xf32, #tpu.memory_space<vmem>>, %arg28: memref<2x1x32xf32, #tpu.memory_space<vmem>>, %arg29: memref<2x6x32xf32, #tpu.memory_space<vmem>>, %arg30: memref<2x32xf32, #tpu.memory_space<vmem>>, %arg31: memref<1x8x32xf32, #tpu.memory_space<vmem>>) attributes {dimension_semantics = [#tpu.dimension_semantics<parallel>], iteration_bounds = array<i64: 2>, scalar_prefetch = 0 : i64, scratch_operands = 0 : i64, tpu.core_type = #tpu.core_type<tc>, window_params = [{transform_indices = @transform_0, window_bounds = array<i64: 1, 8, 32>}, {transform_indices = @transform_1, window_bounds = array<i64: 1, 8, 32>}, {transform_indices = @transform_2, window_bounds = array<i64: 1, 1, 8>}, {transform_indices = @transform_3, window_bounds = array<i64: 1, 8, 8>}, {pipeline_mode = #tpu.pipeline_mode<synchronous>, transform_indices = @transform_4, window_bounds = array<i64: 2, 32, 96>}, {pipeline_mode = #tpu.pipeline_mode<synchronous>, transform_indices = @transform_5, window_bounds = array<i64: 2, 1, 96>}, {pipeline_mode = #tpu.pipeline_mode<synchronous>, transform_indices = @transform_6, window_bounds = array<i64: 2, 32, 32>}, {pipeline_mode = #tpu.pipeline_mode<synchronous>, transform_indices = @transform_7, window_bounds = array<i64: 2, 1, 32>}, {pipeline_mode = #tpu.pipeline_mode<synchronous>, transform_indices = @transform_8, window_bounds = array<i64: 2, 32, 64>}, {pipeline_mode = #tpu.pipeline_mode<synchronous>, transform_indices = @transform_9, window_bounds = array<i64: 2, 1, 64>}, {pipeline_mode = #tpu.pipeline_mode<synchronous>, transform_indices = @transform_10, window_bounds = array<i64: 2, 64, 32>}, {pipeline_mode = #tpu.pipeline_mode<synchronous>, transform_indices = @transform_11, window_bounds = array<i64: 2, 1, 32>}, {pipeline_mode = #tpu.pipeline_mode<synchronous>, transform_indices = @transform_12, window_bounds = array<i64: 2, 4, 32>}, {pipeline_mode = #tpu.pipeline_mode<synchronous>, transform_indices = @transform_13, window_bounds = array<i64: 2, 32>}, {pipeline_mode = #tpu.pipeline_mode<synchronous>, transform_indices = @transform_14, window_bounds = array<i64: 2, 32, 96>}, {pipeline_mode = #tpu.pipeline_mode<synchronous>, transform_indices = @transform_15, window_bounds = array<i64: 2, 1, 96>}, {pipeline_mode = #tpu.pipeline_mode<synchronous>, transform_indices = @transform_16, window_bounds = array<i64: 2, 32, 32>}, {pipeline_mode = #tpu.pipeline_mode<synchronous>, transform_indices = @transform_17, window_bounds = array<i64: 2, 1, 32>}, {pipeline_mode = #tpu.pipeline_mode<synchronous>, transform_indices = @transform_18, window_bounds = array<i64: 2, 32, 32>}, {pipeline_mode = #tpu.pipeline_mode<synchronous>, transform_indices = @transform_19, window_bounds = array<i64: 2, 1, 32>}, {pipeline_mode = #tpu.pipeline_mode<synchronous>, transform_indices = @transform_20, window_bounds = array<i64: 2, 32, 64>}, {pipeline_mode = #tpu.pipeline_mode<synchronous>, transform_indices = @transform_21, window_bounds = array<i64: 2, 1, 64>}, {pipeline_mode = #tpu.pipeline_mode<synchronous>, transform_indices = @transform_22, window_bounds = array<i64: 2, 32, 32>}, {pipeline_mode = #tpu.pipeline_mode<synchronous>, transform_indices = @transform_23, window_bounds = array<i64: 2, 1, 32>}, {pipeline_mode = #tpu.pipeline_mode<synchronous>, transform_indices = @transform_24, window_bounds = array<i64: 2, 32, 64>}, {pipeline_mode = #tpu.pipeline_mode<synchronous>, transform_indices = @transform_25, window_bounds = array<i64: 2, 1, 64>}, {pipeline_mode = #tpu.pipeline_mode<synchronous>, transform_indices = @transform_26, window_bounds = array<i64: 2, 64, 32>}, {pipeline_mode = #tpu.pipeline_mode<synchronous>, transform_indices = @transform_27, window_bounds = array<i64: 2, 1, 32>}, {pipeline_mode = #tpu.pipeline_mode<synchronous>, transform_indices = @transform_28, window_bounds = array<i64: 2, 6, 32>}, {pipeline_mode = #tpu.pipeline_mode<synchronous>, transform_indices = @transform_29, window_bounds = array<i64: 2, 32>}, {transform_indices = @transform_30, window_bounds = array<i64: 1, 8, 32>}]} {
    %c0 = arith.constant 0 : index
    %c0_0 = arith.constant 0 : index
    %c0_1 = arith.constant 0 : index
    %0 = vector.load %arg1[%c0, %c0_0, %c0_1] : memref<1x8x32xf32, #tpu.memory_space<vmem>>, vector<1x8x32xf32>
    %1 = vector.shape_cast %0 : vector<1x8x32xf32> to vector<8x32xf32>
    %c0_2 = arith.constant 0 : index
    %c0_3 = arith.constant 0 : index
    %c0_4 = arith.constant 0 : index
    %2 = vector.load %arg2[%c0_2, %c0_3, %c0_4] : memref<1x8x32xf32, #tpu.memory_space<vmem>>, vector<1x8x32xf32>
    %3 = vector.shape_cast %2 : vector<1x8x32xf32> to vector<8x32xf32>
    %c0_5 = arith.constant 0 : index
    %c0_6 = arith.constant 0 : index
    %c0_7 = arith.constant 0 : index
    %4 = vector.load %arg3[%c0_5, %c0_6, %c0_7] : memref<1x1x8xf32, #tpu.memory_space<vmem>>, vector<1x1x8xf32>
    %5 = vector.shape_cast %4 : vector<1x1x8xf32> to vector<1x8xf32>
    %c0_8 = arith.constant 0 : index
    %c0_9 = arith.constant 0 : index
    %c0_10 = arith.constant 0 : index
    %6 = vector.load %arg4[%c0_8, %c0_9, %c0_10] : memref<1x8x8xf32, #tpu.memory_space<vmem>>, vector<1x8x8xf32>
    %7 = vector.shape_cast %6 : vector<1x8x8xf32> to vector<8x8xf32>
    %c0_11 = arith.constant 0 : index
    %c0_12 = arith.constant 0 : index
    %c0_13 = arith.constant 0 : index
    %8 = vector.load %arg13[%c0_11, %c0_12, %c0_13] : memref<2x4x32xf32, #tpu.memory_space<vmem>>, vector<1x4x32xf32>
    %9 = vector.shape_cast %8 : vector<1x4x32xf32> to vector<4x32xf32>
    %10 = vector.extract_strided_slice %9 {offsets = [0, 0], sizes = [1, 32], strides = [1, 1]} : vector<4x32xf32> to vector<1x32xf32>
    %11 = vector.extract_strided_slice %9 {offsets = [1, 0], sizes = [1, 32], strides = [1, 1]} : vector<4x32xf32> to vector<1x32xf32>
    %cst = arith.constant dense<0.000000e+00> : vector<8xf32>
    %12 = vector.multi_reduction <add>, %1, %cst [1] : vector<8x32xf32> to vector<8xf32>
    %13 = vector.shape_cast %12 : vector<8xf32> to vector<8x1xf32>
    %cst_14 = arith.constant 3.200000e+01 : f32
    %14 = vector.broadcast %cst_14 : f32 to vector<8x1xf32>
    %15 = arith.divf %13, %14 : vector<8x1xf32>
    %16 = vector.broadcast %15 : vector<8x1xf32> to vector<8x32xf32>
    %17 = arith.subf %1, %16 : vector<8x32xf32>
    %18 = arith.mulf %17, %17 : vector<8x32xf32>
    %cst_15 = arith.constant dense<0.000000e+00> : vector<8xf32>
    %19 = vector.multi_reduction <add>, %18, %cst_15 [1] : vector<8x32xf32> to vector<8xf32>
    %20 = vector.shape_cast %19 : vector<8xf32> to vector<8x1xf32>
    %cst_16 = arith.constant 0.0322580636 : f32
    %21 = vector.broadcast %cst_16 : f32 to vector<8x1xf32>
    %22 = arith.mulf %20, %21 : vector<8x1xf32>
    %23 = math.sqrt %22 : vector<8x1xf32>
    %cst_17 = arith.constant 9.99999997E-7 : f32
    %24 = vector.broadcast %cst_17 : f32 to vector<8x1xf32>
    %25 = arith.addf %23, %24 : vector<8x1xf32>
    %26 = tpu.reciprocal %25 {approx = true} : vector<8x1xf32> -> vector<8x1xf32>
    %27 = vector.broadcast %10 : vector<1x32xf32> to vector<8x32xf32>
    %28 = arith.mulf %27, %17 : vector<8x32xf32>
    %29 = vector.broadcast %26 : vector<8x1xf32> to vector<8x32xf32>
    %30 = arith.mulf %28, %29 : vector<8x32xf32>
    %31 = vector.broadcast %11 : vector<1x32xf32> to vector<8x32xf32>
    %32 = arith.addf %30, %31 : vector<8x32xf32>
    %c0_18 = arith.constant 0 : index
    %c0_19 = arith.constant 0 : index
    %c0_20 = arith.constant 0 : index
    %33 = vector.load %arg5[%c0_18, %c0_19, %c0_20] : memref<2x32x96xf32, #tpu.memory_space<vmem>>, vector<1x32x96xf32>
    %34 = vector.shape_cast %33 : vector<1x32x96xf32> to vector<32x96xf32>
    %cst_21 = arith.constant dense<0.000000e+00> : vector<8x96xf32>
    %35 = tpu.matmul %32, %34, %cst_21 {dimension_numbers = #tpu.dot_dimension_numbers<[1], [0], [0], [1], [0, 0, 1, 1], [], []>} : vector<8x32xf32>, vector<32x96xf32>, vector<8x96xf32> -> vector<8x96xf32>
    %c0_22 = arith.constant 0 : index
    %c0_23 = arith.constant 0 : index
    %c0_24 = arith.constant 0 : index
    %36 = vector.load %arg6[%c0_22, %c0_23, %c0_24] : memref<2x1x96xf32, #tpu.memory_space<vmem>>, vector<1x1x96xf32>
    %37 = vector.shape_cast %36 : vector<1x1x96xf32> to vector<1x96xf32>
    %38 = vector.broadcast %37 : vector<1x96xf32> to vector<8x96xf32>
    %39 = arith.addf %35, %38 : vector<8x96xf32>
    %40 = vector.extract_strided_slice %39 {offsets = [0, 0], sizes = [8, 32], strides = [1, 1]} : vector<8x96xf32> to vector<8x32xf32>
    %41 = vector.extract_strided_slice %39 {offsets = [0, 32], sizes = [8, 32], strides = [1, 1]} : vector<8x96xf32> to vector<8x32xf32>
    %42 = vector.extract_strided_slice %39 {offsets = [0, 64], sizes = [8, 32], strides = [1, 1]} : vector<8x96xf32> to vector<8x32xf32>
    %c0_25 = arith.constant 0 : index
    %c0_26 = arith.constant 0 : index
    %c0_27 = arith.constant 0 : index
    %43 = vector.load %arg7[%c0_25, %c0_26, %c0_27] : memref<2x32x32xf32, #tpu.memory_space<vmem>>, vector<1x32x32xf32>
    %44 = vector.shape_cast %43 : vector<1x32x32xf32> to vector<32x32xf32>
    %c0_28 = arith.constant 0 : index
    %c0_29 = arith.constant 0 : index
    %c0_30 = arith.constant 0 : index
    %45 = vector.load %arg8[%c0_28, %c0_29, %c0_30] : memref<2x1x32xf32, #tpu.memory_space<vmem>>, vector<1x1x32xf32>
    %46 = vector.shape_cast %45 : vector<1x1x32xf32> to vector<1x32xf32>
    %47 = vector.extract_strided_slice %40 {offsets = [0, 0], sizes = [8, 8], strides = [1, 1]} : vector<8x32xf32> to vector<8x8xf32>
    %48 = vector.extract_strided_slice %41 {offsets = [0, 0], sizes = [8, 8], strides = [1, 1]} : vector<8x32xf32> to vector<8x8xf32>
    %49 = vector.extract_strided_slice %42 {offsets = [0, 0], sizes = [8, 8], strides = [1, 1]} : vector<8x32xf32> to vector<8x8xf32>
    %cst_31 = arith.constant dense<0.000000e+00> : vector<8x8xf32>
    %50 = tpu.matmul %47, %48, %cst_31 {dimension_numbers = #tpu.dot_dimension_numbers<[1], [1], [0], [0], [0, 0, 1, 0], [], []>} : vector<8x8xf32>, vector<8x8xf32>, vector<8x8xf32> -> vector<8x8xf32>
    %51 = vector.broadcast %5 : vector<1x8xf32> to vector<8x8xf32>
    %52 = arith.addf %50, %51 : vector<8x8xf32>
    %cst_32 = arith.constant dense<0xFF800000> : vector<8xf32>
    %53 = vector.multi_reduction <maximumf>, %52, %cst_32 [1] : vector<8x8xf32> to vector<8xf32>
    %54 = vector.shape_cast %53 : vector<8xf32> to vector<8x1xf32>
    %55 = vector.broadcast %54 : vector<8x1xf32> to vector<8x8xf32>
    %56 = arith.subf %52, %55 : vector<8x8xf32>
    %57 = math.exp %56 : vector<8x8xf32>
    %cst_33 = arith.constant dense<0.000000e+00> : vector<8xf32>
    %58 = vector.multi_reduction <add>, %57, %cst_33 [1] : vector<8x8xf32> to vector<8xf32>
    %59 = vector.shape_cast %58 : vector<8xf32> to vector<8x1xf32>
    %60 = tpu.reciprocal %59 {approx = true} : vector<8x1xf32> -> vector<8x1xf32>
    %61 = vector.broadcast %60 : vector<8x1xf32> to vector<8x8xf32>
    %62 = arith.mulf %57, %61 : vector<8x8xf32>
    %cst_34 = arith.constant dense<0.000000e+00> : vector<8x8xf32>
    %63 = tpu.matmul %62, %49, %cst_34 {dimension_numbers = #tpu.dot_dimension_numbers<[1], [0], [0], [1], [0, 0, 1, 1], [], []>} : vector<8x8xf32>, vector<8x8xf32>, vector<8x8xf32> -> vector<8x8xf32>
    %64 = vector.extract_strided_slice %44 {offsets = [0, 0], sizes = [8, 32], strides = [1, 1]} : vector<32x32xf32> to vector<8x32xf32>
    %cst_35 = arith.constant dense<0.000000e+00> : vector<8x32xf32>
    %65 = tpu.matmul %63, %64, %cst_35 {dimension_numbers = #tpu.dot_dimension_numbers<[1], [0], [0], [1], [0, 0, 1, 1], [], []>} : vector<8x8xf32>, vector<8x32xf32>, vector<8x32xf32> -> vector<8x32xf32>
    %66 = vector.extract_strided_slice %40 {offsets = [0, 8], sizes = [8, 8], strides = [1, 1]} : vector<8x32xf32> to vector<8x8xf32>
    %67 = vector.extract_strided_slice %41 {offsets = [0, 8], sizes = [8, 8], strides = [1, 1]} : vector<8x32xf32> to vector<8x8xf32>
    %68 = vector.extract_strided_slice %42 {offsets = [0, 8], sizes = [8, 8], strides = [1, 1]} : vector<8x32xf32> to vector<8x8xf32>
    %cst_36 = arith.constant dense<0.000000e+00> : vector<8x8xf32>
    %69 = tpu.matmul %66, %67, %cst_36 {dimension_numbers = #tpu.dot_dimension_numbers<[1], [1], [0], [0], [0, 0, 1, 0], [], []>} : vector<8x8xf32>, vector<8x8xf32>, vector<8x8xf32> -> vector<8x8xf32>
    %70 = vector.broadcast %5 : vector<1x8xf32> to vector<8x8xf32>
    %71 = arith.addf %69, %70 : vector<8x8xf32>
    %cst_37 = arith.constant dense<0xFF800000> : vector<8xf32>
    %72 = vector.multi_reduction <maximumf>, %71, %cst_37 [1] : vector<8x8xf32> to vector<8xf32>
    %73 = vector.shape_cast %72 : vector<8xf32> to vector<8x1xf32>
    %74 = vector.broadcast %73 : vector<8x1xf32> to vector<8x8xf32>
    %75 = arith.subf %71, %74 : vector<8x8xf32>
    %76 = math.exp %75 : vector<8x8xf32>
    %cst_38 = arith.constant dense<0.000000e+00> : vector<8xf32>
    %77 = vector.multi_reduction <add>, %76, %cst_38 [1] : vector<8x8xf32> to vector<8xf32>
    %78 = vector.shape_cast %77 : vector<8xf32> to vector<8x1xf32>
    %79 = tpu.reciprocal %78 {approx = true} : vector<8x1xf32> -> vector<8x1xf32>
    %80 = vector.broadcast %79 : vector<8x1xf32> to vector<8x8xf32>
    %81 = arith.mulf %76, %80 : vector<8x8xf32>
    %cst_39 = arith.constant dense<0.000000e+00> : vector<8x8xf32>
    %82 = tpu.matmul %81, %68, %cst_39 {dimension_numbers = #tpu.dot_dimension_numbers<[1], [0], [0], [1], [0, 0, 1, 1], [], []>} : vector<8x8xf32>, vector<8x8xf32>, vector<8x8xf32> -> vector<8x8xf32>
    %83 = vector.extract_strided_slice %44 {offsets = [8, 0], sizes = [8, 32], strides = [1, 1]} : vector<32x32xf32> to vector<8x32xf32>
    %cst_40 = arith.constant dense<0.000000e+00> : vector<8x32xf32>
    %84 = tpu.matmul %82, %83, %cst_40 {dimension_numbers = #tpu.dot_dimension_numbers<[1], [0], [0], [1], [0, 0, 1, 1], [], []>} : vector<8x8xf32>, vector<8x32xf32>, vector<8x32xf32> -> vector<8x32xf32>
    %85 = arith.addf %65, %84 : vector<8x32xf32>
    %86 = vector.extract_strided_slice %40 {offsets = [0, 16], sizes = [8, 8], strides = [1, 1]} : vector<8x32xf32> to vector<8x8xf32>
    %87 = vector.extract_strided_slice %41 {offsets = [0, 16], sizes = [8, 8], strides = [1, 1]} : vector<8x32xf32> to vector<8x8xf32>
    %88 = vector.extract_strided_slice %42 {offsets = [0, 16], sizes = [8, 8], strides = [1, 1]} : vector<8x32xf32> to vector<8x8xf32>
    %cst_41 = arith.constant dense<0.000000e+00> : vector<8x8xf32>
    %89 = tpu.matmul %86, %87, %cst_41 {dimension_numbers = #tpu.dot_dimension_numbers<[1], [1], [0], [0], [0, 0, 1, 0], [], []>} : vector<8x8xf32>, vector<8x8xf32>, vector<8x8xf32> -> vector<8x8xf32>
    %90 = vector.broadcast %5 : vector<1x8xf32> to vector<8x8xf32>
    %91 = arith.addf %89, %90 : vector<8x8xf32>
    %cst_42 = arith.constant dense<0xFF800000> : vector<8xf32>
    %92 = vector.multi_reduction <maximumf>, %91, %cst_42 [1] : vector<8x8xf32> to vector<8xf32>
    %93 = vector.shape_cast %92 : vector<8xf32> to vector<8x1xf32>
    %94 = vector.broadcast %93 : vector<8x1xf32> to vector<8x8xf32>
    %95 = arith.subf %91, %94 : vector<8x8xf32>
    %96 = math.exp %95 : vector<8x8xf32>
    %cst_43 = arith.constant dense<0.000000e+00> : vector<8xf32>
    %97 = vector.multi_reduction <add>, %96, %cst_43 [1] : vector<8x8xf32> to vector<8xf32>
    %98 = vector.shape_cast %97 : vector<8xf32> to vector<8x1xf32>
    %99 = tpu.reciprocal %98 {approx = true} : vector<8x1xf32> -> vector<8x1xf32>
    %100 = vector.broadcast %99 : vector<8x1xf32> to vector<8x8xf32>
    %101 = arith.mulf %96, %100 : vector<8x8xf32>
    %cst_44 = arith.constant dense<0.000000e+00> : vector<8x8xf32>
    %102 = tpu.matmul %101, %88, %cst_44 {dimension_numbers = #tpu.dot_dimension_numbers<[1], [0], [0], [1], [0, 0, 1, 1], [], []>} : vector<8x8xf32>, vector<8x8xf32>, vector<8x8xf32> -> vector<8x8xf32>
    %103 = vector.extract_strided_slice %44 {offsets = [16, 0], sizes = [8, 32], strides = [1, 1]} : vector<32x32xf32> to vector<8x32xf32>
    %cst_45 = arith.constant dense<0.000000e+00> : vector<8x32xf32>
    %104 = tpu.matmul %102, %103, %cst_45 {dimension_numbers = #tpu.dot_dimension_numbers<[1], [0], [0], [1], [0, 0, 1, 1], [], []>} : vector<8x8xf32>, vector<8x32xf32>, vector<8x32xf32> -> vector<8x32xf32>
    %105 = arith.addf %85, %104 : vector<8x32xf32>
    %106 = vector.extract_strided_slice %40 {offsets = [0, 24], sizes = [8, 8], strides = [1, 1]} : vector<8x32xf32> to vector<8x8xf32>
    %107 = vector.extract_strided_slice %41 {offsets = [0, 24], sizes = [8, 8], strides = [1, 1]} : vector<8x32xf32> to vector<8x8xf32>
    %108 = vector.extract_strided_slice %42 {offsets = [0, 24], sizes = [8, 8], strides = [1, 1]} : vector<8x32xf32> to vector<8x8xf32>
    %cst_46 = arith.constant dense<0.000000e+00> : vector<8x8xf32>
    %109 = tpu.matmul %106, %107, %cst_46 {dimension_numbers = #tpu.dot_dimension_numbers<[1], [1], [0], [0], [0, 0, 1, 0], [], []>} : vector<8x8xf32>, vector<8x8xf32>, vector<8x8xf32> -> vector<8x8xf32>
    %110 = vector.broadcast %5 : vector<1x8xf32> to vector<8x8xf32>
    %111 = arith.addf %109, %110 : vector<8x8xf32>
    %cst_47 = arith.constant dense<0xFF800000> : vector<8xf32>
    %112 = vector.multi_reduction <maximumf>, %111, %cst_47 [1] : vector<8x8xf32> to vector<8xf32>
    %113 = vector.shape_cast %112 : vector<8xf32> to vector<8x1xf32>
    %114 = vector.broadcast %113 : vector<8x1xf32> to vector<8x8xf32>
    %115 = arith.subf %111, %114 : vector<8x8xf32>
    %116 = math.exp %115 : vector<8x8xf32>
    %cst_48 = arith.constant dense<0.000000e+00> : vector<8xf32>
    %117 = vector.multi_reduction <add>, %116, %cst_48 [1] : vector<8x8xf32> to vector<8xf32>
    %118 = vector.shape_cast %117 : vector<8xf32> to vector<8x1xf32>
    %119 = tpu.reciprocal %118 {approx = true} : vector<8x1xf32> -> vector<8x1xf32>
    %120 = vector.broadcast %119 : vector<8x1xf32> to vector<8x8xf32>
    %121 = arith.mulf %116, %120 : vector<8x8xf32>
    %cst_49 = arith.constant dense<0.000000e+00> : vector<8x8xf32>
    %122 = tpu.matmul %121, %108, %cst_49 {dimension_numbers = #tpu.dot_dimension_numbers<[1], [0], [0], [1], [0, 0, 1, 1], [], []>} : vector<8x8xf32>, vector<8x8xf32>, vector<8x8xf32> -> vector<8x8xf32>
    %123 = vector.extract_strided_slice %44 {offsets = [24, 0], sizes = [8, 32], strides = [1, 1]} : vector<32x32xf32> to vector<8x32xf32>
    %cst_50 = arith.constant dense<0.000000e+00> : vector<8x32xf32>
    %124 = tpu.matmul %122, %123, %cst_50 {dimension_numbers = #tpu.dot_dimension_numbers<[1], [0], [0], [1], [0, 0, 1, 1], [], []>} : vector<8x8xf32>, vector<8x32xf32>, vector<8x32xf32> -> vector<8x32xf32>
    %125 = arith.addf %105, %124 : vector<8x32xf32>
    %126 = vector.broadcast %46 : vector<1x32xf32> to vector<8x32xf32>
    %127 = arith.addf %125, %126 : vector<8x32xf32>
    %128 = arith.addf %1, %127 : vector<8x32xf32>
    %129 = vector.extract_strided_slice %9 {offsets = [2, 0], sizes = [1, 32], strides = [1, 1]} : vector<4x32xf32> to vector<1x32xf32>
    %130 = vector.extract_strided_slice %9 {offsets = [3, 0], sizes = [1, 32], strides = [1, 1]} : vector<4x32xf32> to vector<1x32xf32>
    %cst_51 = arith.constant dense<0.000000e+00> : vector<8xf32>
    %131 = vector.multi_reduction <add>, %128, %cst_51 [1] : vector<8x32xf32> to vector<8xf32>
    %132 = vector.shape_cast %131 : vector<8xf32> to vector<8x1xf32>
    %cst_52 = arith.constant 3.200000e+01 : f32
    %133 = vector.broadcast %cst_52 : f32 to vector<8x1xf32>
    %134 = arith.divf %132, %133 : vector<8x1xf32>
    %135 = vector.broadcast %134 : vector<8x1xf32> to vector<8x32xf32>
    %136 = arith.subf %128, %135 : vector<8x32xf32>
    %137 = arith.mulf %136, %136 : vector<8x32xf32>
    %cst_53 = arith.constant dense<0.000000e+00> : vector<8xf32>
    %138 = vector.multi_reduction <add>, %137, %cst_53 [1] : vector<8x32xf32> to vector<8xf32>
    %139 = vector.shape_cast %138 : vector<8xf32> to vector<8x1xf32>
    %cst_54 = arith.constant 0.0322580636 : f32
    %140 = vector.broadcast %cst_54 : f32 to vector<8x1xf32>
    %141 = arith.mulf %139, %140 : vector<8x1xf32>
    %142 = math.sqrt %141 : vector<8x1xf32>
    %cst_55 = arith.constant 9.99999997E-7 : f32
    %143 = vector.broadcast %cst_55 : f32 to vector<8x1xf32>
    %144 = arith.addf %142, %143 : vector<8x1xf32>
    %145 = tpu.reciprocal %144 {approx = true} : vector<8x1xf32> -> vector<8x1xf32>
    %146 = vector.broadcast %129 : vector<1x32xf32> to vector<8x32xf32>
    %147 = arith.mulf %146, %136 : vector<8x32xf32>
    %148 = vector.broadcast %145 : vector<8x1xf32> to vector<8x32xf32>
    %149 = arith.mulf %147, %148 : vector<8x32xf32>
    %150 = vector.broadcast %130 : vector<1x32xf32> to vector<8x32xf32>
    %151 = arith.addf %149, %150 : vector<8x32xf32>
    %c0_56 = arith.constant 0 : index
    %c0_57 = arith.constant 0 : index
    %c0_58 = arith.constant 0 : index
    %152 = vector.load %arg9[%c0_56, %c0_57, %c0_58] : memref<2x32x64xf32, #tpu.memory_space<vmem>>, vector<1x32x64xf32>
    %153 = vector.shape_cast %152 : vector<1x32x64xf32> to vector<32x64xf32>
    %cst_59 = arith.constant dense<0.000000e+00> : vector<8x64xf32>
    %154 = tpu.matmul %151, %153, %cst_59 {dimension_numbers = #tpu.dot_dimension_numbers<[1], [0], [0], [1], [0, 0, 1, 1], [], []>} : vector<8x32xf32>, vector<32x64xf32>, vector<8x64xf32> -> vector<8x64xf32>
    %c0_60 = arith.constant 0 : index
    %c0_61 = arith.constant 0 : index
    %c0_62 = arith.constant 0 : index
    %155 = vector.load %arg10[%c0_60, %c0_61, %c0_62] : memref<2x1x64xf32, #tpu.memory_space<vmem>>, vector<1x1x64xf32>
    %156 = vector.shape_cast %155 : vector<1x1x64xf32> to vector<1x64xf32>
    %157 = vector.broadcast %156 : vector<1x64xf32> to vector<8x64xf32>
    %158 = arith.addf %154, %157 : vector<8x64xf32>
    %cst_63 = arith.constant 0.000000e+00 : f32
    %159 = vector.broadcast %cst_63 : f32 to vector<8x64xf32>
    %160 = arith.maximumf %158, %159 : vector<8x64xf32>
    %c0_64 = arith.constant 0 : index
    %c0_65 = arith.constant 0 : index
    %c0_66 = arith.constant 0 : index
    %161 = vector.load %arg11[%c0_64, %c0_65, %c0_66] : memref<2x64x32xf32, #tpu.memory_space<vmem>>, vector<1x64x32xf32>
    %162 = vector.shape_cast %161 : vector<1x64x32xf32> to vector<64x32xf32>
    %cst_67 = arith.constant dense<0.000000e+00> : vector<8x32xf32>
    %163 = tpu.matmul %160, %162, %cst_67 {dimension_numbers = #tpu.dot_dimension_numbers<[1], [0], [0], [1], [0, 0, 1, 1], [], []>} : vector<8x64xf32>, vector<64x32xf32>, vector<8x32xf32> -> vector<8x32xf32>
    %164 = arith.addf %128, %163 : vector<8x32xf32>
    %c0_68 = arith.constant 0 : index
    %c0_69 = arith.constant 0 : index
    %c0_70 = arith.constant 0 : index
    %165 = vector.load %arg12[%c0_68, %c0_69, %c0_70] : memref<2x1x32xf32, #tpu.memory_space<vmem>>, vector<1x1x32xf32>
    %166 = vector.shape_cast %165 : vector<1x1x32xf32> to vector<1x32xf32>
    %167 = vector.broadcast %166 : vector<1x32xf32> to vector<8x32xf32>
    %168 = arith.addf %164, %167 : vector<8x32xf32>
    %c1 = arith.constant 1 : index
    %c0_71 = arith.constant 0 : index
    %c0_72 = arith.constant 0 : index
    %169 = vector.load %arg13[%c1, %c0_71, %c0_72] : memref<2x4x32xf32, #tpu.memory_space<vmem>>, vector<1x4x32xf32>
    %170 = vector.shape_cast %169 : vector<1x4x32xf32> to vector<4x32xf32>
    %171 = vector.extract_strided_slice %170 {offsets = [0, 0], sizes = [1, 32], strides = [1, 1]} : vector<4x32xf32> to vector<1x32xf32>
    %172 = vector.extract_strided_slice %170 {offsets = [1, 0], sizes = [1, 32], strides = [1, 1]} : vector<4x32xf32> to vector<1x32xf32>
    %cst_73 = arith.constant dense<0.000000e+00> : vector<8xf32>
    %173 = vector.multi_reduction <add>, %168, %cst_73 [1] : vector<8x32xf32> to vector<8xf32>
    %174 = vector.shape_cast %173 : vector<8xf32> to vector<8x1xf32>
    %cst_74 = arith.constant 3.200000e+01 : f32
    %175 = vector.broadcast %cst_74 : f32 to vector<8x1xf32>
    %176 = arith.divf %174, %175 : vector<8x1xf32>
    %177 = vector.broadcast %176 : vector<8x1xf32> to vector<8x32xf32>
    %178 = arith.subf %168, %177 : vector<8x32xf32>
    %179 = arith.mulf %178, %178 : vector<8x32xf32>
    %cst_75 = arith.constant dense<0.000000e+00> : vector<8xf32>
    %180 = vector.multi_reduction <add>, %179, %cst_75 [1] : vector<8x32xf32> to vector<8xf32>
    %181 = vector.shape_cast %180 : vector<8xf32> to vector<8x1xf32>
    %cst_76 = arith.constant 0.0322580636 : f32
    %182 = vector.broadcast %cst_76 : f32 to vector<8x1xf32>
    %183 = arith.mulf %181, %182 : vector<8x1xf32>
    %184 = math.sqrt %183 : vector<8x1xf32>
    %cst_77 = arith.constant 9.99999997E-7 : f32
    %185 = vector.broadcast %cst_77 : f32 to vector<8x1xf32>
    %186 = arith.addf %184, %185 : vector<8x1xf32>
    %187 = tpu.reciprocal %186 {approx = true} : vector<8x1xf32> -> vector<8x1xf32>
    %188 = vector.broadcast %171 : vector<1x32xf32> to vector<8x32xf32>
    %189 = arith.mulf %188, %178 : vector<8x32xf32>
    %190 = vector.broadcast %187 : vector<8x1xf32> to vector<8x32xf32>
    %191 = arith.mulf %189, %190 : vector<8x32xf32>
    %192 = vector.broadcast %172 : vector<1x32xf32> to vector<8x32xf32>
    %193 = arith.addf %191, %192 : vector<8x32xf32>
    %c1_78 = arith.constant 1 : index
    %c0_79 = arith.constant 0 : index
    %c0_80 = arith.constant 0 : index
    %194 = vector.load %arg5[%c1_78, %c0_79, %c0_80] : memref<2x32x96xf32, #tpu.memory_space<vmem>>, vector<1x32x96xf32>
    %195 = vector.shape_cast %194 : vector<1x32x96xf32> to vector<32x96xf32>
    %cst_81 = arith.constant dense<0.000000e+00> : vector<8x96xf32>
    %196 = tpu.matmul %193, %195, %cst_81 {dimension_numbers = #tpu.dot_dimension_numbers<[1], [0], [0], [1], [0, 0, 1, 1], [], []>} : vector<8x32xf32>, vector<32x96xf32>, vector<8x96xf32> -> vector<8x96xf32>
    %c1_82 = arith.constant 1 : index
    %c0_83 = arith.constant 0 : index
    %c0_84 = arith.constant 0 : index
    %197 = vector.load %arg6[%c1_82, %c0_83, %c0_84] : memref<2x1x96xf32, #tpu.memory_space<vmem>>, vector<1x1x96xf32>
    %198 = vector.shape_cast %197 : vector<1x1x96xf32> to vector<1x96xf32>
    %199 = vector.broadcast %198 : vector<1x96xf32> to vector<8x96xf32>
    %200 = arith.addf %196, %199 : vector<8x96xf32>
    %201 = vector.extract_strided_slice %200 {offsets = [0, 0], sizes = [8, 32], strides = [1, 1]} : vector<8x96xf32> to vector<8x32xf32>
    %202 = vector.extract_strided_slice %200 {offsets = [0, 32], sizes = [8, 32], strides = [1, 1]} : vector<8x96xf32> to vector<8x32xf32>
    %203 = vector.extract_strided_slice %200 {offsets = [0, 64], sizes = [8, 32], strides = [1, 1]} : vector<8x96xf32> to vector<8x32xf32>
    %c1_85 = arith.constant 1 : index
    %c0_86 = arith.constant 0 : index
    %c0_87 = arith.constant 0 : index
    %204 = vector.load %arg7[%c1_85, %c0_86, %c0_87] : memref<2x32x32xf32, #tpu.memory_space<vmem>>, vector<1x32x32xf32>
    %205 = vector.shape_cast %204 : vector<1x32x32xf32> to vector<32x32xf32>
    %c1_88 = arith.constant 1 : index
    %c0_89 = arith.constant 0 : index
    %c0_90 = arith.constant 0 : index
    %206 = vector.load %arg8[%c1_88, %c0_89, %c0_90] : memref<2x1x32xf32, #tpu.memory_space<vmem>>, vector<1x1x32xf32>
    %207 = vector.shape_cast %206 : vector<1x1x32xf32> to vector<1x32xf32>
    %208 = vector.extract_strided_slice %201 {offsets = [0, 0], sizes = [8, 8], strides = [1, 1]} : vector<8x32xf32> to vector<8x8xf32>
    %209 = vector.extract_strided_slice %202 {offsets = [0, 0], sizes = [8, 8], strides = [1, 1]} : vector<8x32xf32> to vector<8x8xf32>
    %210 = vector.extract_strided_slice %203 {offsets = [0, 0], sizes = [8, 8], strides = [1, 1]} : vector<8x32xf32> to vector<8x8xf32>
    %cst_91 = arith.constant dense<0.000000e+00> : vector<8x8xf32>
    %211 = tpu.matmul %208, %209, %cst_91 {dimension_numbers = #tpu.dot_dimension_numbers<[1], [1], [0], [0], [0, 0, 1, 0], [], []>} : vector<8x8xf32>, vector<8x8xf32>, vector<8x8xf32> -> vector<8x8xf32>
    %212 = vector.broadcast %5 : vector<1x8xf32> to vector<8x8xf32>
    %213 = arith.addf %211, %212 : vector<8x8xf32>
    %cst_92 = arith.constant dense<0xFF800000> : vector<8xf32>
    %214 = vector.multi_reduction <maximumf>, %213, %cst_92 [1] : vector<8x8xf32> to vector<8xf32>
    %215 = vector.shape_cast %214 : vector<8xf32> to vector<8x1xf32>
    %216 = vector.broadcast %215 : vector<8x1xf32> to vector<8x8xf32>
    %217 = arith.subf %213, %216 : vector<8x8xf32>
    %218 = math.exp %217 : vector<8x8xf32>
    %cst_93 = arith.constant dense<0.000000e+00> : vector<8xf32>
    %219 = vector.multi_reduction <add>, %218, %cst_93 [1] : vector<8x8xf32> to vector<8xf32>
    %220 = vector.shape_cast %219 : vector<8xf32> to vector<8x1xf32>
    %221 = tpu.reciprocal %220 {approx = true} : vector<8x1xf32> -> vector<8x1xf32>
    %222 = vector.broadcast %221 : vector<8x1xf32> to vector<8x8xf32>
    %223 = arith.mulf %218, %222 : vector<8x8xf32>
    %cst_94 = arith.constant dense<0.000000e+00> : vector<8x8xf32>
    %224 = tpu.matmul %223, %210, %cst_94 {dimension_numbers = #tpu.dot_dimension_numbers<[1], [0], [0], [1], [0, 0, 1, 1], [], []>} : vector<8x8xf32>, vector<8x8xf32>, vector<8x8xf32> -> vector<8x8xf32>
    %225 = vector.extract_strided_slice %205 {offsets = [0, 0], sizes = [8, 32], strides = [1, 1]} : vector<32x32xf32> to vector<8x32xf32>
    %cst_95 = arith.constant dense<0.000000e+00> : vector<8x32xf32>
    %226 = tpu.matmul %224, %225, %cst_95 {dimension_numbers = #tpu.dot_dimension_numbers<[1], [0], [0], [1], [0, 0, 1, 1], [], []>} : vector<8x8xf32>, vector<8x32xf32>, vector<8x32xf32> -> vector<8x32xf32>
    %227 = vector.extract_strided_slice %201 {offsets = [0, 8], sizes = [8, 8], strides = [1, 1]} : vector<8x32xf32> to vector<8x8xf32>
    %228 = vector.extract_strided_slice %202 {offsets = [0, 8], sizes = [8, 8], strides = [1, 1]} : vector<8x32xf32> to vector<8x8xf32>
    %229 = vector.extract_strided_slice %203 {offsets = [0, 8], sizes = [8, 8], strides = [1, 1]} : vector<8x32xf32> to vector<8x8xf32>
    %cst_96 = arith.constant dense<0.000000e+00> : vector<8x8xf32>
    %230 = tpu.matmul %227, %228, %cst_96 {dimension_numbers = #tpu.dot_dimension_numbers<[1], [1], [0], [0], [0, 0, 1, 0], [], []>} : vector<8x8xf32>, vector<8x8xf32>, vector<8x8xf32> -> vector<8x8xf32>
    %231 = vector.broadcast %5 : vector<1x8xf32> to vector<8x8xf32>
    %232 = arith.addf %230, %231 : vector<8x8xf32>
    %cst_97 = arith.constant dense<0xFF800000> : vector<8xf32>
    %233 = vector.multi_reduction <maximumf>, %232, %cst_97 [1] : vector<8x8xf32> to vector<8xf32>
    %234 = vector.shape_cast %233 : vector<8xf32> to vector<8x1xf32>
    %235 = vector.broadcast %234 : vector<8x1xf32> to vector<8x8xf32>
    %236 = arith.subf %232, %235 : vector<8x8xf32>
    %237 = math.exp %236 : vector<8x8xf32>
    %cst_98 = arith.constant dense<0.000000e+00> : vector<8xf32>
    %238 = vector.multi_reduction <add>, %237, %cst_98 [1] : vector<8x8xf32> to vector<8xf32>
    %239 = vector.shape_cast %238 : vector<8xf32> to vector<8x1xf32>
    %240 = tpu.reciprocal %239 {approx = true} : vector<8x1xf32> -> vector<8x1xf32>
    %241 = vector.broadcast %240 : vector<8x1xf32> to vector<8x8xf32>
    %242 = arith.mulf %237, %241 : vector<8x8xf32>
    %cst_99 = arith.constant dense<0.000000e+00> : vector<8x8xf32>
    %243 = tpu.matmul %242, %229, %cst_99 {dimension_numbers = #tpu.dot_dimension_numbers<[1], [0], [0], [1], [0, 0, 1, 1], [], []>} : vector<8x8xf32>, vector<8x8xf32>, vector<8x8xf32> -> vector<8x8xf32>
    %244 = vector.extract_strided_slice %205 {offsets = [8, 0], sizes = [8, 32], strides = [1, 1]} : vector<32x32xf32> to vector<8x32xf32>
    %cst_100 = arith.constant dense<0.000000e+00> : vector<8x32xf32>
    %245 = tpu.matmul %243, %244, %cst_100 {dimension_numbers = #tpu.dot_dimension_numbers<[1], [0], [0], [1], [0, 0, 1, 1], [], []>} : vector<8x8xf32>, vector<8x32xf32>, vector<8x32xf32> -> vector<8x32xf32>
    %246 = arith.addf %226, %245 : vector<8x32xf32>
    %247 = vector.extract_strided_slice %201 {offsets = [0, 16], sizes = [8, 8], strides = [1, 1]} : vector<8x32xf32> to vector<8x8xf32>
    %248 = vector.extract_strided_slice %202 {offsets = [0, 16], sizes = [8, 8], strides = [1, 1]} : vector<8x32xf32> to vector<8x8xf32>
    %249 = vector.extract_strided_slice %203 {offsets = [0, 16], sizes = [8, 8], strides = [1, 1]} : vector<8x32xf32> to vector<8x8xf32>
    %cst_101 = arith.constant dense<0.000000e+00> : vector<8x8xf32>
    %250 = tpu.matmul %247, %248, %cst_101 {dimension_numbers = #tpu.dot_dimension_numbers<[1], [1], [0], [0], [0, 0, 1, 0], [], []>} : vector<8x8xf32>, vector<8x8xf32>, vector<8x8xf32> -> vector<8x8xf32>
    %251 = vector.broadcast %5 : vector<1x8xf32> to vector<8x8xf32>
    %252 = arith.addf %250, %251 : vector<8x8xf32>
    %cst_102 = arith.constant dense<0xFF800000> : vector<8xf32>
    %253 = vector.multi_reduction <maximumf>, %252, %cst_102 [1] : vector<8x8xf32> to vector<8xf32>
    %254 = vector.shape_cast %253 : vector<8xf32> to vector<8x1xf32>
    %255 = vector.broadcast %254 : vector<8x1xf32> to vector<8x8xf32>
    %256 = arith.subf %252, %255 : vector<8x8xf32>
    %257 = math.exp %256 : vector<8x8xf32>
    %cst_103 = arith.constant dense<0.000000e+00> : vector<8xf32>
    %258 = vector.multi_reduction <add>, %257, %cst_103 [1] : vector<8x8xf32> to vector<8xf32>
    %259 = vector.shape_cast %258 : vector<8xf32> to vector<8x1xf32>
    %260 = tpu.reciprocal %259 {approx = true} : vector<8x1xf32> -> vector<8x1xf32>
    %261 = vector.broadcast %260 : vector<8x1xf32> to vector<8x8xf32>
    %262 = arith.mulf %257, %261 : vector<8x8xf32>
    %cst_104 = arith.constant dense<0.000000e+00> : vector<8x8xf32>
    %263 = tpu.matmul %262, %249, %cst_104 {dimension_numbers = #tpu.dot_dimension_numbers<[1], [0], [0], [1], [0, 0, 1, 1], [], []>} : vector<8x8xf32>, vector<8x8xf32>, vector<8x8xf32> -> vector<8x8xf32>
    %264 = vector.extract_strided_slice %205 {offsets = [16, 0], sizes = [8, 32], strides = [1, 1]} : vector<32x32xf32> to vector<8x32xf32>
    %cst_105 = arith.constant dense<0.000000e+00> : vector<8x32xf32>
    %265 = tpu.matmul %263, %264, %cst_105 {dimension_numbers = #tpu.dot_dimension_numbers<[1], [0], [0], [1], [0, 0, 1, 1], [], []>} : vector<8x8xf32>, vector<8x32xf32>, vector<8x32xf32> -> vector<8x32xf32>
    %266 = arith.addf %246, %265 : vector<8x32xf32>
    %267 = vector.extract_strided_slice %201 {offsets = [0, 24], sizes = [8, 8], strides = [1, 1]} : vector<8x32xf32> to vector<8x8xf32>
    %268 = vector.extract_strided_slice %202 {offsets = [0, 24], sizes = [8, 8], strides = [1, 1]} : vector<8x32xf32> to vector<8x8xf32>
    %269 = vector.extract_strided_slice %203 {offsets = [0, 24], sizes = [8, 8], strides = [1, 1]} : vector<8x32xf32> to vector<8x8xf32>
    %cst_106 = arith.constant dense<0.000000e+00> : vector<8x8xf32>
    %270 = tpu.matmul %267, %268, %cst_106 {dimension_numbers = #tpu.dot_dimension_numbers<[1], [1], [0], [0], [0, 0, 1, 0], [], []>} : vector<8x8xf32>, vector<8x8xf32>, vector<8x8xf32> -> vector<8x8xf32>
    %271 = vector.broadcast %5 : vector<1x8xf32> to vector<8x8xf32>
    %272 = arith.addf %270, %271 : vector<8x8xf32>
    %cst_107 = arith.constant dense<0xFF800000> : vector<8xf32>
    %273 = vector.multi_reduction <maximumf>, %272, %cst_107 [1] : vector<8x8xf32> to vector<8xf32>
    %274 = vector.shape_cast %273 : vector<8xf32> to vector<8x1xf32>
    %275 = vector.broadcast %274 : vector<8x1xf32> to vector<8x8xf32>
    %276 = arith.subf %272, %275 : vector<8x8xf32>
    %277 = math.exp %276 : vector<8x8xf32>
    %cst_108 = arith.constant dense<0.000000e+00> : vector<8xf32>
    %278 = vector.multi_reduction <add>, %277, %cst_108 [1] : vector<8x8xf32> to vector<8xf32>
    %279 = vector.shape_cast %278 : vector<8xf32> to vector<8x1xf32>
    %280 = tpu.reciprocal %279 {approx = true} : vector<8x1xf32> -> vector<8x1xf32>
    %281 = vector.broadcast %280 : vector<8x1xf32> to vector<8x8xf32>
    %282 = arith.mulf %277, %281 : vector<8x8xf32>
    %cst_109 = arith.constant dense<0.000000e+00> : vector<8x8xf32>
    %283 = tpu.matmul %282, %269, %cst_109 {dimension_numbers = #tpu.dot_dimension_numbers<[1], [0], [0], [1], [0, 0, 1, 1], [], []>} : vector<8x8xf32>, vector<8x8xf32>, vector<8x8xf32> -> vector<8x8xf32>
    %284 = vector.extract_strided_slice %205 {offsets = [24, 0], sizes = [8, 32], strides = [1, 1]} : vector<32x32xf32> to vector<8x32xf32>
    %cst_110 = arith.constant dense<0.000000e+00> : vector<8x32xf32>
    %285 = tpu.matmul %283, %284, %cst_110 {dimension_numbers = #tpu.dot_dimension_numbers<[1], [0], [0], [1], [0, 0, 1, 1], [], []>} : vector<8x8xf32>, vector<8x32xf32>, vector<8x32xf32> -> vector<8x32xf32>
    %286 = arith.addf %266, %285 : vector<8x32xf32>
    %287 = vector.broadcast %207 : vector<1x32xf32> to vector<8x32xf32>
    %288 = arith.addf %286, %287 : vector<8x32xf32>
    %289 = arith.addf %168, %288 : vector<8x32xf32>
    %290 = vector.extract_strided_slice %170 {offsets = [2, 0], sizes = [1, 32], strides = [1, 1]} : vector<4x32xf32> to vector<1x32xf32>
    %291 = vector.extract_strided_slice %170 {offsets = [3, 0], sizes = [1, 32], strides = [1, 1]} : vector<4x32xf32> to vector<1x32xf32>
    %cst_111 = arith.constant dense<0.000000e+00> : vector<8xf32>
    %292 = vector.multi_reduction <add>, %289, %cst_111 [1] : vector<8x32xf32> to vector<8xf32>
    %293 = vector.shape_cast %292 : vector<8xf32> to vector<8x1xf32>
    %cst_112 = arith.constant 3.200000e+01 : f32
    %294 = vector.broadcast %cst_112 : f32 to vector<8x1xf32>
    %295 = arith.divf %293, %294 : vector<8x1xf32>
    %296 = vector.broadcast %295 : vector<8x1xf32> to vector<8x32xf32>
    %297 = arith.subf %289, %296 : vector<8x32xf32>
    %298 = arith.mulf %297, %297 : vector<8x32xf32>
    %cst_113 = arith.constant dense<0.000000e+00> : vector<8xf32>
    %299 = vector.multi_reduction <add>, %298, %cst_113 [1] : vector<8x32xf32> to vector<8xf32>
    %300 = vector.shape_cast %299 : vector<8xf32> to vector<8x1xf32>
    %cst_114 = arith.constant 0.0322580636 : f32
    %301 = vector.broadcast %cst_114 : f32 to vector<8x1xf32>
    %302 = arith.mulf %300, %301 : vector<8x1xf32>
    %303 = math.sqrt %302 : vector<8x1xf32>
    %cst_115 = arith.constant 9.99999997E-7 : f32
    %304 = vector.broadcast %cst_115 : f32 to vector<8x1xf32>
    %305 = arith.addf %303, %304 : vector<8x1xf32>
    %306 = tpu.reciprocal %305 {approx = true} : vector<8x1xf32> -> vector<8x1xf32>
    %307 = vector.broadcast %290 : vector<1x32xf32> to vector<8x32xf32>
    %308 = arith.mulf %307, %297 : vector<8x32xf32>
    %309 = vector.broadcast %306 : vector<8x1xf32> to vector<8x32xf32>
    %310 = arith.mulf %308, %309 : vector<8x32xf32>
    %311 = vector.broadcast %291 : vector<1x32xf32> to vector<8x32xf32>
    %312 = arith.addf %310, %311 : vector<8x32xf32>
    %c1_116 = arith.constant 1 : index
    %c0_117 = arith.constant 0 : index
    %c0_118 = arith.constant 0 : index
    %313 = vector.load %arg9[%c1_116, %c0_117, %c0_118] : memref<2x32x64xf32, #tpu.memory_space<vmem>>, vector<1x32x64xf32>
    %314 = vector.shape_cast %313 : vector<1x32x64xf32> to vector<32x64xf32>
    %cst_119 = arith.constant dense<0.000000e+00> : vector<8x64xf32>
    %315 = tpu.matmul %312, %314, %cst_119 {dimension_numbers = #tpu.dot_dimension_numbers<[1], [0], [0], [1], [0, 0, 1, 1], [], []>} : vector<8x32xf32>, vector<32x64xf32>, vector<8x64xf32> -> vector<8x64xf32>
    %c1_120 = arith.constant 1 : index
    %c0_121 = arith.constant 0 : index
    %c0_122 = arith.constant 0 : index
    %316 = vector.load %arg10[%c1_120, %c0_121, %c0_122] : memref<2x1x64xf32, #tpu.memory_space<vmem>>, vector<1x1x64xf32>
    %317 = vector.shape_cast %316 : vector<1x1x64xf32> to vector<1x64xf32>
    %318 = vector.broadcast %317 : vector<1x64xf32> to vector<8x64xf32>
    %319 = arith.addf %315, %318 : vector<8x64xf32>
    %cst_123 = arith.constant 0.000000e+00 : f32
    %320 = vector.broadcast %cst_123 : f32 to vector<8x64xf32>
    %321 = arith.maximumf %319, %320 : vector<8x64xf32>
    %c1_124 = arith.constant 1 : index
    %c0_125 = arith.constant 0 : index
    %c0_126 = arith.constant 0 : index
    %322 = vector.load %arg11[%c1_124, %c0_125, %c0_126] : memref<2x64x32xf32, #tpu.memory_space<vmem>>, vector<1x64x32xf32>
    %323 = vector.shape_cast %322 : vector<1x64x32xf32> to vector<64x32xf32>
    %cst_127 = arith.constant dense<0.000000e+00> : vector<8x32xf32>
    %324 = tpu.matmul %321, %323, %cst_127 {dimension_numbers = #tpu.dot_dimension_numbers<[1], [0], [0], [1], [0, 0, 1, 1], [], []>} : vector<8x64xf32>, vector<64x32xf32>, vector<8x32xf32> -> vector<8x32xf32>
    %325 = arith.addf %289, %324 : vector<8x32xf32>
    %c1_128 = arith.constant 1 : index
    %c0_129 = arith.constant 0 : index
    %c0_130 = arith.constant 0 : index
    %326 = vector.load %arg12[%c1_128, %c0_129, %c0_130] : memref<2x1x32xf32, #tpu.memory_space<vmem>>, vector<1x1x32xf32>
    %327 = vector.shape_cast %326 : vector<1x1x32xf32> to vector<1x32xf32>
    %328 = vector.broadcast %327 : vector<1x32xf32> to vector<8x32xf32>
    %329 = arith.addf %325, %328 : vector<8x32xf32>
    %c0_131 = arith.constant 0 : index
    %c0_132 = arith.constant 0 : index
    %330 = vector.load %arg14[%c0_131, %c0_132] : memref<2x32xf32, #tpu.memory_space<vmem>>, vector<2x32xf32>
    %331 = vector.extract_strided_slice %330 {offsets = [0, 0], sizes = [1, 32], strides = [1, 1]} : vector<2x32xf32> to vector<1x32xf32>
    %332 = vector.extract_strided_slice %330 {offsets = [1, 0], sizes = [1, 32], strides = [1, 1]} : vector<2x32xf32> to vector<1x32xf32>
    %cst_133 = arith.constant dense<0.000000e+00> : vector<8xf32>
    %333 = vector.multi_reduction <add>, %329, %cst_133 [1] : vector<8x32xf32> to vector<8xf32>
    %334 = vector.shape_cast %333 : vector<8xf32> to vector<8x1xf32>
    %cst_134 = arith.constant 3.200000e+01 : f32
    %335 = vector.broadcast %cst_134 : f32 to vector<8x1xf32>
    %336 = arith.divf %334, %335 : vector<8x1xf32>
    %337 = vector.broadcast %336 : vector<8x1xf32> to vector<8x32xf32>
    %338 = arith.subf %329, %337 : vector<8x32xf32>
    %339 = arith.mulf %338, %338 : vector<8x32xf32>
    %cst_135 = arith.constant dense<0.000000e+00> : vector<8xf32>
    %340 = vector.multi_reduction <add>, %339, %cst_135 [1] : vector<8x32xf32> to vector<8xf32>
    %341 = vector.shape_cast %340 : vector<8xf32> to vector<8x1xf32>
    %cst_136 = arith.constant 0.0322580636 : f32
    %342 = vector.broadcast %cst_136 : f32 to vector<8x1xf32>
    %343 = arith.mulf %341, %342 : vector<8x1xf32>
    %344 = math.sqrt %343 : vector<8x1xf32>
    %cst_137 = arith.constant 9.99999997E-7 : f32
    %345 = vector.broadcast %cst_137 : f32 to vector<8x1xf32>
    %346 = arith.addf %344, %345 : vector<8x1xf32>
    %347 = tpu.reciprocal %346 {approx = true} : vector<8x1xf32> -> vector<8x1xf32>
    %348 = vector.broadcast %331 : vector<1x32xf32> to vector<8x32xf32>
    %349 = arith.mulf %348, %338 : vector<8x32xf32>
    %350 = vector.broadcast %347 : vector<8x1xf32> to vector<8x32xf32>
    %351 = arith.mulf %349, %350 : vector<8x32xf32>
    %352 = vector.broadcast %332 : vector<1x32xf32> to vector<8x32xf32>
    %353 = arith.addf %351, %352 : vector<8x32xf32>
    %c0_138 = arith.constant 0 : index
    %c0_139 = arith.constant 0 : index
    %c0_140 = arith.constant 0 : index
    %354 = vector.load %arg29[%c0_138, %c0_139, %c0_140] : memref<2x6x32xf32, #tpu.memory_space<vmem>>, vector<1x6x32xf32>
    %355 = vector.shape_cast %354 : vector<1x6x32xf32> to vector<6x32xf32>
    %356 = vector.extract_strided_slice %355 {offsets = [0, 0], sizes = [1, 32], strides = [1, 1]} : vector<6x32xf32> to vector<1x32xf32>
    %357 = vector.extract_strided_slice %355 {offsets = [1, 0], sizes = [1, 32], strides = [1, 1]} : vector<6x32xf32> to vector<1x32xf32>
    %cst_141 = arith.constant dense<0.000000e+00> : vector<8xf32>
    %358 = vector.multi_reduction <add>, %3, %cst_141 [1] : vector<8x32xf32> to vector<8xf32>
    %359 = vector.shape_cast %358 : vector<8xf32> to vector<8x1xf32>
    %cst_142 = arith.constant 3.200000e+01 : f32
    %360 = vector.broadcast %cst_142 : f32 to vector<8x1xf32>
    %361 = arith.divf %359, %360 : vector<8x1xf32>
    %362 = vector.broadcast %361 : vector<8x1xf32> to vector<8x32xf32>
    %363 = arith.subf %3, %362 : vector<8x32xf32>
    %364 = arith.mulf %363, %363 : vector<8x32xf32>
    %cst_143 = arith.constant dense<0.000000e+00> : vector<8xf32>
    %365 = vector.multi_reduction <add>, %364, %cst_143 [1] : vector<8x32xf32> to vector<8xf32>
    %366 = vector.shape_cast %365 : vector<8xf32> to vector<8x1xf32>
    %cst_144 = arith.constant 0.0322580636 : f32
    %367 = vector.broadcast %cst_144 : f32 to vector<8x1xf32>
    %368 = arith.mulf %366, %367 : vector<8x1xf32>
    %369 = math.sqrt %368 : vector<8x1xf32>
    %cst_145 = arith.constant 9.99999997E-7 : f32
    %370 = vector.broadcast %cst_145 : f32 to vector<8x1xf32>
    %371 = arith.addf %369, %370 : vector<8x1xf32>
    %372 = tpu.reciprocal %371 {approx = true} : vector<8x1xf32> -> vector<8x1xf32>
    %373 = vector.broadcast %356 : vector<1x32xf32> to vector<8x32xf32>
    %374 = arith.mulf %373, %363 : vector<8x32xf32>
    %375 = vector.broadcast %372 : vector<8x1xf32> to vector<8x32xf32>
    %376 = arith.mulf %374, %375 : vector<8x32xf32>
    %377 = vector.broadcast %357 : vector<1x32xf32> to vector<8x32xf32>
    %378 = arith.addf %376, %377 : vector<8x32xf32>
    %c0_146 = arith.constant 0 : index
    %c0_147 = arith.constant 0 : index
    %c0_148 = arith.constant 0 : index
    %379 = vector.load %arg15[%c0_146, %c0_147, %c0_148] : memref<2x32x96xf32, #tpu.memory_space<vmem>>, vector<1x32x96xf32>
    %380 = vector.shape_cast %379 : vector<1x32x96xf32> to vector<32x96xf32>
    %cst_149 = arith.constant dense<0.000000e+00> : vector<8x96xf32>
    %381 = tpu.matmul %378, %380, %cst_149 {dimension_numbers = #tpu.dot_dimension_numbers<[1], [0], [0], [1], [0, 0, 1, 1], [], []>} : vector<8x32xf32>, vector<32x96xf32>, vector<8x96xf32> -> vector<8x96xf32>
    %c0_150 = arith.constant 0 : index
    %c0_151 = arith.constant 0 : index
    %c0_152 = arith.constant 0 : index
    %382 = vector.load %arg16[%c0_150, %c0_151, %c0_152] : memref<2x1x96xf32, #tpu.memory_space<vmem>>, vector<1x1x96xf32>
    %383 = vector.shape_cast %382 : vector<1x1x96xf32> to vector<1x96xf32>
    %384 = vector.broadcast %383 : vector<1x96xf32> to vector<8x96xf32>
    %385 = arith.addf %381, %384 : vector<8x96xf32>
    %386 = vector.extract_strided_slice %385 {offsets = [0, 0], sizes = [8, 32], strides = [1, 1]} : vector<8x96xf32> to vector<8x32xf32>
    %387 = vector.extract_strided_slice %385 {offsets = [0, 32], sizes = [8, 32], strides = [1, 1]} : vector<8x96xf32> to vector<8x32xf32>
    %388 = vector.extract_strided_slice %385 {offsets = [0, 64], sizes = [8, 32], strides = [1, 1]} : vector<8x96xf32> to vector<8x32xf32>
    %c0_153 = arith.constant 0 : index
    %c0_154 = arith.constant 0 : index
    %c0_155 = arith.constant 0 : index
    %389 = vector.load %arg17[%c0_153, %c0_154, %c0_155] : memref<2x32x32xf32, #tpu.memory_space<vmem>>, vector<1x32x32xf32>
    %390 = vector.shape_cast %389 : vector<1x32x32xf32> to vector<32x32xf32>
    %c0_156 = arith.constant 0 : index
    %c0_157 = arith.constant 0 : index
    %c0_158 = arith.constant 0 : index
    %391 = vector.load %arg18[%c0_156, %c0_157, %c0_158] : memref<2x1x32xf32, #tpu.memory_space<vmem>>, vector<1x1x32xf32>
    %392 = vector.shape_cast %391 : vector<1x1x32xf32> to vector<1x32xf32>
    %393 = vector.extract_strided_slice %386 {offsets = [0, 0], sizes = [8, 8], strides = [1, 1]} : vector<8x32xf32> to vector<8x8xf32>
    %394 = vector.extract_strided_slice %387 {offsets = [0, 0], sizes = [8, 8], strides = [1, 1]} : vector<8x32xf32> to vector<8x8xf32>
    %395 = vector.extract_strided_slice %388 {offsets = [0, 0], sizes = [8, 8], strides = [1, 1]} : vector<8x32xf32> to vector<8x8xf32>
    %cst_159 = arith.constant dense<0.000000e+00> : vector<8x8xf32>
    %396 = tpu.matmul %393, %394, %cst_159 {dimension_numbers = #tpu.dot_dimension_numbers<[1], [1], [0], [0], [0, 0, 1, 0], [], []>} : vector<8x8xf32>, vector<8x8xf32>, vector<8x8xf32> -> vector<8x8xf32>
    %397 = arith.addf %396, %7 : vector<8x8xf32>
    %cst_160 = arith.constant dense<0xFF800000> : vector<8xf32>
    %398 = vector.multi_reduction <maximumf>, %397, %cst_160 [1] : vector<8x8xf32> to vector<8xf32>
    %399 = vector.shape_cast %398 : vector<8xf32> to vector<8x1xf32>
    %400 = vector.broadcast %399 : vector<8x1xf32> to vector<8x8xf32>
    %401 = arith.subf %397, %400 : vector<8x8xf32>
    %402 = math.exp %401 : vector<8x8xf32>
    %cst_161 = arith.constant dense<0.000000e+00> : vector<8xf32>
    %403 = vector.multi_reduction <add>, %402, %cst_161 [1] : vector<8x8xf32> to vector<8xf32>
    %404 = vector.shape_cast %403 : vector<8xf32> to vector<8x1xf32>
    %405 = tpu.reciprocal %404 {approx = true} : vector<8x1xf32> -> vector<8x1xf32>
    %406 = vector.broadcast %405 : vector<8x1xf32> to vector<8x8xf32>
    %407 = arith.mulf %402, %406 : vector<8x8xf32>
    %cst_162 = arith.constant dense<0.000000e+00> : vector<8x8xf32>
    %408 = tpu.matmul %407, %395, %cst_162 {dimension_numbers = #tpu.dot_dimension_numbers<[1], [0], [0], [1], [0, 0, 1, 1], [], []>} : vector<8x8xf32>, vector<8x8xf32>, vector<8x8xf32> -> vector<8x8xf32>
    %409 = vector.extract_strided_slice %390 {offsets = [0, 0], sizes = [8, 32], strides = [1, 1]} : vector<32x32xf32> to vector<8x32xf32>
    %cst_163 = arith.constant dense<0.000000e+00> : vector<8x32xf32>
    %410 = tpu.matmul %408, %409, %cst_163 {dimension_numbers = #tpu.dot_dimension_numbers<[1], [0], [0], [1], [0, 0, 1, 1], [], []>} : vector<8x8xf32>, vector<8x32xf32>, vector<8x32xf32> -> vector<8x32xf32>
    %411 = vector.extract_strided_slice %386 {offsets = [0, 8], sizes = [8, 8], strides = [1, 1]} : vector<8x32xf32> to vector<8x8xf32>
    %412 = vector.extract_strided_slice %387 {offsets = [0, 8], sizes = [8, 8], strides = [1, 1]} : vector<8x32xf32> to vector<8x8xf32>
    %413 = vector.extract_strided_slice %388 {offsets = [0, 8], sizes = [8, 8], strides = [1, 1]} : vector<8x32xf32> to vector<8x8xf32>
    %cst_164 = arith.constant dense<0.000000e+00> : vector<8x8xf32>
    %414 = tpu.matmul %411, %412, %cst_164 {dimension_numbers = #tpu.dot_dimension_numbers<[1], [1], [0], [0], [0, 0, 1, 0], [], []>} : vector<8x8xf32>, vector<8x8xf32>, vector<8x8xf32> -> vector<8x8xf32>
    %415 = arith.addf %414, %7 : vector<8x8xf32>
    %cst_165 = arith.constant dense<0xFF800000> : vector<8xf32>
    %416 = vector.multi_reduction <maximumf>, %415, %cst_165 [1] : vector<8x8xf32> to vector<8xf32>
    %417 = vector.shape_cast %416 : vector<8xf32> to vector<8x1xf32>
    %418 = vector.broadcast %417 : vector<8x1xf32> to vector<8x8xf32>
    %419 = arith.subf %415, %418 : vector<8x8xf32>
    %420 = math.exp %419 : vector<8x8xf32>
    %cst_166 = arith.constant dense<0.000000e+00> : vector<8xf32>
    %421 = vector.multi_reduction <add>, %420, %cst_166 [1] : vector<8x8xf32> to vector<8xf32>
    %422 = vector.shape_cast %421 : vector<8xf32> to vector<8x1xf32>
    %423 = tpu.reciprocal %422 {approx = true} : vector<8x1xf32> -> vector<8x1xf32>
    %424 = vector.broadcast %423 : vector<8x1xf32> to vector<8x8xf32>
    %425 = arith.mulf %420, %424 : vector<8x8xf32>
    %cst_167 = arith.constant dense<0.000000e+00> : vector<8x8xf32>
    %426 = tpu.matmul %425, %413, %cst_167 {dimension_numbers = #tpu.dot_dimension_numbers<[1], [0], [0], [1], [0, 0, 1, 1], [], []>} : vector<8x8xf32>, vector<8x8xf32>, vector<8x8xf32> -> vector<8x8xf32>
    %427 = vector.extract_strided_slice %390 {offsets = [8, 0], sizes = [8, 32], strides = [1, 1]} : vector<32x32xf32> to vector<8x32xf32>
    %cst_168 = arith.constant dense<0.000000e+00> : vector<8x32xf32>
    %428 = tpu.matmul %426, %427, %cst_168 {dimension_numbers = #tpu.dot_dimension_numbers<[1], [0], [0], [1], [0, 0, 1, 1], [], []>} : vector<8x8xf32>, vector<8x32xf32>, vector<8x32xf32> -> vector<8x32xf32>
    %429 = arith.addf %410, %428 : vector<8x32xf32>
    %430 = vector.extract_strided_slice %386 {offsets = [0, 16], sizes = [8, 8], strides = [1, 1]} : vector<8x32xf32> to vector<8x8xf32>
    %431 = vector.extract_strided_slice %387 {offsets = [0, 16], sizes = [8, 8], strides = [1, 1]} : vector<8x32xf32> to vector<8x8xf32>
    %432 = vector.extract_strided_slice %388 {offsets = [0, 16], sizes = [8, 8], strides = [1, 1]} : vector<8x32xf32> to vector<8x8xf32>
    %cst_169 = arith.constant dense<0.000000e+00> : vector<8x8xf32>
    %433 = tpu.matmul %430, %431, %cst_169 {dimension_numbers = #tpu.dot_dimension_numbers<[1], [1], [0], [0], [0, 0, 1, 0], [], []>} : vector<8x8xf32>, vector<8x8xf32>, vector<8x8xf32> -> vector<8x8xf32>
    %434 = arith.addf %433, %7 : vector<8x8xf32>
    %cst_170 = arith.constant dense<0xFF800000> : vector<8xf32>
    %435 = vector.multi_reduction <maximumf>, %434, %cst_170 [1] : vector<8x8xf32> to vector<8xf32>
    %436 = vector.shape_cast %435 : vector<8xf32> to vector<8x1xf32>
    %437 = vector.broadcast %436 : vector<8x1xf32> to vector<8x8xf32>
    %438 = arith.subf %434, %437 : vector<8x8xf32>
    %439 = math.exp %438 : vector<8x8xf32>
    %cst_171 = arith.constant dense<0.000000e+00> : vector<8xf32>
    %440 = vector.multi_reduction <add>, %439, %cst_171 [1] : vector<8x8xf32> to vector<8xf32>
    %441 = vector.shape_cast %440 : vector<8xf32> to vector<8x1xf32>
    %442 = tpu.reciprocal %441 {approx = true} : vector<8x1xf32> -> vector<8x1xf32>
    %443 = vector.broadcast %442 : vector<8x1xf32> to vector<8x8xf32>
    %444 = arith.mulf %439, %443 : vector<8x8xf32>
    %cst_172 = arith.constant dense<0.000000e+00> : vector<8x8xf32>
    %445 = tpu.matmul %444, %432, %cst_172 {dimension_numbers = #tpu.dot_dimension_numbers<[1], [0], [0], [1], [0, 0, 1, 1], [], []>} : vector<8x8xf32>, vector<8x8xf32>, vector<8x8xf32> -> vector<8x8xf32>
    %446 = vector.extract_strided_slice %390 {offsets = [16, 0], sizes = [8, 32], strides = [1, 1]} : vector<32x32xf32> to vector<8x32xf32>
    %cst_173 = arith.constant dense<0.000000e+00> : vector<8x32xf32>
    %447 = tpu.matmul %445, %446, %cst_173 {dimension_numbers = #tpu.dot_dimension_numbers<[1], [0], [0], [1], [0, 0, 1, 1], [], []>} : vector<8x8xf32>, vector<8x32xf32>, vector<8x32xf32> -> vector<8x32xf32>
    %448 = arith.addf %429, %447 : vector<8x32xf32>
    %449 = vector.extract_strided_slice %386 {offsets = [0, 24], sizes = [8, 8], strides = [1, 1]} : vector<8x32xf32> to vector<8x8xf32>
    %450 = vector.extract_strided_slice %387 {offsets = [0, 24], sizes = [8, 8], strides = [1, 1]} : vector<8x32xf32> to vector<8x8xf32>
    %451 = vector.extract_strided_slice %388 {offsets = [0, 24], sizes = [8, 8], strides = [1, 1]} : vector<8x32xf32> to vector<8x8xf32>
    %cst_174 = arith.constant dense<0.000000e+00> : vector<8x8xf32>
    %452 = tpu.matmul %449, %450, %cst_174 {dimension_numbers = #tpu.dot_dimension_numbers<[1], [1], [0], [0], [0, 0, 1, 0], [], []>} : vector<8x8xf32>, vector<8x8xf32>, vector<8x8xf32> -> vector<8x8xf32>
    %453 = arith.addf %452, %7 : vector<8x8xf32>
    %cst_175 = arith.constant dense<0xFF800000> : vector<8xf32>
    %454 = vector.multi_reduction <maximumf>, %453, %cst_175 [1] : vector<8x8xf32> to vector<8xf32>
    %455 = vector.shape_cast %454 : vector<8xf32> to vector<8x1xf32>
    %456 = vector.broadcast %455 : vector<8x1xf32> to vector<8x8xf32>
    %457 = arith.subf %453, %456 : vector<8x8xf32>
    %458 = math.exp %457 : vector<8x8xf32>
    %cst_176 = arith.constant dense<0.000000e+00> : vector<8xf32>
    %459 = vector.multi_reduction <add>, %458, %cst_176 [1] : vector<8x8xf32> to vector<8xf32>
    %460 = vector.shape_cast %459 : vector<8xf32> to vector<8x1xf32>
    %461 = tpu.reciprocal %460 {approx = true} : vector<8x1xf32> -> vector<8x1xf32>
    %462 = vector.broadcast %461 : vector<8x1xf32> to vector<8x8xf32>
    %463 = arith.mulf %458, %462 : vector<8x8xf32>
    %cst_177 = arith.constant dense<0.000000e+00> : vector<8x8xf32>
    %464 = tpu.matmul %463, %451, %cst_177 {dimension_numbers = #tpu.dot_dimension_numbers<[1], [0], [0], [1], [0, 0, 1, 1], [], []>} : vector<8x8xf32>, vector<8x8xf32>, vector<8x8xf32> -> vector<8x8xf32>
    %465 = vector.extract_strided_slice %390 {offsets = [24, 0], sizes = [8, 32], strides = [1, 1]} : vector<32x32xf32> to vector<8x32xf32>
    %cst_178 = arith.constant dense<0.000000e+00> : vector<8x32xf32>
    %466 = tpu.matmul %464, %465, %cst_178 {dimension_numbers = #tpu.dot_dimension_numbers<[1], [0], [0], [1], [0, 0, 1, 1], [], []>} : vector<8x8xf32>, vector<8x32xf32>, vector<8x32xf32> -> vector<8x32xf32>
    %467 = arith.addf %448, %466 : vector<8x32xf32>
    %468 = vector.broadcast %392 : vector<1x32xf32> to vector<8x32xf32>
    %469 = arith.addf %467, %468 : vector<8x32xf32>
    %470 = arith.addf %3, %469 : vector<8x32xf32>
    %471 = vector.extract_strided_slice %355 {offsets = [2, 0], sizes = [1, 32], strides = [1, 1]} : vector<6x32xf32> to vector<1x32xf32>
    %472 = vector.extract_strided_slice %355 {offsets = [3, 0], sizes = [1, 32], strides = [1, 1]} : vector<6x32xf32> to vector<1x32xf32>
    %cst_179 = arith.constant dense<0.000000e+00> : vector<8xf32>
    %473 = vector.multi_reduction <add>, %470, %cst_179 [1] : vector<8x32xf32> to vector<8xf32>
    %474 = vector.shape_cast %473 : vector<8xf32> to vector<8x1xf32>
    %cst_180 = arith.constant 3.200000e+01 : f32
    %475 = vector.broadcast %cst_180 : f32 to vector<8x1xf32>
    %476 = arith.divf %474, %475 : vector<8x1xf32>
    %477 = vector.broadcast %476 : vector<8x1xf32> to vector<8x32xf32>
    %478 = arith.subf %470, %477 : vector<8x32xf32>
    %479 = arith.mulf %478, %478 : vector<8x32xf32>
    %cst_181 = arith.constant dense<0.000000e+00> : vector<8xf32>
    %480 = vector.multi_reduction <add>, %479, %cst_181 [1] : vector<8x32xf32> to vector<8xf32>
    %481 = vector.shape_cast %480 : vector<8xf32> to vector<8x1xf32>
    %cst_182 = arith.constant 0.0322580636 : f32
    %482 = vector.broadcast %cst_182 : f32 to vector<8x1xf32>
    %483 = arith.mulf %481, %482 : vector<8x1xf32>
    %484 = math.sqrt %483 : vector<8x1xf32>
    %cst_183 = arith.constant 9.99999997E-7 : f32
    %485 = vector.broadcast %cst_183 : f32 to vector<8x1xf32>
    %486 = arith.addf %484, %485 : vector<8x1xf32>
    %487 = tpu.reciprocal %486 {approx = true} : vector<8x1xf32> -> vector<8x1xf32>
    %488 = vector.broadcast %471 : vector<1x32xf32> to vector<8x32xf32>
    %489 = arith.mulf %488, %478 : vector<8x32xf32>
    %490 = vector.broadcast %487 : vector<8x1xf32> to vector<8x32xf32>
    %491 = arith.mulf %489, %490 : vector<8x32xf32>
    %492 = vector.broadcast %472 : vector<1x32xf32> to vector<8x32xf32>
    %493 = arith.addf %491, %492 : vector<8x32xf32>
    %c0_184 = arith.constant 0 : index
    %c0_185 = arith.constant 0 : index
    %c0_186 = arith.constant 0 : index
    %494 = vector.load %arg19[%c0_184, %c0_185, %c0_186] : memref<2x32x32xf32, #tpu.memory_space<vmem>>, vector<1x32x32xf32>
    %495 = vector.shape_cast %494 : vector<1x32x32xf32> to vector<32x32xf32>
    %cst_187 = arith.constant dense<0.000000e+00> : vector<8x32xf32>
    %496 = tpu.matmul %493, %495, %cst_187 {dimension_numbers = #tpu.dot_dimension_numbers<[1], [0], [0], [1], [0, 0, 1, 1], [], []>} : vector<8x32xf32>, vector<32x32xf32>, vector<8x32xf32> -> vector<8x32xf32>
    %c0_188 = arith.constant 0 : index
    %c0_189 = arith.constant 0 : index
    %c0_190 = arith.constant 0 : index
    %497 = vector.load %arg20[%c0_188, %c0_189, %c0_190] : memref<2x1x32xf32, #tpu.memory_space<vmem>>, vector<1x1x32xf32>
    %498 = vector.shape_cast %497 : vector<1x1x32xf32> to vector<1x32xf32>
    %499 = vector.broadcast %498 : vector<1x32xf32> to vector<8x32xf32>
    %500 = arith.addf %496, %499 : vector<8x32xf32>
    %c0_191 = arith.constant 0 : index
    %c0_192 = arith.constant 0 : index
    %c0_193 = arith.constant 0 : index
    %501 = vector.load %arg21[%c0_191, %c0_192, %c0_193] : memref<2x32x64xf32, #tpu.memory_space<vmem>>, vector<1x32x64xf32>
    %502 = vector.shape_cast %501 : vector<1x32x64xf32> to vector<32x64xf32>
    %cst_194 = arith.constant dense<0.000000e+00> : vector<8x64xf32>
    %503 = tpu.matmul %353, %502, %cst_194 {dimension_numbers = #tpu.dot_dimension_numbers<[1], [0], [0], [1], [0, 0, 1, 1], [], []>} : vector<8x32xf32>, vector<32x64xf32>, vector<8x64xf32> -> vector<8x64xf32>
    %c0_195 = arith.constant 0 : index
    %c0_196 = arith.constant 0 : index
    %c0_197 = arith.constant 0 : index
    %504 = vector.load %arg22[%c0_195, %c0_196, %c0_197] : memref<2x1x64xf32, #tpu.memory_space<vmem>>, vector<1x1x64xf32>
    %505 = vector.shape_cast %504 : vector<1x1x64xf32> to vector<1x64xf32>
    %506 = vector.broadcast %505 : vector<1x64xf32> to vector<8x64xf32>
    %507 = arith.addf %503, %506 : vector<8x64xf32>
    %508 = vector.extract_strided_slice %507 {offsets = [0, 0], sizes = [8, 32], strides = [1, 1]} : vector<8x64xf32> to vector<8x32xf32>
    %509 = vector.extract_strided_slice %507 {offsets = [0, 32], sizes = [8, 32], strides = [1, 1]} : vector<8x64xf32> to vector<8x32xf32>
    %c0_198 = arith.constant 0 : index
    %c0_199 = arith.constant 0 : index
    %c0_200 = arith.constant 0 : index
    %510 = vector.load %arg23[%c0_198, %c0_199, %c0_200] : memref<2x32x32xf32, #tpu.memory_space<vmem>>, vector<1x32x32xf32>
    %511 = vector.shape_cast %510 : vector<1x32x32xf32> to vector<32x32xf32>
    %c0_201 = arith.constant 0 : index
    %c0_202 = arith.constant 0 : index
    %c0_203 = arith.constant 0 : index
    %512 = vector.load %arg24[%c0_201, %c0_202, %c0_203] : memref<2x1x32xf32, #tpu.memory_space<vmem>>, vector<1x1x32xf32>
    %513 = vector.shape_cast %512 : vector<1x1x32xf32> to vector<1x32xf32>
    %514 = vector.extract_strided_slice %500 {offsets = [0, 0], sizes = [8, 8], strides = [1, 1]} : vector<8x32xf32> to vector<8x8xf32>
    %515 = vector.extract_strided_slice %508 {offsets = [0, 0], sizes = [8, 8], strides = [1, 1]} : vector<8x32xf32> to vector<8x8xf32>
    %516 = vector.extract_strided_slice %509 {offsets = [0, 0], sizes = [8, 8], strides = [1, 1]} : vector<8x32xf32> to vector<8x8xf32>
    %cst_204 = arith.constant dense<0.000000e+00> : vector<8x8xf32>
    %517 = tpu.matmul %514, %515, %cst_204 {dimension_numbers = #tpu.dot_dimension_numbers<[1], [1], [0], [0], [0, 0, 1, 0], [], []>} : vector<8x8xf32>, vector<8x8xf32>, vector<8x8xf32> -> vector<8x8xf32>
    %518 = vector.broadcast %5 : vector<1x8xf32> to vector<8x8xf32>
    %519 = arith.addf %517, %518 : vector<8x8xf32>
    %cst_205 = arith.constant dense<0xFF800000> : vector<8xf32>
    %520 = vector.multi_reduction <maximumf>, %519, %cst_205 [1] : vector<8x8xf32> to vector<8xf32>
    %521 = vector.shape_cast %520 : vector<8xf32> to vector<8x1xf32>
    %522 = vector.broadcast %521 : vector<8x1xf32> to vector<8x8xf32>
    %523 = arith.subf %519, %522 : vector<8x8xf32>
    %524 = math.exp %523 : vector<8x8xf32>
    %cst_206 = arith.constant dense<0.000000e+00> : vector<8xf32>
    %525 = vector.multi_reduction <add>, %524, %cst_206 [1] : vector<8x8xf32> to vector<8xf32>
    %526 = vector.shape_cast %525 : vector<8xf32> to vector<8x1xf32>
    %527 = tpu.reciprocal %526 {approx = true} : vector<8x1xf32> -> vector<8x1xf32>
    %528 = vector.broadcast %527 : vector<8x1xf32> to vector<8x8xf32>
    %529 = arith.mulf %524, %528 : vector<8x8xf32>
    %cst_207 = arith.constant dense<0.000000e+00> : vector<8x8xf32>
    %530 = tpu.matmul %529, %516, %cst_207 {dimension_numbers = #tpu.dot_dimension_numbers<[1], [0], [0], [1], [0, 0, 1, 1], [], []>} : vector<8x8xf32>, vector<8x8xf32>, vector<8x8xf32> -> vector<8x8xf32>
    %531 = vector.extract_strided_slice %511 {offsets = [0, 0], sizes = [8, 32], strides = [1, 1]} : vector<32x32xf32> to vector<8x32xf32>
    %cst_208 = arith.constant dense<0.000000e+00> : vector<8x32xf32>
    %532 = tpu.matmul %530, %531, %cst_208 {dimension_numbers = #tpu.dot_dimension_numbers<[1], [0], [0], [1], [0, 0, 1, 1], [], []>} : vector<8x8xf32>, vector<8x32xf32>, vector<8x32xf32> -> vector<8x32xf32>
    %533 = vector.extract_strided_slice %500 {offsets = [0, 8], sizes = [8, 8], strides = [1, 1]} : vector<8x32xf32> to vector<8x8xf32>
    %534 = vector.extract_strided_slice %508 {offsets = [0, 8], sizes = [8, 8], strides = [1, 1]} : vector<8x32xf32> to vector<8x8xf32>
    %535 = vector.extract_strided_slice %509 {offsets = [0, 8], sizes = [8, 8], strides = [1, 1]} : vector<8x32xf32> to vector<8x8xf32>
    %cst_209 = arith.constant dense<0.000000e+00> : vector<8x8xf32>
    %536 = tpu.matmul %533, %534, %cst_209 {dimension_numbers = #tpu.dot_dimension_numbers<[1], [1], [0], [0], [0, 0, 1, 0], [], []>} : vector<8x8xf32>, vector<8x8xf32>, vector<8x8xf32> -> vector<8x8xf32>
    %537 = vector.broadcast %5 : vector<1x8xf32> to vector<8x8xf32>
    %538 = arith.addf %536, %537 : vector<8x8xf32>
    %cst_210 = arith.constant dense<0xFF800000> : vector<8xf32>
    %539 = vector.multi_reduction <maximumf>, %538, %cst_210 [1] : vector<8x8xf32> to vector<8xf32>
    %540 = vector.shape_cast %539 : vector<8xf32> to vector<8x1xf32>
    %541 = vector.broadcast %540 : vector<8x1xf32> to vector<8x8xf32>
    %542 = arith.subf %538, %541 : vector<8x8xf32>
    %543 = math.exp %542 : vector<8x8xf32>
    %cst_211 = arith.constant dense<0.000000e+00> : vector<8xf32>
    %544 = vector.multi_reduction <add>, %543, %cst_211 [1] : vector<8x8xf32> to vector<8xf32>
    %545 = vector.shape_cast %544 : vector<8xf32> to vector<8x1xf32>
    %546 = tpu.reciprocal %545 {approx = true} : vector<8x1xf32> -> vector<8x1xf32>
    %547 = vector.broadcast %546 : vector<8x1xf32> to vector<8x8xf32>
    %548 = arith.mulf %543, %547 : vector<8x8xf32>
    %cst_212 = arith.constant dense<0.000000e+00> : vector<8x8xf32>
    %549 = tpu.matmul %548, %535, %cst_212 {dimension_numbers = #tpu.dot_dimension_numbers<[1], [0], [0], [1], [0, 0, 1, 1], [], []>} : vector<8x8xf32>, vector<8x8xf32>, vector<8x8xf32> -> vector<8x8xf32>
    %550 = vector.extract_strided_slice %511 {offsets = [8, 0], sizes = [8, 32], strides = [1, 1]} : vector<32x32xf32> to vector<8x32xf32>
    %cst_213 = arith.constant dense<0.000000e+00> : vector<8x32xf32>
    %551 = tpu.matmul %549, %550, %cst_213 {dimension_numbers = #tpu.dot_dimension_numbers<[1], [0], [0], [1], [0, 0, 1, 1], [], []>} : vector<8x8xf32>, vector<8x32xf32>, vector<8x32xf32> -> vector<8x32xf32>
    %552 = arith.addf %532, %551 : vector<8x32xf32>
    %553 = vector.extract_strided_slice %500 {offsets = [0, 16], sizes = [8, 8], strides = [1, 1]} : vector<8x32xf32> to vector<8x8xf32>
    %554 = vector.extract_strided_slice %508 {offsets = [0, 16], sizes = [8, 8], strides = [1, 1]} : vector<8x32xf32> to vector<8x8xf32>
    %555 = vector.extract_strided_slice %509 {offsets = [0, 16], sizes = [8, 8], strides = [1, 1]} : vector<8x32xf32> to vector<8x8xf32>
    %cst_214 = arith.constant dense<0.000000e+00> : vector<8x8xf32>
    %556 = tpu.matmul %553, %554, %cst_214 {dimension_numbers = #tpu.dot_dimension_numbers<[1], [1], [0], [0], [0, 0, 1, 0], [], []>} : vector<8x8xf32>, vector<8x8xf32>, vector<8x8xf32> -> vector<8x8xf32>
    %557 = vector.broadcast %5 : vector<1x8xf32> to vector<8x8xf32>
    %558 = arith.addf %556, %557 : vector<8x8xf32>
    %cst_215 = arith.constant dense<0xFF800000> : vector<8xf32>
    %559 = vector.multi_reduction <maximumf>, %558, %cst_215 [1] : vector<8x8xf32> to vector<8xf32>
    %560 = vector.shape_cast %559 : vector<8xf32> to vector<8x1xf32>
    %561 = vector.broadcast %560 : vector<8x1xf32> to vector<8x8xf32>
    %562 = arith.subf %558, %561 : vector<8x8xf32>
    %563 = math.exp %562 : vector<8x8xf32>
    %cst_216 = arith.constant dense<0.000000e+00> : vector<8xf32>
    %564 = vector.multi_reduction <add>, %563, %cst_216 [1] : vector<8x8xf32> to vector<8xf32>
    %565 = vector.shape_cast %564 : vector<8xf32> to vector<8x1xf32>
    %566 = tpu.reciprocal %565 {approx = true} : vector<8x1xf32> -> vector<8x1xf32>
    %567 = vector.broadcast %566 : vector<8x1xf32> to vector<8x8xf32>
    %568 = arith.mulf %563, %567 : vector<8x8xf32>
    %cst_217 = arith.constant dense<0.000000e+00> : vector<8x8xf32>
    %569 = tpu.matmul %568, %555, %cst_217 {dimension_numbers = #tpu.dot_dimension_numbers<[1], [0], [0], [1], [0, 0, 1, 1], [], []>} : vector<8x8xf32>, vector<8x8xf32>, vector<8x8xf32> -> vector<8x8xf32>
    %570 = vector.extract_strided_slice %511 {offsets = [16, 0], sizes = [8, 32], strides = [1, 1]} : vector<32x32xf32> to vector<8x32xf32>
    %cst_218 = arith.constant dense<0.000000e+00> : vector<8x32xf32>
    %571 = tpu.matmul %569, %570, %cst_218 {dimension_numbers = #tpu.dot_dimension_numbers<[1], [0], [0], [1], [0, 0, 1, 1], [], []>} : vector<8x8xf32>, vector<8x32xf32>, vector<8x32xf32> -> vector<8x32xf32>
    %572 = arith.addf %552, %571 : vector<8x32xf32>
    %573 = vector.extract_strided_slice %500 {offsets = [0, 24], sizes = [8, 8], strides = [1, 1]} : vector<8x32xf32> to vector<8x8xf32>
    %574 = vector.extract_strided_slice %508 {offsets = [0, 24], sizes = [8, 8], strides = [1, 1]} : vector<8x32xf32> to vector<8x8xf32>
    %575 = vector.extract_strided_slice %509 {offsets = [0, 24], sizes = [8, 8], strides = [1, 1]} : vector<8x32xf32> to vector<8x8xf32>
    %cst_219 = arith.constant dense<0.000000e+00> : vector<8x8xf32>
    %576 = tpu.matmul %573, %574, %cst_219 {dimension_numbers = #tpu.dot_dimension_numbers<[1], [1], [0], [0], [0, 0, 1, 0], [], []>} : vector<8x8xf32>, vector<8x8xf32>, vector<8x8xf32> -> vector<8x8xf32>
    %577 = vector.broadcast %5 : vector<1x8xf32> to vector<8x8xf32>
    %578 = arith.addf %576, %577 : vector<8x8xf32>
    %cst_220 = arith.constant dense<0xFF800000> : vector<8xf32>
    %579 = vector.multi_reduction <maximumf>, %578, %cst_220 [1] : vector<8x8xf32> to vector<8xf32>
    %580 = vector.shape_cast %579 : vector<8xf32> to vector<8x1xf32>
    %581 = vector.broadcast %580 : vector<8x1xf32> to vector<8x8xf32>
    %582 = arith.subf %578, %581 : vector<8x8xf32>
    %583 = math.exp %582 : vector<8x8xf32>
    %cst_221 = arith.constant dense<0.000000e+00> : vector<8xf32>
    %584 = vector.multi_reduction <add>, %583, %cst_221 [1] : vector<8x8xf32> to vector<8xf32>
    %585 = vector.shape_cast %584 : vector<8xf32> to vector<8x1xf32>
    %586 = tpu.reciprocal %585 {approx = true} : vector<8x1xf32> -> vector<8x1xf32>
    %587 = vector.broadcast %586 : vector<8x1xf32> to vector<8x8xf32>
    %588 = arith.mulf %583, %587 : vector<8x8xf32>
    %cst_222 = arith.constant dense<0.000000e+00> : vector<8x8xf32>
    %589 = tpu.matmul %588, %575, %cst_222 {dimension_numbers = #tpu.dot_dimension_numbers<[1], [0], [0], [1], [0, 0, 1, 1], [], []>} : vector<8x8xf32>, vector<8x8xf32>, vector<8x8xf32> -> vector<8x8xf32>
    %590 = vector.extract_strided_slice %511 {offsets = [24, 0], sizes = [8, 32], strides = [1, 1]} : vector<32x32xf32> to vector<8x32xf32>
    %cst_223 = arith.constant dense<0.000000e+00> : vector<8x32xf32>
    %591 = tpu.matmul %589, %590, %cst_223 {dimension_numbers = #tpu.dot_dimension_numbers<[1], [0], [0], [1], [0, 0, 1, 1], [], []>} : vector<8x8xf32>, vector<8x32xf32>, vector<8x32xf32> -> vector<8x32xf32>
    %592 = arith.addf %572, %591 : vector<8x32xf32>
    %593 = vector.broadcast %513 : vector<1x32xf32> to vector<8x32xf32>
    %594 = arith.addf %592, %593 : vector<8x32xf32>
    %595 = arith.addf %470, %594 : vector<8x32xf32>
    %596 = vector.extract_strided_slice %355 {offsets = [4, 0], sizes = [1, 32], strides = [1, 1]} : vector<6x32xf32> to vector<1x32xf32>
    %597 = vector.extract_strided_slice %355 {offsets = [5, 0], sizes = [1, 32], strides = [1, 1]} : vector<6x32xf32> to vector<1x32xf32>
    %cst_224 = arith.constant dense<0.000000e+00> : vector<8xf32>
    %598 = vector.multi_reduction <add>, %595, %cst_224 [1] : vector<8x32xf32> to vector<8xf32>
    %599 = vector.shape_cast %598 : vector<8xf32> to vector<8x1xf32>
    %cst_225 = arith.constant 3.200000e+01 : f32
    %600 = vector.broadcast %cst_225 : f32 to vector<8x1xf32>
    %601 = arith.divf %599, %600 : vector<8x1xf32>
    %602 = vector.broadcast %601 : vector<8x1xf32> to vector<8x32xf32>
    %603 = arith.subf %595, %602 : vector<8x32xf32>
    %604 = arith.mulf %603, %603 : vector<8x32xf32>
    %cst_226 = arith.constant dense<0.000000e+00> : vector<8xf32>
    %605 = vector.multi_reduction <add>, %604, %cst_226 [1] : vector<8x32xf32> to vector<8xf32>
    %606 = vector.shape_cast %605 : vector<8xf32> to vector<8x1xf32>
    %cst_227 = arith.constant 0.0322580636 : f32
    %607 = vector.broadcast %cst_227 : f32 to vector<8x1xf32>
    %608 = arith.mulf %606, %607 : vector<8x1xf32>
    %609 = math.sqrt %608 : vector<8x1xf32>
    %cst_228 = arith.constant 9.99999997E-7 : f32
    %610 = vector.broadcast %cst_228 : f32 to vector<8x1xf32>
    %611 = arith.addf %609, %610 : vector<8x1xf32>
    %612 = tpu.reciprocal %611 {approx = true} : vector<8x1xf32> -> vector<8x1xf32>
    %613 = vector.broadcast %596 : vector<1x32xf32> to vector<8x32xf32>
    %614 = arith.mulf %613, %603 : vector<8x32xf32>
    %615 = vector.broadcast %612 : vector<8x1xf32> to vector<8x32xf32>
    %616 = arith.mulf %614, %615 : vector<8x32xf32>
    %617 = vector.broadcast %597 : vector<1x32xf32> to vector<8x32xf32>
    %618 = arith.addf %616, %617 : vector<8x32xf32>
    %c0_229 = arith.constant 0 : index
    %c0_230 = arith.constant 0 : index
    %c0_231 = arith.constant 0 : index
    %619 = vector.load %arg25[%c0_229, %c0_230, %c0_231] : memref<2x32x64xf32, #tpu.memory_space<vmem>>, vector<1x32x64xf32>
    %620 = vector.shape_cast %619 : vector<1x32x64xf32> to vector<32x64xf32>
    %cst_232 = arith.constant dense<0.000000e+00> : vector<8x64xf32>
    %621 = tpu.matmul %618, %620, %cst_232 {dimension_numbers = #tpu.dot_dimension_numbers<[1], [0], [0], [1], [0, 0, 1, 1], [], []>} : vector<8x32xf32>, vector<32x64xf32>, vector<8x64xf32> -> vector<8x64xf32>
    %c0_233 = arith.constant 0 : index
    %c0_234 = arith.constant 0 : index
    %c0_235 = arith.constant 0 : index
    %622 = vector.load %arg26[%c0_233, %c0_234, %c0_235] : memref<2x1x64xf32, #tpu.memory_space<vmem>>, vector<1x1x64xf32>
    %623 = vector.shape_cast %622 : vector<1x1x64xf32> to vector<1x64xf32>
    %624 = vector.broadcast %623 : vector<1x64xf32> to vector<8x64xf32>
    %625 = arith.addf %621, %624 : vector<8x64xf32>
    %cst_236 = arith.constant 0.000000e+00 : f32
    %626 = vector.broadcast %cst_236 : f32 to vector<8x64xf32>
    %627 = arith.maximumf %625, %626 : vector<8x64xf32>
    %c0_237 = arith.constant 0 : index
    %c0_238 = arith.constant 0 : index
    %c0_239 = arith.constant 0 : index
    %628 = vector.load %arg27[%c0_237, %c0_238, %c0_239] : memref<2x64x32xf32, #tpu.memory_space<vmem>>, vector<1x64x32xf32>
    %629 = vector.shape_cast %628 : vector<1x64x32xf32> to vector<64x32xf32>
    %cst_240 = arith.constant dense<0.000000e+00> : vector<8x32xf32>
    %630 = tpu.matmul %627, %629, %cst_240 {dimension_numbers = #tpu.dot_dimension_numbers<[1], [0], [0], [1], [0, 0, 1, 1], [], []>} : vector<8x64xf32>, vector<64x32xf32>, vector<8x32xf32> -> vector<8x32xf32>
    %631 = arith.addf %595, %630 : vector<8x32xf32>
    %c0_241 = arith.constant 0 : index
    %c0_242 = arith.constant 0 : index
    %c0_243 = arith.constant 0 : index
    %632 = vector.load %arg28[%c0_241, %c0_242, %c0_243] : memref<2x1x32xf32, #tpu.memory_space<vmem>>, vector<1x1x32xf32>
    %633 = vector.shape_cast %632 : vector<1x1x32xf32> to vector<1x32xf32>
    %634 = vector.broadcast %633 : vector<1x32xf32> to vector<8x32xf32>
    %635 = arith.addf %631, %634 : vector<8x32xf32>
    %c1_244 = arith.constant 1 : index
    %c0_245 = arith.constant 0 : index
    %c0_246 = arith.constant 0 : index
    %636 = vector.load %arg29[%c1_244, %c0_245, %c0_246] : memref<2x6x32xf32, #tpu.memory_space<vmem>>, vector<1x6x32xf32>
    %637 = vector.shape_cast %636 : vector<1x6x32xf32> to vector<6x32xf32>
    %638 = vector.extract_strided_slice %637 {offsets = [0, 0], sizes = [1, 32], strides = [1, 1]} : vector<6x32xf32> to vector<1x32xf32>
    %639 = vector.extract_strided_slice %637 {offsets = [1, 0], sizes = [1, 32], strides = [1, 1]} : vector<6x32xf32> to vector<1x32xf32>
    %cst_247 = arith.constant dense<0.000000e+00> : vector<8xf32>
    %640 = vector.multi_reduction <add>, %635, %cst_247 [1] : vector<8x32xf32> to vector<8xf32>
    %641 = vector.shape_cast %640 : vector<8xf32> to vector<8x1xf32>
    %cst_248 = arith.constant 3.200000e+01 : f32
    %642 = vector.broadcast %cst_248 : f32 to vector<8x1xf32>
    %643 = arith.divf %641, %642 : vector<8x1xf32>
    %644 = vector.broadcast %643 : vector<8x1xf32> to vector<8x32xf32>
    %645 = arith.subf %635, %644 : vector<8x32xf32>
    %646 = arith.mulf %645, %645 : vector<8x32xf32>
    %cst_249 = arith.constant dense<0.000000e+00> : vector<8xf32>
    %647 = vector.multi_reduction <add>, %646, %cst_249 [1] : vector<8x32xf32> to vector<8xf32>
    %648 = vector.shape_cast %647 : vector<8xf32> to vector<8x1xf32>
    %cst_250 = arith.constant 0.0322580636 : f32
    %649 = vector.broadcast %cst_250 : f32 to vector<8x1xf32>
    %650 = arith.mulf %648, %649 : vector<8x1xf32>
    %651 = math.sqrt %650 : vector<8x1xf32>
    %cst_251 = arith.constant 9.99999997E-7 : f32
    %652 = vector.broadcast %cst_251 : f32 to vector<8x1xf32>
    %653 = arith.addf %651, %652 : vector<8x1xf32>
    %654 = tpu.reciprocal %653 {approx = true} : vector<8x1xf32> -> vector<8x1xf32>
    %655 = vector.broadcast %638 : vector<1x32xf32> to vector<8x32xf32>
    %656 = arith.mulf %655, %645 : vector<8x32xf32>
    %657 = vector.broadcast %654 : vector<8x1xf32> to vector<8x32xf32>
    %658 = arith.mulf %656, %657 : vector<8x32xf32>
    %659 = vector.broadcast %639 : vector<1x32xf32> to vector<8x32xf32>
    %660 = arith.addf %658, %659 : vector<8x32xf32>
    %c1_252 = arith.constant 1 : index
    %c0_253 = arith.constant 0 : index
    %c0_254 = arith.constant 0 : index
    %661 = vector.load %arg15[%c1_252, %c0_253, %c0_254] : memref<2x32x96xf32, #tpu.memory_space<vmem>>, vector<1x32x96xf32>
    %662 = vector.shape_cast %661 : vector<1x32x96xf32> to vector<32x96xf32>
    %cst_255 = arith.constant dense<0.000000e+00> : vector<8x96xf32>
    %663 = tpu.matmul %660, %662, %cst_255 {dimension_numbers = #tpu.dot_dimension_numbers<[1], [0], [0], [1], [0, 0, 1, 1], [], []>} : vector<8x32xf32>, vector<32x96xf32>, vector<8x96xf32> -> vector<8x96xf32>
    %c1_256 = arith.constant 1 : index
    %c0_257 = arith.constant 0 : index
    %c0_258 = arith.constant 0 : index
    %664 = vector.load %arg16[%c1_256, %c0_257, %c0_258] : memref<2x1x96xf32, #tpu.memory_space<vmem>>, vector<1x1x96xf32>
    %665 = vector.shape_cast %664 : vector<1x1x96xf32> to vector<1x96xf32>
    %666 = vector.broadcast %665 : vector<1x96xf32> to vector<8x96xf32>
    %667 = arith.addf %663, %666 : vector<8x96xf32>
    %668 = vector.extract_strided_slice %667 {offsets = [0, 0], sizes = [8, 32], strides = [1, 1]} : vector<8x96xf32> to vector<8x32xf32>
    %669 = vector.extract_strided_slice %667 {offsets = [0, 32], sizes = [8, 32], strides = [1, 1]} : vector<8x96xf32> to vector<8x32xf32>
    %670 = vector.extract_strided_slice %667 {offsets = [0, 64], sizes = [8, 32], strides = [1, 1]} : vector<8x96xf32> to vector<8x32xf32>
    %c1_259 = arith.constant 1 : index
    %c0_260 = arith.constant 0 : index
    %c0_261 = arith.constant 0 : index
    %671 = vector.load %arg17[%c1_259, %c0_260, %c0_261] : memref<2x32x32xf32, #tpu.memory_space<vmem>>, vector<1x32x32xf32>
    %672 = vector.shape_cast %671 : vector<1x32x32xf32> to vector<32x32xf32>
    %c1_262 = arith.constant 1 : index
    %c0_263 = arith.constant 0 : index
    %c0_264 = arith.constant 0 : index
    %673 = vector.load %arg18[%c1_262, %c0_263, %c0_264] : memref<2x1x32xf32, #tpu.memory_space<vmem>>, vector<1x1x32xf32>
    %674 = vector.shape_cast %673 : vector<1x1x32xf32> to vector<1x32xf32>
    %675 = vector.extract_strided_slice %668 {offsets = [0, 0], sizes = [8, 8], strides = [1, 1]} : vector<8x32xf32> to vector<8x8xf32>
    %676 = vector.extract_strided_slice %669 {offsets = [0, 0], sizes = [8, 8], strides = [1, 1]} : vector<8x32xf32> to vector<8x8xf32>
    %677 = vector.extract_strided_slice %670 {offsets = [0, 0], sizes = [8, 8], strides = [1, 1]} : vector<8x32xf32> to vector<8x8xf32>
    %cst_265 = arith.constant dense<0.000000e+00> : vector<8x8xf32>
    %678 = tpu.matmul %675, %676, %cst_265 {dimension_numbers = #tpu.dot_dimension_numbers<[1], [1], [0], [0], [0, 0, 1, 0], [], []>} : vector<8x8xf32>, vector<8x8xf32>, vector<8x8xf32> -> vector<8x8xf32>
    %679 = arith.addf %678, %7 : vector<8x8xf32>
    %cst_266 = arith.constant dense<0xFF800000> : vector<8xf32>
    %680 = vector.multi_reduction <maximumf>, %679, %cst_266 [1] : vector<8x8xf32> to vector<8xf32>
    %681 = vector.shape_cast %680 : vector<8xf32> to vector<8x1xf32>
    %682 = vector.broadcast %681 : vector<8x1xf32> to vector<8x8xf32>
    %683 = arith.subf %679, %682 : vector<8x8xf32>
    %684 = math.exp %683 : vector<8x8xf32>
    %cst_267 = arith.constant dense<0.000000e+00> : vector<8xf32>
    %685 = vector.multi_reduction <add>, %684, %cst_267 [1] : vector<8x8xf32> to vector<8xf32>
    %686 = vector.shape_cast %685 : vector<8xf32> to vector<8x1xf32>
    %687 = tpu.reciprocal %686 {approx = true} : vector<8x1xf32> -> vector<8x1xf32>
    %688 = vector.broadcast %687 : vector<8x1xf32> to vector<8x8xf32>
    %689 = arith.mulf %684, %688 : vector<8x8xf32>
    %cst_268 = arith.constant dense<0.000000e+00> : vector<8x8xf32>
    %690 = tpu.matmul %689, %677, %cst_268 {dimension_numbers = #tpu.dot_dimension_numbers<[1], [0], [0], [1], [0, 0, 1, 1], [], []>} : vector<8x8xf32>, vector<8x8xf32>, vector<8x8xf32> -> vector<8x8xf32>
    %691 = vector.extract_strided_slice %672 {offsets = [0, 0], sizes = [8, 32], strides = [1, 1]} : vector<32x32xf32> to vector<8x32xf32>
    %cst_269 = arith.constant dense<0.000000e+00> : vector<8x32xf32>
    %692 = tpu.matmul %690, %691, %cst_269 {dimension_numbers = #tpu.dot_dimension_numbers<[1], [0], [0], [1], [0, 0, 1, 1], [], []>} : vector<8x8xf32>, vector<8x32xf32>, vector<8x32xf32> -> vector<8x32xf32>
    %693 = vector.extract_strided_slice %668 {offsets = [0, 8], sizes = [8, 8], strides = [1, 1]} : vector<8x32xf32> to vector<8x8xf32>
    %694 = vector.extract_strided_slice %669 {offsets = [0, 8], sizes = [8, 8], strides = [1, 1]} : vector<8x32xf32> to vector<8x8xf32>
    %695 = vector.extract_strided_slice %670 {offsets = [0, 8], sizes = [8, 8], strides = [1, 1]} : vector<8x32xf32> to vector<8x8xf32>
    %cst_270 = arith.constant dense<0.000000e+00> : vector<8x8xf32>
    %696 = tpu.matmul %693, %694, %cst_270 {dimension_numbers = #tpu.dot_dimension_numbers<[1], [1], [0], [0], [0, 0, 1, 0], [], []>} : vector<8x8xf32>, vector<8x8xf32>, vector<8x8xf32> -> vector<8x8xf32>
    %697 = arith.addf %696, %7 : vector<8x8xf32>
    %cst_271 = arith.constant dense<0xFF800000> : vector<8xf32>
    %698 = vector.multi_reduction <maximumf>, %697, %cst_271 [1] : vector<8x8xf32> to vector<8xf32>
    %699 = vector.shape_cast %698 : vector<8xf32> to vector<8x1xf32>
    %700 = vector.broadcast %699 : vector<8x1xf32> to vector<8x8xf32>
    %701 = arith.subf %697, %700 : vector<8x8xf32>
    %702 = math.exp %701 : vector<8x8xf32>
    %cst_272 = arith.constant dense<0.000000e+00> : vector<8xf32>
    %703 = vector.multi_reduction <add>, %702, %cst_272 [1] : vector<8x8xf32> to vector<8xf32>
    %704 = vector.shape_cast %703 : vector<8xf32> to vector<8x1xf32>
    %705 = tpu.reciprocal %704 {approx = true} : vector<8x1xf32> -> vector<8x1xf32>
    %706 = vector.broadcast %705 : vector<8x1xf32> to vector<8x8xf32>
    %707 = arith.mulf %702, %706 : vector<8x8xf32>
    %cst_273 = arith.constant dense<0.000000e+00> : vector<8x8xf32>
    %708 = tpu.matmul %707, %695, %cst_273 {dimension_numbers = #tpu.dot_dimension_numbers<[1], [0], [0], [1], [0, 0, 1, 1], [], []>} : vector<8x8xf32>, vector<8x8xf32>, vector<8x8xf32> -> vector<8x8xf32>
    %709 = vector.extract_strided_slice %672 {offsets = [8, 0], sizes = [8, 32], strides = [1, 1]} : vector<32x32xf32> to vector<8x32xf32>
    %cst_274 = arith.constant dense<0.000000e+00> : vector<8x32xf32>
    %710 = tpu.matmul %708, %709, %cst_274 {dimension_numbers = #tpu.dot_dimension_numbers<[1], [0], [0], [1], [0, 0, 1, 1], [], []>} : vector<8x8xf32>, vector<8x32xf32>, vector<8x32xf32> -> vector<8x32xf32>
    %711 = arith.addf %692, %710 : vector<8x32xf32>
    %712 = vector.extract_strided_slice %668 {offsets = [0, 16], sizes = [8, 8], strides = [1, 1]} : vector<8x32xf32> to vector<8x8xf32>
    %713 = vector.extract_strided_slice %669 {offsets = [0, 16], sizes = [8, 8], strides = [1, 1]} : vector<8x32xf32> to vector<8x8xf32>
    %714 = vector.extract_strided_slice %670 {offsets = [0, 16], sizes = [8, 8], strides = [1, 1]} : vector<8x32xf32> to vector<8x8xf32>
    %cst_275 = arith.constant dense<0.000000e+00> : vector<8x8xf32>
    %715 = tpu.matmul %712, %713, %cst_275 {dimension_numbers = #tpu.dot_dimension_numbers<[1], [1], [0], [0], [0, 0, 1, 0], [], []>} : vector<8x8xf32>, vector<8x8xf32>, vector<8x8xf32> -> vector<8x8xf32>
    %716 = arith.addf %715, %7 : vector<8x8xf32>
    %cst_276 = arith.constant dense<0xFF800000> : vector<8xf32>
    %717 = vector.multi_reduction <maximumf>, %716, %cst_276 [1] : vector<8x8xf32> to vector<8xf32>
    %718 = vector.shape_cast %717 : vector<8xf32> to vector<8x1xf32>
    %719 = vector.broadcast %718 : vector<8x1xf32> to vector<8x8xf32>
    %720 = arith.subf %716, %719 : vector<8x8xf32>
    %721 = math.exp %720 : vector<8x8xf32>
    %cst_277 = arith.constant dense<0.000000e+00> : vector<8xf32>
    %722 = vector.multi_reduction <add>, %721, %cst_277 [1] : vector<8x8xf32> to vector<8xf32>
    %723 = vector.shape_cast %722 : vector<8xf32> to vector<8x1xf32>
    %724 = tpu.reciprocal %723 {approx = true} : vector<8x1xf32> -> vector<8x1xf32>
    %725 = vector.broadcast %724 : vector<8x1xf32> to vector<8x8xf32>
    %726 = arith.mulf %721, %725 : vector<8x8xf32>
    %cst_278 = arith.constant dense<0.000000e+00> : vector<8x8xf32>
    %727 = tpu.matmul %726, %714, %cst_278 {dimension_numbers = #tpu.dot_dimension_numbers<[1], [0], [0], [1], [0, 0, 1, 1], [], []>} : vector<8x8xf32>, vector<8x8xf32>, vector<8x8xf32> -> vector<8x8xf32>
    %728 = vector.extract_strided_slice %672 {offsets = [16, 0], sizes = [8, 32], strides = [1, 1]} : vector<32x32xf32> to vector<8x32xf32>
    %cst_279 = arith.constant dense<0.000000e+00> : vector<8x32xf32>
    %729 = tpu.matmul %727, %728, %cst_279 {dimension_numbers = #tpu.dot_dimension_numbers<[1], [0], [0], [1], [0, 0, 1, 1], [], []>} : vector<8x8xf32>, vector<8x32xf32>, vector<8x32xf32> -> vector<8x32xf32>
    %730 = arith.addf %711, %729 : vector<8x32xf32>
    %731 = vector.extract_strided_slice %668 {offsets = [0, 24], sizes = [8, 8], strides = [1, 1]} : vector<8x32xf32> to vector<8x8xf32>
    %732 = vector.extract_strided_slice %669 {offsets = [0, 24], sizes = [8, 8], strides = [1, 1]} : vector<8x32xf32> to vector<8x8xf32>
    %733 = vector.extract_strided_slice %670 {offsets = [0, 24], sizes = [8, 8], strides = [1, 1]} : vector<8x32xf32> to vector<8x8xf32>
    %cst_280 = arith.constant dense<0.000000e+00> : vector<8x8xf32>
    %734 = tpu.matmul %731, %732, %cst_280 {dimension_numbers = #tpu.dot_dimension_numbers<[1], [1], [0], [0], [0, 0, 1, 0], [], []>} : vector<8x8xf32>, vector<8x8xf32>, vector<8x8xf32> -> vector<8x8xf32>
    %735 = arith.addf %734, %7 : vector<8x8xf32>
    %cst_281 = arith.constant dense<0xFF800000> : vector<8xf32>
    %736 = vector.multi_reduction <maximumf>, %735, %cst_281 [1] : vector<8x8xf32> to vector<8xf32>
    %737 = vector.shape_cast %736 : vector<8xf32> to vector<8x1xf32>
    %738 = vector.broadcast %737 : vector<8x1xf32> to vector<8x8xf32>
    %739 = arith.subf %735, %738 : vector<8x8xf32>
    %740 = math.exp %739 : vector<8x8xf32>
    %cst_282 = arith.constant dense<0.000000e+00> : vector<8xf32>
    %741 = vector.multi_reduction <add>, %740, %cst_282 [1] : vector<8x8xf32> to vector<8xf32>
    %742 = vector.shape_cast %741 : vector<8xf32> to vector<8x1xf32>
    %743 = tpu.reciprocal %742 {approx = true} : vector<8x1xf32> -> vector<8x1xf32>
    %744 = vector.broadcast %743 : vector<8x1xf32> to vector<8x8xf32>
    %745 = arith.mulf %740, %744 : vector<8x8xf32>
    %cst_283 = arith.constant dense<0.000000e+00> : vector<8x8xf32>
    %746 = tpu.matmul %745, %733, %cst_283 {dimension_numbers = #tpu.dot_dimension_numbers<[1], [0], [0], [1], [0, 0, 1, 1], [], []>} : vector<8x8xf32>, vector<8x8xf32>, vector<8x8xf32> -> vector<8x8xf32>
    %747 = vector.extract_strided_slice %672 {offsets = [24, 0], sizes = [8, 32], strides = [1, 1]} : vector<32x32xf32> to vector<8x32xf32>
    %cst_284 = arith.constant dense<0.000000e+00> : vector<8x32xf32>
    %748 = tpu.matmul %746, %747, %cst_284 {dimension_numbers = #tpu.dot_dimension_numbers<[1], [0], [0], [1], [0, 0, 1, 1], [], []>} : vector<8x8xf32>, vector<8x32xf32>, vector<8x32xf32> -> vector<8x32xf32>
    %749 = arith.addf %730, %748 : vector<8x32xf32>
    %750 = vector.broadcast %674 : vector<1x32xf32> to vector<8x32xf32>
    %751 = arith.addf %749, %750 : vector<8x32xf32>
    %752 = arith.addf %635, %751 : vector<8x32xf32>
    %753 = vector.extract_strided_slice %637 {offsets = [2, 0], sizes = [1, 32], strides = [1, 1]} : vector<6x32xf32> to vector<1x32xf32>
    %754 = vector.extract_strided_slice %637 {offsets = [3, 0], sizes = [1, 32], strides = [1, 1]} : vector<6x32xf32> to vector<1x32xf32>
    %cst_285 = arith.constant dense<0.000000e+00> : vector<8xf32>
    %755 = vector.multi_reduction <add>, %752, %cst_285 [1] : vector<8x32xf32> to vector<8xf32>
    %756 = vector.shape_cast %755 : vector<8xf32> to vector<8x1xf32>
    %cst_286 = arith.constant 3.200000e+01 : f32
    %757 = vector.broadcast %cst_286 : f32 to vector<8x1xf32>
    %758 = arith.divf %756, %757 : vector<8x1xf32>
    %759 = vector.broadcast %758 : vector<8x1xf32> to vector<8x32xf32>
    %760 = arith.subf %752, %759 : vector<8x32xf32>
    %761 = arith.mulf %760, %760 : vector<8x32xf32>
    %cst_287 = arith.constant dense<0.000000e+00> : vector<8xf32>
    %762 = vector.multi_reduction <add>, %761, %cst_287 [1] : vector<8x32xf32> to vector<8xf32>
    %763 = vector.shape_cast %762 : vector<8xf32> to vector<8x1xf32>
    %cst_288 = arith.constant 0.0322580636 : f32
    %764 = vector.broadcast %cst_288 : f32 to vector<8x1xf32>
    %765 = arith.mulf %763, %764 : vector<8x1xf32>
    %766 = math.sqrt %765 : vector<8x1xf32>
    %cst_289 = arith.constant 9.99999997E-7 : f32
    %767 = vector.broadcast %cst_289 : f32 to vector<8x1xf32>
    %768 = arith.addf %766, %767 : vector<8x1xf32>
    %769 = tpu.reciprocal %768 {approx = true} : vector<8x1xf32> -> vector<8x1xf32>
    %770 = vector.broadcast %753 : vector<1x32xf32> to vector<8x32xf32>
    %771 = arith.mulf %770, %760 : vector<8x32xf32>
    %772 = vector.broadcast %769 : vector<8x1xf32> to vector<8x32xf32>
    %773 = arith.mulf %771, %772 : vector<8x32xf32>
    %774 = vector.broadcast %754 : vector<1x32xf32> to vector<8x32xf32>
    %775 = arith.addf %773, %774 : vector<8x32xf32>
    %c1_290 = arith.constant 1 : index
    %c0_291 = arith.constant 0 : index
    %c0_292 = arith.constant 0 : index
    %776 = vector.load %arg19[%c1_290, %c0_291, %c0_292] : memref<2x32x32xf32, #tpu.memory_space<vmem>>, vector<1x32x32xf32>
    %777 = vector.shape_cast %776 : vector<1x32x32xf32> to vector<32x32xf32>
    %cst_293 = arith.constant dense<0.000000e+00> : vector<8x32xf32>
    %778 = tpu.matmul %775, %777, %cst_293 {dimension_numbers = #tpu.dot_dimension_numbers<[1], [0], [0], [1], [0, 0, 1, 1], [], []>} : vector<8x32xf32>, vector<32x32xf32>, vector<8x32xf32> -> vector<8x32xf32>
    %c1_294 = arith.constant 1 : index
    %c0_295 = arith.constant 0 : index
    %c0_296 = arith.constant 0 : index
    %779 = vector.load %arg20[%c1_294, %c0_295, %c0_296] : memref<2x1x32xf32, #tpu.memory_space<vmem>>, vector<1x1x32xf32>
    %780 = vector.shape_cast %779 : vector<1x1x32xf32> to vector<1x32xf32>
    %781 = vector.broadcast %780 : vector<1x32xf32> to vector<8x32xf32>
    %782 = arith.addf %778, %781 : vector<8x32xf32>
    %c1_297 = arith.constant 1 : index
    %c0_298 = arith.constant 0 : index
    %c0_299 = arith.constant 0 : index
    %783 = vector.load %arg21[%c1_297, %c0_298, %c0_299] : memref<2x32x64xf32, #tpu.memory_space<vmem>>, vector<1x32x64xf32>
    %784 = vector.shape_cast %783 : vector<1x32x64xf32> to vector<32x64xf32>
    %cst_300 = arith.constant dense<0.000000e+00> : vector<8x64xf32>
    %785 = tpu.matmul %353, %784, %cst_300 {dimension_numbers = #tpu.dot_dimension_numbers<[1], [0], [0], [1], [0, 0, 1, 1], [], []>} : vector<8x32xf32>, vector<32x64xf32>, vector<8x64xf32> -> vector<8x64xf32>
    %c1_301 = arith.constant 1 : index
    %c0_302 = arith.constant 0 : index
    %c0_303 = arith.constant 0 : index
    %786 = vector.load %arg22[%c1_301, %c0_302, %c0_303] : memref<2x1x64xf32, #tpu.memory_space<vmem>>, vector<1x1x64xf32>
    %787 = vector.shape_cast %786 : vector<1x1x64xf32> to vector<1x64xf32>
    %788 = vector.broadcast %787 : vector<1x64xf32> to vector<8x64xf32>
    %789 = arith.addf %785, %788 : vector<8x64xf32>
    %790 = vector.extract_strided_slice %789 {offsets = [0, 0], sizes = [8, 32], strides = [1, 1]} : vector<8x64xf32> to vector<8x32xf32>
    %791 = vector.extract_strided_slice %789 {offsets = [0, 32], sizes = [8, 32], strides = [1, 1]} : vector<8x64xf32> to vector<8x32xf32>
    %c1_304 = arith.constant 1 : index
    %c0_305 = arith.constant 0 : index
    %c0_306 = arith.constant 0 : index
    %792 = vector.load %arg23[%c1_304, %c0_305, %c0_306] : memref<2x32x32xf32, #tpu.memory_space<vmem>>, vector<1x32x32xf32>
    %793 = vector.shape_cast %792 : vector<1x32x32xf32> to vector<32x32xf32>
    %c1_307 = arith.constant 1 : index
    %c0_308 = arith.constant 0 : index
    %c0_309 = arith.constant 0 : index
    %794 = vector.load %arg24[%c1_307, %c0_308, %c0_309] : memref<2x1x32xf32, #tpu.memory_space<vmem>>, vector<1x1x32xf32>
    %795 = vector.shape_cast %794 : vector<1x1x32xf32> to vector<1x32xf32>
    %796 = vector.extract_strided_slice %782 {offsets = [0, 0], sizes = [8, 8], strides = [1, 1]} : vector<8x32xf32> to vector<8x8xf32>
    %797 = vector.extract_strided_slice %790 {offsets = [0, 0], sizes = [8, 8], strides = [1, 1]} : vector<8x32xf32> to vector<8x8xf32>
    %798 = vector.extract_strided_slice %791 {offsets = [0, 0], sizes = [8, 8], strides = [1, 1]} : vector<8x32xf32> to vector<8x8xf32>
    %cst_310 = arith.constant dense<0.000000e+00> : vector<8x8xf32>
    %799 = tpu.matmul %796, %797, %cst_310 {dimension_numbers = #tpu.dot_dimension_numbers<[1], [1], [0], [0], [0, 0, 1, 0], [], []>} : vector<8x8xf32>, vector<8x8xf32>, vector<8x8xf32> -> vector<8x8xf32>
    %800 = vector.broadcast %5 : vector<1x8xf32> to vector<8x8xf32>
    %801 = arith.addf %799, %800 : vector<8x8xf32>
    %cst_311 = arith.constant dense<0xFF800000> : vector<8xf32>
    %802 = vector.multi_reduction <maximumf>, %801, %cst_311 [1] : vector<8x8xf32> to vector<8xf32>
    %803 = vector.shape_cast %802 : vector<8xf32> to vector<8x1xf32>
    %804 = vector.broadcast %803 : vector<8x1xf32> to vector<8x8xf32>
    %805 = arith.subf %801, %804 : vector<8x8xf32>
    %806 = math.exp %805 : vector<8x8xf32>
    %cst_312 = arith.constant dense<0.000000e+00> : vector<8xf32>
    %807 = vector.multi_reduction <add>, %806, %cst_312 [1] : vector<8x8xf32> to vector<8xf32>
    %808 = vector.shape_cast %807 : vector<8xf32> to vector<8x1xf32>
    %809 = tpu.reciprocal %808 {approx = true} : vector<8x1xf32> -> vector<8x1xf32>
    %810 = vector.broadcast %809 : vector<8x1xf32> to vector<8x8xf32>
    %811 = arith.mulf %806, %810 : vector<8x8xf32>
    %cst_313 = arith.constant dense<0.000000e+00> : vector<8x8xf32>
    %812 = tpu.matmul %811, %798, %cst_313 {dimension_numbers = #tpu.dot_dimension_numbers<[1], [0], [0], [1], [0, 0, 1, 1], [], []>} : vector<8x8xf32>, vector<8x8xf32>, vector<8x8xf32> -> vector<8x8xf32>
    %813 = vector.extract_strided_slice %793 {offsets = [0, 0], sizes = [8, 32], strides = [1, 1]} : vector<32x32xf32> to vector<8x32xf32>
    %cst_314 = arith.constant dense<0.000000e+00> : vector<8x32xf32>
    %814 = tpu.matmul %812, %813, %cst_314 {dimension_numbers = #tpu.dot_dimension_numbers<[1], [0], [0], [1], [0, 0, 1, 1], [], []>} : vector<8x8xf32>, vector<8x32xf32>, vector<8x32xf32> -> vector<8x32xf32>
    %815 = vector.extract_strided_slice %782 {offsets = [0, 8], sizes = [8, 8], strides = [1, 1]} : vector<8x32xf32> to vector<8x8xf32>
    %816 = vector.extract_strided_slice %790 {offsets = [0, 8], sizes = [8, 8], strides = [1, 1]} : vector<8x32xf32> to vector<8x8xf32>
    %817 = vector.extract_strided_slice %791 {offsets = [0, 8], sizes = [8, 8], strides = [1, 1]} : vector<8x32xf32> to vector<8x8xf32>
    %cst_315 = arith.constant dense<0.000000e+00> : vector<8x8xf32>
    %818 = tpu.matmul %815, %816, %cst_315 {dimension_numbers = #tpu.dot_dimension_numbers<[1], [1], [0], [0], [0, 0, 1, 0], [], []>} : vector<8x8xf32>, vector<8x8xf32>, vector<8x8xf32> -> vector<8x8xf32>
    %819 = vector.broadcast %5 : vector<1x8xf32> to vector<8x8xf32>
    %820 = arith.addf %818, %819 : vector<8x8xf32>
    %cst_316 = arith.constant dense<0xFF800000> : vector<8xf32>
    %821 = vector.multi_reduction <maximumf>, %820, %cst_316 [1] : vector<8x8xf32> to vector<8xf32>
    %822 = vector.shape_cast %821 : vector<8xf32> to vector<8x1xf32>
    %823 = vector.broadcast %822 : vector<8x1xf32> to vector<8x8xf32>
    %824 = arith.subf %820, %823 : vector<8x8xf32>
    %825 = math.exp %824 : vector<8x8xf32>
    %cst_317 = arith.constant dense<0.000000e+00> : vector<8xf32>
    %826 = vector.multi_reduction <add>, %825, %cst_317 [1] : vector<8x8xf32> to vector<8xf32>
    %827 = vector.shape_cast %826 : vector<8xf32> to vector<8x1xf32>
    %828 = tpu.reciprocal %827 {approx = true} : vector<8x1xf32> -> vector<8x1xf32>
    %829 = vector.broadcast %828 : vector<8x1xf32> to vector<8x8xf32>
    %830 = arith.mulf %825, %829 : vector<8x8xf32>
    %cst_318 = arith.constant dense<0.000000e+00> : vector<8x8xf32>
    %831 = tpu.matmul %830, %817, %cst_318 {dimension_numbers = #tpu.dot_dimension_numbers<[1], [0], [0], [1], [0, 0, 1, 1], [], []>} : vector<8x8xf32>, vector<8x8xf32>, vector<8x8xf32> -> vector<8x8xf32>
    %832 = vector.extract_strided_slice %793 {offsets = [8, 0], sizes = [8, 32], strides = [1, 1]} : vector<32x32xf32> to vector<8x32xf32>
    %cst_319 = arith.constant dense<0.000000e+00> : vector<8x32xf32>
    %833 = tpu.matmul %831, %832, %cst_319 {dimension_numbers = #tpu.dot_dimension_numbers<[1], [0], [0], [1], [0, 0, 1, 1], [], []>} : vector<8x8xf32>, vector<8x32xf32>, vector<8x32xf32> -> vector<8x32xf32>
    %834 = arith.addf %814, %833 : vector<8x32xf32>
    %835 = vector.extract_strided_slice %782 {offsets = [0, 16], sizes = [8, 8], strides = [1, 1]} : vector<8x32xf32> to vector<8x8xf32>
    %836 = vector.extract_strided_slice %790 {offsets = [0, 16], sizes = [8, 8], strides = [1, 1]} : vector<8x32xf32> to vector<8x8xf32>
    %837 = vector.extract_strided_slice %791 {offsets = [0, 16], sizes = [8, 8], strides = [1, 1]} : vector<8x32xf32> to vector<8x8xf32>
    %cst_320 = arith.constant dense<0.000000e+00> : vector<8x8xf32>
    %838 = tpu.matmul %835, %836, %cst_320 {dimension_numbers = #tpu.dot_dimension_numbers<[1], [1], [0], [0], [0, 0, 1, 0], [], []>} : vector<8x8xf32>, vector<8x8xf32>, vector<8x8xf32> -> vector<8x8xf32>
    %839 = vector.broadcast %5 : vector<1x8xf32> to vector<8x8xf32>
    %840 = arith.addf %838, %839 : vector<8x8xf32>
    %cst_321 = arith.constant dense<0xFF800000> : vector<8xf32>
    %841 = vector.multi_reduction <maximumf>, %840, %cst_321 [1] : vector<8x8xf32> to vector<8xf32>
    %842 = vector.shape_cast %841 : vector<8xf32> to vector<8x1xf32>
    %843 = vector.broadcast %842 : vector<8x1xf32> to vector<8x8xf32>
    %844 = arith.subf %840, %843 : vector<8x8xf32>
    %845 = math.exp %844 : vector<8x8xf32>
    %cst_322 = arith.constant dense<0.000000e+00> : vector<8xf32>
    %846 = vector.multi_reduction <add>, %845, %cst_322 [1] : vector<8x8xf32> to vector<8xf32>
    %847 = vector.shape_cast %846 : vector<8xf32> to vector<8x1xf32>
    %848 = tpu.reciprocal %847 {approx = true} : vector<8x1xf32> -> vector<8x1xf32>
    %849 = vector.broadcast %848 : vector<8x1xf32> to vector<8x8xf32>
    %850 = arith.mulf %845, %849 : vector<8x8xf32>
    %cst_323 = arith.constant dense<0.000000e+00> : vector<8x8xf32>
    %851 = tpu.matmul %850, %837, %cst_323 {dimension_numbers = #tpu.dot_dimension_numbers<[1], [0], [0], [1], [0, 0, 1, 1], [], []>} : vector<8x8xf32>, vector<8x8xf32>, vector<8x8xf32> -> vector<8x8xf32>
    %852 = vector.extract_strided_slice %793 {offsets = [16, 0], sizes = [8, 32], strides = [1, 1]} : vector<32x32xf32> to vector<8x32xf32>
    %cst_324 = arith.constant dense<0.000000e+00> : vector<8x32xf32>
    %853 = tpu.matmul %851, %852, %cst_324 {dimension_numbers = #tpu.dot_dimension_numbers<[1], [0], [0], [1], [0, 0, 1, 1], [], []>} : vector<8x8xf32>, vector<8x32xf32>, vector<8x32xf32> -> vector<8x32xf32>
    %854 = arith.addf %834, %853 : vector<8x32xf32>
    %855 = vector.extract_strided_slice %782 {offsets = [0, 24], sizes = [8, 8], strides = [1, 1]} : vector<8x32xf32> to vector<8x8xf32>
    %856 = vector.extract_strided_slice %790 {offsets = [0, 24], sizes = [8, 8], strides = [1, 1]} : vector<8x32xf32> to vector<8x8xf32>
    %857 = vector.extract_strided_slice %791 {offsets = [0, 24], sizes = [8, 8], strides = [1, 1]} : vector<8x32xf32> to vector<8x8xf32>
    %cst_325 = arith.constant dense<0.000000e+00> : vector<8x8xf32>
    %858 = tpu.matmul %855, %856, %cst_325 {dimension_numbers = #tpu.dot_dimension_numbers<[1], [1], [0], [0], [0, 0, 1, 0], [], []>} : vector<8x8xf32>, vector<8x8xf32>, vector<8x8xf32> -> vector<8x8xf32>
    %859 = vector.broadcast %5 : vector<1x8xf32> to vector<8x8xf32>
    %860 = arith.addf %858, %859 : vector<8x8xf32>
    %cst_326 = arith.constant dense<0xFF800000> : vector<8xf32>
    %861 = vector.multi_reduction <maximumf>, %860, %cst_326 [1] : vector<8x8xf32> to vector<8xf32>
    %862 = vector.shape_cast %861 : vector<8xf32> to vector<8x1xf32>
    %863 = vector.broadcast %862 : vector<8x1xf32> to vector<8x8xf32>
    %864 = arith.subf %860, %863 : vector<8x8xf32>
    %865 = math.exp %864 : vector<8x8xf32>
    %cst_327 = arith.constant dense<0.000000e+00> : vector<8xf32>
    %866 = vector.multi_reduction <add>, %865, %cst_327 [1] : vector<8x8xf32> to vector<8xf32>
    %867 = vector.shape_cast %866 : vector<8xf32> to vector<8x1xf32>
    %868 = tpu.reciprocal %867 {approx = true} : vector<8x1xf32> -> vector<8x1xf32>
    %869 = vector.broadcast %868 : vector<8x1xf32> to vector<8x8xf32>
    %870 = arith.mulf %865, %869 : vector<8x8xf32>
    %cst_328 = arith.constant dense<0.000000e+00> : vector<8x8xf32>
    %871 = tpu.matmul %870, %857, %cst_328 {dimension_numbers = #tpu.dot_dimension_numbers<[1], [0], [0], [1], [0, 0, 1, 1], [], []>} : vector<8x8xf32>, vector<8x8xf32>, vector<8x8xf32> -> vector<8x8xf32>
    %872 = vector.extract_strided_slice %793 {offsets = [24, 0], sizes = [8, 32], strides = [1, 1]} : vector<32x32xf32> to vector<8x32xf32>
    %cst_329 = arith.constant dense<0.000000e+00> : vector<8x32xf32>
    %873 = tpu.matmul %871, %872, %cst_329 {dimension_numbers = #tpu.dot_dimension_numbers<[1], [0], [0], [1], [0, 0, 1, 1], [], []>} : vector<8x8xf32>, vector<8x32xf32>, vector<8x32xf32> -> vector<8x32xf32>
    %874 = arith.addf %854, %873 : vector<8x32xf32>
    %875 = vector.broadcast %795 : vector<1x32xf32> to vector<8x32xf32>
    %876 = arith.addf %874, %875 : vector<8x32xf32>
    %877 = arith.addf %752, %876 : vector<8x32xf32>
    %878 = vector.extract_strided_slice %637 {offsets = [4, 0], sizes = [1, 32], strides = [1, 1]} : vector<6x32xf32> to vector<1x32xf32>
    %879 = vector.extract_strided_slice %637 {offsets = [5, 0], sizes = [1, 32], strides = [1, 1]} : vector<6x32xf32> to vector<1x32xf32>
    %cst_330 = arith.constant dense<0.000000e+00> : vector<8xf32>
    %880 = vector.multi_reduction <add>, %877, %cst_330 [1] : vector<8x32xf32> to vector<8xf32>
    %881 = vector.shape_cast %880 : vector<8xf32> to vector<8x1xf32>
    %cst_331 = arith.constant 3.200000e+01 : f32
    %882 = vector.broadcast %cst_331 : f32 to vector<8x1xf32>
    %883 = arith.divf %881, %882 : vector<8x1xf32>
    %884 = vector.broadcast %883 : vector<8x1xf32> to vector<8x32xf32>
    %885 = arith.subf %877, %884 : vector<8x32xf32>
    %886 = arith.mulf %885, %885 : vector<8x32xf32>
    %cst_332 = arith.constant dense<0.000000e+00> : vector<8xf32>
    %887 = vector.multi_reduction <add>, %886, %cst_332 [1] : vector<8x32xf32> to vector<8xf32>
    %888 = vector.shape_cast %887 : vector<8xf32> to vector<8x1xf32>
    %cst_333 = arith.constant 0.0322580636 : f32
    %889 = vector.broadcast %cst_333 : f32 to vector<8x1xf32>
    %890 = arith.mulf %888, %889 : vector<8x1xf32>
    %891 = math.sqrt %890 : vector<8x1xf32>
    %cst_334 = arith.constant 9.99999997E-7 : f32
    %892 = vector.broadcast %cst_334 : f32 to vector<8x1xf32>
    %893 = arith.addf %891, %892 : vector<8x1xf32>
    %894 = tpu.reciprocal %893 {approx = true} : vector<8x1xf32> -> vector<8x1xf32>
    %895 = vector.broadcast %878 : vector<1x32xf32> to vector<8x32xf32>
    %896 = arith.mulf %895, %885 : vector<8x32xf32>
    %897 = vector.broadcast %894 : vector<8x1xf32> to vector<8x32xf32>
    %898 = arith.mulf %896, %897 : vector<8x32xf32>
    %899 = vector.broadcast %879 : vector<1x32xf32> to vector<8x32xf32>
    %900 = arith.addf %898, %899 : vector<8x32xf32>
    %c1_335 = arith.constant 1 : index
    %c0_336 = arith.constant 0 : index
    %c0_337 = arith.constant 0 : index
    %901 = vector.load %arg25[%c1_335, %c0_336, %c0_337] : memref<2x32x64xf32, #tpu.memory_space<vmem>>, vector<1x32x64xf32>
    %902 = vector.shape_cast %901 : vector<1x32x64xf32> to vector<32x64xf32>
    %cst_338 = arith.constant dense<0.000000e+00> : vector<8x64xf32>
    %903 = tpu.matmul %900, %902, %cst_338 {dimension_numbers = #tpu.dot_dimension_numbers<[1], [0], [0], [1], [0, 0, 1, 1], [], []>} : vector<8x32xf32>, vector<32x64xf32>, vector<8x64xf32> -> vector<8x64xf32>
    %c1_339 = arith.constant 1 : index
    %c0_340 = arith.constant 0 : index
    %c0_341 = arith.constant 0 : index
    %904 = vector.load %arg26[%c1_339, %c0_340, %c0_341] : memref<2x1x64xf32, #tpu.memory_space<vmem>>, vector<1x1x64xf32>
    %905 = vector.shape_cast %904 : vector<1x1x64xf32> to vector<1x64xf32>
    %906 = vector.broadcast %905 : vector<1x64xf32> to vector<8x64xf32>
    %907 = arith.addf %903, %906 : vector<8x64xf32>
    %cst_342 = arith.constant 0.000000e+00 : f32
    %908 = vector.broadcast %cst_342 : f32 to vector<8x64xf32>
    %909 = arith.maximumf %907, %908 : vector<8x64xf32>
    %c1_343 = arith.constant 1 : index
    %c0_344 = arith.constant 0 : index
    %c0_345 = arith.constant 0 : index
    %910 = vector.load %arg27[%c1_343, %c0_344, %c0_345] : memref<2x64x32xf32, #tpu.memory_space<vmem>>, vector<1x64x32xf32>
    %911 = vector.shape_cast %910 : vector<1x64x32xf32> to vector<64x32xf32>
    %cst_346 = arith.constant dense<0.000000e+00> : vector<8x32xf32>
    %912 = tpu.matmul %909, %911, %cst_346 {dimension_numbers = #tpu.dot_dimension_numbers<[1], [0], [0], [1], [0, 0, 1, 1], [], []>} : vector<8x64xf32>, vector<64x32xf32>, vector<8x32xf32> -> vector<8x32xf32>
    %913 = arith.addf %877, %912 : vector<8x32xf32>
    %c1_347 = arith.constant 1 : index
    %c0_348 = arith.constant 0 : index
    %c0_349 = arith.constant 0 : index
    %914 = vector.load %arg28[%c1_347, %c0_348, %c0_349] : memref<2x1x32xf32, #tpu.memory_space<vmem>>, vector<1x1x32xf32>
    %915 = vector.shape_cast %914 : vector<1x1x32xf32> to vector<1x32xf32>
    %916 = vector.broadcast %915 : vector<1x32xf32> to vector<8x32xf32>
    %917 = arith.addf %913, %916 : vector<8x32xf32>
    %c0_350 = arith.constant 0 : index
    %c0_351 = arith.constant 0 : index
    %918 = vector.load %arg30[%c0_350, %c0_351] : memref<2x32xf32, #tpu.memory_space<vmem>>, vector<2x32xf32>
    %919 = vector.extract_strided_slice %918 {offsets = [0, 0], sizes = [1, 32], strides = [1, 1]} : vector<2x32xf32> to vector<1x32xf32>
    %920 = vector.extract_strided_slice %918 {offsets = [1, 0], sizes = [1, 32], strides = [1, 1]} : vector<2x32xf32> to vector<1x32xf32>
    %cst_352 = arith.constant dense<0.000000e+00> : vector<8xf32>
    %921 = vector.multi_reduction <add>, %917, %cst_352 [1] : vector<8x32xf32> to vector<8xf32>
    %922 = vector.shape_cast %921 : vector<8xf32> to vector<8x1xf32>
    %cst_353 = arith.constant 3.200000e+01 : f32
    %923 = vector.broadcast %cst_353 : f32 to vector<8x1xf32>
    %924 = arith.divf %922, %923 : vector<8x1xf32>
    %925 = vector.broadcast %924 : vector<8x1xf32> to vector<8x32xf32>
    %926 = arith.subf %917, %925 : vector<8x32xf32>
    %927 = arith.mulf %926, %926 : vector<8x32xf32>
    %cst_354 = arith.constant dense<0.000000e+00> : vector<8xf32>
    %928 = vector.multi_reduction <add>, %927, %cst_354 [1] : vector<8x32xf32> to vector<8xf32>
    %929 = vector.shape_cast %928 : vector<8xf32> to vector<8x1xf32>
    %cst_355 = arith.constant 0.0322580636 : f32
    %930 = vector.broadcast %cst_355 : f32 to vector<8x1xf32>
    %931 = arith.mulf %929, %930 : vector<8x1xf32>
    %932 = math.sqrt %931 : vector<8x1xf32>
    %cst_356 = arith.constant 9.99999997E-7 : f32
    %933 = vector.broadcast %cst_356 : f32 to vector<8x1xf32>
    %934 = arith.addf %932, %933 : vector<8x1xf32>
    %935 = tpu.reciprocal %934 {approx = true} : vector<8x1xf32> -> vector<8x1xf32>
    %936 = vector.broadcast %919 : vector<1x32xf32> to vector<8x32xf32>
    %937 = arith.mulf %936, %926 : vector<8x32xf32>
    %938 = vector.broadcast %935 : vector<8x1xf32> to vector<8x32xf32>
    %939 = arith.mulf %937, %938 : vector<8x32xf32>
    %940 = vector.broadcast %920 : vector<1x32xf32> to vector<8x32xf32>
    %941 = arith.addf %939, %940 : vector<8x32xf32>
    %c0_357 = arith.constant 0 : index
    %c0_358 = arith.constant 0 : index
    %c0_359 = arith.constant 0 : index
    %942 = vector.load %arg31[%c0_357, %c0_358, %c0_359] : memref<1x8x32xf32, #tpu.memory_space<vmem>>, vector<1x8x32xf32>
    %943 = vector.shape_cast %942 : vector<1x8x32xf32> to vector<8x32xf32>
    %944 = vector.shape_cast %941 : vector<8x32xf32> to vector<1x8x32xf32>
    tpu.vector_store %arg31[%c0_357, %c0_358, %c0_359], %944 {strides = array<i32>} : memref<1x8x32xf32, #tpu.memory_space<vmem>>, vector<1x8x32xf32>,
    return
  }
  func.func @transform_0(%arg0: i32) -> (i32, i32, i32) {
    %c0_i32 = arith.constant 0 : i32
    %c0_i32_0 = arith.constant 0 : i32
    %c0_i32_1 = arith.constant 0 : i32
    return %arg0, %c0_i32, %c0_i32_0 : i32, i32, i32
  }
  func.func @transform_1(%arg0: i32) -> (i32, i32, i32) {
    %c0_i32 = arith.constant 0 : i32
    %c0_i32_0 = arith.constant 0 : i32
    %c0_i32_1 = arith.constant 0 : i32
    return %arg0, %c0_i32, %c0_i32_0 : i32, i32, i32
  }
  func.func @transform_2(%arg0: i32) -> (i32, i32, i32) {
    %c0_i32 = arith.constant 0 : i32
    %c0_i32_0 = arith.constant 0 : i32
    %c0_i32_1 = arith.constant 0 : i32
    return %arg0, %c0_i32, %c0_i32_0 : i32, i32, i32
  }
  func.func @transform_3(%arg0: i32) -> (i32, i32, i32) {
    %c0_i32 = arith.constant 0 : i32
    %c0_i32_0 = arith.constant 0 : i32
    %c0_i32_1 = arith.constant 0 : i32
    return %arg0, %c0_i32, %c0_i32_0 : i32, i32, i32
  }
  func.func @transform_4(%arg0: i32) -> (i32, i32, i32) {
    %c0_i32 = arith.constant 0 : i32
    %c0_i32_0 = arith.constant 0 : i32
    %c0_i32_1 = arith.constant 0 : i32
    %c0_i32_2 = arith.constant 0 : i32
    return %c0_i32, %c0_i32_0, %c0_i32_1 : i32, i32, i32
  }
  func.func @transform_5(%arg0: i32) -> (i32, i32, i32) {
    %c0_i32 = arith.constant 0 : i32
    %c0_i32_0 = arith.constant 0 : i32
    %c0_i32_1 = arith.constant 0 : i32
    %c0_i32_2 = arith.constant 0 : i32
    return %c0_i32, %c0_i32_0, %c0_i32_1 : i32, i32, i32
  }
  func.func @transform_6(%arg0: i32) -> (i32, i32, i32) {
    %c0_i32 = arith.constant 0 : i32
    %c0_i32_0 = arith.constant 0 : i32
    %c0_i32_1 = arith.constant 0 : i32
    %c0_i32_2 = arith.constant 0 : i32
    return %c0_i32, %c0_i32_0, %c0_i32_1 : i32, i32, i32
  }
  func.func @transform_7(%arg0: i32) -> (i32, i32, i32) {
    %c0_i32 = arith.constant 0 : i32
    %c0_i32_0 = arith.constant 0 : i32
    %c0_i32_1 = arith.constant 0 : i32
    %c0_i32_2 = arith.constant 0 : i32
    return %c0_i32, %c0_i32_0, %c0_i32_1 : i32, i32, i32
  }
  func.func @transform_8(%arg0: i32) -> (i32, i32, i32) {
    %c0_i32 = arith.constant 0 : i32
    %c0_i32_0 = arith.constant 0 : i32
    %c0_i32_1 = arith.constant 0 : i32
    %c0_i32_2 = arith.constant 0 : i32
    return %c0_i32, %c0_i32_0, %c0_i32_1 : i32, i32, i32
  }
  func.func @transform_9(%arg0: i32) -> (i32, i32, i32) {
    %c0_i32 = arith.constant 0 : i32
    %c0_i32_0 = arith.constant 0 : i32
    %c0_i32_1 = arith.constant 0 : i32
    %c0_i32_2 = arith.constant 0 : i32
    return %c0_i32, %c0_i32_0, %c0_i32_1 : i32, i32, i32
  }
  func.func @transform_10(%arg0: i32) -> (i32, i32, i32) {
    %c0_i32 = arith.constant 0 : i32
    %c0_i32_0 = arith.constant 0 : i32
    %c0_i32_1 = arith.constant 0 : i32
    %c0_i32_2 = arith.constant 0 : i32
    return %c0_i32, %c0_i32_0, %c0_i32_1 : i32, i32, i32
  }
  func.func @transform_11(%arg0: i32) -> (i32, i32, i32) {
    %c0_i32 = arith.constant 0 : i32
    %c0_i32_0 = arith.constant 0 : i32
    %c0_i32_1 = arith.constant 0 : i32
    %c0_i32_2 = arith.constant 0 : i32
    return %c0_i32, %c0_i32_0, %c0_i32_1 : i32, i32, i32
  }
  func.func @transform_12(%arg0: i32) -> (i32, i32, i32) {
    %c0_i32 = arith.constant 0 : i32
    %c0_i32_0 = arith.constant 0 : i32
    %c0_i32_1 = arith.constant 0 : i32
    %c0_i32_2 = arith.constant 0 : i32
    return %c0_i32, %c0_i32_0, %c0_i32_1 : i32, i32, i32
  }
  func.func @transform_13(%arg0: i32) -> (i32, i32) {
    %c0_i32 = arith.constant 0 : i32
    %c0_i32_0 = arith.constant 0 : i32
    %c0_i32_1 = arith.constant 0 : i32
    return %c0_i32, %c0_i32_0 : i32, i32
  }
  func.func @transform_14(%arg0: i32) -> (i32, i32, i32) {
    %c0_i32 = arith.constant 0 : i32
    %c0_i32_0 = arith.constant 0 : i32
    %c0_i32_1 = arith.constant 0 : i32
    %c0_i32_2 = arith.constant 0 : i32
    return %c0_i32, %c0_i32_0, %c0_i32_1 : i32, i32, i32
  }
  func.func @transform_15(%arg0: i32) -> (i32, i32, i32) {
    %c0_i32 = arith.constant 0 : i32
    %c0_i32_0 = arith.constant 0 : i32
    %c0_i32_1 = arith.constant 0 : i32
    %c0_i32_2 = arith.constant 0 : i32
    return %c0_i32, %c0_i32_0, %c0_i32_1 : i32, i32, i32
  }
  func.func @transform_16(%arg0: i32) -> (i32, i32, i32) {
    %c0_i32 = arith.constant 0 : i32
    %c0_i32_0 = arith.constant 0 : i32
    %c0_i32_1 = arith.constant 0 : i32
    %c0_i32_2 = arith.constant 0 : i32
    return %c0_i32, %c0_i32_0, %c0_i32_1 : i32, i32, i32
  }
  func.func @transform_17(%arg0: i32) -> (i32, i32, i32) {
    %c0_i32 = arith.constant 0 : i32
    %c0_i32_0 = arith.constant 0 : i32
    %c0_i32_1 = arith.constant 0 : i32
    %c0_i32_2 = arith.constant 0 : i32
    return %c0_i32, %c0_i32_0, %c0_i32_1 : i32, i32, i32
  }
  func.func @transform_18(%arg0: i32) -> (i32, i32, i32) {
    %c0_i32 = arith.constant 0 : i32
    %c0_i32_0 = arith.constant 0 : i32
    %c0_i32_1 = arith.constant 0 : i32
    %c0_i32_2 = arith.constant 0 : i32
    return %c0_i32, %c0_i32_0, %c0_i32_1 : i32, i32, i32
  }
  func.func @transform_19(%arg0: i32) -> (i32, i32, i32) {
    %c0_i32 = arith.constant 0 : i32
    %c0_i32_0 = arith.constant 0 : i32
    %c0_i32_1 = arith.constant 0 : i32
    %c0_i32_2 = arith.constant 0 : i32
    return %c0_i32, %c0_i32_0, %c0_i32_1 : i32, i32, i32
  }
  func.func @transform_20(%arg0: i32) -> (i32, i32, i32) {
    %c0_i32 = arith.constant 0 : i32
    %c0_i32_0 = arith.constant 0 : i32
    %c0_i32_1 = arith.constant 0 : i32
    %c0_i32_2 = arith.constant 0 : i32
    return %c0_i32, %c0_i32_0, %c0_i32_1 : i32, i32, i32
  }
  func.func @transform_21(%arg0: i32) -> (i32, i32, i32) {
    %c0_i32 = arith.constant 0 : i32
    %c0_i32_0 = arith.constant 0 : i32
    %c0_i32_1 = arith.constant 0 : i32
    %c0_i32_2 = arith.constant 0 : i32
    return %c0_i32, %c0_i32_0, %c0_i32_1 : i32, i32, i32
  }
  func.func @transform_22(%arg0: i32) -> (i32, i32, i32) {
    %c0_i32 = arith.constant 0 : i32
    %c0_i32_0 = arith.constant 0 : i32
    %c0_i32_1 = arith.constant 0 : i32
    %c0_i32_2 = arith.constant 0 : i32
    return %c0_i32, %c0_i32_0, %c0_i32_1 : i32, i32, i32
  }
  func.func @transform_23(%arg0: i32) -> (i32, i32, i32) {
    %c0_i32 = arith.constant 0 : i32
    %c0_i32_0 = arith.constant 0 : i32
    %c0_i32_1 = arith.constant 0 : i32
    %c0_i32_2 = arith.constant 0 : i32
    return %c0_i32, %c0_i32_0, %c0_i32_1 : i32, i32, i32
  }
  func.func @transform_24(%arg0: i32) -> (i32, i32, i32) {
    %c0_i32 = arith.constant 0 : i32
    %c0_i32_0 = arith.constant 0 : i32
    %c0_i32_1 = arith.constant 0 : i32
    %c0_i32_2 = arith.constant 0 : i32
    return %c0_i32, %c0_i32_0, %c0_i32_1 : i32, i32, i32
  }
  func.func @transform_25(%arg0: i32) -> (i32, i32, i32) {
    %c0_i32 = arith.constant 0 : i32
    %c0_i32_0 = arith.constant 0 : i32
    %c0_i32_1 = arith.constant 0 : i32
    %c0_i32_2 = arith.constant 0 : i32
    return %c0_i32, %c0_i32_0, %c0_i32_1 : i32, i32, i32
  }
  func.func @transform_26(%arg0: i32) -> (i32, i32, i32) {
    %c0_i32 = arith.constant 0 : i32
    %c0_i32_0 = arith.constant 0 : i32
    %c0_i32_1 = arith.constant 0 : i32
    %c0_i32_2 = arith.constant 0 : i32
    return %c0_i32, %c0_i32_0, %c0_i32_1 : i32, i32, i32
  }
  func.func @transform_27(%arg0: i32) -> (i32, i32, i32) {
    %c0_i32 = arith.constant 0 : i32
    %c0_i32_0 = arith.constant 0 : i32
    %c0_i32_1 = arith.constant 0 : i32
    %c0_i32_2 = arith.constant 0 : i32
    return %c0_i32, %c0_i32_0, %c0_i32_1 : i32, i32, i32
  }
  func.func @transform_28(%arg0: i32) -> (i32, i32, i32) {
    %c0_i32 = arith.constant 0 : i32
    %c0_i32_0 = arith.constant 0 : i32
    %c0_i32_1 = arith.constant 0 : i32
    %c0_i32_2 = arith.constant 0 : i32
    return %c0_i32, %c0_i32_0, %c0_i32_1 : i32, i32, i32
  }
  func.func @transform_29(%arg0: i32) -> (i32, i32) {
    %c0_i32 = arith.constant 0 : i32
    %c0_i32_0 = arith.constant 0 : i32
    %c0_i32_1 = arith.constant 0 : i32
    return %c0_i32, %c0_i32_0 : i32, i32
  }
  func.func @transform_30(%arg0: i32) -> (i32, i32, i32) {
    %c0_i32 = arith.constant 0 : i32
    %c0_i32_0 = arith.constant 0 : i32
    %c0_i32_1 = arith.constant 0 : i32
    return %arg0, %c0_i32, %c0_i32_0 : i32, i32, i32
  }
}

</mosaic_0001>

<llo_original>
// kernel: transformer_forward.1
$region0: #{transformer_forward.1}
  #allocation0 [shape = 'u32[]', space=smem, size = 0x4, offset = 0x4, fixed_abs, tag = 'smem constant byte address 0x4 - core index']
  #allocation1 [shape = 'u32[144,128]{1,0:T(1,128)}', space=vmem, size = 0x12000, scoped, tag = 'internal scratch']
  %s0 = inlined_call_operand.smem [shape: u32[31], index: -1, kind: input, shape index: {}]
  %s1 = sld [smem:[%s0]]
  %s2 = scalar_lea.smem %s0, 1
  %s3 = sld [smem:[%s2]]
  %s4 = scalar_lea.smem %s0, 2
  %s5 = sld [smem:[%s4]]
  %s6 = scalar_lea.smem %s0, 3
  %s7 = sld [smem:[%s6]]
  %s8 = scalar_lea.smem %s0, 4
  %s9 = sld [smem:[%s8]]
  %s10 = scalar_lea.smem %s0, 5
  %s11 = sld [smem:[%s10]]
  %s12 = scalar_lea.smem %s0, 6
  %s13 = sld [smem:[%s12]]
  %s14 = scalar_lea.smem %s0, 7
  %s15 = sld [smem:[%s14]]
  %s16 = scalar_lea.smem %s0, 8
  %s17 = sld [smem:[%s16]]
  %s18 = scalar_lea.smem %s0, 9
  %s19 = sld [smem:[%s18]]
  %s20 = scalar_lea.smem %s0, 10
  %s21 = sld [smem:[%s20]]
  %s22 = scalar_lea.smem %s0, 11
  %s23 = sld [smem:[%s22]]
  %s24 = scalar_lea.smem %s0, 12
  %s25 = sld [smem:[%s24]]
  %s26 = scalar_lea.smem %s0, 13
  %s27 = sld [smem:[%s26]]
  %s28 = scalar_lea.smem %s0, 14
  %s29 = sld [smem:[%s28]]
  %s30 = scalar_lea.smem %s0, 15
  %s31 = sld [smem:[%s30]]
  %s32 = scalar_lea.smem %s0, 16
  %s33 = sld [smem:[%s32]]
  %s34 = scalar_lea.smem %s0, 17
  %s35 = sld [smem:[%s34]]
  %s36 = scalar_lea.smem %s0, 18
  %s37 = sld [smem:[%s36]]
  %s38 = scalar_lea.smem %s0, 19
  %s39 = sld [smem:[%s38]]
  %s40 = scalar_lea.smem %s0, 20
  %s41 = sld [smem:[%s40]]
  %s42 = scalar_lea.smem %s0, 21
  %s43 = sld [smem:[%s42]]
  %s44 = scalar_lea.smem %s0, 22
  %s45 = sld [smem:[%s44]]
  %s46 = scalar_lea.smem %s0, 23
  %s47 = sld [smem:[%s46]]
  %s48 = scalar_lea.smem %s0, 24
  %s49 = sld [smem:[%s48]]
  %s50 = scalar_lea.smem %s0, 25
  %s51 = sld [smem:[%s50]]
  %s52 = scalar_lea.smem %s0, 26
  %s53 = sld [smem:[%s52]]
  %s54 = scalar_lea.smem %s0, 27
  %s55 = sld [smem:[%s54]]
  %s56 = scalar_lea.smem %s0, 28
  %s57 = sld [smem:[%s56]]
  %s58 = scalar_lea.smem %s0, 29
  %s59 = sld [smem:[%s58]]
  %s60 = scalar_lea.smem %s0, 30
  %s61 = sld [smem:[%s60]]
  %s62 = sld [smem:[#allocation0]]
  $region153: #{transformer_forward.1} parent=0
    _
  %s64 = ssub.s32 1, %s62
  %s65 = scalar_select 0, %s64, %s62
  $region1: #{transformer_forward.1} parent=0
    #allocation2 [shape = 'u8[8192]{0}', space=vmem, size = 0x2000, scoped, tag = 'output window, operand 0']
    #allocation3 [shape = 's32[2]{0}', space=sflag, size = 0x8, scoped, tag = 'scoped memory for transformer_forward.1']
    %66 = vsyncpa [#allocation3], 0
    %s67 = scalar_lea.sflag [#allocation3], 1
    %68 = vsyncpa %s67, 0
    loop: start=0, step=1, limit=4
    $region2: #{transformer_forward.1} parent=1 // loop_pre_header
      _
    $region3: #{transformer_forward.1} parent=1 // loop_header
      %s70 = sphi 0, %s74
      %p71 = scmp.ge.s32.totalorder %s70, 4
      %s80 = sphi 0, %s82
      %s83 = sphi 0, %s80
      %s84 = sphi 0, %s83
      %s100 = sphi 0, %s84
      %s106 = sphi 0, %s108
      %s109 = sphi 0, %s106
      %s110 = sphi 0, %s109
      %s126 = sphi 0, %s110
      %s132 = sphi 0, %s134
      %s135 = sphi 0, %s132
      %s136 = sphi 0, %s135
      %s152 = sphi 0, %s136
      %s158 = sphi 0, %s160
      %s161 = sphi 0, %s158
      %s162 = sphi 0, %s161
      %s178 = sphi 0, %s162
      %s182 = sphi 0, %s182
      %s184 = sphi 0, %s182
      %s185 = sphi 0, %s184
      %s199 = sphi 0, %s185
      %s203 = sphi 0, %s203
      %s205 = sphi 0, %s203
      %s206 = sphi 0, %s205
      %s220 = sphi 0, %s206
      %s224 = sphi 0, %s224
      %s226 = sphi 0, %s224
      %s227 = sphi 0, %s226
      %s241 = sphi 0, %s227
      %s245 = sphi 0, %s245
      %s247 = sphi 0, %s245
      %s248 = sphi 0, %s247
      %s262 = sphi 0, %s248
      %s266 = sphi 0, %s266
      %s268 = sphi 0, %s266
      %s269 = sphi 0, %s268
      %s283 = sphi 0, %s269
      %s287 = sphi 0, %s287
      %s289 = sphi 0, %s287
      %s290 = sphi 0, %s289
      %s304 = sphi 0, %s290
      %s308 = sphi 0, %s308
      %s310 = sphi 0, %s308
      %s311 = sphi 0, %s310
      %s325 = sphi 0, %s311
      %s329 = sphi 0, %s329
      %s331 = sphi 0, %s329
      %s332 = sphi 0, %s331
      %s346 = sphi 0, %s332
      %s350 = sphi 0, %s350
      %s352 = sphi 0, %s350
      %s353 = sphi 0, %s352
      %s367 = sphi 0, %s353
      %s371 = sphi 0, %s371
      %s373 = sphi 0, %s371
      %s374 = sphi 0, %s373
      %s388 = sphi 0, %s374
      %s392 = sphi 0, %s392
      %s394 = sphi 0, %s392
      %s395 = sphi 0, %s394
      %s409 = sphi 0, %s395
      %s413 = sphi 0, %s413
      %s415 = sphi 0, %s413
      %s416 = sphi 0, %s415
      %s430 = sphi 0, %s416
      %s434 = sphi 0, %s434
      %s436 = sphi 0, %s434
      %s437 = sphi 0, %s436
      %s451 = sphi 0, %s437
      %s455 = sphi 0, %s455
      %s457 = sphi 0, %s455
      %s458 = sphi 0, %s457
      %s472 = sphi 0, %s458
      %s476 = sphi 0, %s476
      %s478 = sphi 0, %s476
      %s479 = sphi 0, %s478
      %s493 = sphi 0, %s479
      %s497 = sphi 0, %s497
      %s499 = sphi 0, %s497
      %s500 = sphi 0, %s499
      %s514 = sphi 0, %s500
      %s518 = sphi 0, %s518
      %s520 = sphi 0, %s518
      %s521 = sphi 0, %s520
      %s535 = sphi 0, %s521
      %s539 = sphi 0, %s539
      %s541 = sphi 0, %s539
      %s542 = sphi 0, %s541
      %s556 = sphi 0, %s542
      %s560 = sphi 0, %s560
      %s562 = sphi 0, %s560
      %s563 = sphi 0, %s562
      %s577 = sphi 0, %s563
      %s581 = sphi 0, %s581
      %s583 = sphi 0, %s581
      %s584 = sphi 0, %s583
      %s598 = sphi 0, %s584
      %s602 = sphi 0, %s602
      %s604 = sphi 0, %s602
      %s605 = sphi 0, %s604
      %s619 = sphi 0, %s605
      %s623 = sphi 0, %s623
      %s625 = sphi 0, %s623
      %s626 = sphi 0, %s625
      %s640 = sphi 0, %s626
      %s644 = sphi 0, %s644
      %s646 = sphi 0, %s644
      %s647 = sphi 0, %s646
      %s661 = sphi 0, %s647
      %s665 = sphi 0, %s665
      %s667 = sphi 0, %s665
      %s668 = sphi 0, %s667
      %s682 = sphi 0, %s668
      %s686 = sphi 0, %s686
      %s688 = sphi 0, %s686
      %s689 = sphi 0, %s688
      %s703 = sphi 0, %s689
      %s707 = sphi 0, %s707
      %s709 = sphi 0, %s707
      %s710 = sphi 0, %s709
      %s724 = sphi 0, %s710
      %s730 = sphi 0, %s732
      %s733 = sphi 0, %s730
      %s734 = sphi 0, %s733
      %s750 = sphi 0, %s734
    $region4: #{transformer_forward.1} parent=1 // loop_header_branch
      %73 = sbr.rel (%p71) target = $region8
    $region5: #{transformer_forward.1} parent=1 // loop_body
      %s75 = ssub.s32 %s70, 1
      %s76 = ssub.s32 %s70, 2
      %s77 = sadd.s32 %s70, 1
      %s78 = ssub.s32 %s70, %s77
      %p79 = scmp.eq.s32.totalorder %s78, 0
      %s81 = sadd.s32 %s80, 1
      %s82 = scalar_select %p79, %s80, %s81
      %p85 = pneg %p79
      %p86 = scmp.eq.s32.totalorder %s70, 1
      %p87 = por %p85, %p86
      %p88 = scmp.ne.s32.totalorder %s80, %s83
      %p89 = scmp.eq.s32.totalorder %s70, 0
      %p90 = por %p88, %p89
      %p91 = scmp.ne.s32.totalorder %s80, %s83
      %p92 = scmp.eq.s32.totalorder %s75, 1
      %p93 = por %p91, %p92
      %p94 = scmp.ne.s32.totalorder %s83, %s84
      %p95 = scmp.eq.s32.totalorder %s75, 0
      %p96 = por %p94, %p95
      %p97 = scmp.ne.s32.totalorder %s83, %s84
      %p98 = scmp.eq.s32.totalorder %s76, 1
      %p99 = por %p97, %p98
      %p101 = scmp.ne.s32.totalorder %s84, %s100
      %p102 = scmp.eq.s32.totalorder %s76, 0
      %p103 = por %p101, %p102
      %s104 = ssub.s32 %s70, %s77
      %p105 = scmp.eq.s32.totalorder %s104, 0
      %s107 = sadd.s32 %s106, 1
      %s108 = scalar_select %p105, %s106, %s107
      %p111 = pneg %p105
      %p112 = scmp.eq.s32.totalorder %s70, 1
      %p113 = por %p111, %p112
      %p114 = scmp.ne.s32.totalorder %s106, %s109
      %p115 = scmp.eq.s32.totalorder %s70, 0
      %p116 = por %p114, %p115
      %p117 = scmp.ne.s32.totalorder %s106, %s109
      %p118 = scmp.eq.s32.totalorder %s75, 1
      %p119 = por %p117, %p118
      %p120 = scmp.ne.s32.totalorder %s109, %s110
      %p121 = scmp.eq.s32.totalorder %s75, 0
      %p122 = por %p120, %p121
      %p123 = scmp.ne.s32.totalorder %s109, %s110
      %p124 = scmp.eq.s32.totalorder %s76, 1
      %p125 = por %p123, %p124
      %p127 = scmp.ne.s32.totalorder %s110, %s126
      %p128 = scmp.eq.s32.totalorder %s76, 0
      %p129 = por %p127, %p128
      %s130 = ssub.s32 %s70, %s77
      %p131 = scmp.eq.s32.totalorder %s130, 0
      %s133 = sadd.s32 %s132, 1
      %s134 = scalar_select %p131, %s132, %s133
      %p137 = pneg %p131
      %p138 = scmp.eq.s32.totalorder %s70, 1
      %p139 = por %p137, %p138
      %p140 = scmp.ne.s32.totalorder %s132, %s135
      %p141 = scmp.eq.s32.totalorder %s70, 0
      %p142 = por %p140, %p141
      %p143 = scmp.ne.s32.totalorder %s132, %s135
      %p144 = scmp.eq.s32.totalorder %s75, 1
      %p145 = por %p143, %p144
      %p146 = scmp.ne.s32.totalorder %s135, %s136
      %p147 = scmp.eq.s32.totalorder %s75, 0
      %p148 = por %p146, %p147
      %p149 = scmp.ne.s32.totalorder %s135, %s136
      %p150 = scmp.eq.s32.totalorder %s76, 1
      %p151 = por %p149, %p150
      %p153 = scmp.ne.s32.totalorder %s136, %s152
      %p154 = scmp.eq.s32.totalorder %s76, 0
      %p155 = por %p153, %p154
      %s156 = ssub.s32 %s70, %s77
      %p157 = scmp.eq.s32.totalorder %s156, 0
      %s159 = sadd.s32 %s158, 1
      %s160 = scalar_select %p157, %s158, %s159
      %p163 = pneg %p157
      %p164 = scmp.eq.s32.totalorder %s70, 1
      %p165 = por %p163, %p164
      %p166 = scmp.ne.s32.totalorder %s158, %s161
      %p167 = scmp.eq.s32.totalorder %s70, 0
      %p168 = por %p166, %p167
      %p169 = scmp.ne.s32.totalorder %s158, %s161
      %p170 = scmp.eq.s32.totalorder %s75, 1
      %p171 = por %p169, %p170
      %p172 = scmp.ne.s32.totalorder %s161, %s162
      %p173 = scmp.eq.s32.totalorder %s75, 0
      %p174 = por %p172, %p173
      %p175 = scmp.ne.s32.totalorder %s161, %s162
      %p176 = scmp.eq.s32.totalorder %s76, 1
      %p177 = por %p175, %p176
      %p179 = scmp.ne.s32.totalorder %s162, %s178
      %p180 = scmp.eq.s32.totalorder %s76, 0
      %p181 = por %p179, %p180
      %s183 = sadd.s32 %s182, 1
      %p186 = scmp.eq.s32.totalorder %s70, 1
      %p187 = scmp.ne.s32.totalorder %s182, %s184
      %p188 = scmp.eq.s32.totalorder %s70, 0
      %p189 = por %p187, %p188
      %p190 = scmp.ne.s32.totalorder %s182, %s184
      %p191 = scmp.eq.s32.totalorder %s75, 1
      %p192 = por %p190, %p191
      %p193 = scmp.ne.s32.totalorder %s184, %s185
      %p194 = scmp.eq.s32.totalorder %s75, 0
      %p195 = por %p193, %p194
      %p196 = scmp.ne.s32.totalorder %s184, %s185
      %p197 = scmp.eq.s32.totalorder %s76, 1
      %p198 = por %p196, %p197
      %p200 = scmp.ne.s32.totalorder %s185, %s199
      %p201 = scmp.eq.s32.totalorder %s76, 0
      %p202 = por %p200, %p201
      %s204 = sadd.s32 %s203, 1
      %p207 = scmp.eq.s32.totalorder %s70, 1
      %p208 = scmp.ne.s32.totalorder %s203, %s205
      %p209 = scmp.eq.s32.totalorder %s70, 0
      %p210 = por %p208, %p209
      %p211 = scmp.ne.s32.totalorder %s203, %s205
      %p212 = scmp.eq.s32.totalorder %s75, 1
      %p213 = por %p211, %p212
      %p214 = scmp.ne.s32.totalorder %s205, %s206
      %p215 = scmp.eq.s32.totalorder %s75, 0
      %p216 = por %p214, %p215
      %p217 = scmp.ne.s32.totalorder %s205, %s206
      %p218 = scmp.eq.s32.totalorder %s76, 1
      %p219 = por %p217, %p218
      %p221 = scmp.ne.s32.totalorder %s206, %s220
      %p222 = scmp.eq.s32.totalorder %s76, 0
      %p223 = por %p221, %p222
      %s225 = sadd.s32 %s224, 1
      %p228 = scmp.eq.s32.totalorder %s70, 1
      %p229 = scmp.ne.s32.totalorder %s224, %s226
      %p230 = scmp.eq.s32.totalorder %s70, 0
      %p231 = por %p229, %p230
      %p232 = scmp.ne.s32.totalorder %s224, %s226
      %p233 = scmp.eq.s32.totalorder %s75, 1
      %p234 = por %p232, %p233
      %p235 = scmp.ne.s32.totalorder %s226, %s227
      %p236 = scmp.eq.s32.totalorder %s75, 0
      %p237 = por %p235, %p236
      %p238 = scmp.ne.s32.totalorder %s226, %s227
      %p239 = scmp.eq.s32.totalorder %s76, 1
      %p240 = por %p238, %p239
      %p242 = scmp.ne.s32.totalorder %s227, %s241
      %p243 = scmp.eq.s32.totalorder %s76, 0
      %p244 = por %p242, %p243
      %s246 = sadd.s32 %s245, 1
      %p249 = scmp.eq.s32.totalorder %s70, 1
      %p250 = scmp.ne.s32.totalorder %s245, %s247
      %p251 = scmp.eq.s32.totalorder %s70, 0
      %p252 = por %p250, %p251
      %p253 = scmp.ne.s32.totalorder %s245, %s247
      %p254 = scmp.eq.s32.totalorder %s75, 1
      %p255 = por %p253, %p254
      %p256 = scmp.ne.s32.totalorder %s247, %s248
      %p257 = scmp.eq.s32.totalorder %s75, 0
      %p258 = por %p256, %p257
      %p259 = scmp.ne.s32.totalorder %s247, %s248
      %p260 = scmp.eq.s32.totalorder %s76, 1
      %p261 = por %p259, %p260
      %p263 = scmp.ne.s32.totalorder %s248, %s262
      %p264 = scmp.eq.s32.totalorder %s76, 0
      %p265 = por %p263, %p264
      %s267 = sadd.s32 %s266, 1
      %p270 = scmp.eq.s32.totalorder %s70, 1
      %p271 = scmp.ne.s32.totalorder %s266, %s268
      %p272 = scmp.eq.s32.totalorder %s70, 0
      %p273 = por %p271, %p272
      %p274 = scmp.ne.s32.totalorder %s266, %s268
      %p275 = scmp.eq.s32.totalorder %s75, 1
      %p276 = por %p274, %p275
      %p277 = scmp.ne.s32.totalorder %s268, %s269
      %p278 = scmp.eq.s32.totalorder %s75, 0
      %p279 = por %p277, %p278
      %p280 = scmp.ne.s32.totalorder %s268, %s269
      %p281 = scmp.eq.s32.totalorder %s76, 1
      %p282 = por %p280, %p281
      %p284 = scmp.ne.s32.totalorder %s269, %s283
      %p285 = scmp.eq.s32.totalorder %s76, 0
      %p286 = por %p284, %p285
      %s288 = sadd.s32 %s287, 1
      %p291 = scmp.eq.s32.totalorder %s70, 1
      %p292 = scmp.ne.s32.totalorder %s287, %s289
      %p293 = scmp.eq.s32.totalorder %s70, 0
      %p294 = por %p292, %p293
      %p295 = scmp.ne.s32.totalorder %s287, %s289
      %p296 = scmp.eq.s32.totalorder %s75, 1
      %p297 = por %p295, %p296
      %p298 = scmp.ne.s32.totalorder %s289, %s290
      %p299 = scmp.eq.s32.totalorder %s75, 0
      %p300 = por %p298, %p299
      %p301 = scmp.ne.s32.totalorder %s289, %s290
      %p302 = scmp.eq.s32.totalorder %s76, 1
      %p303 = por %p301, %p302
      %p305 = scmp.ne.s32.totalorder %s290, %s304
      %p306 = scmp.eq.s32.totalorder %s76, 0
      %p307 = por %p305, %p306
      %s309 = sadd.s32 %s308, 1
      %p312 = scmp.eq.s32.totalorder %s70, 1
      %p313 = scmp.ne.s32.totalorder %s308, %s310
      %p314 = scmp.eq.s32.totalorder %s70, 0
      %p315 = por %p313, %p314
      %p316 = scmp.ne.s32.totalorder %s308, %s310
      %p317 = scmp.eq.s32.totalorder %s75, 1
      %p318 = por %p316, %p317
      %p319 = scmp.ne.s32.totalorder %s310, %s311
      %p320 = scmp.eq.s32.totalorder %s75, 0
      %p321 = por %p319, %p320
      %p322 = scmp.ne.s32.totalorder %s310, %s311
      %p323 = scmp.eq.s32.totalorder %s76, 1
      %p324 = por %p322, %p323
      %p326 = scmp.ne.s32.totalorder %s311, %s325
      %p327 = scmp.eq.s32.totalorder %s76, 0
      %p328 = por %p326, %p327
      %s330 = sadd.s32 %s329, 1
      %p333 = scmp.eq.s32.totalorder %s70, 1
      %p334 = scmp.ne.s32.totalorder %s329, %s331
      %p335 = scmp.eq.s32.totalorder %s70, 0
      %p336 = por %p334, %p335
      %p337 = scmp.ne.s32.totalorder %s329, %s331
      %p338 = scmp.eq.s32.totalorder %s75, 1
      %p339 = por %p337, %p338
      %p340 = scmp.ne.s32.totalorder %s331, %s332
      %p341 = scmp.eq.s32.totalorder %s75, 0
      %p342 = por %p340, %p341
      %p343 = scmp.ne.s32.totalorder %s331, %s332
      %p344 = scmp.eq.s32.totalorder %s76, 1
      %p345 = por %p343, %p344
      %p347 = scmp.ne.s32.totalorder %s332, %s346
      %p348 = scmp.eq.s32.totalorder %s76, 0
      %p349 = por %p347, %p348
      %s351 = sadd.s32 %s350, 1
      %p354 = scmp.eq.s32.totalorder %s70, 1
      %p355 = scmp.ne.s32.totalorder %s350, %s352
      %p356 = scmp.eq.s32.totalorder %s70, 0
      %p357 = por %p355, %p356
      %p358 = scmp.ne.s32.totalorder %s350, %s352
      %p359 = scmp.eq.s32.totalorder %s75, 1
      %p360 = por %p358, %p359
      %p361 = scmp.ne.s32.totalorder %s352, %s353
      %p362 = scmp.eq.s32.totalorder %s75, 0
      %p363 = por %p361, %p362
      %p364 = scmp.ne.s32.totalorder %s352, %s353
      %p365 = scmp.eq.s32.totalorder %s76, 1
      %p366 = por %p364, %p365
      %p368 = scmp.ne.s32.totalorder %s353, %s367
      %p369 = scmp.eq.s32.totalorder %s76, 0
      %p370 = por %p368, %p369
      %s372 = sadd.s32 %s371, 1
      %p375 = scmp.eq.s32.totalorder %s70, 1
      %p376 = scmp.ne.s32.totalorder %s371, %s373
      %p377 = scmp.eq.s32.totalorder %s70, 0
      %p378 = por %p376, %p377
      %p379 = scmp.ne.s32.totalorder %s371, %s373
      %p380 = scmp.eq.s32.totalorder %s75, 1
      %p381 = por %p379, %p380
      %p382 = scmp.ne.s32.totalorder %s373, %s374
      %p383 = scmp.eq.s32.totalorder %s75, 0
      %p384 = por %p382, %p383
      %p385 = scmp.ne.s32.totalorder %s373, %s374
      %p386 = scmp.eq.s32.totalorder %s76, 1
      %p387 = por %p385, %p386
      %p389 = scmp.ne.s32.totalorder %s374, %s388
      %p390 = scmp.eq.s32.totalorder %s76, 0
      %p391 = por %p389, %p390
      %s393 = sadd.s32 %s392, 1
      %p396 = scmp.eq.s32.totalorder %s70, 1
      %p397 = scmp.ne.s32.totalorder %s392, %s394
      %p398 = scmp.eq.s32.totalorder %s70, 0
      %p399 = por %p397, %p398
      %p400 = scmp.ne.s32.totalorder %s392, %s394
      %p401 = scmp.eq.s32.totalorder %s75, 1
      %p402 = por %p400, %p401
      %p403 = scmp.ne.s32.totalorder %s394, %s395
      %p404 = scmp.eq.s32.totalorder %s75, 0
      %p405 = por %p403, %p404
      %p406 = scmp.ne.s32.totalorder %s394, %s395
      %p407 = scmp.eq.s32.totalorder %s76, 1
      %p408 = por %p406, %p407
      %p410 = scmp.ne.s32.totalorder %s395, %s409
      %p411 = scmp.eq.s32.totalorder %s76, 0
      %p412 = por %p410, %p411
      %s414 = sadd.s32 %s413, 1
      %p417 = scmp.eq.s32.totalorder %s70, 1
      %p418 = scmp.ne.s32.totalorder %s413, %s415
      %p419 = scmp.eq.s32.totalorder %s70, 0
      %p420 = por %p418, %p419
      %p421 = scmp.ne.s32.totalorder %s413, %s415
      %p422 = scmp.eq.s32.totalorder %s75, 1
      %p423 = por %p421, %p422
      %p424 = scmp.ne.s32.totalorder %s415, %s416
      %p425 = scmp.eq.s32.totalorder %s75, 0
      %p426 = por %p424, %p425
      %p427 = scmp.ne.s32.totalorder %s415, %s416
      %p428 = scmp.eq.s32.totalorder %s76, 1
      %p429 = por %p427, %p428
      %p431 = scmp.ne.s32.totalorder %s416, %s430
      %p432 = scmp.eq.s32.totalorder %s76, 0
      %p433 = por %p431, %p432
      %s435 = sadd.s32 %s434, 1
      %p438 = scmp.eq.s32.totalorder %s70, 1
      %p439 = scmp.ne.s32.totalorder %s434, %s436
      %p440 = scmp.eq.s32.totalorder %s70, 0
      %p441 = por %p439, %p440
      %p442 = scmp.ne.s32.totalorder %s434, %s436
      %p443 = scmp.eq.s32.totalorder %s75, 1
      %p444 = por %p442, %p443
      %p445 = scmp.ne.s32.totalorder %s436, %s437
      %p446 = scmp.eq.s32.totalorder %s75, 0
      %p447 = por %p445, %p446
      %p448 = scmp.ne.s32.totalorder %s436, %s437
      %p449 = scmp.eq.s32.totalorder %s76, 1
      %p450 = por %p448, %p449
      %p452 = scmp.ne.s32.totalorder %s437, %s451
      %p453 = scmp.eq.s32.totalorder %s76, 0
      %p454 = por %p452, %p453
      %s456 = sadd.s32 %s455, 1
      %p459 = scmp.eq.s32.totalorder %s70, 1
      %p460 = scmp.ne.s32.totalorder %s455, %s457
      %p461 = scmp.eq.s32.totalorder %s70, 0
      %p462 = por %p460, %p461
      %p463 = scmp.ne.s32.totalorder %s455, %s457
      %p464 = scmp.eq.s32.totalorder %s75, 1
      %p465 = por %p463, %p464
      %p466 = scmp.ne.s32.totalorder %s457, %s458
      %p467 = scmp.eq.s32.totalorder %s75, 0
      %p468 = por %p466, %p467
      %p469 = scmp.ne.s32.totalorder %s457, %s458
      %p470 = scmp.eq.s32.totalorder %s76, 1
      %p471 = por %p469, %p470
      %p473 = scmp.ne.s32.totalorder %s458, %s472
      %p474 = scmp.eq.s32.totalorder %s76, 0
      %p475 = por %p473, %p474
      %s477 = sadd.s32 %s476, 1
      %p480 = scmp.eq.s32.totalorder %s70, 1
      %p481 = scmp.ne.s32.totalorder %s476, %s478
      %p482 = scmp.eq.s32.totalorder %s70, 0
      %p483 = por %p481, %p482
      %p484 = scmp.ne.s32.totalorder %s476, %s478
      %p485 = scmp.eq.s32.totalorder %s75, 1
      %p486 = por %p484, %p485
      %p487 = scmp.ne.s32.totalorder %s478, %s479
      %p488 = scmp.eq.s32.totalorder %s75, 0
      %p489 = por %p487, %p488
      %p490 = scmp.ne.s32.totalorder %s478, %s479
      %p491 = scmp.eq.s32.totalorder %s76, 1
      %p492 = por %p490, %p491
      %p494 = scmp.ne.s32.totalorder %s479, %s493
      %p495 = scmp.eq.s32.totalorder %s76, 0
      %p496 = por %p494, %p495
      %s498 = sadd.s32 %s497, 1
      %p501 = scmp.eq.s32.totalorder %s70, 1
      %p502 = scmp.ne.s32.totalorder %s497, %s499
      %p503 = scmp.eq.s32.totalorder %s70, 0
      %p504 = por %p502, %p503
      %p505 = scmp.ne.s32.totalorder %s497, %s499
      %p506 = scmp.eq.s32.totalorder %s75, 1
      %p507 = por %p505, %p506
      %p508 = scmp.ne.s32.totalorder %s499, %s500
      %p509 = scmp.eq.s32.totalorder %s75, 0
      %p510 = por %p508, %p509
      %p511 = scmp.ne.s32.totalorder %s499, %s500
      %p512 = scmp.eq.s32.totalorder %s76, 1
      %p513 = por %p511, %p512
      %p515 = scmp.ne.s32.totalorder %s500, %s514
      %p516 = scmp.eq.s32.totalorder %s76, 0
      %p517 = por %p515, %p516
      %s519 = sadd.s32 %s518, 1
      %p522 = scmp.eq.s32.totalorder %s70, 1
      %p523 = scmp.ne.s32.totalorder %s518, %s520
      %p524 = scmp.eq.s32.totalorder %s70, 0
      %p525 = por %p523, %p524
      %p526 = scmp.ne.s32.totalorder %s518, %s520
      %p527 = scmp.eq.s32.totalorder %s75, 1
      %p528 = por %p526, %p527
      %p529 = scmp.ne.s32.totalorder %s520, %s521
      %p530 = scmp.eq.s32.totalorder %s75, 0
      %p531 = por %p529, %p530
      %p532 = scmp.ne.s32.totalorder %s520, %s521
      %p533 = scmp.eq.s32.totalorder %s76, 1
      %p534 = por %p532, %p533
      %p536 = scmp.ne.s32.totalorder %s521, %s535
      %p537 = scmp.eq.s32.totalorder %s76, 0
      %p538 = por %p536, %p537
      %s540 = sadd.s32 %s539, 1
      %p543 = scmp.eq.s32.totalorder %s70, 1
      %p544 = scmp.ne.s32.totalorder %s539, %s541
      %p545 = scmp.eq.s32.totalorder %s70, 0
      %p546 = por %p544, %p545
      %p547 = scmp.ne.s32.totalorder %s539, %s541
      %p548 = scmp.eq.s32.totalorder %s75, 1
      %p549 = por %p547, %p548
      %p550 = scmp.ne.s32.totalorder %s541, %s542
      %p551 = scmp.eq.s32.totalorder %s75, 0
      %p552 = por %p550, %p551
      %p553 = scmp.ne.s32.totalorder %s541, %s542
      %p554 = scmp.eq.s32.totalorder %s76, 1
      %p555 = por %p553, %p554
      %p557 = scmp.ne.s32.totalorder %s542, %s556
      %p558 = scmp.eq.s32.totalorder %s76, 0
      %p559 = por %p557, %p558
      %s561 = sadd.s32 %s560, 1
      %p564 = scmp.eq.s32.totalorder %s70, 1
      %p565 = scmp.ne.s32.totalorder %s560, %s562
      %p566 = scmp.eq.s32.totalorder %s70, 0
      %p567 = por %p565, %p566
      %p568 = scmp.ne.s32.totalorder %s560, %s562
      %p569 = scmp.eq.s32.totalorder %s75, 1
      %p570 = por %p568, %p569
      %p571 = scmp.ne.s32.totalorder %s562, %s563
      %p572 = scmp.eq.s32.totalorder %s75, 0
      %p573 = por %p571, %p572
      %p574 = scmp.ne.s32.totalorder %s562, %s563
      %p575 = scmp.eq.s32.totalorder %s76, 1
      %p576 = por %p574, %p575
      %p578 = scmp.ne.s32.totalorder %s563, %s577
      %p579 = scmp.eq.s32.totalorder %s76, 0
      %p580 = por %p578, %p579
      %s582 = sadd.s32 %s581, 1
      %p585 = scmp.eq.s32.totalorder %s70, 1
      %p586 = scmp.ne.s32.totalorder %s581, %s583
      %p587 = scmp.eq.s32.totalorder %s70, 0
      %p588 = por %p586, %p587
      %p589 = scmp.ne.s32.totalorder %s581, %s583
      %p590 = scmp.eq.s32.totalorder %s75, 1
      %p591 = por %p589, %p590
      %p592 = scmp.ne.s32.totalorder %s583, %s584
      %p593 = scmp.eq.s32.totalorder %s75, 0
      %p594 = por %p592, %p593
      %p595 = scmp.ne.s32.totalorder %s583, %s584
      %p596 = scmp.eq.s32.totalorder %s76, 1
      %p597 = por %p595, %p596
      %p599 = scmp.ne.s32.totalorder %s584, %s598
      %p600 = scmp.eq.s32.totalorder %s76, 0
      %p601 = por %p599, %p600
      %s603 = sadd.s32 %s602, 1
      %p606 = scmp.eq.s32.totalorder %s70, 1
      %p607 = scmp.ne.s32.totalorder %s602, %s604
      %p608 = scmp.eq.s32.totalorder %s70, 0
      %p609 = por %p607, %p608
      %p610 = scmp.ne.s32.totalorder %s602, %s604
      %p611 = scmp.eq.s32.totalorder %s75, 1
      %p612 = por %p610, %p611
      %p613 = scmp.ne.s32.totalorder %s604, %s605
      %p614 = scmp.eq.s32.totalorder %s75, 0
      %p615 = por %p613, %p614
      %p616 = scmp.ne.s32.totalorder %s604, %s605
      %p617 = scmp.eq.s32.totalorder %s76, 1
      %p618 = por %p616, %p617
      %p620 = scmp.ne.s32.totalorder %s605, %s619
      %p621 = scmp.eq.s32.totalorder %s76, 0
      %p622 = por %p620, %p621
      %s624 = sadd.s32 %s623, 1
      %p627 = scmp.eq.s32.totalorder %s70, 1
      %p628 = scmp.ne.s32.totalorder %s623, %s625
      %p629 = scmp.eq.s32.totalorder %s70, 0
      %p630 = por %p628, %p629
      %p631 = scmp.ne.s32.totalorder %s623, %s625
      %p632 = scmp.eq.s32.totalorder %s75, 1
      %p633 = por %p631, %p632
      %p634 = scmp.ne.s32.totalorder %s625, %s626
      %p635 = scmp.eq.s32.totalorder %s75, 0
      %p636 = por %p634, %p635
      %p637 = scmp.ne.s32.totalorder %s625, %s626
      %p638 = scmp.eq.s32.totalorder %s76, 1
      %p639 = por %p637, %p638
      %p641 = scmp.ne.s32.totalorder %s626, %s640
      %p642 = scmp.eq.s32.totalorder %s76, 0
      %p643 = por %p641, %p642
      %s645 = sadd.s32 %s644, 1
      %p648 = scmp.eq.s32.totalorder %s70, 1
      %p649 = scmp.ne.s32.totalorder %s644, %s646
      %p650 = scmp.eq.s32.totalorder %s70, 0
      %p651 = por %p649, %p650
      %p652 = scmp.ne.s32.totalorder %s644, %s646
      %p653 = scmp.eq.s32.totalorder %s75, 1
      %p654 = por %p652, %p653
      %p655 = scmp.ne.s32.totalorder %s646, %s647
      %p656 = scmp.eq.s32.totalorder %s75, 0
      %p657 = por %p655, %p656
      %p658 = scmp.ne.s32.totalorder %s646, %s647
      %p659 = scmp.eq.s32.totalorder %s76, 1
      %p660 = por %p658, %p659
      %p662 = scmp.ne.s32.totalorder %s647, %s661
      %p663 = scmp.eq.s32.totalorder %s76, 0
      %p664 = por %p662, %p663
      %s666 = sadd.s32 %s665, 1
      %p669 = scmp.eq.s32.totalorder %s70, 1
      %p670 = scmp.ne.s32.totalorder %s665, %s667
      %p671 = scmp.eq.s32.totalorder %s70, 0
      %p672 = por %p670, %p671
      %p673 = scmp.ne.s32.totalorder %s665, %s667
      %p674 = scmp.eq.s32.totalorder %s75, 1
      %p675 = por %p673, %p674
      %p676 = scmp.ne.s32.totalorder %s667, %s668
      %p677 = scmp.eq.s32.totalorder %s75, 0
      %p678 = por %p676, %p677
      %p679 = scmp.ne.s32.totalorder %s667, %s668
      %p680 = scmp.eq.s32.totalorder %s76, 1
      %p681 = por %p679, %p680
      %p683 = scmp.ne.s32.totalorder %s668, %s682
      %p684 = scmp.eq.s32.totalorder %s76, 0
      %p685 = por %p683, %p684
      %s687 = sadd.s32 %s686, 1
      %p690 = scmp.eq.s32.totalorder %s70, 1
      %p691 = scmp.ne.s32.totalorder %s686, %s688
      %p692 = scmp.eq.s32.totalorder %s70, 0
      %p693 = por %p691, %p692
      %p694 = scmp.ne.s32.totalorder %s686, %s688
      %p695 = scmp.eq.s32.totalorder %s75, 1
      %p696 = por %p694, %p695
      %p697 = scmp.ne.s32.totalorder %s688, %s689
      %p698 = scmp.eq.s32.totalorder %s75, 0
      %p699 = por %p697, %p698
      %p700 = scmp.ne.s32.totalorder %s688, %s689
      %p701 = scmp.eq.s32.totalorder %s76, 1
      %p702 = por %p700, %p701
      %p704 = scmp.ne.s32.totalorder %s689, %s703
      %p705 = scmp.eq.s32.totalorder %s76, 0
      %p706 = por %p704, %p705
      %s708 = sadd.s32 %s707, 1
      %p711 = scmp.eq.s32.totalorder %s70, 1
      %p712 = scmp.ne.s32.totalorder %s707, %s709
      %p713 = scmp.eq.s32.totalorder %s70, 0
      %p714 = por %p712, %p713
      %p715 = scmp.ne.s32.totalorder %s707, %s709
      %p716 = scmp.eq.s32.totalorder %s75, 1
      %p717 = por %p715, %p716
      %p718 = scmp.ne.s32.totalorder %s709, %s710
      %p719 = scmp.eq.s32.totalorder %s75, 0
      %p720 = por %p718, %p719
      %p721 = scmp.ne.s32.totalorder %s709, %s710
      %p722 = scmp.eq.s32.totalorder %s76, 1
      %p723 = por %p721, %p722
      %p725 = scmp.ne.s32.totalorder %s710, %s724
      %p726 = scmp.eq.s32.totalorder %s76, 0
      %p727 = por %p725, %p726
      %s728 = ssub.s32 %s70, %s77
      %p729 = scmp.eq.s32.totalorder %s728, 0
      %s731 = sadd.s32 %s730, 1
      %s732 = scalar_select %p729, %s730, %s731
      %p735 = pneg %p729
      %p736 = scmp.eq.s32.totalorder %s70, 1
      %p737 = por %p735, %p736
      %p738 = scmp.ne.s32.totalorder %s730, %s733
      %p739 = scmp.eq.s32.totalorder %s70, 0
      %p740 = por %p738, %p739
      %p741 = scmp.ne.s32.totalorder %s730, %s733
      %p742 = scmp.eq.s32.totalorder %s75, 1
      %p743 = por %p741, %p742
      %p744 = scmp.ne.s32.totalorder %s733, %s734
      %p745 = scmp.eq.s32.totalorder %s75, 0
      %p746 = por %p744, %p745
      %p747 = scmp.ne.s32.totalorder %s733, %s734
      %p748 = scmp.eq.s32.totalorder %s76, 1
      %p749 = por %p747, %p748
      %p751 = scmp.ne.s32.totalorder %s734, %s750
      %p752 = scmp.eq.s32.totalorder %s76, 0
      %p753 = por %p751, %p752
      %p754 = scmp.le.s32.totalorder 1, %s70
      %p755 = scmp.lt.s32.totalorder %s70, 3
      %p756 = pnand %p754, %p755
      %p757 = pneg %p756
      // Predicated region
      $region9: #{transformer_forward.1} parent=5 // pred_check
        _
      $region10: #{transformer_forward.1} parent=5 // pred_check_branch
        %759 = sbr.rel (%p756) target = $region12
      $region11: #{transformer_forward.1} parent=5 // pred_region
        %s760 = ssub.s32 %s70, 1
        // Predicated region
        $region13: #{transformer_forward.1} parent=11 // pred_check
          %p761 = pneg %p195
        $region14: #{transformer_forward.1} parent=11 // pred_check_branch
          %763 = sbr.rel (%p761) target = $region16
        $region15: #{transformer_forward.1} parent=11 // pred_region
          _
        $region16: #{transformer_forward.1} parent=11 // pred_fallthru
          _
        // Predicated region
        $region17: #{transformer_forward.1} parent=11 // pred_check
          %p764 = pneg %p216
        $region18: #{transformer_forward.1} parent=11 // pred_check_branch
          %766 = sbr.rel (%p764) target = $region20
        $region19: #{transformer_forward.1} parent=11 // pred_region
          _
        $region20: #{transformer_forward.1} parent=11 // pred_fallthru
          _
        // Predicated region
        $region21: #{transformer_forward.1} parent=11 // pred_check
          %p767 = pneg %p237
        $region22: #{transformer_forward.1} parent=11 // pred_check_branch
          %769 = sbr.rel (%p767) target = $region24
        $region23: #{transformer_forward.1} parent=11 // pred_region
          _
        $region24: #{transformer_forward.1} parent=11 // pred_fallthru
          _
        // Predicated region
        $region25: #{transformer_forward.1} parent=11 // pred_check
          %p770 = pneg %p258
        $region26: #{transformer_forward.1} parent=11 // pred_check_branch
          %772 = sbr.rel (%p770) target = $region28
        $region27: #{transformer_forward.1} parent=11 // pred_region
          _
        $region28: #{transformer_forward.1} parent=11 // pred_fallthru
          _
        // Predicated region
        $region29: #{transformer_forward.1} parent=11 // pred_check
          %p773 = pneg %p279
        $region30: #{transformer_forward.1} parent=11 // pred_check_branch
          %775 = sbr.rel (%p773) target = $region32
        $region31: #{transformer_forward.1} parent=11 // pred_region
          _
        $region32: #{transformer_forward.1} parent=11 // pred_fallthru
          _
        // Predicated region
        $region33: #{transformer_forward.1} parent=11 // pred_check
          %p776 = pneg %p300
        $region34: #{transformer_forward.1} parent=11 // pred_check_branch
          %778 = sbr.rel (%p776) target = $region36
        $region35: #{transformer_forward.1} parent=11 // pred_region
          _
        $region36: #{transformer_forward.1} parent=11 // pred_fallthru
          _
        // Predicated region
        $region37: #{transformer_forward.1} parent=11 // pred_check
          %p779 = pneg %p321
        $region38: #{transformer_forward.1} parent=11 // pred_check_branch
          %781 = sbr.rel (%p779) target = $region40
        $region39: #{transformer_forward.1} parent=11 // pred_region
          _
        $region40: #{transformer_forward.1} parent=11 // pred_fallthru
          _
        // Predicated region
        $region41: #{transformer_forward.1} parent=11 // pred_check
          %p782 = pneg %p342
        $region42: #{transformer_forward.1} parent=11 // pred_check_branch
          %784 = sbr.rel (%p782) target = $region44
        $region43: #{transformer_forward.1} parent=11 // pred_region
          _
        $region44: #{transformer_forward.1} parent=11 // pred_fallthru
          _
        // Predicated region
        $region45: #{transformer_forward.1} parent=11 // pred_check
          %p785 = pneg %p363
        $region46: #{transformer_forward.1} parent=11 // pred_check_branch
          %787 = sbr.rel (%p785) target = $region48
        $region47: #{transformer_forward.1} parent=11 // pred_region
          _
        $region48: #{transformer_forward.1} parent=11 // pred_fallthru
          _
        // Predicated region
        $region49: #{transformer_forward.1} parent=11 // pred_check
          %p788 = pneg %p384
        $region50: #{transformer_forward.1} parent=11 // pred_check_branch
          %790 = sbr.rel (%p788) target = $region52
        $region51: #{transformer_forward.1} parent=11 // pred_region
          _
        $region52: #{transformer_forward.1} parent=11 // pred_fallthru
          _
        // Predicated region
        $region53: #{transformer_forward.1} parent=11 // pred_check
          %p791 = pneg %p405
        $region54: #{transformer_forward.1} parent=11 // pred_check_branch
          %793 = sbr.rel (%p791) target = $region56
        $region55: #{transformer_forward.1} parent=11 // pred_region
          _
        $region56: #{transformer_forward.1} parent=11 // pred_fallthru
          _
        // Predicated region
        $region57: #{transformer_forward.1} parent=11 // pred_check
          %p794 = pneg %p426
        $region58: #{transformer_forward.1} parent=11 // pred_check_branch
          %796 = sbr.rel (%p794) target = $region60
        $region59: #{transformer_forward.1} parent=11 // pred_region
          _
        $region60: #{transformer_forward.1} parent=11 // pred_fallthru
          _
        // Predicated region
        $region61: #{transformer_forward.1} parent=11 // pred_check
          %p797 = pneg %p447
        $region62: #{transformer_forward.1} parent=11 // pred_check_branch
          %799 = sbr.rel (%p797) target = $region64
        $region63: #{transformer_forward.1} parent=11 // pred_region
          _
        $region64: #{transformer_forward.1} parent=11 // pred_fallthru
          _
        // Predicated region
        $region65: #{transformer_forward.1} parent=11 // pred_check
          %p800 = pneg %p468
        $region66: #{transformer_forward.1} parent=11 // pred_check_branch
          %802 = sbr.rel (%p800) target = $region68
        $region67: #{transformer_forward.1} parent=11 // pred_region
          _
        $region68: #{transformer_forward.1} parent=11 // pred_fallthru
          _
        // Predicated region
        $region69: #{transformer_forward.1} parent=11 // pred_check
          %p803 = pneg %p489
        $region70: #{transformer_forward.1} parent=11 // pred_check_branch
          %805 = sbr.rel (%p803) target = $region72
        $region71: #{transformer_forward.1} parent=11 // pred_region
          _
        $region72: #{transformer_forward.1} parent=11 // pred_fallthru
          _
        // Predicated region
        $region73: #{transformer_forward.1} parent=11 // pred_check
          %p806 = pneg %p510
        $region74: #{transformer_forward.1} parent=11 // pred_check_branch
          %808 = sbr.rel (%p806) target = $region76
        $region75: #{transformer_forward.1} parent=11 // pred_region
          _
        $region76: #{transformer_forward.1} parent=11 // pred_fallthru
          _
        // Predicated region
        $region77: #{transformer_forward.1} parent=11 // pred_check
          %p809 = pneg %p531
        $region78: #{transformer_forward.1} parent=11 // pred_check_branch
          %811 = sbr.rel (%p809) target = $region80
        $region79: #{transformer_forward.1} parent=11 // pred_region
          _
        $region80: #{transformer_forward.1} parent=11 // pred_fallthru
          _
        // Predicated region
        $region81: #{transformer_forward.1} parent=11 // pred_check
          %p812 = pneg %p552
        $region82: #{transformer_forward.1} parent=11 // pred_check_branch
          %814 = sbr.rel (%p812) target = $region84
        $region83: #{transformer_forward.1} parent=11 // pred_region
          _
        $region84: #{transformer_forward.1} parent=11 // pred_fallthru
          _
        // Predicated region
        $region85: #{transformer_forward.1} parent=11 // pred_check
          %p815 = pneg %p573
        $region86: #{transformer_forward.1} parent=11 // pred_check_branch
          %817 = sbr.rel (%p815) target = $region88
        $region87: #{transformer_forward.1} parent=11 // pred_region
          _
        $region88: #{transformer_forward.1} parent=11 // pred_fallthru
          _
        // Predicated region
        $region89: #{transformer_forward.1} parent=11 // pred_check
          %p818 = pneg %p594
        $region90: #{transformer_forward.1} parent=11 // pred_check_branch
          %820 = sbr.rel (%p818) target = $region92
        $region91: #{transformer_forward.1} parent=11 // pred_region
          _
        $region92: #{transformer_forward.1} parent=11 // pred_fallthru
          _
        // Predicated region
        $region93: #{transformer_forward.1} parent=11 // pred_check
          %p821 = pneg %p615
        $region94: #{transformer_forward.1} parent=11 // pred_check_branch
          %823 = sbr.rel (%p821) target = $region96
        $region95: #{transformer_forward.1} parent=11 // pred_region
          _
        $region96: #{transformer_forward.1} parent=11 // pred_fallthru
          _
        // Predicated region
        $region97: #{transformer_forward.1} parent=11 // pred_check
          %p824 = pneg %p636
        $region98: #{transformer_forward.1} parent=11 // pred_check_branch
          %826 = sbr.rel (%p824) target = $region100
        $region99: #{transformer_forward.1} parent=11 // pred_region
          _
        $region100: #{transformer_forward.1} parent=11 // pred_fallthru
          _
        // Predicated region
        $region101: #{transformer_forward.1} parent=11 // pred_check
          %p827 = pneg %p657
        $region102: #{transformer_forward.1} parent=11 // pred_check_branch
          %829 = sbr.rel (%p827) target = $region104
        $region103: #{transformer_forward.1} parent=11 // pred_region
          _
        $region104: #{transformer_forward.1} parent=11 // pred_fallthru
          _
        // Predicated region
        $region105: #{transformer_forward.1} parent=11 // pred_check
          %p830 = pneg %p678
        $region106: #{transformer_forward.1} parent=11 // pred_check_branch
          %832 = sbr.rel (%p830) target = $region108
        $region107: #{transformer_forward.1} parent=11 // pred_region
          _
        $region108: #{transformer_forward.1} parent=11 // pred_fallthru
          _
        // Predicated region
        $region109: #{transformer_forward.1} parent=11 // pred_check
          %p833 = pneg %p699
        $region110: #{transformer_forward.1} parent=11 // pred_check_branch
          %835 = sbr.rel (%p833) target = $region112
        $region111: #{transformer_forward.1} parent=11 // pred_region
          _
        $region112: #{transformer_forward.1} parent=11 // pred_fallthru
          _
        // Predicated region
        $region113: #{transformer_forward.1} parent=11 // pred_check
          %p836 = pneg %p720
        $region114: #{transformer_forward.1} parent=11 // pred_check_branch
          %838 = sbr.rel (%p836) target = $region116
        $region115: #{transformer_forward.1} parent=11 // pred_region
          _
        $region116: #{transformer_forward.1} parent=11 // pred_fallthru
          _
      $region12: #{transformer_forward.1} parent=5 // pred_fallthru
        _
      %p839 = scmp.lt.s32.totalorder %s70, 2
      // Predicated region
      $region117: #{transformer_forward.1} parent=5 // pred_check
        %p840 = pneg %p839
      $region118: #{transformer_forward.1} parent=5 // pred_check_branch
        %842 = sbr.rel (%p840) target = $region120
      $region119: #{transformer_forward.1} parent=5 // pred_region
        // Predicated region
        $region121: #{transformer_forward.1} parent=119 // pred_check
          %p843 = pneg %p90
        $region122: #{transformer_forward.1} parent=119 // pred_check_branch
          %845 = sbr.rel (%p843) target = $region124
        $region123: #{transformer_forward.1} parent=119 // pred_region
          %p846 = scmp.lt.s32.totalorder %s70, 1
          %s847 = scalar_select %p846, %s70, 1
          %s848 = smul.addr %s847, 8
          %s849 = scalar_lea.vmem %s1, %s848
        $region124: #{transformer_forward.1} parent=119 // pred_fallthru
          _
        // Predicated region
        $region125: #{transformer_forward.1} parent=119 // pred_check
          %p850 = pneg %p116
        $region126: #{transformer_forward.1} parent=119 // pred_check_branch
          %852 = sbr.rel (%p850) target = $region128
        $region127: #{transformer_forward.1} parent=119 // pred_region
          %p853 = scmp.lt.s32.totalorder %s70, 1
          %s854 = scalar_select %p853, %s70, 1
          %s855 = smul.addr %s854, 8
          %s856 = scalar_lea.vmem %s3, %s855
        $region128: #{transformer_forward.1} parent=119 // pred_fallthru
          _
        // Predicated region
        $region129: #{transformer_forward.1} parent=119 // pred_check
          %p857 = pneg %p142
        $region130: #{transformer_forward.1} parent=119 // pred_check_branch
          %859 = sbr.rel (%p857) target = $region132
        $region131: #{transformer_forward.1} parent=119 // pred_region
          %p860 = scmp.lt.s32.totalorder %s70, 1
          %s861 = scalar_select %p860, %s70, 1
          %s862 = scalar_lea.vmem %s5, %s861
        $region132: #{transformer_forward.1} parent=119 // pred_fallthru
          _
        // Predicated region
        $region133: #{transformer_forward.1} parent=119 // pred_check
          %p863 = pneg %p168
        $region134: #{transformer_forward.1} parent=119 // pred_check_branch
          %865 = sbr.rel (%p863) target = $region136
        $region135: #{transformer_forward.1} parent=119 // pred_region
          %p866 = scmp.lt.s32.totalorder %s70, 1
          %s867 = scalar_select %p866, %s70, 1
          %s868 = smul.addr %s867, 8
          %s869 = scalar_lea.vmem %s7, %s868
        $region136: #{transformer_forward.1} parent=119 // pred_fallthru
          _
      $region120: #{transformer_forward.1} parent=5 // pred_fallthru
        _
      %p870 = scmp.le.s32.totalorder 1, %s70
      %p871 = scmp.lt.s32.totalorder %s70, 3
      %p872 = pnand %p870, %p871
      %p873 = pneg %p872
      // Predicated region
      $region137: #{transformer_forward.1} parent=5 // pred_check
        _
      $region138: #{transformer_forward.1} parent=5 // pred_check_branch
        %875 = sbr.rel (%p872) target = $region140
      $region139: #{transformer_forward.1} parent=5 // pred_region
        %s876 = ssub.s32 %s70, 1
        %p877 = scmp.lt.s32.totalorder %s75, 1
        %s878 = scalar_select %p877, %s75, 1
        %s879 = smul.addr %s878, 8
        %s880 = scalar_lea.vmem %s1, %s879
        %p881 = pneg %p96
        %p882 = pneg %p93
        %p883 = scmp.lt.s32.totalorder %s75, 1
        %s884 = scalar_select %p883, %s75, 1
        %s885 = smul.addr %s884, 8
        %s886 = scalar_lea.vmem %s3, %s885
        %p887 = pneg %p122
        %p888 = pneg %p119
        %p889 = scmp.lt.s32.totalorder %s75, 1
        %s890 = scalar_select %p889, %s75, 1
        %s891 = scalar_lea.vmem %s5, %s890
        %p892 = pneg %p148
        %p893 = pneg %p145
        %p894 = scmp.lt.s32.totalorder %s75, 1
        %s895 = scalar_select %p894, %s75, 1
        %s896 = smul.addr %s895, 8
        %s897 = scalar_lea.vmem %s7, %s896
        %p898 = pneg %p174
        %p899 = pneg %p171
        %p900 = pneg %p195
        %p901 = pneg %p192
        %p902 = pneg %p216
        %p903 = pneg %p213
        %p904 = pneg %p237
        %p905 = pneg %p234
        %p906 = pneg %p258
        %p907 = pneg %p255
        %p908 = pneg %p279
        %p909 = pneg %p276
        %p910 = pneg %p300
        %p911 = pneg %p297
        %p912 = pneg %p321
        %p913 = pneg %p318
        %p914 = pneg %p342
        %p915 = pneg %p339
        %p916 = pneg %p363
        %p917 = pneg %p360
        %p918 = pneg %p384
        %p919 = pneg %p381
        %p920 = pneg %p405
        %p921 = pneg %p402
        %p922 = pneg %p426
        %p923 = pneg %p423
        %p924 = pneg %p447
        %p925 = pneg %p444
        %p926 = pneg %p468
        %p927 = pneg %p465
        %p928 = pneg %p489
        %p929 = pneg %p486
        %p930 = pneg %p510
        %p931 = pneg %p507
        %p932 = pneg %p531
        %p933 = pneg %p528
        %p934 = pneg %p552
        %p935 = pneg %p549
        %p936 = pneg %p573
        %p937 = pneg %p570
        %p938 = pneg %p594
        %p939 = pneg %p591
        %p940 = pneg %p615
        %p941 = pneg %p612
        %p942 = pneg %p636
        %p943 = pneg %p633
        %p944 = pneg %p657
        %p945 = pneg %p654
        %p946 = pneg %p678
        %p947 = pneg %p675
        %p948 = pneg %p699
        %p949 = pneg %p696
        %p950 = pneg %p720
        %p951 = pneg %p717
        %p952 = pneg %p746
        %p953 = pneg %p743
        %s954 = sand.u32 %s733, 1
        %s955 = scalar_lea.sflag [#allocation3], %s954
        %s956 = sand.u32 %s733, 1
        %s957 = smul.addr %s956, 8
        %s958 = scalar_lea.vmem [#allocation2], %s957
        %p959 = scmp.lt.s32.totalorder %s75, 1
        %s960 = scalar_select %p959, %s75, 1
        %s961 = smul.addr %s960, 8
        %s962 = scalar_lea.vmem %s1, %s961
        %p963 = scmp.lt.s32.totalorder %s75, 1
        %s964 = scalar_select %p963, %s75, 1
        %s965 = smul.addr %s964, 8
        %s966 = scalar_lea.vmem %s3, %s965
        %p967 = scmp.lt.s32.totalorder %s75, 1
        %s968 = scalar_select %p967, %s75, 1
        %s969 = scalar_lea.vmem %s5, %s968
        %p970 = scmp.lt.s32.totalorder %s75, 1
        %s971 = scalar_select %p970, %s75, 1
        %s972 = smul.addr %s971, 8
        %s973 = scalar_lea.vmem %s7, %s972
        %v974 = vld [vmem:[%s962] sm:$0xff]
        %v975 = vld [vmem:[%s966] sm:$0xff]
        %v976 = vld [vmem:[%s969] sm:$0x1]
        %v977 = vld [vmem:[%s973] sm:$0xff]
        %v978 = vld [vmem:[%s25] sm:$0xf]
        %vm979 = vcmask 261120
        %v980 = vsel %vm979, %v974, 0.0
        %981 = vadd.xlane.f32.xlu0 %v980
        %v982 = vpop.xlane.xlu0 %981
        %v983 = vrcp.pop 32.0
        %v984 = vmul.f32 %v982, %v983
        %v985 = vsub.f32 %v974, %v984
        %v986 = vmul.f32 %v985, %v985
        %v987 = vsel %vm979, %v986, 0.0
        %988 = vadd.xlane.f32.xlu0 %v987
        %v989 = vpop.xlane.xlu0 %988
        %v990 = vmul.f32 %v989, 0.032258064
        %v991 = vrsqrt.pop %v990
        %v992 = vmul.f32 %v990, %v991
        %vm993 = vcmp.eq.f32.partialorder %v990, inf
        %v994 = vsel %vm993, %v990, %v992
        %vm995 = vcmp.eq.f32.partialorder %v990, 0.0
        %v996 = vand.u32 %v990, 2147483648
        %v997 = vsel %vm995, %v996, %v994
        %v998 = vadd.f32 %v997, 1e-06
        %v999 = vrcp.pop %v998
        %v1000 = vlaneseq
        %v1001 = vshrl.u32 %v1000, 7
        %v1002 = vsub.s32 0, %v1001
        %v1003 = vrot.slane %v978, %v1002
        %v1004 = vmul.f32 %v1003, %v985
        %v1005 = vmul.f32 %v1004, %v999
        %v1006 = vlaneseq
        %v1007 = vshrl.u32 %v1006, 7
        %v1008 = vsub.s32 1, %v1007
        %v1009 = vrot.slane %v978, %v1008
        %v1010 = vadd.f32 %v1005, %v1009
        %v1011 = vld [vmem:[%s9] sm:$0xff]
        %v1012 = vld [vmem:[%s9 + $0x8] sm:$0xff]
        %v1013 = vld [vmem:[%s9 + $0x10] sm:$0xff]
        %v1014 = vld [vmem:[%s9 + $0x18] sm:$0xff]
        %v1015 = vld [vmem:[%s11] sm:$0x1]
        %v1017 = vlaneseq
        %v1018 = vshrl.u32 %v1017, 7
        %v1019 = vsub.s32 0, %v1018
        %v1020 = vrot.slane %v1015, %v1019
        %v1023 = vsel %vm979, %v1010, 0
        %1025 = vmatprep.subr.mxu0 0.0
        %1026 = vmatpush1.msra.mxu0 0.0
        %1027 = vmatprep.subr.mxu0 0.0
        %1028 = vmatpush1.msra.mxu0 0.0
        %1029 = vmatprep.subr.mxu0 0.0
        %1030 = vmatpush1.msra.mxu0 0.0
        %1031 = vmatprep.subr.mxu0 0.0
        %1032 = vmatpush1.msra.mxu0 0.0
        %1033 = vmatprep.subr.mxu0 0.0
        %1034 = vmatpush1.msra.mxu0 0.0
        %1035 = vmatprep.subr.mxu0 0.0
        %1036 = vmatpush1.msra.mxu0 0.0
        %1037 = vmatprep.subr.mxu0 0.0
        %1038 = vmatpush1.msra.mxu0 0.0
        %1039 = vmatprep.subr.mxu0 0.0
        %1040 = vmatpush1.msra.mxu0 0.0
        %1041 = vmatprep.subr.mxu0 0.0
        %1042 = vmatpush1.msra.mxu0 0.0
        %1043 = vmatprep.subr.mxu0 0.0
        %1044 = vmatpush1.msra.mxu0 0.0
        %1045 = vmatprep.subr.mxu0 0.0
        %1046 = vmatpush1.msra.mxu0 0.0
        %1047 = vmatprep.subr.mxu0 0.0
        %1048 = vmatpush1.msra.mxu0 0.0
        %1049 = vmatprep.subr.mxu0 0.0
        %1050 = vmatpush1.msra.mxu0 %v1014
        %1051 = vmatprep.subr.mxu0 0.0
        %1052 = vmatpush1.msra.mxu0 %v1013
        %1053 = vmatprep.subr.mxu0 0.0
        %1054 = vmatpush1.msra.mxu0 %v1012
        %1055 = vmatprep.subr.mxu0 0.0
        %1056 = vmatpush1.msra.mxu0 %v1011
        %1057 = vmatprep.subr.mxu0 0.0
        %1058 = vmatpush2.msra.mxu0 0.0
        %1059 = vmatprep.subr.mxu0 0.0
        %1060 = vmatpush2.msra.mxu0 0.0
        %1061 = vmatprep.subr.mxu0 0.0
        %1062 = vmatpush2.msra.mxu0 0.0
        %1063 = vmatprep.subr.mxu0 0.0
        %1064 = vmatpush2.msra.mxu0 0.0
        %1065 = vmatprep.subr.mxu0 0.0
        %1066 = vmatpush2.msra.mxu0 0.0
        %1067 = vmatprep.subr.mxu0 0.0
        %1068 = vmatpush2.msra.mxu0 0.0
        %1069 = vmatprep.subr.mxu0 0.0
        %1070 = vmatpush2.msra.mxu0 0.0
        %1071 = vmatprep.subr.mxu0 0.0
        %1072 = vmatpush2.msra.mxu0 0.0
        %1073 = vmatprep.subr.mxu0 0.0
        %1074 = vmatpush2.msra.mxu0 0.0
        %1075 = vmatprep.subr.mxu0 0.0
        %1076 = vmatpush2.msra.mxu0 0.0
        %1077 = vmatprep.subr.mxu0 0.0
        %1078 = vmatpush2.msra.mxu0 0.0
        %1079 = vmatprep.subr.mxu0 0.0
        %1080 = vmatpush2.msra.mxu0 0.0
        %1081 = vmatprep.subr.mxu0 0.0
        %1082 = vmatpush2.msra.mxu0 0.0
        %1083 = vmatprep.subr.mxu0 0.0
        %1084 = vmatpush2.msra.mxu0 0.0
        %1085 = vmatprep.subr.mxu0 0.0
        %1086 = vmatpush2.msra.mxu0 0.0
        %1087 = vmatprep.subr.mxu0 0.0
        %1088 = vmatpush2.msra.mxu0 0.0
        %1089 = vmatprep.mubr.f32.mxu0 0.0
        %1090 = vmatmul.mubr.f32.gmra.mxu0 %v1023
        %v1091 = vpop.f32.mrf.mxu0
        %v1092 = vadd.f32 %v1020, %v1091
        %v1093 = vpop.f32.mrf.mxu0
        %1094 = vdwg.mxu0
        %v1095 = vld [vmem:[%s13] sm:$0xff]
        %v1096 = vld [vmem:[%s13 + $0x8] sm:$0xff]
        %v1097 = vld [vmem:[%s13 + $0x10] sm:$0xff]
        %v1098 = vld [vmem:[%s13 + $0x18] sm:$0xff]
        %v1099 = vld [vmem:[%s15] sm:$0x1]
        %v1101 = vlaneseq
        %v1102 = vshrl.u32 %v1101, 7
        %v1103 = vsub.s32 0, %v1102
        %v1104 = vrot.slane %v976, %v1103
        %1107 = vrot.lane.b32.xlu0 %v1092, 96
        %v1108 = vpop.permute.xlu0 %1107
        %vm1109 = vcmask 64512
        %v1110 = vsel %vm1109, %v1092, 0
        %v1112 = vsel %vm1109, %v1108, 0
        %1114 = vmatprep.subr.mxu0 0.0
        %1115 = vmatpush1.xpose.msra.mxu0 0.0
        %1116 = vmatprep.subr.mxu0 0.0
        %1117 = vmatpush1.xpose.msra.mxu0 0.0
        %1118 = vmatprep.subr.mxu0 0.0
        %1119 = vmatpush1.xpose.msra.mxu0 0.0
        %1120 = vmatprep.subr.mxu0 0.0
        %1121 = vmatpush1.xpose.msra.mxu0 0.0
        %1122 = vmatprep.subr.mxu0 0.0
        %1123 = vmatpush1.xpose.msra.mxu0 0.0
        %1124 = vmatprep.subr.mxu0 0.0
        %1125 = vmatpush1.xpose.msra.mxu0 0.0
        %1126 = vmatprep.subr.mxu0 0.0
        %1127 = vmatpush1.xpose.msra.mxu0 0.0
        %1128 = vmatprep.subr.mxu0 0.0
        %1129 = vmatpush1.xpose.msra.mxu0 0.0
        %1130 = vmatprep.subr.mxu0 0.0
        %1131 = vmatpush1.xpose.msra.mxu0 0.0
        %1132 = vmatprep.subr.mxu0 0.0
        %1133 = vmatpush1.xpose.msra.mxu0 0.0
        %1134 = vmatprep.subr.mxu0 0.0
        %1135 = vmatpush1.xpose.msra.mxu0 0.0
        %1136 = vmatprep.subr.mxu0 0.0
        %1137 = vmatpush1.xpose.msra.mxu0 0.0
        %1138 = vmatprep.subr.mxu0 0.0
        %1139 = vmatpush1.xpose.msra.mxu0 0.0
        %1140 = vmatprep.subr.mxu0 0.0
        %1141 = vmatpush1.xpose.msra.mxu0 0.0
        %1142 = vmatprep.subr.mxu0 0.0
        %1143 = vmatpush1.xpose.msra.mxu0 0.0
        %1144 = vmatprep.subr.mxu0 0.0
        %1145 = vmatpush1.xpose.msra.mxu0 %v1112
        %1146 = vmatprep.subr.mxu0 0.0
        %1147 = vmatpush2.xpose.msra.mxu0 0.0
        %1148 = vmatprep.subr.mxu0 0.0
        %1149 = vmatpush2.xpose.msra.mxu0 0.0
        %1150 = vmatprep.subr.mxu0 0.0
        %1151 = vmatpush2.xpose.msra.mxu0 0.0
        %1152 = vmatprep.subr.mxu0 0.0
        %1153 = vmatpush2.xpose.msra.mxu0 0.0
        %1154 = vmatprep.subr.mxu0 0.0
        %1155 = vmatpush2.xpose.msra.mxu0 0.0
        %1156 = vmatprep.subr.mxu0 0.0
        %1157 = vmatpush2.xpose.msra.mxu0 0.0
        %1158 = vmatprep.subr.mxu0 0.0
        %1159 = vmatpush2.xpose.msra.mxu0 0.0
        %1160 = vmatprep.subr.mxu0 0.0
        %1161 = vmatpush2.xpose.msra.mxu0 0.0
        %1162 = vmatprep.subr.mxu0 0.0
        %1163 = vmatpush2.xpose.msra.mxu0 0.0
        %1164 = vmatprep.subr.mxu0 0.0
        %1165 = vmatpush2.xpose.msra.mxu0 0.0
        %1166 = vmatprep.subr.mxu0 0.0
        %1167 = vmatpush2.xpose.msra.mxu0 0.0
        %1168 = vmatprep.subr.mxu0 0.0
        %1169 = vmatpush2.xpose.msra.mxu0 0.0
        %1170 = vmatprep.subr.mxu0 0.0
        %1171 = vmatpush2.xpose.msra.mxu0 0.0
        %1172 = vmatprep.subr.mxu0 0.0
        %1173 = vmatpush2.xpose.msra.mxu0 0.0
        %1174 = vmatprep.subr.mxu0 0.0
        %1175 = vmatpush2.xpose.msra.mxu0 0.0
        %1176 = vmatprep.subr.mxu0 0.0
        %1177 = vmatpush2.xpose.msra.mxu0 0.0
        %1178 = vmatprep.mubr.f32.mxu0 0.0
        %1179 = vmatmul.mubr.f32.gmra.mxu0 %v1110
        %v1180 = vpop.f32.mrf.mxu0
        %v1181 = vadd.f32 %v1104, %v1180
        %v1182 = vpop.f32.mrf.mxu0
        %1183 = vdwg.mxu0
        %v1184 = vsel %vm1109, %v1181, -inf
        %1185 = vmax.xlane.f32.xlu0 %v1184
        %v1186 = vpop.xlane.xlu0 %1185
        %v1187 = vsub.f32 %v1181, %v1186
        %v1188 = vmul.f32 %v1187, 1.442695
        %v1189 = vpow.pop %v1188
        %v1190 = vsel %vm1109, %v1189, 0.0
        %1191 = vadd.xlane.f32.xlu0 %v1190
        %v1192 = vpop.xlane.xlu0 %1191
        %v1193 = vrcp.pop %v1192
        %v1194 = vmul.f32 %v1189, %v1193
        %1195 = vrot.lane.b32.xlu0 %v1092, 64
        %v1196 = vpop.permute.xlu0 %1195
        %v1199 = vsel %vm1109, %v1194, 0
        %1201 = vmatprep.subr.mxu0 0.0
        %1202 = vmatpush1.msra.mxu0 0.0
        %1203 = vmatprep.subr.mxu0 0.0
        %1204 = vmatpush1.msra.mxu0 0.0
        %1205 = vmatprep.subr.mxu0 0.0
        %1206 = vmatpush1.msra.mxu0 0.0
        %1207 = vmatprep.subr.mxu0 0.0
        %1208 = vmatpush1.msra.mxu0 0.0
        %1209 = vmatprep.subr.mxu0 0.0
        %1210 = vmatpush1.msra.mxu0 0.0
        %1211 = vmatprep.subr.mxu0 0.0
        %1212 = vmatpush1.msra.mxu0 0.0
        %1213 = vmatprep.subr.mxu0 0.0
        %1214 = vmatpush1.msra.mxu0 0.0
        %1215 = vmatprep.subr.mxu0 0.0
        %1216 = vmatpush1.msra.mxu0 0.0
        %1217 = vmatprep.subr.mxu0 0.0
        %1218 = vmatpush1.msra.mxu0 0.0
        %1219 = vmatprep.subr.mxu0 0.0
        %1220 = vmatpush1.msra.mxu0 0.0
        %1221 = vmatprep.subr.mxu0 0.0
        %1222 = vmatpush1.msra.mxu0 0.0
        %1223 = vmatprep.subr.mxu0 0.0
        %1224 = vmatpush1.msra.mxu0 0.0
        %1225 = vmatprep.subr.mxu0 0.0
        %1226 = vmatpush1.msra.mxu0 0.0
        %1227 = vmatprep.subr.mxu0 0.0
        %1228 = vmatpush1.msra.mxu0 0.0
        %1229 = vmatprep.subr.mxu0 0.0
        %1230 = vmatpush1.msra.mxu0 0.0
        %1231 = vmatprep.subr.mxu0 0.0
        %1232 = vmatpush1.msra.mxu0 %v1196
        %1233 = vmatprep.subr.mxu0 0.0
        %1234 = vmatpush2.msra.mxu0 0.0
        %1235 = vmatprep.subr.mxu0 0.0
        %1236 = vmatpush2.msra.mxu0 0.0
        %1237 = vmatprep.subr.mxu0 0.0
        %1238 = vmatpush2.msra.mxu0 0.0
        %1239 = vmatprep.subr.mxu0 0.0
        %1240 = vmatpush2.msra.mxu0 0.0
        %1241 = vmatprep.subr.mxu0 0.0
        %1242 = vmatpush2.msra.mxu0 0.0
        %1243 = vmatprep.subr.mxu0 0.0
        %1244 = vmatpush2.msra.mxu0 0.0
        %1245 = vmatprep.subr.mxu0 0.0
        %1246 = vmatpush2.msra.mxu0 0.0
        %1247 = vmatprep.subr.mxu0 0.0
        %1248 = vmatpush2.msra.mxu0 0.0
        %1249 = vmatprep.subr.mxu0 0.0
        %1250 = vmatpush2.msra.mxu0 0.0
        %1251 = vmatprep.subr.mxu0 0.0
        %1252 = vmatpush2.msra.mxu0 0.0
        %1253 = vmatprep.subr.mxu0 0.0
        %1254 = vmatpush2.msra.mxu0 0.0
        %1255 = vmatprep.subr.mxu0 0.0
        %1256 = vmatpush2.msra.mxu0 0.0
        %1257 = vmatprep.subr.mxu0 0.0
        %1258 = vmatpush2.msra.mxu0 0.0
        %1259 = vmatprep.subr.mxu0 0.0
        %1260 = vmatpush2.msra.mxu0 0.0
        %1261 = vmatprep.subr.mxu0 0.0
        %1262 = vmatpush2.msra.mxu0 0.0
        %1263 = vmatprep.subr.mxu0 0.0
        %1264 = vmatpush2.msra.mxu0 0.0
        %1265 = vmatprep.mubr.f32.mxu0 0.0
        %1266 = vmatmul.mubr.f32.gmra.mxu0 %v1199
        %v1267 = vpop.f32.mrf.mxu0
        %v1268 = vadd.f32 0.0, %v1267
        %v1269 = vpop.f32.mrf.mxu0
        %1270 = vdwg.mxu0
        %1271 = vrot.lane.b32.xlu0 %v1092, 120
        %v1272 = vpop.permute.xlu0 %1271
        %1273 = vrot.lane.b32.xlu0 %v1092, 88
        %v1274 = vpop.permute.xlu0 %1273
        %v1275 = vsel %vm1109, %v1272, 0
        %v1277 = vsel %vm1109, %v1274, 0
        %1279 = vmatprep.subr.mxu0 0.0
        %1280 = vmatpush1.xpose.msra.mxu0 0.0
        %1281 = vmatprep.subr.mxu0 0.0
        %1282 = vmatpush1.xpose.msra.mxu0 0.0
        %1283 = vmatprep.subr.mxu0 0.0
        %1284 = vmatpush1.xpose.msra.mxu0 0.0
        %1285 = vmatprep.subr.mxu0 0.0
        %1286 = vmatpush1.xpose.msra.mxu0 0.0
        %1287 = vmatprep.subr.mxu0 0.0
        %1288 = vmatpush1.xpose.msra.mxu0 0.0
        %1289 = vmatprep.subr.mxu0 0.0
        %1290 = vmatpush1.xpose.msra.mxu0 0.0
        %1291 = vmatprep.subr.mxu0 0.0
        %1292 = vmatpush1.xpose.msra.mxu0 0.0
        %1293 = vmatprep.subr.mxu0 0.0
        %1294 = vmatpush1.xpose.msra.mxu0 0.0
        %1295 = vmatprep.subr.mxu0 0.0
        %1296 = vmatpush1.xpose.msra.mxu0 0.0
        %1297 = vmatprep.subr.mxu0 0.0
        %1298 = vmatpush1.xpose.msra.mxu0 0.0
        %1299 = vmatprep.subr.mxu0 0.0
        %1300 = vmatpush1.xpose.msra.mxu0 0.0
        %1301 = vmatprep.subr.mxu0 0.0
        %1302 = vmatpush1.xpose.msra.mxu0 0.0
        %1303 = vmatprep.subr.mxu0 0.0
        %1304 = vmatpush1.xpose.msra.mxu0 0.0
        %1305 = vmatprep.subr.mxu0 0.0
        %1306 = vmatpush1.xpose.msra.mxu0 0.0
        %1307 = vmatprep.subr.mxu0 0.0
        %1308 = vmatpush1.xpose.msra.mxu0 0.0
        %1309 = vmatprep.subr.mxu0 0.0
        %1310 = vmatpush1.xpose.msra.mxu0 %v1277
        %1311 = vmatprep.subr.mxu0 0.0
        %1312 = vmatpush2.xpose.msra.mxu0 0.0
        %1313 = vmatprep.subr.mxu0 0.0
        %1314 = vmatpush2.xpose.msra.mxu0 0.0
        %1315 = vmatprep.subr.mxu0 0.0
        %1316 = vmatpush2.xpose.msra.mxu0 0.0
        %1317 = vmatprep.subr.mxu0 0.0
        %1318 = vmatpush2.xpose.msra.mxu0 0.0
        %1319 = vmatprep.subr.mxu0 0.0
        %1320 = vmatpush2.xpose.msra.mxu0 0.0
        %1321 = vmatprep.subr.mxu0 0.0
        %1322 = vmatpush2.xpose.msra.mxu0 0.0
        %1323 = vmatprep.subr.mxu0 0.0
        %1324 = vmatpush2.xpose.msra.mxu0 0.0
        %1325 = vmatprep.subr.mxu0 0.0
        %1326 = vmatpush2.xpose.msra.mxu0 0.0
        %1327 = vmatprep.subr.mxu0 0.0
        %1328 = vmatpush2.xpose.msra.mxu0 0.0
        %1329 = vmatprep.subr.mxu0 0.0
        %1330 = vmatpush2.xpose.msra.mxu0 0.0
        %1331 = vmatprep.subr.mxu0 0.0
        %1332 = vmatpush2.xpose.msra.mxu0 0.0
        %1333 = vmatprep.subr.mxu0 0.0
        %1334 = vmatpush2.xpose.msra.mxu0 0.0
        %1335 = vmatprep.subr.mxu0 0.0
        %1336 = vmatpush2.xpose.msra.mxu0 0.0
        %1337 = vmatprep.subr.mxu0 0.0
        %1338 = vmatpush2.xpose.msra.mxu0 0.0
        %1339 = vmatprep.subr.mxu0 0.0
        %1340 = vmatpush2.xpose.msra.mxu0 0.0
        %1341 = vmatprep.subr.mxu0 0.0
        %1342 = vmatpush2.xpose.msra.mxu0 0.0
        %1343 = vmatprep.mubr.f32.mxu0 0.0
        %1344 = vmatmul.mubr.f32.gmra.mxu0 %v1275
        %v1345 = vpop.f32.mrf.mxu0
        %v1346 = vadd.f32 %v1104, %v1345
        %v1347 = vpop.f32.mrf.mxu0
        %1348 = vdwg.mxu0
        %v1349 = vsel %vm1109, %v1346, -inf
        %1350 = vmax.xlane.f32.xlu0 %v1349
        %v1351 = vpop.xlane.xlu0 %1350
        %v1352 = vsub.f32 %v1346, %v1351
        %v1353 = vmul.f32 %v1352, 1.442695
        %v1354 = vpow.pop %v1353
        %v1355 = vsel %vm1109, %v1354, 0.0
        %1356 = vadd.xlane.f32.xlu0 %v1355
        %v1357 = vpop.xlane.xlu0 %1356
        %v1358 = vrcp.pop %v1357
        %v1359 = vmul.f32 %v1354, %v1358
        %1360 = vrot.lane.b32.xlu0 %v1092, 56
        %v1361 = vpop.permute.xlu0 %1360
        %v1364 = vsel %vm1109, %v1359, 0
        %1366 = vmatprep.subr.mxu0 0.0
        %1367 = vmatpush1.msra.mxu0 0.0
        %1368 = vmatprep.subr.mxu0 0.0
        %1369 = vmatpush1.msra.mxu0 0.0
        %1370 = vmatprep.subr.mxu0 0.0
        %1371 = vmatpush1.msra.mxu0 0.0
        %1372 = vmatprep.subr.mxu0 0.0
        %1373 = vmatpush1.msra.mxu0 0.0
        %1374 = vmatprep.subr.mxu0 0.0
        %1375 = vmatpush1.msra.mxu0 0.0
        %1376 = vmatprep.subr.mxu0 0.0
        %1377 = vmatpush1.msra.mxu0 0.0
        %1378 = vmatprep.subr.mxu0 0.0
        %1379 = vmatpush1.msra.mxu0 0.0
        %1380 = vmatprep.subr.mxu0 0.0
        %1381 = vmatpush1.msra.mxu0 0.0
        %1382 = vmatprep.subr.mxu0 0.0
        %1383 = vmatpush1.msra.mxu0 0.0
        %1384 = vmatprep.subr.mxu0 0.0
        %1385 = vmatpush1.msra.mxu0 0.0
        %1386 = vmatprep.subr.mxu0 0.0
        %1387 = vmatpush1.msra.mxu0 0.0
        %1388 = vmatprep.subr.mxu0 0.0
        %1389 = vmatpush1.msra.mxu0 0.0
        %1390 = vmatprep.subr.mxu0 0.0
        %1391 = vmatpush1.msra.mxu0 0.0
        %1392 = vmatprep.subr.mxu0 0.0
        %1393 = vmatpush1.msra.mxu0 0.0
        %1394 = vmatprep.subr.mxu0 0.0
        %1395 = vmatpush1.msra.mxu0 0.0
        %1396 = vmatprep.subr.mxu0 0.0
        %1397 = vmatpush1.msra.mxu0 %v1361
        %1398 = vmatprep.subr.mxu0 0.0
        %1399 = vmatpush2.msra.mxu0 0.0
        %1400 = vmatprep.subr.mxu0 0.0
        %1401 = vmatpush2.msra.mxu0 0.0
        %1402 = vmatprep.subr.mxu0 0.0
        %1403 = vmatpush2.msra.mxu0 0.0
        %1404 = vmatprep.subr.mxu0 0.0
        %1405 = vmatpush2.msra.mxu0 0.0
        %1406 = vmatprep.subr.mxu0 0.0
        %1407 = vmatpush2.msra.mxu0 0.0
        %1408 = vmatprep.subr.mxu0 0.0
        %1409 = vmatpush2.msra.mxu0 0.0
        %1410 = vmatprep.subr.mxu0 0.0
        %1411 = vmatpush2.msra.mxu0 0.0
        %1412 = vmatprep.subr.mxu0 0.0
        %1413 = vmatpush2.msra.mxu0 0.0
        %1414 = vmatprep.subr.mxu0 0.0
        %1415 = vmatpush2.msra.mxu0 0.0
        %1416 = vmatprep.subr.mxu0 0.0
        %1417 = vmatpush2.msra.mxu0 0.0
        %1418 = vmatprep.subr.mxu0 0.0
        %1419 = vmatpush2.msra.mxu0 0.0
        %1420 = vmatprep.subr.mxu0 0.0
        %1421 = vmatpush2.msra.mxu0 0.0
        %1422 = vmatprep.subr.mxu0 0.0
        %1423 = vmatpush2.msra.mxu0 0.0
        %1424 = vmatprep.subr.mxu0 0.0
        %1425 = vmatpush2.msra.mxu0 0.0
        %1426 = vmatprep.subr.mxu0 0.0
        %1427 = vmatpush2.msra.mxu0 0.0
        %1428 = vmatprep.subr.mxu0 0.0
        %1429 = vmatpush2.msra.mxu0 0.0
        %1430 = vmatprep.mubr.f32.mxu0 0.0
        %1431 = vmatmul.mubr.f32.gmra.mxu0 %v1364
        %v1432 = vpop.f32.mrf.mxu0
        %v1433 = vadd.f32 0.0, %v1432
        %v1434 = vpop.f32.mrf.mxu0
        %1435 = vdwg.mxu0
        %v1437 = vsel %vm1109, %v1433, 0
        %1439 = vmatprep.subr.mxu0 0.0
        %1440 = vmatpush1.msra.mxu0 0.0
        %1441 = vmatprep.subr.mxu0 0.0
        %1442 = vmatpush1.msra.mxu0 0.0
        %1443 = vmatprep.subr.mxu0 0.0
        %1444 = vmatpush1.msra.mxu0 0.0
        %1445 = vmatprep.subr.mxu0 0.0
        %1446 = vmatpush1.msra.mxu0 0.0
        %1447 = vmatprep.subr.mxu0 0.0
        %1448 = vmatpush1.msra.mxu0 0.0
        %1449 = vmatprep.subr.mxu0 0.0
        %1450 = vmatpush1.msra.mxu0 0.0
        %1451 = vmatprep.subr.mxu0 0.0
        %1452 = vmatpush1.msra.mxu0 0.0
        %1453 = vmatprep.subr.mxu0 0.0
        %1454 = vmatpush1.msra.mxu0 0.0
        %1455 = vmatprep.subr.mxu0 0.0
        %1456 = vmatpush1.msra.mxu0 0.0
        %1457 = vmatprep.subr.mxu0 0.0
        %1458 = vmatpush1.msra.mxu0 0.0
        %1459 = vmatprep.subr.mxu0 0.0
        %1460 = vmatpush1.msra.mxu0 0.0
        %1461 = vmatprep.subr.mxu0 0.0
        %1462 = vmatpush1.msra.mxu0 0.0
        %1463 = vmatprep.subr.mxu0 0.0
        %1464 = vmatpush1.msra.mxu0 0.0
        %1465 = vmatprep.subr.mxu0 0.0
        %1466 = vmatpush1.msra.mxu0 0.0
        %1467 = vmatprep.subr.mxu0 0.0
        %1468 = vmatpush1.msra.mxu0 0.0
        %1469 = vmatprep.subr.mxu0 0.0
        %1470 = vmatpush1.msra.mxu0 %v1096
        %1471 = vmatprep.subr.mxu0 0.0
        %1472 = vmatpush2.msra.mxu0 0.0
        %1473 = vmatprep.subr.mxu0 0.0
        %1474 = vmatpush2.msra.mxu0 0.0
        %1475 = vmatprep.subr.mxu0 0.0
        %1476 = vmatpush2.msra.mxu0 0.0
        %1477 = vmatprep.subr.mxu0 0.0
        %1478 = vmatpush2.msra.mxu0 0.0
        %1479 = vmatprep.subr.mxu0 0.0
        %1480 = vmatpush2.msra.mxu0 0.0
        %1481 = vmatprep.subr.mxu0 0.0
        %1482 = vmatpush2.msra.mxu0 0.0
        %1483 = vmatprep.subr.mxu0 0.0
        %1484 = vmatpush2.msra.mxu0 0.0
        %1485 = vmatprep.subr.mxu0 0.0
        %1486 = vmatpush2.msra.mxu0 0.0
        %1487 = vmatprep.subr.mxu0 0.0
        %1488 = vmatpush2.msra.mxu0 0.0
        %1489 = vmatprep.subr.mxu0 0.0
        %1490 = vmatpush2.msra.mxu0 0.0
        %1491 = vmatprep.subr.mxu0 0.0
        %1492 = vmatpush2.msra.mxu0 0.0
        %1493 = vmatprep.subr.mxu0 0.0
        %1494 = vmatpush2.msra.mxu0 0.0
        %1495 = vmatprep.subr.mxu0 0.0
        %1496 = vmatpush2.msra.mxu0 0.0
        %1497 = vmatprep.subr.mxu0 0.0
        %1498 = vmatpush2.msra.mxu0 0.0
        %1499 = vmatprep.subr.mxu0 0.0
        %1500 = vmatpush2.msra.mxu0 0.0
        %1501 = vmatprep.subr.mxu0 0.0
        %1502 = vmatpush2.msra.mxu0 0.0
        %1503 = vmatprep.mubr.f32.mxu0 0.0
        %1504 = vmatmul.mubr.f32.gmra.mxu0 %v1437
        %v1505 = vpop.f32.mrf.mxu0
        %v1506 = vadd.f32 0.0, %v1505
        %v1507 = vpop.f32.mrf.mxu0
        %1508 = vdwg.mxu0
        %v1510 = vsel %vm1109, %v1268, 0
        %1512 = vmatprep.subr.mxu0 0.0
        %1513 = vmatpush1.msra.mxu0 0.0
        %1514 = vmatprep.subr.mxu0 0.0
        %1515 = vmatpush1.msra.mxu0 0.0
        %1516 = vmatprep.subr.mxu0 0.0
        %1517 = vmatpush1.msra.mxu0 0.0
        %1518 = vmatprep.subr.mxu0 0.0
        %1519 = vmatpush1.msra.mxu0 0.0
        %1520 = vmatprep.subr.mxu0 0.0
        %1521 = vmatpush1.msra.mxu0 0.0
        %1522 = vmatprep.subr.mxu0 0.0
        %1523 = vmatpush1.msra.mxu0 0.0
        %1524 = vmatprep.subr.mxu0 0.0
        %1525 = vmatpush1.msra.mxu0 0.0
        %1526 = vmatprep.subr.mxu0 0.0
        %1527 = vmatpush1.msra.mxu0 0.0
        %1528 = vmatprep.subr.mxu0 0.0
        %1529 = vmatpush1.msra.mxu0 0.0
        %1530 = vmatprep.subr.mxu0 0.0
        %1531 = vmatpush1.msra.mxu0 0.0
        %1532 = vmatprep.subr.mxu0 0.0
        %1533 = vmatpush1.msra.mxu0 0.0
        %1534 = vmatprep.subr.mxu0 0.0
        %1535 = vmatpush1.msra.mxu0 0.0
        %1536 = vmatprep.subr.mxu0 0.0
        %1537 = vmatpush1.msra.mxu0 0.0
        %1538 = vmatprep.subr.mxu0 0.0
        %1539 = vmatpush1.msra.mxu0 0.0
        %1540 = vmatprep.subr.mxu0 0.0
        %1541 = vmatpush1.msra.mxu0 0.0
        %1542 = vmatprep.subr.mxu0 0.0
        %1543 = vmatpush1.msra.mxu0 %v1095
        %1544 = vmatprep.subr.mxu0 0.0
        %1545 = vmatpush2.msra.mxu0 0.0
        %1546 = vmatprep.subr.mxu0 0.0
        %1547 = vmatpush2.msra.mxu0 0.0
        %1548 = vmatprep.subr.mxu0 0.0
        %1549 = vmatpush2.msra.mxu0 0.0
        %1550 = vmatprep.subr.mxu0 0.0
        %1551 = vmatpush2.msra.mxu0 0.0
        %1552 = vmatprep.subr.mxu0 0.0
        %1553 = vmatpush2.msra.mxu0 0.0
        %1554 = vmatprep.subr.mxu0 0.0
        %1555 = vmatpush2.msra.mxu0 0.0
        %1556 = vmatprep.subr.mxu0 0.0
        %1557 = vmatpush2.msra.mxu0 0.0
        %1558 = vmatprep.subr.mxu0 0.0
        %1559 = vmatpush2.msra.mxu0 0.0
        %1560 = vmatprep.subr.mxu0 0.0
        %1561 = vmatpush2.msra.mxu0 0.0
        %1562 = vmatprep.subr.mxu0 0.0
        %1563 = vmatpush2.msra.mxu0 0.0
        %1564 = vmatprep.subr.mxu0 0.0
        %1565 = vmatpush2.msra.mxu0 0.0
        %1566 = vmatprep.subr.mxu0 0.0
        %1567 = vmatpush2.msra.mxu0 0.0
        %1568 = vmatprep.subr.mxu0 0.0
        %1569 = vmatpush2.msra.mxu0 0.0
        %1570 = vmatprep.subr.mxu0 0.0
        %1571 = vmatpush2.msra.mxu0 0.0
        %1572 = vmatprep.subr.mxu0 0.0
        %1573 = vmatpush2.msra.mxu0 0.0
        %1574 = vmatprep.subr.mxu0 0.0
        %1575 = vmatpush2.msra.mxu0 0.0
        %1576 = vmatprep.mubr.f32.mxu0 0.0
        %1577 = vmatmul.mubr.f32.gmra.mxu0 %v1510
        %v1578 = vpop.f32.mrf.mxu0
        %v1579 = vadd.f32 %v1506, %v1578
        %v1580 = vpop.f32.mrf.mxu0
        %1581 = vdwg.mxu0
        %1582 = vrot.lane.b32.xlu0 %v1092, 112
        %v1583 = vpop.permute.xlu0 %1582
        %1584 = vrot.lane.b32.xlu0 %v1092, 80
        %v1585 = vpop.permute.xlu0 %1584
        %v1586 = vsel %vm1109, %v1583, 0
        %v1588 = vsel %vm1109, %v1585, 0
        %1590 = vmatprep.subr.mxu0 0.0
        %1591 = vmatpush1.xpose.msra.mxu0 0.0
        %1592 = vmatprep.subr.mxu0 0.0
        %1593 = vmatpush1.xpose.msra.mxu0 0.0
        %1594 = vmatprep.subr.mxu0 0.0
        %1595 = vmatpush1.xpose.msra.mxu0 0.0
        %1596 = vmatprep.subr.mxu0 0.0
        %1597 = vmatpush1.xpose.msra.mxu0 0.0
        %1598 = vmatprep.subr.mxu0 0.0
        %1599 = vmatpush1.xpose.msra.mxu0 0.0
        %1600 = vmatprep.subr.mxu0 0.0
        %1601 = vmatpush1.xpose.msra.mxu0 0.0
        %1602 = vmatprep.subr.mxu0 0.0
        %1603 = vmatpush1.xpose.msra.mxu0 0.0
        %1604 = vmatprep.subr.mxu0 0.0
        %1605 = vmatpush1.xpose.msra.mxu0 0.0
        %1606 = vmatprep.subr.mxu0 0.0
        %1607 = vmatpush1.xpose.msra.mxu0 0.0
        %1608 = vmatprep.subr.mxu0 0.0
        %1609 = vmatpush1.xpose.msra.mxu0 0.0
        %1610 = vmatprep.subr.mxu0 0.0
        %1611 = vmatpush1.xpose.msra.mxu0 0.0
        %1612 = vmatprep.subr.mxu0 0.0
        %1613 = vmatpush1.xpose.msra.mxu0 0.0
        %1614 = vmatprep.subr.mxu0 0.0
        %1615 = vmatpush1.xpose.msra.mxu0 0.0
        %1616 = vmatprep.subr.mxu0 0.0
        %1617 = vmatpush1.xpose.msra.mxu0 0.0
        %1618 = vmatprep.subr.mxu0 0.0
        %1619 = vmatpush1.xpose.msra.mxu0 0.0
        %1620 = vmatprep.subr.mxu0 0.0
        %1621 = vmatpush1.xpose.msra.mxu0 %v1588
        %1622 = vmatprep.subr.mxu0 0.0
        %1623 = vmatpush2.xpose.msra.mxu0 0.0
        %1624 = vmatprep.subr.mxu0 0.0
        %1625 = vmatpush2.xpose.msra.mxu0 0.0
        %1626 = vmatprep.subr.mxu0 0.0
        %1627 = vmatpush2.xpose.msra.mxu0 0.0
        %1628 = vmatprep.subr.mxu0 0.0
        %1629 = vmatpush2.xpose.msra.mxu0 0.0
        %1630 = vmatprep.subr.mxu0 0.0
        %1631 = vmatpush2.xpose.msra.mxu0 0.0
        %1632 = vmatprep.subr.mxu0 0.0
        %1633 = vmatpush2.xpose.msra.mxu0 0.0
        %1634 = vmatprep.subr.mxu0 0.0
        %1635 = vmatpush2.xpose.msra.mxu0 0.0
        %1636 = vmatprep.subr.mxu0 0.0
        %1637 = vmatpush2.xpose.msra.mxu0 0.0
        %1638 = vmatprep.subr.mxu0 0.0
        %1639 = vmatpush2.xpose.msra.mxu0 0.0
        %1640 = vmatprep.subr.mxu0 0.0
        %1641 = vmatpush2.xpose.msra.mxu0 0.0
        %1642 = vmatprep.subr.mxu0 0.0
        %1643 = vmatpush2.xpose.msra.mxu0 0.0
        %1644 = vmatprep.subr.mxu0 0.0
        %1645 = vmatpush2.xpose.msra.mxu0 0.0
        %1646 = vmatprep.subr.mxu0 0.0
        %1647 = vmatpush2.xpose.msra.mxu0 0.0
        %1648 = vmatprep.subr.mxu0 0.0
        %1649 = vmatpush2.xpose.msra.mxu0 0.0
        %1650 = vmatprep.subr.mxu0 0.0
        %1651 = vmatpush2.xpose.msra.mxu0 0.0
        %1652 = vmatprep.subr.mxu0 0.0
        %1653 = vmatpush2.xpose.msra.mxu0 0.0
        %1654 = vmatprep.mubr.f32.mxu0 0.0
        %1655 = vmatmul.mubr.f32.gmra.mxu0 %v1586
        %v1656 = vpop.f32.mrf.mxu0
        %v1657 = vadd.f32 %v1104, %v1656
        %v1658 = vpop.f32.mrf.mxu0
        %1659 = vdwg.mxu0
        %v1660 = vsel %vm1109, %v1657, -inf
        %1661 = vmax.xlane.f32.xlu0 %v1660
        %v1662 = vpop.xlane.xlu0 %1661
        %v1663 = vsub.f32 %v1657, %v1662
        %v1664 = vmul.f32 %v1663, 1.442695
        %v1665 = vpow.pop %v1664
        %v1666 = vsel %vm1109, %v1665, 0.0
        %1667 = vadd.xlane.f32.xlu0 %v1666
        %v1668 = vpop.xlane.xlu0 %1667
        %v1669 = vrcp.pop %v1668
        %v1670 = vmul.f32 %v1665, %v1669
        %1671 = vrot.lane.b32.xlu0 %v1092, 48
        %v1672 = vpop.permute.xlu0 %1671
        %v1675 = vsel %vm1109, %v1670, 0
        %1677 = vmatprep.subr.mxu0 0.0
        %1678 = vmatpush1.msra.mxu0 0.0
        %1679 = vmatprep.subr.mxu0 0.0
        %1680 = vmatpush1.msra.mxu0 0.0
        %1681 = vmatprep.subr.mxu0 0.0
        %1682 = vmatpush1.msra.mxu0 0.0
        %1683 = vmatprep.subr.mxu0 0.0
        %1684 = vmatpush1.msra.mxu0 0.0
        %1685 = vmatprep.subr.mxu0 0.0
        %1686 = vmatpush1.msra.mxu0 0.0
        %1687 = vmatprep.subr.mxu0 0.0
        %1688 = vmatpush1.msra.mxu0 0.0
        %1689 = vmatprep.subr.mxu0 0.0
        %1690 = vmatpush1.msra.mxu0 0.0
        %1691 = vmatprep.subr.mxu0 0.0
        %1692 = vmatpush1.msra.mxu0 0.0
        %1693 = vmatprep.subr.mxu0 0.0
        %1694 = vmatpush1.msra.mxu0 0.0
        %1695 = vmatprep.subr.mxu0 0.0
        %1696 = vmatpush1.msra.mxu0 0.0
        %1697 = vmatprep.subr.mxu0 0.0
        %1698 = vmatpush1.msra.mxu0 0.0
        %1699 = vmatprep.subr.mxu0 0.0
        %1700 = vmatpush1.msra.mxu0 0.0
        %1701 = vmatprep.subr.mxu0 0.0
        %1702 = vmatpush1.msra.mxu0 0.0
        %1703 = vmatprep.subr.mxu0 0.0
        %1704 = vmatpush1.msra.mxu0 0.0
        %1705 = vmatprep.subr.mxu0 0.0
        %1706 = vmatpush1.msra.mxu0 0.0
        %1707 = vmatprep.subr.mxu0 0.0
        %1708 = vmatpush1.msra.mxu0 %v1672
        %1709 = vmatprep.subr.mxu0 0.0
        %1710 = vmatpush2.msra.mxu0 0.0
        %1711 = vmatprep.subr.mxu0 0.0
        %1712 = vmatpush2.msra.mxu0 0.0
        %1713 = vmatprep.subr.mxu0 0.0
        %1714 = vmatpush2.msra.mxu0 0.0
        %1715 = vmatprep.subr.mxu0 0.0
        %1716 = vmatpush2.msra.mxu0 0.0
        %1717 = vmatprep.subr.mxu0 0.0
        %1718 = vmatpush2.msra.mxu0 0.0
        %1719 = vmatprep.subr.mxu0 0.0
        %1720 = vmatpush2.msra.mxu0 0.0
        %1721 = vmatprep.subr.mxu0 0.0
        %1722 = vmatpush2.msra.mxu0 0.0
        %1723 = vmatprep.subr.mxu0 0.0
        %1724 = vmatpush2.msra.mxu0 0.0
        %1725 = vmatprep.subr.mxu0 0.0
        %1726 = vmatpush2.msra.mxu0 0.0
        %1727 = vmatprep.subr.mxu0 0.0
        %1728 = vmatpush2.msra.mxu0 0.0
        %1729 = vmatprep.subr.mxu0 0.0
        %1730 = vmatpush2.msra.mxu0 0.0
        %1731 = vmatprep.subr.mxu0 0.0
        %1732 = vmatpush2.msra.mxu0 0.0
        %1733 = vmatprep.subr.mxu0 0.0
        %1734 = vmatpush2.msra.mxu0 0.0
        %1735 = vmatprep.subr.mxu0 0.0
        %1736 = vmatpush2.msra.mxu0 0.0
        %1737 = vmatprep.subr.mxu0 0.0
        %1738 = vmatpush2.msra.mxu0 0.0
        %1739 = vmatprep.subr.mxu0 0.0
        %1740 = vmatpush2.msra.mxu0 0.0
        %1741 = vmatprep.mubr.f32.mxu0 0.0
        %1742 = vmatmul.mubr.f32.gmra.mxu0 %v1675
        %v1743 = vpop.f32.mrf.mxu0
        %v1744 = vadd.f32 0.0, %v1743
        %v1745 = vpop.f32.mrf.mxu0
        %1746 = vdwg.mxu0
        %v1748 = vsel %vm1109, %v1744, 0
        %1750 = vmatprep.subr.mxu0 0.0
        %1751 = vmatpush1.msra.mxu0 0.0
        %1752 = vmatprep.subr.mxu0 0.0
        %1753 = vmatpush1.msra.mxu0 0.0
        %1754 = vmatprep.subr.mxu0 0.0
        %1755 = vmatpush1.msra.mxu0 0.0
        %1756 = vmatprep.subr.mxu0 0.0
        %1757 = vmatpush1.msra.mxu0 0.0
        %1758 = vmatprep.subr.mxu0 0.0
        %1759 = vmatpush1.msra.mxu0 0.0
        %1760 = vmatprep.subr.mxu0 0.0
        %1761 = vmatpush1.msra.mxu0 0.0
        %1762 = vmatprep.subr.mxu0 0.0
        %1763 = vmatpush1.msra.mxu0 0.0
        %1764 = vmatprep.subr.mxu0 0.0
        %1765 = vmatpush1.msra.mxu0 0.0
        %1766 = vmatprep.subr.mxu0 0.0
        %1767 = vmatpush1.msra.mxu0 0.0
        %1768 = vmatprep.subr.mxu0 0.0
        %1769 = vmatpush1.msra.mxu0 0.0
        %1770 = vmatprep.subr.mxu0 0.0
        %1771 = vmatpush1.msra.mxu0 0.0
        %1772 = vmatprep.subr.mxu0 0.0
        %1773 = vmatpush1.msra.mxu0 0.0
        %1774 = vmatprep.subr.mxu0 0.0
        %1775 = vmatpush1.msra.mxu0 0.0
        %1776 = vmatprep.subr.mxu0 0.0
        %1777 = vmatpush1.msra.mxu0 0.0
        %1778 = vmatprep.subr.mxu0 0.0
        %1779 = vmatpush1.msra.mxu0 0.0
        %1780 = vmatprep.subr.mxu0 0.0
        %1781 = vmatpush1.msra.mxu0 %v1097
        %1782 = vmatprep.subr.mxu0 0.0
        %1783 = vmatpush2.msra.mxu0 0.0
        %1784 = vmatprep.subr.mxu0 0.0
        %1785 = vmatpush2.msra.mxu0 0.0
        %1786 = vmatprep.subr.mxu0 0.0
        %1787 = vmatpush2.msra.mxu0 0.0
        %1788 = vmatprep.subr.mxu0 0.0
        %1789 = vmatpush2.msra.mxu0 0.0
        %1790 = vmatprep.subr.mxu0 0.0
        %1791 = vmatpush2.msra.mxu0 0.0
        %1792 = vmatprep.subr.mxu0 0.0
        %1793 = vmatpush2.msra.mxu0 0.0
        %1794 = vmatprep.subr.mxu0 0.0
        %1795 = vmatpush2.msra.mxu0 0.0
        %1796 = vmatprep.subr.mxu0 0.0
        %1797 = vmatpush2.msra.mxu0 0.0
        %1798 = vmatprep.subr.mxu0 0.0
        %1799 = vmatpush2.msra.mxu0 0.0
        %1800 = vmatprep.subr.mxu0 0.0
        %1801 = vmatpush2.msra.mxu0 0.0
        %1802 = vmatprep.subr.mxu0 0.0
        %1803 = vmatpush2.msra.mxu0 0.0
        %1804 = vmatprep.subr.mxu0 0.0
        %1805 = vmatpush2.msra.mxu0 0.0
        %1806 = vmatprep.subr.mxu0 0.0
        %1807 = vmatpush2.msra.mxu0 0.0
        %1808 = vmatprep.subr.mxu0 0.0
        %1809 = vmatpush2.msra.mxu0 0.0
        %1810 = vmatprep.subr.mxu0 0.0
        %1811 = vmatpush2.msra.mxu0 0.0
        %1812 = vmatprep.subr.mxu0 0.0
        %1813 = vmatpush2.msra.mxu0 0.0
        %1814 = vmatprep.mubr.f32.mxu0 0.0
        %1815 = vmatmul.mubr.f32.gmra.mxu0 %v1748
        %v1816 = vpop.f32.mrf.mxu0
        %v1817 = vadd.f32 0.0, %v1816
        %v1818 = vpop.f32.mrf.mxu0
        %1819 = vdwg.mxu0
        %v1820 = vadd.f32 %v1579, %v1817
        %1821 = vrot.lane.b32.xlu0 %v1092, 104
        %v1822 = vpop.permute.xlu0 %1821
        %1823 = vrot.lane.b32.xlu0 %v1092, 72
        %v1824 = vpop.permute.xlu0 %1823
        %v1825 = vsel %vm1109, %v1822, 0
        %v1827 = vsel %vm1109, %v1824, 0
        %1829 = vmatprep.subr.mxu0 0.0
        %1830 = vmatpush1.xpose.msra.mxu0 0.0
        %1831 = vmatprep.subr.mxu0 0.0
        %1832 = vmatpush1.xpose.msra.mxu0 0.0
        %1833 = vmatprep.subr.mxu0 0.0
        %1834 = vmatpush1.xpose.msra.mxu0 0.0
        %1835 = vmatprep.subr.mxu0 0.0
        %1836 = vmatpush1.xpose.msra.mxu0 0.0
        %1837 = vmatprep.subr.mxu0 0.0
        %1838 = vmatpush1.xpose.msra.mxu0 0.0
        %1839 = vmatprep.subr.mxu0 0.0
        %1840 = vmatpush1.xpose.msra.mxu0 0.0
        %1841 = vmatprep.subr.mxu0 0.0
        %1842 = vmatpush1.xpose.msra.mxu0 0.0
        %1843 = vmatprep.subr.mxu0 0.0
        %1844 = vmatpush1.xpose.msra.mxu0 0.0
        %1845 = vmatprep.subr.mxu0 0.0
        %1846 = vmatpush1.xpose.msra.mxu0 0.0
        %1847 = vmatprep.subr.mxu0 0.0
        %1848 = vmatpush1.xpose.msra.mxu0 0.0
        %1849 = vmatprep.subr.mxu0 0.0
        %1850 = vmatpush1.xpose.msra.mxu0 0.0
        %1851 = vmatprep.subr.mxu0 0.0
        %1852 = vmatpush1.xpose.msra.mxu0 0.0
        %1853 = vmatprep.subr.mxu0 0.0
        %1854 = vmatpush1.xpose.msra.mxu0 0.0
        %1855 = vmatprep.subr.mxu0 0.0
        %1856 = vmatpush1.xpose.msra.mxu0 0.0
        %1857 = vmatprep.subr.mxu0 0.0
        %1858 = vmatpush1.xpose.msra.mxu0 0.0
        %1859 = vmatprep.subr.mxu0 0.0
        %1860 = vmatpush1.xpose.msra.mxu0 %v1827
        %1861 = vmatprep.subr.mxu0 0.0
        %1862 = vmatpush2.xpose.msra.mxu0 0.0
        %1863 = vmatprep.subr.mxu0 0.0
        %1864 = vmatpush2.xpose.msra.mxu0 0.0
        %1865 = vmatprep.subr.mxu0 0.0
        %1866 = vmatpush2.xpose.msra.mxu0 0.0
        %1867 = vmatprep.subr.mxu0 0.0
        %1868 = vmatpush2.xpose.msra.mxu0 0.0
        %1869 = vmatprep.subr.mxu0 0.0
        %1870 = vmatpush2.xpose.msra.mxu0 0.0
        %1871 = vmatprep.subr.mxu0 0.0
        %1872 = vmatpush2.xpose.msra.mxu0 0.0
        %1873 = vmatprep.subr.mxu0 0.0
        %1874 = vmatpush2.xpose.msra.mxu0 0.0
        %1875 = vmatprep.subr.mxu0 0.0
        %1876 = vmatpush2.xpose.msra.mxu0 0.0
        %1877 = vmatprep.subr.mxu0 0.0
        %1878 = vmatpush2.xpose.msra.mxu0 0.0
        %1879 = vmatprep.subr.mxu0 0.0
        %1880 = vmatpush2.xpose.msra.mxu0 0.0
        %1881 = vmatprep.subr.mxu0 0.0
        %1882 = vmatpush2.xpose.msra.mxu0 0.0
        %1883 = vmatprep.subr.mxu0 0.0
        %1884 = vmatpush2.xpose.msra.mxu0 0.0
        %1885 = vmatprep.subr.mxu0 0.0
        %1886 = vmatpush2.xpose.msra.mxu0 0.0
        %1887 = vmatprep.subr.mxu0 0.0
        %1888 = vmatpush2.xpose.msra.mxu0 0.0
        %1889 = vmatprep.subr.mxu0 0.0
        %1890 = vmatpush2.xpose.msra.mxu0 0.0
        %1891 = vmatprep.subr.mxu0 0.0
        %1892 = vmatpush2.xpose.msra.mxu0 0.0
        %1893 = vmatprep.mubr.f32.mxu0 0.0
        %1894 = vmatmul.mubr.f32.gmra.mxu0 %v1825
        %v1895 = vpop.f32.mrf.mxu0
        %v1896 = vadd.f32 %v1104, %v1895
        %v1897 = vpop.f32.mrf.mxu0
        %1898 = vdwg.mxu0
        %v1899 = vsel %vm1109, %v1896, -inf
        %1900 = vmax.xlane.f32.xlu0 %v1899
        %v1901 = vpop.xlane.xlu0 %1900
        %v1902 = vsub.f32 %v1896, %v1901
        %v1903 = vmul.f32 %v1902, 1.442695
        %v1904 = vpow.pop %v1903
        %v1905 = vsel %vm1109, %v1904, 0.0
        %1906 = vadd.xlane.f32.xlu0 %v1905
        %v1907 = vpop.xlane.xlu0 %1906
        %v1908 = vrcp.pop %v1907
        %v1909 = vmul.f32 %v1904, %v1908
        %1910 = vrot.lane.b32.xlu0 %v1092, 40
        %v1911 = vpop.permute.xlu0 %1910
        %v1914 = vsel %vm1109, %v1909, 0
        %1916 = vmatprep.subr.mxu0 0.0
        %1917 = vmatpush1.msra.mxu0 0.0
        %1918 = vmatprep.subr.mxu0 0.0
        %1919 = vmatpush1.msra.mxu0 0.0
        %1920 = vmatprep.subr.mxu0 0.0
        %1921 = vmatpush1.msra.mxu0 0.0
        %1922 = vmatprep.subr.mxu0 0.0
        %1923 = vmatpush1.msra.mxu0 0.0
        %1924 = vmatprep.subr.mxu0 0.0
        %1925 = vmatpush1.msra.mxu0 0.0
        %1926 = vmatprep.subr.mxu0 0.0
        %1927 = vmatpush1.msra.mxu0 0.0
        %1928 = vmatprep.subr.mxu0 0.0
        %1929 = vmatpush1.msra.mxu0 0.0
        %1930 = vmatprep.subr.mxu0 0.0
        %1931 = vmatpush1.msra.mxu0 0.0
        %1932 = vmatprep.subr.mxu0 0.0
        %1933 = vmatpush1.msra.mxu0 0.0
        %1934 = vmatprep.subr.mxu0 0.0
        %1935 = vmatpush1.msra.mxu0 0.0
        %1936 = vmatprep.subr.mxu0 0.0
        %1937 = vmatpush1.msra.mxu0 0.0
        %1938 = vmatprep.subr.mxu0 0.0
        %1939 = vmatpush1.msra.mxu0 0.0
        %1940 = vmatprep.subr.mxu0 0.0
        %1941 = vmatpush1.msra.mxu0 0.0
        %1942 = vmatprep.subr.mxu0 0.0
        %1943 = vmatpush1.msra.mxu0 0.0
        %1944 = vmatprep.subr.mxu0 0.0
        %1945 = vmatpush1.msra.mxu0 0.0
        %1946 = vmatprep.subr.mxu0 0.0
        %1947 = vmatpush1.msra.mxu0 %v1911
        %1948 = vmatprep.subr.mxu0 0.0
        %1949 = vmatpush2.msra.mxu0 0.0
        %1950 = vmatprep.subr.mxu0 0.0
        %1951 = vmatpush2.msra.mxu0 0.0
        %1952 = vmatprep.subr.mxu0 0.0
        %1953 = vmatpush2.msra.mxu0 0.0
        %1954 = vmatprep.subr.mxu0 0.0
        %1955 = vmatpush2.msra.mxu0 0.0
        %1956 = vmatprep.subr.mxu0 0.0
        %1957 = vmatpush2.msra.mxu0 0.0
        %1958 = vmatprep.subr.mxu0 0.0
        %1959 = vmatpush2.msra.mxu0 0.0
        %1960 = vmatprep.subr.mxu0 0.0
        %1961 = vmatpush2.msra.mxu0 0.0
        %1962 = vmatprep.subr.mxu0 0.0
        %1963 = vmatpush2.msra.mxu0 0.0
        %1964 = vmatprep.subr.mxu0 0.0
        %1965 = vmatpush2.msra.mxu0 0.0
        %1966 = vmatprep.subr.mxu0 0.0
        %1967 = vmatpush2.msra.mxu0 0.0
        %1968 = vmatprep.subr.mxu0 0.0
        %1969 = vmatpush2.msra.mxu0 0.0
        %1970 = vmatprep.subr.mxu0 0.0
        %1971 = vmatpush2.msra.mxu0 0.0
        %1972 = vmatprep.subr.mxu0 0.0
        %1973 = vmatpush2.msra.mxu0 0.0
        %1974 = vmatprep.subr.mxu0 0.0
        %1975 = vmatpush2.msra.mxu0 0.0
        %1976 = vmatprep.subr.mxu0 0.0
        %1977 = vmatpush2.msra.mxu0 0.0
        %1978 = vmatprep.subr.mxu0 0.0
        %1979 = vmatpush2.msra.mxu0 0.0
        %1980 = vmatprep.mubr.f32.mxu0 0.0
        %1981 = vmatmul.mubr.f32.gmra.mxu0 %v1914
        %v1982 = vpop.f32.mrf.mxu0
        %v1983 = vadd.f32 0.0, %v1982
        %v1984 = vpop.f32.mrf.mxu0
        %1985 = vdwg.mxu0
        %v1987 = vsel %vm1109, %v1983, 0
        %1989 = vmatprep.subr.mxu0 0.0
        %1990 = vmatpush1.msra.mxu0 0.0
        %1991 = vmatprep.subr.mxu0 0.0
        %1992 = vmatpush1.msra.mxu0 0.0
        %1993 = vmatprep.subr.mxu0 0.0
        %1994 = vmatpush1.msra.mxu0 0.0
        %1995 = vmatprep.subr.mxu0 0.0
        %1996 = vmatpush1.msra.mxu0 0.0
        %1997 = vmatprep.subr.mxu0 0.0
        %1998 = vmatpush1.msra.mxu0 0.0
        %1999 = vmatprep.subr.mxu0 0.0
        %2000 = vmatpush1.msra.mxu0 0.0
        %2001 = vmatprep.subr.mxu0 0.0
        %2002 = vmatpush1.msra.mxu0 0.0
        %2003 = vmatprep.subr.mxu0 0.0
        %2004 = vmatpush1.msra.mxu0 0.0
        %2005 = vmatprep.subr.mxu0 0.0
        %2006 = vmatpush1.msra.mxu0 0.0
        %2007 = vmatprep.subr.mxu0 0.0
        %2008 = vmatpush1.msra.mxu0 0.0
        %2009 = vmatprep.subr.mxu0 0.0
        %2010 = vmatpush1.msra.mxu0 0.0
        %2011 = vmatprep.subr.mxu0 0.0
        %2012 = vmatpush1.msra.mxu0 0.0
        %2013 = vmatprep.subr.mxu0 0.0
        %2014 = vmatpush1.msra.mxu0 0.0
        %2015 = vmatprep.subr.mxu0 0.0
        %2016 = vmatpush1.msra.mxu0 0.0
        %2017 = vmatprep.subr.mxu0 0.0
        %2018 = vmatpush1.msra.mxu0 0.0
        %2019 = vmatprep.subr.mxu0 0.0
        %2020 = vmatpush1.msra.mxu0 %v1098
        %2021 = vmatprep.subr.mxu0 0.0
        %2022 = vmatpush2.msra.mxu0 0.0
        %2023 = vmatprep.subr.mxu0 0.0
        %2024 = vmatpush2.msra.mxu0 0.0
        %2025 = vmatprep.subr.mxu0 0.0
        %2026 = vmatpush2.msra.mxu0 0.0
        %2027 = vmatprep.subr.mxu0 0.0
        %2028 = vmatpush2.msra.mxu0 0.0
        %2029 = vmatprep.subr.mxu0 0.0
        %2030 = vmatpush2.msra.mxu0 0.0
        %2031 = vmatprep.subr.mxu0 0.0
        %2032 = vmatpush2.msra.mxu0 0.0
        %2033 = vmatprep.subr.mxu0 0.0
        %2034 = vmatpush2.msra.mxu0 0.0
        %2035 = vmatprep.subr.mxu0 0.0
        %2036 = vmatpush2.msra.mxu0 0.0
        %2037 = vmatprep.subr.mxu0 0.0
        %2038 = vmatpush2.msra.mxu0 0.0
        %2039 = vmatprep.subr.mxu0 0.0
        %2040 = vmatpush2.msra.mxu0 0.0
        %2041 = vmatprep.subr.mxu0 0.0
        %2042 = vmatpush2.msra.mxu0 0.0
        %2043 = vmatprep.subr.mxu0 0.0
        %2044 = vmatpush2.msra.mxu0 0.0
        %2045 = vmatprep.subr.mxu0 0.0
        %2046 = vmatpush2.msra.mxu0 0.0
        %2047 = vmatprep.subr.mxu0 0.0
        %2048 = vmatpush2.msra.mxu0 0.0
        %2049 = vmatprep.subr.mxu0 0.0
        %2050 = vmatpush2.msra.mxu0 0.0
        %2051 = vmatprep.subr.mxu0 0.0
        %2052 = vmatpush2.msra.mxu0 0.0
        %2053 = vmatprep.mubr.f32.mxu0 0.0
        %2054 = vmatmul.mubr.f32.gmra.mxu0 %v1987
        %v2055 = vpop.f32.mrf.mxu0
        %v2056 = vadd.f32 0.0, %v2055
        %v2057 = vpop.f32.mrf.mxu0
        %2058 = vdwg.mxu0
        %v2059 = vadd.f32 %v1820, %v2056
        %v2061 = vlaneseq
        %v2062 = vshrl.u32 %v2061, 7
        %v2063 = vsub.s32 0, %v2062
        %v2064 = vrot.slane %v1099, %v2063
        %v2066 = vadd.f32 %v2059, %v2064
        %v2067 = vadd.f32 %v974, %v2066
        %v2068 = vsel %vm979, %v2067, 0.0
        %2069 = vadd.xlane.f32.xlu0 %v2068
        %v2070 = vpop.xlane.xlu0 %2069
        %v2071 = vmul.f32 %v2070, %v983
        %v2072 = vsub.f32 %v2067, %v2071
        %v2073 = vmul.f32 %v2072, %v2072
        %v2074 = vsel %vm979, %v2073, 0.0
        %2075 = vadd.xlane.f32.xlu0 %v2074
        %v2076 = vpop.xlane.xlu0 %2075
        %v2077 = vmul.f32 %v2076, 0.032258064
        %v2078 = vrsqrt.pop %v2077
        %v2079 = vmul.f32 %v2077, %v2078
        %vm2080 = vcmp.eq.f32.partialorder %v2077, inf
        %v2081 = vsel %vm2080, %v2077, %v2079
        %vm2082 = vcmp.eq.f32.partialorder %v2077, 0.0
        %v2083 = vand.u32 %v2077, 2147483648
        %v2084 = vsel %vm2082, %v2083, %v2081
        %v2085 = vadd.f32 %v2084, 1e-06
        %v2086 = vrcp.pop %v2085
        %v2087 = vlaneseq
        %v2088 = vshrl.u32 %v2087, 7
        %v2089 = vsub.s32 2, %v2088
        %v2090 = vrot.slane %v978, %v2089
        %v2091 = vmul.f32 %v2090, %v2072
        %v2092 = vmul.f32 %v2091, %v2086
        %v2093 = vlaneseq
        %v2094 = vshrl.u32 %v2093, 7
        %v2095 = vsub.s32 3, %v2094
        %v2096 = vrot.slane %v978, %v2095
        %v2097 = vadd.f32 %v2092, %v2096
        %v2098 = vld [vmem:[%s17] sm:$0xff]
        %v2099 = vld [vmem:[%s17 + $0x8] sm:$0xff]
        %v2100 = vld [vmem:[%s17 + $0x10] sm:$0xff]
        %v2101 = vld [vmem:[%s17 + $0x18] sm:$0xff]
        %v2102 = vld [vmem:[%s19] sm:$0x1]
        %v2104 = vlaneseq
        %v2105 = vshrl.u32 %v2104, 7
        %v2106 = vsub.s32 0, %v2105
        %v2107 = vrot.slane %v2102, %v2106
        %v2110 = vsel %vm979, %v2097, 0
        %2112 = vmatprep.subr.mxu0 0.0
        %2113 = vmatpush1.msra.mxu0 0.0
        %2114 = vmatprep.subr.mxu0 0.0
        %2115 = vmatpush1.msra.mxu0 0.0
        %2116 = vmatprep.subr.mxu0 0.0
        %2117 = vmatpush1.msra.mxu0 0.0
        %2118 = vmatprep.subr.mxu0 0.0
        %2119 = vmatpush1.msra.mxu0 0.0
        %2120 = vmatprep.subr.mxu0 0.0
        %2121 = vmatpush1.msra.mxu0 0.0
        %2122 = vmatprep.subr.mxu0 0.0
        %2123 = vmatpush1.msra.mxu0 0.0
        %2124 = vmatprep.subr.mxu0 0.0
        %2125 = vmatpush1.msra.mxu0 0.0
        %2126 = vmatprep.subr.mxu0 0.0
        %2127 = vmatpush1.msra.mxu0 0.0
        %2128 = vmatprep.subr.mxu0 0.0
        %2129 = vmatpush1.msra.mxu0 0.0
        %2130 = vmatprep.subr.mxu0 0.0
        %2131 = vmatpush1.msra.mxu0 0.0
        %2132 = vmatprep.subr.mxu0 0.0
        %2133 = vmatpush1.msra.mxu0 0.0
        %2134 = vmatprep.subr.mxu0 0.0
        %2135 = vmatpush1.msra.mxu0 0.0
        %2136 = vmatprep.subr.mxu0 0.0
        %2137 = vmatpush1.msra.mxu0 %v2101
        %2138 = vmatprep.subr.mxu0 0.0
        %2139 = vmatpush1.msra.mxu0 %v2100
        %2140 = vmatprep.subr.mxu0 0.0
        %2141 = vmatpush1.msra.mxu0 %v2099
        %2142 = vmatprep.subr.mxu0 0.0
        %2143 = vmatpush1.msra.mxu0 %v2098
        %2144 = vmatprep.subr.mxu0 0.0
        %2145 = vmatpush2.msra.mxu0 0.0
        %2146 = vmatprep.subr.mxu0 0.0
        %2147 = vmatpush2.msra.mxu0 0.0
        %2148 = vmatprep.subr.mxu0 0.0
        %2149 = vmatpush2.msra.mxu0 0.0
        %2150 = vmatprep.subr.mxu0 0.0
        %2151 = vmatpush2.msra.mxu0 0.0
        %2152 = vmatprep.subr.mxu0 0.0
        %2153 = vmatpush2.msra.mxu0 0.0
        %2154 = vmatprep.subr.mxu0 0.0
        %2155 = vmatpush2.msra.mxu0 0.0
        %2156 = vmatprep.subr.mxu0 0.0
        %2157 = vmatpush2.msra.mxu0 0.0
        %2158 = vmatprep.subr.mxu0 0.0
        %2159 = vmatpush2.msra.mxu0 0.0
        %2160 = vmatprep.subr.mxu0 0.0
        %2161 = vmatpush2.msra.mxu0 0.0
        %2162 = vmatprep.subr.mxu0 0.0
        %2163 = vmatpush2.msra.mxu0 0.0
        %2164 = vmatprep.subr.mxu0 0.0
        %2165 = vmatpush2.msra.mxu0 0.0
        %2166 = vmatprep.subr.mxu0 0.0
        %2167 = vmatpush2.msra.mxu0 0.0
        %2168 = vmatprep.subr.mxu0 0.0
        %2169 = vmatpush2.msra.mxu0 0.0
        %2170 = vmatprep.subr.mxu0 0.0
        %2171 = vmatpush2.msra.mxu0 0.0
        %2172 = vmatprep.subr.mxu0 0.0
        %2173 = vmatpush2.msra.mxu0 0.0
        %2174 = vmatprep.subr.mxu0 0.0
        %2175 = vmatpush2.msra.mxu0 0.0
        %2176 = vmatprep.mubr.f32.mxu0 0.0
        %2177 = vmatmul.mubr.f32.gmra.mxu0 %v2110
        %v2178 = vpop.f32.mrf.mxu0
        %v2179 = vadd.f32 %v2107, %v2178
        %v2180 = vpop.f32.mrf.mxu0
        %2181 = vdwg.mxu0
        %v2182 = vmax.f32 %v2179, 0.0
        %v2183 = vld [vmem:[%s21] sm:$0xff]
        %v2184 = vld [vmem:[%s21 + $0x8] sm:$0xff]
        %v2185 = vld [vmem:[%s21 + $0x10] sm:$0xff]
        %v2186 = vld [vmem:[%s21 + $0x18] sm:$0xff]
        %v2187 = vld [vmem:[%s21 + $0x20] sm:$0xff]
        %v2188 = vld [vmem:[%s21 + $0x28] sm:$0xff]
        %v2189 = vld [vmem:[%s21 + $0x30] sm:$0xff]
        %v2190 = vld [vmem:[%s21 + $0x38] sm:$0xff]
        %vm2191 = vcmask 523264
        %v2193 = vsel %vm2191, %v2182, 0
        %2195 = vmatprep.subr.mxu0 0.0
        %2196 = vmatpush1.msra.mxu0 0.0
        %2197 = vmatprep.subr.mxu0 0.0
        %2198 = vmatpush1.msra.mxu0 0.0
        %2199 = vmatprep.subr.mxu0 0.0
        %2200 = vmatpush1.msra.mxu0 0.0
        %2201 = vmatprep.subr.mxu0 0.0
        %2202 = vmatpush1.msra.mxu0 0.0
        %2203 = vmatprep.subr.mxu0 0.0
        %2204 = vmatpush1.msra.mxu0 0.0
        %2205 = vmatprep.subr.mxu0 0.0
        %2206 = vmatpush1.msra.mxu0 0.0
        %2207 = vmatprep.subr.mxu0 0.0
        %2208 = vmatpush1.msra.mxu0 0.0
        %2209 = vmatprep.subr.mxu0 0.0
        %2210 = vmatpush1.msra.mxu0 0.0
        %2211 = vmatprep.subr.mxu0 0.0
        %2212 = vmatpush1.msra.mxu0 %v2190
        %2213 = vmatprep.subr.mxu0 0.0
        %2214 = vmatpush1.msra.mxu0 %v2189
        %2215 = vmatprep.subr.mxu0 0.0
        %2216 = vmatpush1.msra.mxu0 %v2188
        %2217 = vmatprep.subr.mxu0 0.0
        %2218 = vmatpush1.msra.mxu0 %v2187
        %2219 = vmatprep.subr.mxu0 0.0
        %2220 = vmatpush1.msra.mxu0 %v2186
        %2221 = vmatprep.subr.mxu0 0.0
        %2222 = vmatpush1.msra.mxu0 %v2185
        %2223 = vmatprep.subr.mxu0 0.0
        %2224 = vmatpush1.msra.mxu0 %v2184
        %2225 = vmatprep.subr.mxu0 0.0
        %2226 = vmatpush1.msra.mxu0 %v2183
        %2227 = vmatprep.subr.mxu0 0.0
        %2228 = vmatpush2.msra.mxu0 0.0
        %2229 = vmatprep.subr.mxu0 0.0
        %2230 = vmatpush2.msra.mxu0 0.0
        %2231 = vmatprep.subr.mxu0 0.0
        %2232 = vmatpush2.msra.mxu0 0.0
        %2233 = vmatprep.subr.mxu0 0.0
        %2234 = vmatpush2.msra.mxu0 0.0
        %2235 = vmatprep.subr.mxu0 0.0
        %2236 = vmatpush2.msra.mxu0 0.0
        %2237 = vmatprep.subr.mxu0 0.0
        %2238 = vmatpush2.msra.mxu0 0.0
        %2239 = vmatprep.subr.mxu0 0.0
        %2240 = vmatpush2.msra.mxu0 0.0
        %2241 = vmatprep.subr.mxu0 0.0
        %2242 = vmatpush2.msra.mxu0 0.0
        %2243 = vmatprep.subr.mxu0 0.0
        %2244 = vmatpush2.msra.mxu0 0.0
        %2245 = vmatprep.subr.mxu0 0.0
        %2246 = vmatpush2.msra.mxu0 0.0
        %2247 = vmatprep.subr.mxu0 0.0
        %2248 = vmatpush2.msra.mxu0 0.0
        %2249 = vmatprep.subr.mxu0 0.0
        %2250 = vmatpush2.msra.mxu0 0.0
        %2251 = vmatprep.subr.mxu0 0.0
        %2252 = vmatpush2.msra.mxu0 0.0
        %2253 = vmatprep.subr.mxu0 0.0
        %2254 = vmatpush2.msra.mxu0 0.0
        %2255 = vmatprep.subr.mxu0 0.0
        %2256 = vmatpush2.msra.mxu0 0.0
        %2257 = vmatprep.subr.mxu0 0.0
        %2258 = vmatpush2.msra.mxu0 0.0
        %2259 = vmatprep.mubr.f32.mxu0 0.0
        %2260 = vmatmul.mubr.f32.gmra.mxu0 %v2193
        %v2261 = vpop.f32.mrf.mxu0
        %v2262 = vadd.f32 0.0, %v2261
        %v2263 = vpop.f32.mrf.mxu0
        %2264 = vdwg.mxu0
        %v2265 = vadd.f32 %v2067, %v2262
        %v2266 = vld [vmem:[%s23] sm:$0x1]
        %v2268 = vlaneseq
        %v2269 = vshrl.u32 %v2268, 7
        %v2270 = vsub.s32 0, %v2269
        %v2271 = vrot.slane %v2266, %v2270
        %v2273 = vadd.f32 %v2265, %v2271
        %s2274 = scalar_lea.vmem %s25, 4
        %v2275 = vld [vmem:[%s2274] sm:$0xf]
        %v2276 = vsel %vm979, %v2273, 0.0
        %2277 = vadd.xlane.f32.xlu0 %v2276
        %v2278 = vpop.xlane.xlu0 %2277
        %v2279 = vmul.f32 %v2278, %v983
        %v2280 = vsub.f32 %v2273, %v2279
        %v2281 = vmul.f32 %v2280, %v2280
        %v2282 = vsel %vm979, %v2281, 0.0
        %2283 = vadd.xlane.f32.xlu0 %v2282
        %v2284 = vpop.xlane.xlu0 %2283
        %v2285 = vmul.f32 %v2284, 0.032258064
        %v2286 = vrsqrt.pop %v2285
        %v2287 = vmul.f32 %v2285, %v2286
        %vm2288 = vcmp.eq.f32.partialorder %v2285, inf
        %v2289 = vsel %vm2288, %v2285, %v2287
        %vm2290 = vcmp.eq.f32.partialorder %v2285, 0.0
        %v2291 = vand.u32 %v2285, 2147483648
        %v2292 = vsel %vm2290, %v2291, %v2289
        %v2293 = vadd.f32 %v2292, 1e-06
        %v2294 = vrcp.pop %v2293
        %v2295 = vlaneseq
        %v2296 = vshrl.u32 %v2295, 7
        %v2297 = vsub.s32 0, %v2296
        %v2298 = vrot.slane %v2275, %v2297
        %v2299 = vmul.f32 %v2298, %v2280
        %v2300 = vmul.f32 %v2299, %v2294
        %v2301 = vlaneseq
        %v2302 = vshrl.u32 %v2301, 7
        %v2303 = vsub.s32 1, %v2302
        %v2304 = vrot.slane %v2275, %v2303
        %v2305 = vadd.f32 %v2300, %v2304
        %s2306 = scalar_lea.vmem %s9, 32
        %v2307 = vld [vmem:[%s2306] sm:$0xff]
        %v2308 = vld [vmem:[%s2306 + $0x8] sm:$0xff]
        %v2309 = vld [vmem:[%s2306 + $0x10] sm:$0xff]
        %v2310 = vld [vmem:[%s2306 + $0x18] sm:$0xff]
        %s2311 = scalar_lea.vmem %s11, 1
        %v2312 = vld [vmem:[%s2311] sm:$0x1]
        %v2314 = vlaneseq
        %v2315 = vshrl.u32 %v2314, 7
        %v2316 = vsub.s32 0, %v2315
        %v2317 = vrot.slane %v2312, %v2316
        %v2320 = vsel %vm979, %v2305, 0
        %2322 = vmatprep.subr.mxu0 0.0
        %2323 = vmatpush1.msra.mxu0 0.0
        %2324 = vmatprep.subr.mxu0 0.0
        %2325 = vmatpush1.msra.mxu0 0.0
        %2326 = vmatprep.subr.mxu0 0.0
        %2327 = vmatpush1.msra.mxu0 0.0
        %2328 = vmatprep.subr.mxu0 0.0
        %2329 = vmatpush1.msra.mxu0 0.0
        %2330 = vmatprep.subr.mxu0 0.0
        %2331 = vmatpush1.msra.mxu0 0.0
        %2332 = vmatprep.subr.mxu0 0.0
        %2333 = vmatpush1.msra.mxu0 0.0
        %2334 = vmatprep.subr.mxu0 0.0
        %2335 = vmatpush1.msra.mxu0 0.0
        %2336 = vmatprep.subr.mxu0 0.0
        %2337 = vmatpush1.msra.mxu0 0.0
        %2338 = vmatprep.subr.mxu0 0.0
        %2339 = vmatpush1.msra.mxu0 0.0
        %2340 = vmatprep.subr.mxu0 0.0
        %2341 = vmatpush1.msra.mxu0 0.0
        %2342 = vmatprep.subr.mxu0 0.0
        %2343 = vmatpush1.msra.mxu0 0.0
        %2344 = vmatprep.subr.mxu0 0.0
        %2345 = vmatpush1.msra.mxu0 0.0
        %2346 = vmatprep.subr.mxu0 0.0
        %2347 = vmatpush1.msra.mxu0 %v2310
        %2348 = vmatprep.subr.mxu0 0.0
        %2349 = vmatpush1.msra.mxu0 %v2309
        %2350 = vmatprep.subr.mxu0 0.0
        %2351 = vmatpush1.msra.mxu0 %v2308
        %2352 = vmatprep.subr.mxu0 0.0
        %2353 = vmatpush1.msra.mxu0 %v2307
        %2354 = vmatprep.subr.mxu0 0.0
        %2355 = vmatpush2.msra.mxu0 0.0
        %2356 = vmatprep.subr.mxu0 0.0
        %2357 = vmatpush2.msra.mxu0 0.0
        %2358 = vmatprep.subr.mxu0 0.0
        %2359 = vmatpush2.msra.mxu0 0.0
        %2360 = vmatprep.subr.mxu0 0.0
        %2361 = vmatpush2.msra.mxu0 0.0
        %2362 = vmatprep.subr.mxu0 0.0
        %2363 = vmatpush2.msra.mxu0 0.0
        %2364 = vmatprep.subr.mxu0 0.0
        %2365 = vmatpush2.msra.mxu0 0.0
        %2366 = vmatprep.subr.mxu0 0.0
        %2367 = vmatpush2.msra.mxu0 0.0
        %2368 = vmatprep.subr.mxu0 0.0
        %2369 = vmatpush2.msra.mxu0 0.0
        %2370 = vmatprep.subr.mxu0 0.0
        %2371 = vmatpush2.msra.mxu0 0.0
        %2372 = vmatprep.subr.mxu0 0.0
        %2373 = vmatpush2.msra.mxu0 0.0
        %2374 = vmatprep.subr.mxu0 0.0
        %2375 = vmatpush2.msra.mxu0 0.0
        %2376 = vmatprep.subr.mxu0 0.0
        %2377 = vmatpush2.msra.mxu0 0.0
        %2378 = vmatprep.subr.mxu0 0.0
        %2379 = vmatpush2.msra.mxu0 0.0
        %2380 = vmatprep.subr.mxu0 0.0
        %2381 = vmatpush2.msra.mxu0 0.0
        %2382 = vmatprep.subr.mxu0 0.0
        %2383 = vmatpush2.msra.mxu0 0.0
        %2384 = vmatprep.subr.mxu0 0.0
        %2385 = vmatpush2.msra.mxu0 0.0
        %2386 = vmatprep.mubr.f32.mxu0 0.0
        %2387 = vmatmul.mubr.f32.gmra.mxu0 %v2320
        %v2388 = vpop.f32.mrf.mxu0
        %v2389 = vadd.f32 %v2317, %v2388
        %v2390 = vpop.f32.mrf.mxu0
        %2391 = vdwg.mxu0
        %s2392 = scalar_lea.vmem %s13, 32
        %v2393 = vld [vmem:[%s2392] sm:$0xff]
        %v2394 = vld [vmem:[%s2392 + $0x8] sm:$0xff]
        %v2395 = vld [vmem:[%s2392 + $0x10] sm:$0xff]
        %v2396 = vld [vmem:[%s2392 + $0x18] sm:$0xff]
        %s2397 = scalar_lea.vmem %s15, 1
        %v2398 = vld [vmem:[%s2397] sm:$0x1]
        %2400 = vrot.lane.b32.xlu0 %v2389, 96
        %v2401 = vpop.permute.xlu0 %2400
        %v2402 = vsel %vm1109, %v2389, 0
        %v2404 = vsel %vm1109, %v2401, 0
        %2406 = vmatprep.subr.mxu0 0.0
        %2407 = vmatpush1.xpose.msra.mxu0 0.0
        %2408 = vmatprep.subr.mxu0 0.0
        %2409 = vmatpush1.xpose.msra.mxu0 0.0
        %2410 = vmatprep.subr.mxu0 0.0
        %2411 = vmatpush1.xpose.msra.mxu0 0.0
        %2412 = vmatprep.subr.mxu0 0.0
        %2413 = vmatpush1.xpose.msra.mxu0 0.0
        %2414 = vmatprep.subr.mxu0 0.0
        %2415 = vmatpush1.xpose.msra.mxu0 0.0
        %2416 = vmatprep.subr.mxu0 0.0
        %2417 = vmatpush1.xpose.msra.mxu0 0.0
        %2418 = vmatprep.subr.mxu0 0.0
        %2419 = vmatpush1.xpose.msra.mxu0 0.0
        %2420 = vmatprep.subr.mxu0 0.0
        %2421 = vmatpush1.xpose.msra.mxu0 0.0
        %2422 = vmatprep.subr.mxu0 0.0
        %2423 = vmatpush1.xpose.msra.mxu0 0.0
        %2424 = vmatprep.subr.mxu0 0.0
        %2425 = vmatpush1.xpose.msra.mxu0 0.0
        %2426 = vmatprep.subr.mxu0 0.0
        %2427 = vmatpush1.xpose.msra.mxu0 0.0
        %2428 = vmatprep.subr.mxu0 0.0
        %2429 = vmatpush1.xpose.msra.mxu0 0.0
        %2430 = vmatprep.subr.mxu0 0.0
        %2431 = vmatpush1.xpose.msra.mxu0 0.0
        %2432 = vmatprep.subr.mxu0 0.0
        %2433 = vmatpush1.xpose.msra.mxu0 0.0
        %2434 = vmatprep.subr.mxu0 0.0
        %2435 = vmatpush1.xpose.msra.mxu0 0.0
        %2436 = vmatprep.subr.mxu0 0.0
        %2437 = vmatpush1.xpose.msra.mxu0 %v2404
        %2438 = vmatprep.subr.mxu0 0.0
        %2439 = vmatpush2.xpose.msra.mxu0 0.0
        %2440 = vmatprep.subr.mxu0 0.0
        %2441 = vmatpush2.xpose.msra.mxu0 0.0
        %2442 = vmatprep.subr.mxu0 0.0
        %2443 = vmatpush2.xpose.msra.mxu0 0.0
        %2444 = vmatprep.subr.mxu0 0.0
        %2445 = vmatpush2.xpose.msra.mxu0 0.0
        %2446 = vmatprep.subr.mxu0 0.0
        %2447 = vmatpush2.xpose.msra.mxu0 0.0
        %2448 = vmatprep.subr.mxu0 0.0
        %2449 = vmatpush2.xpose.msra.mxu0 0.0
        %2450 = vmatprep.subr.mxu0 0.0
        %2451 = vmatpush2.xpose.msra.mxu0 0.0
        %2452 = vmatprep.subr.mxu0 0.0
        %2453 = vmatpush2.xpose.msra.mxu0 0.0
        %2454 = vmatprep.subr.mxu0 0.0
        %2455 = vmatpush2.xpose.msra.mxu0 0.0
        %2456 = vmatprep.subr.mxu0 0.0
        %2457 = vmatpush2.xpose.msra.mxu0 0.0
        %2458 = vmatprep.subr.mxu0 0.0
        %2459 = vmatpush2.xpose.msra.mxu0 0.0
        %2460 = vmatprep.subr.mxu0 0.0
        %2461 = vmatpush2.xpose.msra.mxu0 0.0
        %2462 = vmatprep.subr.mxu0 0.0
        %2463 = vmatpush2.xpose.msra.mxu0 0.0
        %2464 = vmatprep.subr.mxu0 0.0
        %2465 = vmatpush2.xpose.msra.mxu0 0.0
        %2466 = vmatprep.subr.mxu0 0.0
        %2467 = vmatpush2.xpose.msra.mxu0 0.0
        %2468 = vmatprep.subr.mxu0 0.0
        %2469 = vmatpush2.xpose.msra.mxu0 0.0
        %2470 = vmatprep.mubr.f32.mxu0 0.0
        %2471 = vmatmul.mubr.f32.gmra.mxu0 %v2402
        %v2472 = vpop.f32.mrf.mxu0
        %v2473 = vadd.f32 %v1104, %v2472
        %v2474 = vpop.f32.mrf.mxu0
        %2475 = vdwg.mxu0
        %v2476 = vsel %vm1109, %v2473, -inf
        %2477 = vmax.xlane.f32.xlu0 %v2476
        %v2478 = vpop.xlane.xlu0 %2477
        %v2479 = vsub.f32 %v2473, %v2478
        %v2480 = vmul.f32 %v2479, 1.442695
        %v2481 = vpow.pop %v2480
        %v2482 = vsel %vm1109, %v2481, 0.0
        %2483 = vadd.xlane.f32.xlu0 %v2482
        %v2484 = vpop.xlane.xlu0 %2483
        %v2485 = vrcp.pop %v2484
        %v2486 = vmul.f32 %v2481, %v2485
        %2487 = vrot.lane.b32.xlu0 %v2389, 64
        %v2488 = vpop.permute.xlu0 %2487
        %v2491 = vsel %vm1109, %v2486, 0
        %2493 = vmatprep.subr.mxu0 0.0
        %2494 = vmatpush1.msra.mxu0 0.0
        %2495 = vmatprep.subr.mxu0 0.0
        %2496 = vmatpush1.msra.mxu0 0.0
        %2497 = vmatprep.subr.mxu0 0.0
        %2498 = vmatpush1.msra.mxu0 0.0
        %2499 = vmatprep.subr.mxu0 0.0
        %2500 = vmatpush1.msra.mxu0 0.0
        %2501 = vmatprep.subr.mxu0 0.0
        %2502 = vmatpush1.msra.mxu0 0.0
        %2503 = vmatprep.subr.mxu0 0.0
        %2504 = vmatpush1.msra.mxu0 0.0
        %2505 = vmatprep.subr.mxu0 0.0
        %2506 = vmatpush1.msra.mxu0 0.0
        %2507 = vmatprep.subr.mxu0 0.0
        %2508 = vmatpush1.msra.mxu0 0.0
        %2509 = vmatprep.subr.mxu0 0.0
        %2510 = vmatpush1.msra.mxu0 0.0
        %2511 = vmatprep.subr.mxu0 0.0
        %2512 = vmatpush1.msra.mxu0 0.0
        %2513 = vmatprep.subr.mxu0 0.0
        %2514 = vmatpush1.msra.mxu0 0.0
        %2515 = vmatprep.subr.mxu0 0.0
        %2516 = vmatpush1.msra.mxu0 0.0
        %2517 = vmatprep.subr.mxu0 0.0
        %2518 = vmatpush1.msra.mxu0 0.0
        %2519 = vmatprep.subr.mxu0 0.0
        %2520 = vmatpush1.msra.mxu0 0.0
        %2521 = vmatprep.subr.mxu0 0.0
        %2522 = vmatpush1.msra.mxu0 0.0
        %2523 = vmatprep.subr.mxu0 0.0
        %2524 = vmatpush1.msra.mxu0 %v2488
        %2525 = vmatprep.subr.mxu0 0.0
        %2526 = vmatpush2.msra.mxu0 0.0
        %2527 = vmatprep.subr.mxu0 0.0
        %2528 = vmatpush2.msra.mxu0 0.0
        %2529 = vmatprep.subr.mxu0 0.0
        %2530 = vmatpush2.msra.mxu0 0.0
        %2531 = vmatprep.subr.mxu0 0.0
        %2532 = vmatpush2.msra.mxu0 0.0
        %2533 = vmatprep.subr.mxu0 0.0
        %2534 = vmatpush2.msra.mxu0 0.0
        %2535 = vmatprep.subr.mxu0 0.0
        %2536 = vmatpush2.msra.mxu0 0.0
        %2537 = vmatprep.subr.mxu0 0.0
        %2538 = vmatpush2.msra.mxu0 0.0
        %2539 = vmatprep.subr.mxu0 0.0
        %2540 = vmatpush2.msra.mxu0 0.0
        %2541 = vmatprep.subr.mxu0 0.0
        %2542 = vmatpush2.msra.mxu0 0.0
        %2543 = vmatprep.subr.mxu0 0.0
        %2544 = vmatpush2.msra.mxu0 0.0
        %2545 = vmatprep.subr.mxu0 0.0
        %2546 = vmatpush2.msra.mxu0 0.0
        %2547 = vmatprep.subr.mxu0 0.0
        %2548 = vmatpush2.msra.mxu0 0.0
        %2549 = vmatprep.subr.mxu0 0.0
        %2550 = vmatpush2.msra.mxu0 0.0
        %2551 = vmatprep.subr.mxu0 0.0
        %2552 = vmatpush2.msra.mxu0 0.0
        %2553 = vmatprep.subr.mxu0 0.0
        %2554 = vmatpush2.msra.mxu0 0.0
        %2555 = vmatprep.subr.mxu0 0.0
        %2556 = vmatpush2.msra.mxu0 0.0
        %2557 = vmatprep.mubr.f32.mxu0 0.0
        %2558 = vmatmul.mubr.f32.gmra.mxu0 %v2491
        %v2559 = vpop.f32.mrf.mxu0
        %v2560 = vadd.f32 0.0, %v2559
        %v2561 = vpop.f32.mrf.mxu0
        %2562 = vdwg.mxu0
        %2563 = vrot.lane.b32.xlu0 %v2389, 120
        %v2564 = vpop.permute.xlu0 %2563
        %2565 = vrot.lane.b32.xlu0 %v2389, 88
        %v2566 = vpop.permute.xlu0 %2565
        %v2567 = vsel %vm1109, %v2564, 0
        %v2569 = vsel %vm1109, %v2566, 0
        %2571 = vmatprep.subr.mxu0 0.0
        %2572 = vmatpush1.xpose.msra.mxu0 0.0
        %2573 = vmatprep.subr.mxu0 0.0
        %2574 = vmatpush1.xpose.msra.mxu0 0.0
        %2575 = vmatprep.subr.mxu0 0.0
        %2576 = vmatpush1.xpose.msra.mxu0 0.0
        %2577 = vmatprep.subr.mxu0 0.0
        %2578 = vmatpush1.xpose.msra.mxu0 0.0
        %2579 = vmatprep.subr.mxu0 0.0
        %2580 = vmatpush1.xpose.msra.mxu0 0.0
        %2581 = vmatprep.subr.mxu0 0.0
        %2582 = vmatpush1.xpose.msra.mxu0 0.0
        %2583 = vmatprep.subr.mxu0 0.0
        %2584 = vmatpush1.xpose.msra.mxu0 0.0
        %2585 = vmatprep.subr.mxu0 0.0
        %2586 = vmatpush1.xpose.msra.mxu0 0.0
        %2587 = vmatprep.subr.mxu0 0.0
        %2588 = vmatpush1.xpose.msra.mxu0 0.0
        %2589 = vmatprep.subr.mxu0 0.0
        %2590 = vmatpush1.xpose.msra.mxu0 0.0
        %2591 = vmatprep.subr.mxu0 0.0
        %2592 = vmatpush1.xpose.msra.mxu0 0.0
        %2593 = vmatprep.subr.mxu0 0.0
        %2594 = vmatpush1.xpose.msra.mxu0 0.0
        %2595 = vmatprep.subr.mxu0 0.0
        %2596 = vmatpush1.xpose.msra.mxu0 0.0
        %2597 = vmatprep.subr.mxu0 0.0
        %2598 = vmatpush1.xpose.msra.mxu0 0.0
        %2599 = vmatprep.subr.mxu0 0.0
        %2600 = vmatpush1.xpose.msra.mxu0 0.0
        %2601 = vmatprep.subr.mxu0 0.0
        %2602 = vmatpush1.xpose.msra.mxu0 %v2569
        %2603 = vmatprep.subr.mxu0 0.0
        %2604 = vmatpush2.xpose.msra.mxu0 0.0
        %2605 = vmatprep.subr.mxu0 0.0
        %2606 = vmatpush2.xpose.msra.mxu0 0.0
        %2607 = vmatprep.subr.mxu0 0.0
        %2608 = vmatpush2.xpose.msra.mxu0 0.0
        %2609 = vmatprep.subr.mxu0 0.0
        %2610 = vmatpush2.xpose.msra.mxu0 0.0
        %2611 = vmatprep.subr.mxu0 0.0
        %2612 = vmatpush2.xpose.msra.mxu0 0.0
        %2613 = vmatprep.subr.mxu0 0.0
        %2614 = vmatpush2.xpose.msra.mxu0 0.0
        %2615 = vmatprep.subr.mxu0 0.0
        %2616 = vmatpush2.xpose.msra.mxu0 0.0
        %2617 = vmatprep.subr.mxu0 0.0
        %2618 = vmatpush2.xpose.msra.mxu0 0.0
        %2619 = vmatprep.subr.mxu0 0.0
        %2620 = vmatpush2.xpose.msra.mxu0 0.0
        %2621 = vmatprep.subr.mxu0 0.0
        %2622 = vmatpush2.xpose.msra.mxu0 0.0
        %2623 = vmatprep.subr.mxu0 0.0
        %2624 = vmatpush2.xpose.msra.mxu0 0.0
        %2625 = vmatprep.subr.mxu0 0.0
        %2626 = vmatpush2.xpose.msra.mxu0 0.0
        %2627 = vmatprep.subr.mxu0 0.0
        %2628 = vmatpush2.xpose.msra.mxu0 0.0
        %2629 = vmatprep.subr.mxu0 0.0
        %2630 = vmatpush2.xpose.msra.mxu0 0.0
        %2631 = vmatprep.subr.mxu0 0.0
        %2632 = vmatpush2.xpose.msra.mxu0 0.0
        %2633 = vmatprep.subr.mxu0 0.0
        %2634 = vmatpush2.xpose.msra.mxu0 0.0
        %2635 = vmatprep.mubr.f32.mxu0 0.0
        %2636 = vmatmul.mubr.f32.gmra.mxu0 %v2567
        %v2637 = vpop.f32.mrf.mxu0
        %v2638 = vadd.f32 %v1104, %v2637
        %v2639 = vpop.f32.mrf.mxu0
        %2640 = vdwg.mxu0
        %v2641 = vsel %vm1109, %v2638, -inf
        %2642 = vmax.xlane.f32.xlu0 %v2641
        %v2643 = vpop.xlane.xlu0 %2642
        %v2644 = vsub.f32 %v2638, %v2643
        %v2645 = vmul.f32 %v2644, 1.442695
        %v2646 = vpow.pop %v2645
        %v2647 = vsel %vm1109, %v2646, 0.0
        %2648 = vadd.xlane.f32.xlu0 %v2647
        %v2649 = vpop.xlane.xlu0 %2648
        %v2650 = vrcp.pop %v2649
        %v2651 = vmul.f32 %v2646, %v2650
        %2652 = vrot.lane.b32.xlu0 %v2389, 56
        %v2653 = vpop.permute.xlu0 %2652
        %v2656 = vsel %vm1109, %v2651, 0
        %2658 = vmatprep.subr.mxu0 0.0
        %2659 = vmatpush1.msra.mxu0 0.0
        %2660 = vmatprep.subr.mxu0 0.0
        %2661 = vmatpush1.msra.mxu0 0.0
        %2662 = vmatprep.subr.mxu0 0.0
        %2663 = vmatpush1.msra.mxu0 0.0
        %2664 = vmatprep.subr.mxu0 0.0
        %2665 = vmatpush1.msra.mxu0 0.0
        %2666 = vmatprep.subr.mxu0 0.0
        %2667 = vmatpush1.msra.mxu0 0.0
        %2668 = vmatprep.subr.mxu0 0.0
        %2669 = vmatpush1.msra.mxu0 0.0
        %2670 = vmatprep.subr.mxu0 0.0
        %2671 = vmatpush1.msra.mxu0 0.0
        %2672 = vmatprep.subr.mxu0 0.0
        %2673 = vmatpush1.msra.mxu0 0.0
        %2674 = vmatprep.subr.mxu0 0.0
        %2675 = vmatpush1.msra.mxu0 0.0
        %2676 = vmatprep.subr.mxu0 0.0
        %2677 = vmatpush1.msra.mxu0 0.0
        %2678 = vmatprep.subr.mxu0 0.0
        %2679 = vmatpush1.msra.mxu0 0.0
        %2680 = vmatprep.subr.mxu0 0.0
        %2681 = vmatpush1.msra.mxu0 0.0
        %2682 = vmatprep.subr.mxu0 0.0
        %2683 = vmatpush1.msra.mxu0 0.0
        %2684 = vmatprep.subr.mxu0 0.0
        %2685 = vmatpush1.msra.mxu0 0.0
        %2686 = vmatprep.subr.mxu0 0.0
        %2687 = vmatpush1.msra.mxu0 0.0
        %2688 = vmatprep.subr.mxu0 0.0
        %2689 = vmatpush1.msra.mxu0 %v2653
        %2690 = vmatprep.subr.mxu0 0.0
        %2691 = vmatpush2.msra.mxu0 0.0
        %2692 = vmatprep.subr.mxu0 0.0
        %2693 = vmatpush2.msra.mxu0 0.0
        %2694 = vmatprep.subr.mxu0 0.0
        %2695 = vmatpush2.msra.mxu0 0.0
        %2696 = vmatprep.subr.mxu0 0.0
        %2697 = vmatpush2.msra.mxu0 0.0
        %2698 = vmatprep.subr.mxu0 0.0
        %2699 = vmatpush2.msra.mxu0 0.0
        %2700 = vmatprep.subr.mxu0 0.0
        %2701 = vmatpush2.msra.mxu0 0.0
        %2702 = vmatprep.subr.mxu0 0.0
        %2703 = vmatpush2.msra.mxu0 0.0
        %2704 = vmatprep.subr.mxu0 0.0
        %2705 = vmatpush2.msra.mxu0 0.0
        %2706 = vmatprep.subr.mxu0 0.0
        %2707 = vmatpush2.msra.mxu0 0.0
        %2708 = vmatprep.subr.mxu0 0.0
        %2709 = vmatpush2.msra.mxu0 0.0
        %2710 = vmatprep.subr.mxu0 0.0
        %2711 = vmatpush2.msra.mxu0 0.0
        %2712 = vmatprep.subr.mxu0 0.0
        %2713 = vmatpush2.msra.mxu0 0.0
        %2714 = vmatprep.subr.mxu0 0.0
        %2715 = vmatpush2.msra.mxu0 0.0
        %2716 = vmatprep.subr.mxu0 0.0
        %2717 = vmatpush2.msra.mxu0 0.0
        %2718 = vmatprep.subr.mxu0 0.0
        %2719 = vmatpush2.msra.mxu0 0.0
        %2720 = vmatprep.subr.mxu0 0.0
        %2721 = vmatpush2.msra.mxu0 0.0
        %2722 = vmatprep.mubr.f32.mxu0 0.0
        %2723 = vmatmul.mubr.f32.gmra.mxu0 %v2656
        %v2724 = vpop.f32.mrf.mxu0
        %v2725 = vadd.f32 0.0, %v2724
        %v2726 = vpop.f32.mrf.mxu0
        %2727 = vdwg.mxu0
        %v2729 = vsel %vm1109, %v2725, 0
        %2731 = vmatprep.subr.mxu0 0.0
        %2732 = vmatpush1.msra.mxu0 0.0
        %2733 = vmatprep.subr.mxu0 0.0
        %2734 = vmatpush1.msra.mxu0 0.0
        %2735 = vmatprep.subr.mxu0 0.0
        %2736 = vmatpush1.msra.mxu0 0.0
        %2737 = vmatprep.subr.mxu0 0.0
        %2738 = vmatpush1.msra.mxu0 0.0
        %2739 = vmatprep.subr.mxu0 0.0
        %2740 = vmatpush1.msra.mxu0 0.0
        %2741 = vmatprep.subr.mxu0 0.0
        %2742 = vmatpush1.msra.mxu0 0.0
        %2743 = vmatprep.subr.mxu0 0.0
        %2744 = vmatpush1.msra.mxu0 0.0
        %2745 = vmatprep.subr.mxu0 0.0
        %2746 = vmatpush1.msra.mxu0 0.0
        %2747 = vmatprep.subr.mxu0 0.0
        %2748 = vmatpush1.msra.mxu0 0.0
        %2749 = vmatprep.subr.mxu0 0.0
        %2750 = vmatpush1.msra.mxu0 0.0
        %2751 = vmatprep.subr.mxu0 0.0
        %2752 = vmatpush1.msra.mxu0 0.0
        %2753 = vmatprep.subr.mxu0 0.0
        %2754 = vmatpush1.msra.mxu0 0.0
        %2755 = vmatprep.subr.mxu0 0.0
        %2756 = vmatpush1.msra.mxu0 0.0
        %2757 = vmatprep.subr.mxu0 0.0
        %2758 = vmatpush1.msra.mxu0 0.0
        %2759 = vmatprep.subr.mxu0 0.0
        %2760 = vmatpush1.msra.mxu0 0.0
        %2761 = vmatprep.subr.mxu0 0.0
        %2762 = vmatpush1.msra.mxu0 %v2394
        %2763 = vmatprep.subr.mxu0 0.0
        %2764 = vmatpush2.msra.mxu0 0.0
        %2765 = vmatprep.subr.mxu0 0.0
        %2766 = vmatpush2.msra.mxu0 0.0
        %2767 = vmatprep.subr.mxu0 0.0
        %2768 = vmatpush2.msra.mxu0 0.0
        %2769 = vmatprep.subr.mxu0 0.0
        %2770 = vmatpush2.msra.mxu0 0.0
        %2771 = vmatprep.subr.mxu0 0.0
        %2772 = vmatpush2.msra.mxu0 0.0
        %2773 = vmatprep.subr.mxu0 0.0
        %2774 = vmatpush2.msra.mxu0 0.0
        %2775 = vmatprep.subr.mxu0 0.0
        %2776 = vmatpush2.msra.mxu0 0.0
        %2777 = vmatprep.subr.mxu0 0.0
        %2778 = vmatpush2.msra.mxu0 0.0
        %2779 = vmatprep.subr.mxu0 0.0
        %2780 = vmatpush2.msra.mxu0 0.0
        %2781 = vmatprep.subr.mxu0 0.0
        %2782 = vmatpush2.msra.mxu0 0.0
        %2783 = vmatprep.subr.mxu0 0.0
        %2784 = vmatpush2.msra.mxu0 0.0
        %2785 = vmatprep.subr.mxu0 0.0
        %2786 = vmatpush2.msra.mxu0 0.0
        %2787 = vmatprep.subr.mxu0 0.0
        %2788 = vmatpush2.msra.mxu0 0.0
        %2789 = vmatprep.subr.mxu0 0.0
        %2790 = vmatpush2.msra.mxu0 0.0
        %2791 = vmatprep.subr.mxu0 0.0
        %2792 = vmatpush2.msra.mxu0 0.0
        %2793 = vmatprep.subr.mxu0 0.0
        %2794 = vmatpush2.msra.mxu0 0.0
        %2795 = vmatprep.mubr.f32.mxu0 0.0
        %2796 = vmatmul.mubr.f32.gmra.mxu0 %v2729
        %v2797 = vpop.f32.mrf.mxu0
        %v2798 = vadd.f32 0.0, %v2797
        %v2799 = vpop.f32.mrf.mxu0
        %2800 = vdwg.mxu0
        %v2802 = vsel %vm1109, %v2560, 0
        %2804 = vmatprep.subr.mxu0 0.0
        %2805 = vmatpush1.msra.mxu0 0.0
        %2806 = vmatprep.subr.mxu0 0.0
        %2807 = vmatpush1.msra.mxu0 0.0
        %2808 = vmatprep.subr.mxu0 0.0
        %2809 = vmatpush1.msra.mxu0 0.0
        %2810 = vmatprep.subr.mxu0 0.0
        %2811 = vmatpush1.msra.mxu0 0.0
        %2812 = vmatprep.subr.mxu0 0.0
        %2813 = vmatpush1.msra.mxu0 0.0
        %2814 = vmatprep.subr.mxu0 0.0
        %2815 = vmatpush1.msra.mxu0 0.0
        %2816 = vmatprep.subr.mxu0 0.0
        %2817 = vmatpush1.msra.mxu0 0.0
        %2818 = vmatprep.subr.mxu0 0.0
        %2819 = vmatpush1.msra.mxu0 0.0
        %2820 = vmatprep.subr.mxu0 0.0
        %2821 = vmatpush1.msra.mxu0 0.0
        %2822 = vmatprep.subr.mxu0 0.0
        %2823 = vmatpush1.msra.mxu0 0.0
        %2824 = vmatprep.subr.mxu0 0.0
        %2825 = vmatpush1.msra.mxu0 0.0
        %2826 = vmatprep.subr.mxu0 0.0
        %2827 = vmatpush1.msra.mxu0 0.0
        %2828 = vmatprep.subr.mxu0 0.0
        %2829 = vmatpush1.msra.mxu0 0.0
        %2830 = vmatprep.subr.mxu0 0.0
        %2831 = vmatpush1.msra.mxu0 0.0
        %2832 = vmatprep.subr.mxu0 0.0
        %2833 = vmatpush1.msra.mxu0 0.0
        %2834 = vmatprep.subr.mxu0 0.0
        %2835 = vmatpush1.msra.mxu0 %v2393
        %2836 = vmatprep.subr.mxu0 0.0
        %2837 = vmatpush2.msra.mxu0 0.0
        %2838 = vmatprep.subr.mxu0 0.0
        %2839 = vmatpush2.msra.mxu0 0.0
        %2840 = vmatprep.subr.mxu0 0.0
        %2841 = vmatpush2.msra.mxu0 0.0
        %2842 = vmatprep.subr.mxu0 0.0
        %2843 = vmatpush2.msra.mxu0 0.0
        %2844 = vmatprep.subr.mxu0 0.0
        %2845 = vmatpush2.msra.mxu0 0.0
        %2846 = vmatprep.subr.mxu0 0.0
        %2847 = vmatpush2.msra.mxu0 0.0
        %2848 = vmatprep.subr.mxu0 0.0
        %2849 = vmatpush2.msra.mxu0 0.0
        %2850 = vmatprep.subr.mxu0 0.0
        %2851 = vmatpush2.msra.mxu0 0.0
        %2852 = vmatprep.subr.mxu0 0.0
        %2853 = vmatpush2.msra.mxu0 0.0
        %2854 = vmatprep.subr.mxu0 0.0
        %2855 = vmatpush2.msra.mxu0 0.0
        %2856 = vmatprep.subr.mxu0 0.0
        %2857 = vmatpush2.msra.mxu0 0.0
        %2858 = vmatprep.subr.mxu0 0.0
        %2859 = vmatpush2.msra.mxu0 0.0
        %2860 = vmatprep.subr.mxu0 0.0
        %2861 = vmatpush2.msra.mxu0 0.0
        %2862 = vmatprep.subr.mxu0 0.0
        %2863 = vmatpush2.msra.mxu0 0.0
        %2864 = vmatprep.subr.mxu0 0.0
        %2865 = vmatpush2.msra.mxu0 0.0
        %2866 = vmatprep.subr.mxu0 0.0
        %2867 = vmatpush2.msra.mxu0 0.0
        %2868 = vmatprep.mubr.f32.mxu0 0.0
        %2869 = vmatmul.mubr.f32.gmra.mxu0 %v2802
        %v2870 = vpop.f32.mrf.mxu0
        %v2871 = vadd.f32 %v2798, %v2870
        %v2872 = vpop.f32.mrf.mxu0
        %2873 = vdwg.mxu0
        %2874 = vrot.lane.b32.xlu0 %v2389, 112
        %v2875 = vpop.permute.xlu0 %2874
        %2876 = vrot.lane.b32.xlu0 %v2389, 80
        %v2877 = vpop.permute.xlu0 %2876
        %v2878 = vsel %vm1109, %v2875, 0
        %v2880 = vsel %vm1109, %v2877, 0
        %2882 = vmatprep.subr.mxu0 0.0
        %2883 = vmatpush1.xpose.msra.mxu0 0.0
        %2884 = vmatprep.subr.mxu0 0.0
        %2885 = vmatpush1.xpose.msra.mxu0 0.0
        %2886 = vmatprep.subr.mxu0 0.0
        %2887 = vmatpush1.xpose.msra.mxu0 0.0
        %2888 = vmatprep.subr.mxu0 0.0
        %2889 = vmatpush1.xpose.msra.mxu0 0.0
        %2890 = vmatprep.subr.mxu0 0.0
        %2891 = vmatpush1.xpose.msra.mxu0 0.0
        %2892 = vmatprep.subr.mxu0 0.0
        %2893 = vmatpush1.xpose.msra.mxu0 0.0
        %2894 = vmatprep.subr.mxu0 0.0
        %2895 = vmatpush1.xpose.msra.mxu0 0.0
        %2896 = vmatprep.subr.mxu0 0.0
        %2897 = vmatpush1.xpose.msra.mxu0 0.0
        %2898 = vmatprep.subr.mxu0 0.0
        %2899 = vmatpush1.xpose.msra.mxu0 0.0
        %2900 = vmatprep.subr.mxu0 0.0
        %2901 = vmatpush1.xpose.msra.mxu0 0.0
        %2902 = vmatprep.subr.mxu0 0.0
        %2903 = vmatpush1.xpose.msra.mxu0 0.0
        %2904 = vmatprep.subr.mxu0 0.0
        %2905 = vmatpush1.xpose.msra.mxu0 0.0
        %2906 = vmatprep.subr.mxu0 0.0
        %2907 = vmatpush1.xpose.msra.mxu0 0.0
        %2908 = vmatprep.subr.mxu0 0.0
        %2909 = vmatpush1.xpose.msra.mxu0 0.0
        %2910 = vmatprep.subr.mxu0 0.0
        %2911 = vmatpush1.xpose.msra.mxu0 0.0
        %2912 = vmatprep.subr.mxu0 0.0
        %2913 = vmatpush1.xpose.msra.mxu0 %v2880
        %2914 = vmatprep.subr.mxu0 0.0
        %2915 = vmatpush2.xpose.msra.mxu0 0.0
        %2916 = vmatprep.subr.mxu0 0.0
        %2917 = vmatpush2.xpose.msra.mxu0 0.0
        %2918 = vmatprep.subr.mxu0 0.0
        %2919 = vmatpush2.xpose.msra.mxu0 0.0
        %2920 = vmatprep.subr.mxu0 0.0
        %2921 = vmatpush2.xpose.msra.mxu0 0.0
        %2922 = vmatprep.subr.mxu0 0.0
        %2923 = vmatpush2.xpose.msra.mxu0 0.0
        %2924 = vmatprep.subr.mxu0 0.0
        %2925 = vmatpush2.xpose.msra.mxu0 0.0
        %2926 = vmatprep.subr.mxu0 0.0
        %2927 = vmatpush2.xpose.msra.mxu0 0.0
        %2928 = vmatprep.subr.mxu0 0.0
        %2929 = vmatpush2.xpose.msra.mxu0 0.0
        %2930 = vmatprep.subr.mxu0 0.0
        %2931 = vmatpush2.xpose.msra.mxu0 0.0
        %2932 = vmatprep.subr.mxu0 0.0
        %2933 = vmatpush2.xpose.msra.mxu0 0.0
        %2934 = vmatprep.subr.mxu0 0.0
        %2935 = vmatpush2.xpose.msra.mxu0 0.0
        %2936 = vmatprep.subr.mxu0 0.0
        %2937 = vmatpush2.xpose.msra.mxu0 0.0
        %2938 = vmatprep.subr.mxu0 0.0
        %2939 = vmatpush2.xpose.msra.mxu0 0.0
        %2940 = vmatprep.subr.mxu0 0.0
        %2941 = vmatpush2.xpose.msra.mxu0 0.0
        %2942 = vmatprep.subr.mxu0 0.0
        %2943 = vmatpush2.xpose.msra.mxu0 0.0
        %2944 = vmatprep.subr.mxu0 0.0
        %2945 = vmatpush2.xpose.msra.mxu0 0.0
        %2946 = vmatprep.mubr.f32.mxu0 0.0
        %2947 = vmatmul.mubr.f32.gmra.mxu0 %v2878
        %v2948 = vpop.f32.mrf.mxu0
        %v2949 = vadd.f32 %v1104, %v2948
        %v2950 = vpop.f32.mrf.mxu0
        %2951 = vdwg.mxu0
        %v2952 = vsel %vm1109, %v2949, -inf
        %2953 = vmax.xlane.f32.xlu0 %v2952
        %v2954 = vpop.xlane.xlu0 %2953
        %v2955 = vsub.f32 %v2949, %v2954
        %v2956 = vmul.f32 %v2955, 1.442695
        %v2957 = vpow.pop %v2956
        %v2958 = vsel %vm1109, %v2957, 0.0
        %2959 = vadd.xlane.f32.xlu0 %v2958
        %v2960 = vpop.xlane.xlu0 %2959
        %v2961 = vrcp.pop %v2960
        %v2962 = vmul.f32 %v2957, %v2961
        %2963 = vrot.lane.b32.xlu0 %v2389, 48
        %v2964 = vpop.permute.xlu0 %2963
        %v2967 = vsel %vm1109, %v2962, 0
        %2969 = vmatprep.subr.mxu0 0.0
        %2970 = vmatpush1.msra.mxu0 0.0
        %2971 = vmatprep.subr.mxu0 0.0
        %2972 = vmatpush1.msra.mxu0 0.0
        %2973 = vmatprep.subr.mxu0 0.0
        %2974 = vmatpush1.msra.mxu0 0.0
        %2975 = vmatprep.subr.mxu0 0.0
        %2976 = vmatpush1.msra.mxu0 0.0
        %2977 = vmatprep.subr.mxu0 0.0
        %2978 = vmatpush1.msra.mxu0 0.0
        %2979 = vmatprep.subr.mxu0 0.0
        %2980 = vmatpush1.msra.mxu0 0.0
        %2981 = vmatprep.subr.mxu0 0.0
        %2982 = vmatpush1.msra.mxu0 0.0
        %2983 = vmatprep.subr.mxu0 0.0
        %2984 = vmatpush1.msra.mxu0 0.0
        %2985 = vmatprep.subr.mxu0 0.0
        %2986 = vmatpush1.msra.mxu0 0.0
        %2987 = vmatprep.subr.mxu0 0.0
        %2988 = vmatpush1.msra.mxu0 0.0
        %2989 = vmatprep.subr.mxu0 0.0
        %2990 = vmatpush1.msra.mxu0 0.0
        %2991 = vmatprep.subr.mxu0 0.0
        %2992 = vmatpush1.msra.mxu0 0.0
        %2993 = vmatprep.subr.mxu0 0.0
        %2994 = vmatpush1.msra.mxu0 0.0
        %2995 = vmatprep.subr.mxu0 0.0
        %2996 = vmatpush1.msra.mxu0 0.0
        %2997 = vmatprep.subr.mxu0 0.0
        %2998 = vmatpush1.msra.mxu0 0.0
        %2999 = vmatprep.subr.mxu0 0.0
        %3000 = vmatpush1.msra.mxu0 %v2964
        %3001 = vmatprep.subr.mxu0 0.0
        %3002 = vmatpush2.msra.mxu0 0.0
        %3003 = vmatprep.subr.mxu0 0.0
        %3004 = vmatpush2.msra.mxu0 0.0
        %3005 = vmatprep.subr.mxu0 0.0
        %3006 = vmatpush2.msra.mxu0 0.0
        %3007 = vmatprep.subr.mxu0 0.0
        %3008 = vmatpush2.msra.mxu0 0.0
        %3009 = vmatprep.subr.mxu0 0.0
        %3010 = vmatpush2.msra.mxu0 0.0
        %3011 = vmatprep.subr.mxu0 0.0
        %3012 = vmatpush2.msra.mxu0 0.0
        %3013 = vmatprep.subr.mxu0 0.0
        %3014 = vmatpush2.msra.mxu0 0.0
        %3015 = vmatprep.subr.mxu0 0.0
        %3016 = vmatpush2.msra.mxu0 0.0
        %3017 = vmatprep.subr.mxu0 0.0
        %3018 = vmatpush2.msra.mxu0 0.0
        %3019 = vmatprep.subr.mxu0 0.0
        %3020 = vmatpush2.msra.mxu0 0.0
        %3021 = vmatprep.subr.mxu0 0.0
        %3022 = vmatpush2.msra.mxu0 0.0
        %3023 = vmatprep.subr.mxu0 0.0
        %3024 = vmatpush2.msra.mxu0 0.0
        %3025 = vmatprep.subr.mxu0 0.0
        %3026 = vmatpush2.msra.mxu0 0.0
        %3027 = vmatprep.subr.mxu0 0.0
        %3028 = vmatpush2.msra.mxu0 0.0
        %3029 = vmatprep.subr.mxu0 0.0
        %3030 = vmatpush2.msra.mxu0 0.0
        %3031 = vmatprep.subr.mxu0 0.0
        %3032 = vmatpush2.msra.mxu0 0.0
        %3033 = vmatprep.mubr.f32.mxu0 0.0
        %3034 = vmatmul.mubr.f32.gmra.mxu0 %v2967
        %v3035 = vpop.f32.mrf.mxu0
        %v3036 = vadd.f32 0.0, %v3035
        %v3037 = vpop.f32.mrf.mxu0
        %3038 = vdwg.mxu0
        %v3040 = vsel %vm1109, %v3036, 0
        %3042 = vmatprep.subr.mxu0 0.0
        %3043 = vmatpush1.msra.mxu0 0.0
        %3044 = vmatprep.subr.mxu0 0.0
        %3045 = vmatpush1.msra.mxu0 0.0
        %3046 = vmatprep.subr.mxu0 0.0
        %3047 = vmatpush1.msra.mxu0 0.0
        %3048 = vmatprep.subr.mxu0 0.0
        %3049 = vmatpush1.msra.mxu0 0.0
        %3050 = vmatprep.subr.mxu0 0.0
        %3051 = vmatpush1.msra.mxu0 0.0
        %3052 = vmatprep.subr.mxu0 0.0
        %3053 = vmatpush1.msra.mxu0 0.0
        %3054 = vmatprep.subr.mxu0 0.0
        %3055 = vmatpush1.msra.mxu0 0.0
        %3056 = vmatprep.subr.mxu0 0.0
        %3057 = vmatpush1.msra.mxu0 0.0
        %3058 = vmatprep.subr.mxu0 0.0
        %3059 = vmatpush1.msra.mxu0 0.0
        %3060 = vmatprep.subr.mxu0 0.0
        %3061 = vmatpush1.msra.mxu0 0.0
        %3062 = vmatprep.subr.mxu0 0.0
        %3063 = vmatpush1.msra.mxu0 0.0
        %3064 = vmatprep.subr.mxu0 0.0
        %3065 = vmatpush1.msra.mxu0 0.0
        %3066 = vmatprep.subr.mxu0 0.0
        %3067 = vmatpush1.msra.mxu0 0.0
        %3068 = vmatprep.subr.mxu0 0.0
        %3069 = vmatpush1.msra.mxu0 0.0
        %3070 = vmatprep.subr.mxu0 0.0
        %3071 = vmatpush1.msra.mxu0 0.0
        %3072 = vmatprep.subr.mxu0 0.0
        %3073 = vmatpush1.msra.mxu0 %v2395
        %3074 = vmatprep.subr.mxu0 0.0
        %3075 = vmatpush2.msra.mxu0 0.0
        %3076 = vmatprep.subr.mxu0 0.0
        %3077 = vmatpush2.msra.mxu0 0.0
        %3078 = vmatprep.subr.mxu0 0.0
        %3079 = vmatpush2.msra.mxu0 0.0
        %3080 = vmatprep.subr.mxu0 0.0
        %3081 = vmatpush2.msra.mxu0 0.0
        %3082 = vmatprep.subr.mxu0 0.0
        %3083 = vmatpush2.msra.mxu0 0.0
        %3084 = vmatprep.subr.mxu0 0.0
        %3085 = vmatpush2.msra.mxu0 0.0
        %3086 = vmatprep.subr.mxu0 0.0
        %3087 = vmatpush2.msra.mxu0 0.0
        %3088 = vmatprep.subr.mxu0 0.0
        %3089 = vmatpush2.msra.mxu0 0.0
        %3090 = vmatprep.subr.mxu0 0.0
        %3091 = vmatpush2.msra.mxu0 0.0
        %3092 = vmatprep.subr.mxu0 0.0
        %3093 = vmatpush2.msra.mxu0 0.0
        %3094 = vmatprep.subr.mxu0 0.0
        %3095 = vmatpush2.msra.mxu0 0.0
        %3096 = vmatprep.subr.mxu0 0.0
        %3097 = vmatpush2.msra.mxu0 0.0
        %3098 = vmatprep.subr.mxu0 0.0
        %3099 = vmatpush2.msra.mxu0 0.0
        %3100 = vmatprep.subr.mxu0 0.0
        %3101 = vmatpush2.msra.mxu0 0.0
        %3102 = vmatprep.subr.mxu0 0.0
        %3103 = vmatpush2.msra.mxu0 0.0
        %3104 = vmatprep.subr.mxu0 0.0
        %3105 = vmatpush2.msra.mxu0 0.0
        %3106 = vmatprep.mubr.f32.mxu0 0.0
        %3107 = vmatmul.mubr.f32.gmra.mxu0 %v3040
        %v3108 = vpop.f32.mrf.mxu0
        %v3109 = vadd.f32 0.0, %v3108
        %v3110 = vpop.f32.mrf.mxu0
        %3111 = vdwg.mxu0
        %v3112 = vadd.f32 %v2871, %v3109
        %3113 = vrot.lane.b32.xlu0 %v2389, 104
        %v3114 = vpop.permute.xlu0 %3113
        %3115 = vrot.lane.b32.xlu0 %v2389, 72
        %v3116 = vpop.permute.xlu0 %3115
        %v3117 = vsel %vm1109, %v3114, 0
        %v3119 = vsel %vm1109, %v3116, 0
        %3121 = vmatprep.subr.mxu0 0.0
        %3122 = vmatpush1.xpose.msra.mxu0 0.0
        %3123 = vmatprep.subr.mxu0 0.0
        %3124 = vmatpush1.xpose.msra.mxu0 0.0
        %3125 = vmatprep.subr.mxu0 0.0
        %3126 = vmatpush1.xpose.msra.mxu0 0.0
        %3127 = vmatprep.subr.mxu0 0.0
        %3128 = vmatpush1.xpose.msra.mxu0 0.0
        %3129 = vmatprep.subr.mxu0 0.0
        %3130 = vmatpush1.xpose.msra.mxu0 0.0
        %3131 = vmatprep.subr.mxu0 0.0
        %3132 = vmatpush1.xpose.msra.mxu0 0.0
        %3133 = vmatprep.subr.mxu0 0.0
        %3134 = vmatpush1.xpose.msra.mxu0 0.0
        %3135 = vmatprep.subr.mxu0 0.0
        %3136 = vmatpush1.xpose.msra.mxu0 0.0
        %3137 = vmatprep.subr.mxu0 0.0
        %3138 = vmatpush1.xpose.msra.mxu0 0.0
        %3139 = vmatprep.subr.mxu0 0.0
        %3140 = vmatpush1.xpose.msra.mxu0 0.0
        %3141 = vmatprep.subr.mxu0 0.0
        %3142 = vmatpush1.xpose.msra.mxu0 0.0
        %3143 = vmatprep.subr.mxu0 0.0
        %3144 = vmatpush1.xpose.msra.mxu0 0.0
        %3145 = vmatprep.subr.mxu0 0.0
        %3146 = vmatpush1.xpose.msra.mxu0 0.0
        %3147 = vmatprep.subr.mxu0 0.0
        %3148 = vmatpush1.xpose.msra.mxu0 0.0
        %3149 = vmatprep.subr.mxu0 0.0
        %3150 = vmatpush1.xpose.msra.mxu0 0.0
        %3151 = vmatprep.subr.mxu0 0.0
        %3152 = vmatpush1.xpose.msra.mxu0 %v3119
        %3153 = vmatprep.subr.mxu0 0.0
        %3154 = vmatpush2.xpose.msra.mxu0 0.0
        %3155 = vmatprep.subr.mxu0 0.0
        %3156 = vmatpush2.xpose.msra.mxu0 0.0
        %3157 = vmatprep.subr.mxu0 0.0
        %3158 = vmatpush2.xpose.msra.mxu0 0.0
        %3159 = vmatprep.subr.mxu0 0.0
        %3160 = vmatpush2.xpose.msra.mxu0 0.0
        %3161 = vmatprep.subr.mxu0 0.0
        %3162 = vmatpush2.xpose.msra.mxu0 0.0
        %3163 = vmatprep.subr.mxu0 0.0
        %3164 = vmatpush2.xpose.msra.mxu0 0.0
        %3165 = vmatprep.subr.mxu0 0.0
        %3166 = vmatpush2.xpose.msra.mxu0 0.0
        %3167 = vmatprep.subr.mxu0 0.0
        %3168 = vmatpush2.xpose.msra.mxu0 0.0
        %3169 = vmatprep.subr.mxu0 0.0
        %3170 = vmatpush2.xpose.msra.mxu0 0.0
        %3171 = vmatprep.subr.mxu0 0.0
        %3172 = vmatpush2.xpose.msra.mxu0 0.0
        %3173 = vmatprep.subr.mxu0 0.0
        %3174 = vmatpush2.xpose.msra.mxu0 0.0
        %3175 = vmatprep.subr.mxu0 0.0
        %3176 = vmatpush2.xpose.msra.mxu0 0.0
        %3177 = vmatprep.subr.mxu0 0.0
        %3178 = vmatpush2.xpose.msra.mxu0 0.0
        %3179 = vmatprep.subr.mxu0 0.0
        %3180 = vmatpush2.xpose.msra.mxu0 0.0
        %3181 = vmatprep.subr.mxu0 0.0
        %3182 = vmatpush2.xpose.msra.mxu0 0.0
        %3183 = vmatprep.subr.mxu0 0.0
        %3184 = vmatpush2.xpose.msra.mxu0 0.0
        %3185 = vmatprep.mubr.f32.mxu0 0.0
        %3186 = vmatmul.mubr.f32.gmra.mxu0 %v3117
        %v3187 = vpop.f32.mrf.mxu0
        %v3188 = vadd.f32 %v1104, %v3187
        %v3189 = vpop.f32.mrf.mxu0
        %3190 = vdwg.mxu0
        %v3191 = vsel %vm1109, %v3188, -inf
        %3192 = vmax.xlane.f32.xlu0 %v3191
        %v3193 = vpop.xlane.xlu0 %3192
        %v3194 = vsub.f32 %v3188, %v3193
        %v3195 = vmul.f32 %v3194, 1.442695
        %v3196 = vpow.pop %v3195
        %v3197 = vsel %vm1109, %v3196, 0.0
        %3198 = vadd.xlane.f32.xlu0 %v3197
        %v3199 = vpop.xlane.xlu0 %3198
        %v3200 = vrcp.pop %v3199
        %v3201 = vmul.f32 %v3196, %v3200
        %3202 = vrot.lane.b32.xlu0 %v2389, 40
        %v3203 = vpop.permute.xlu0 %3202
        %v3206 = vsel %vm1109, %v3201, 0
        %3208 = vmatprep.subr.mxu0 0.0
        %3209 = vmatpush1.msra.mxu0 0.0
        %3210 = vmatprep.subr.mxu0 0.0
        %3211 = vmatpush1.msra.mxu0 0.0
        %3212 = vmatprep.subr.mxu0 0.0
        %3213 = vmatpush1.msra.mxu0 0.0
        %3214 = vmatprep.subr.mxu0 0.0
        %3215 = vmatpush1.msra.mxu0 0.0
        %3216 = vmatprep.subr.mxu0 0.0
        %3217 = vmatpush1.msra.mxu0 0.0
        %3218 = vmatprep.subr.mxu0 0.0
        %3219 = vmatpush1.msra.mxu0 0.0
        %3220 = vmatprep.subr.mxu0 0.0
        %3221 = vmatpush1.msra.mxu0 0.0
        %3222 = vmatprep.subr.mxu0 0.0
        %3223 = vmatpush1.msra.mxu0 0.0
        %3224 = vmatprep.subr.mxu0 0.0
        %3225 = vmatpush1.msra.mxu0 0.0
        %3226 = vmatprep.subr.mxu0 0.0
        %3227 = vmatpush1.msra.mxu0 0.0
        %3228 = vmatprep.subr.mxu0 0.0
        %3229 = vmatpush1.msra.mxu0 0.0
        %3230 = vmatprep.subr.mxu0 0.0
        %3231 = vmatpush1.msra.mxu0 0.0
        %3232 = vmatprep.subr.mxu0 0.0
        %3233 = vmatpush1.msra.mxu0 0.0
        %3234 = vmatprep.subr.mxu0 0.0
        %3235 = vmatpush1.msra.mxu0 0.0
        %3236 = vmatprep.subr.mxu0 0.0
        %3237 = vmatpush1.msra.mxu0 0.0
        %3238 = vmatprep.subr.mxu0 0.0
        %3239 = vmatpush1.msra.mxu0 %v3203
        %3240 = vmatprep.subr.mxu0 0.0
        %3241 = vmatpush2.msra.mxu0 0.0
        %3242 = vmatprep.subr.mxu0 0.0
        %3243 = vmatpush2.msra.mxu0 0.0
        %3244 = vmatprep.subr.mxu0 0.0
        %3245 = vmatpush2.msra.mxu0 0.0
        %3246 = vmatprep.subr.mxu0 0.0
        %3247 = vmatpush2.msra.mxu0 0.0
        %3248 = vmatprep.subr.mxu0 0.0
        %3249 = vmatpush2.msra.mxu0 0.0
        %3250 = vmatprep.subr.mxu0 0.0
        %3251 = vmatpush2.msra.mxu0 0.0
        %3252 = vmatprep.subr.mxu0 0.0
        %3253 = vmatpush2.msra.mxu0 0.0
        %3254 = vmatprep.subr.mxu0 0.0
        %3255 = vmatpush2.msra.mxu0 0.0
        %3256 = vmatprep.subr.mxu0 0.0
        %3257 = vmatpush2.msra.mxu0 0.0
        %3258 = vmatprep.subr.mxu0 0.0
        %3259 = vmatpush2.msra.mxu0 0.0
        %3260 = vmatprep.subr.mxu0 0.0
        %3261 = vmatpush2.msra.mxu0 0.0
        %3262 = vmatprep.subr.mxu0 0.0
        %3263 = vmatpush2.msra.mxu0 0.0
        %3264 = vmatprep.subr.mxu0 0.0
        %3265 = vmatpush2.msra.mxu0 0.0
        %3266 = vmatprep.subr.mxu0 0.0
        %3267 = vmatpush2.msra.mxu0 0.0
        %3268 = vmatprep.subr.mxu0 0.0
        %3269 = vmatpush2.msra.mxu0 0.0
        %3270 = vmatprep.subr.mxu0 0.0
        %3271 = vmatpush2.msra.mxu0 0.0
        %3272 = vmatprep.mubr.f32.mxu0 0.0
        %3273 = vmatmul.mubr.f32.gmra.mxu0 %v3206
        %v3274 = vpop.f32.mrf.mxu0
        %v3275 = vadd.f32 0.0, %v3274
        %v3276 = vpop.f32.mrf.mxu0
        %3277 = vdwg.mxu0
        %v3279 = vsel %vm1109, %v3275, 0
        %3281 = vmatprep.subr.mxu0 0.0
        %3282 = vmatpush1.msra.mxu0 0.0
        %3283 = vmatprep.subr.mxu0 0.0
        %3284 = vmatpush1.msra.mxu0 0.0
        %3285 = vmatprep.subr.mxu0 0.0
        %3286 = vmatpush1.msra.mxu0 0.0
        %3287 = vmatprep.subr.mxu0 0.0
        %3288 = vmatpush1.msra.mxu0 0.0
        %3289 = vmatprep.subr.mxu0 0.0
        %3290 = vmatpush1.msra.mxu0 0.0
        %3291 = vmatprep.subr.mxu0 0.0
        %3292 = vmatpush1.msra.mxu0 0.0
        %3293 = vmatprep.subr.mxu0 0.0
        %3294 = vmatpush1.msra.mxu0 0.0
        %3295 = vmatprep.subr.mxu0 0.0
        %3296 = vmatpush1.msra.mxu0 0.0
        %3297 = vmatprep.subr.mxu0 0.0
        %3298 = vmatpush1.msra.mxu0 0.0
        %3299 = vmatprep.subr.mxu0 0.0
        %3300 = vmatpush1.msra.mxu0 0.0
        %3301 = vmatprep.subr.mxu0 0.0
        %3302 = vmatpush1.msra.mxu0 0.0
        %3303 = vmatprep.subr.mxu0 0.0
        %3304 = vmatpush1.msra.mxu0 0.0
        %3305 = vmatprep.subr.mxu0 0.0
        %3306 = vmatpush1.msra.mxu0 0.0
        %3307 = vmatprep.subr.mxu0 0.0
        %3308 = vmatpush1.msra.mxu0 0.0
        %3309 = vmatprep.subr.mxu0 0.0
        %3310 = vmatpush1.msra.mxu0 0.0
        %3311 = vmatprep.subr.mxu0 0.0
        %3312 = vmatpush1.msra.mxu0 %v2396
        %3313 = vmatprep.subr.mxu0 0.0
        %3314 = vmatpush2.msra.mxu0 0.0
        %3315 = vmatprep.subr.mxu0 0.0
        %3316 = vmatpush2.msra.mxu0 0.0
        %3317 = vmatprep.subr.mxu0 0.0
        %3318 = vmatpush2.msra.mxu0 0.0
        %3319 = vmatprep.subr.mxu0 0.0
        %3320 = vmatpush2.msra.mxu0 0.0
        %3321 = vmatprep.subr.mxu0 0.0
        %3322 = vmatpush2.msra.mxu0 0.0
        %3323 = vmatprep.subr.mxu0 0.0
        %3324 = vmatpush2.msra.mxu0 0.0
        %3325 = vmatprep.subr.mxu0 0.0
        %3326 = vmatpush2.msra.mxu0 0.0
        %3327 = vmatprep.subr.mxu0 0.0
        %3328 = vmatpush2.msra.mxu0 0.0
        %3329 = vmatprep.subr.mxu0 0.0
        %3330 = vmatpush2.msra.mxu0 0.0
        %3331 = vmatprep.subr.mxu0 0.0
        %3332 = vmatpush2.msra.mxu0 0.0
        %3333 = vmatprep.subr.mxu0 0.0
        %3334 = vmatpush2.msra.mxu0 0.0
        %3335 = vmatprep.subr.mxu0 0.0
        %3336 = vmatpush2.msra.mxu0 0.0
        %3337 = vmatprep.subr.mxu0 0.0
        %3338 = vmatpush2.msra.mxu0 0.0
        %3339 = vmatprep.subr.mxu0 0.0
        %3340 = vmatpush2.msra.mxu0 0.0
        %3341 = vmatprep.subr.mxu0 0.0
        %3342 = vmatpush2.msra.mxu0 0.0
        %3343 = vmatprep.subr.mxu0 0.0
        %3344 = vmatpush2.msra.mxu0 0.0
        %3345 = vmatprep.mubr.f32.mxu0 0.0
        %3346 = vmatmul.mubr.f32.gmra.mxu0 %v3279
        %v3347 = vpop.f32.mrf.mxu0
        %v3348 = vadd.f32 0.0, %v3347
        %v3349 = vpop.f32.mrf.mxu0
        %3350 = vdwg.mxu0
        %v3351 = vadd.f32 %v3112, %v3348
        %v3353 = vlaneseq
        %v3354 = vshrl.u32 %v3353, 7
        %v3355 = vsub.s32 0, %v3354
        %v3356 = vrot.slane %v2398, %v3355
        %v3358 = vadd.f32 %v3351, %v3356
        %v3359 = vadd.f32 %v2273, %v3358
        %v3360 = vsel %vm979, %v3359, 0.0
        %3361 = vadd.xlane.f32.xlu0 %v3360
        %v3362 = vpop.xlane.xlu0 %3361
        %v3363 = vmul.f32 %v3362, %v983
        %v3364 = vsub.f32 %v3359, %v3363
        %v3365 = vmul.f32 %v3364, %v3364
        %v3366 = vsel %vm979, %v3365, 0.0
        %3367 = vadd.xlane.f32.xlu0 %v3366
        %v3368 = vpop.xlane.xlu0 %3367
        %v3369 = vmul.f32 %v3368, 0.032258064
        %v3370 = vrsqrt.pop %v3369
        %v3371 = vmul.f32 %v3369, %v3370
        %vm3372 = vcmp.eq.f32.partialorder %v3369, inf
        %v3373 = vsel %vm3372, %v3369, %v3371
        %vm3374 = vcmp.eq.f32.partialorder %v3369, 0.0
        %v3375 = vand.u32 %v3369, 2147483648
        %v3376 = vsel %vm3374, %v3375, %v3373
        %v3377 = vadd.f32 %v3376, 1e-06
        %v3378 = vrcp.pop %v3377
        %v3379 = vlaneseq
        %v3380 = vshrl.u32 %v3379, 7
        %v3381 = vsub.s32 2, %v3380
        %v3382 = vrot.slane %v2275, %v3381
        %v3383 = vmul.f32 %v3382, %v3364
        %v3384 = vmul.f32 %v3383, %v3378
        %v3385 = vlaneseq
        %v3386 = vshrl.u32 %v3385, 7
        %v3387 = vsub.s32 3, %v3386
        %v3388 = vrot.slane %v2275, %v3387
        %v3389 = vadd.f32 %v3384, %v3388
        %s3390 = scalar_lea.vmem %s17, 32
        %v3391 = vld [vmem:[%s3390] sm:$0xff]
        %v3392 = vld [vmem:[%s3390 + $0x8] sm:$0xff]
        %v3393 = vld [vmem:[%s3390 + $0x10] sm:$0xff]
        %v3394 = vld [vmem:[%s3390 + $0x18] sm:$0xff]
        %s3395 = scalar_lea.vmem %s19, 1
        %v3396 = vld [vmem:[%s3395] sm:$0x1]
        %v3398 = vlaneseq
        %v3399 = vshrl.u32 %v3398, 7
        %v3400 = vsub.s32 0, %v3399
        %v3401 = vrot.slane %v3396, %v3400
        %v3404 = vsel %vm979, %v3389, 0
        %3406 = vmatprep.subr.mxu0 0.0
        %3407 = vmatpush1.msra.mxu0 0.0
        %3408 = vmatprep.subr.mxu0 0.0
        %3409 = vmatpush1.msra.mxu0 0.0
        %3410 = vmatprep.subr.mxu0 0.0
        %3411 = vmatpush1.msra.mxu0 0.0
        %3412 = vmatprep.subr.mxu0 0.0
        %3413 = vmatpush1.msra.mxu0 0.0
        %3414 = vmatprep.subr.mxu0 0.0
        %3415 = vmatpush1.msra.mxu0 0.0
        %3416 = vmatprep.subr.mxu0 0.0
        %3417 = vmatpush1.msra.mxu0 0.0
        %3418 = vmatprep.subr.mxu0 0.0
        %3419 = vmatpush1.msra.mxu0 0.0
        %3420 = vmatprep.subr.mxu0 0.0
        %3421 = vmatpush1.msra.mxu0 0.0
        %3422 = vmatprep.subr.mxu0 0.0
        %3423 = vmatpush1.msra.mxu0 0.0
        %3424 = vmatprep.subr.mxu0 0.0
        %3425 = vmatpush1.msra.mxu0 0.0
        %3426 = vmatprep.subr.mxu0 0.0
        %3427 = vmatpush1.msra.mxu0 0.0
        %3428 = vmatprep.subr.mxu0 0.0
        %3429 = vmatpush1.msra.mxu0 0.0
        %3430 = vmatprep.subr.mxu0 0.0
        %3431 = vmatpush1.msra.mxu0 %v3394
        %3432 = vmatprep.subr.mxu0 0.0
        %3433 = vmatpush1.msra.mxu0 %v3393
        %3434 = vmatprep.subr.mxu0 0.0
        %3435 = vmatpush1.msra.mxu0 %v3392
        %3436 = vmatprep.subr.mxu0 0.0
        %3437 = vmatpush1.msra.mxu0 %v3391
        %3438 = vmatprep.subr.mxu0 0.0
        %3439 = vmatpush2.msra.mxu0 0.0
        %3440 = vmatprep.subr.mxu0 0.0
        %3441 = vmatpush2.msra.mxu0 0.0
        %3442 = vmatprep.subr.mxu0 0.0
        %3443 = vmatpush2.msra.mxu0 0.0
        %3444 = vmatprep.subr.mxu0 0.0
        %3445 = vmatpush2.msra.mxu0 0.0
        %3446 = vmatprep.subr.mxu0 0.0
        %3447 = vmatpush2.msra.mxu0 0.0
        %3448 = vmatprep.subr.mxu0 0.0
        %3449 = vmatpush2.msra.mxu0 0.0
        %3450 = vmatprep.subr.mxu0 0.0
        %3451 = vmatpush2.msra.mxu0 0.0
        %3452 = vmatprep.subr.mxu0 0.0
        %3453 = vmatpush2.msra.mxu0 0.0
        %3454 = vmatprep.subr.mxu0 0.0
        %3455 = vmatpush2.msra.mxu0 0.0
        %3456 = vmatprep.subr.mxu0 0.0
        %3457 = vmatpush2.msra.mxu0 0.0
        %3458 = vmatprep.subr.mxu0 0.0
        %3459 = vmatpush2.msra.mxu0 0.0
        %3460 = vmatprep.subr.mxu0 0.0
        %3461 = vmatpush2.msra.mxu0 0.0
        %3462 = vmatprep.subr.mxu0 0.0
        %3463 = vmatpush2.msra.mxu0 0.0
        %3464 = vmatprep.subr.mxu0 0.0
        %3465 = vmatpush2.msra.mxu0 0.0
        %3466 = vmatprep.subr.mxu0 0.0
        %3467 = vmatpush2.msra.mxu0 0.0
        %3468 = vmatprep.subr.mxu0 0.0
        %3469 = vmatpush2.msra.mxu0 0.0
        %3470 = vmatprep.mubr.f32.mxu0 0.0
        %3471 = vmatmul.mubr.f32.gmra.mxu0 %v3404
        %v3472 = vpop.f32.mrf.mxu0
        %v3473 = vadd.f32 %v3401, %v3472
        %v3474 = vpop.f32.mrf.mxu0
        %3475 = vdwg.mxu0
        %v3476 = vmax.f32 %v3473, 0.0
        %s3477 = scalar_lea.vmem %s21, 64
        %v3478 = vld [vmem:[%s3477] sm:$0xff]
        %v3479 = vld [vmem:[%s3477 + $0x8] sm:$0xff]
        %v3480 = vld [vmem:[%s3477 + $0x10] sm:$0xff]
        %v3481 = vld [vmem:[%s3477 + $0x18] sm:$0xff]
        %v3482 = vld [vmem:[%s3477 + $0x20] sm:$0xff]
        %v3483 = vld [vmem:[%s3477 + $0x28] sm:$0xff]
        %v3484 = vld [vmem:[%s3477 + $0x30] sm:$0xff]
        %v3485 = vld [vmem:[%s3477 + $0x38] sm:$0xff]
        %v3487 = vsel %vm2191, %v3476, 0
        %3489 = vmatprep.subr.mxu0 0.0
        %3490 = vmatpush1.msra.mxu0 0.0
        %3491 = vmatprep.subr.mxu0 0.0
        %3492 = vmatpush1.msra.mxu0 0.0
        %3493 = vmatprep.subr.mxu0 0.0
        %3494 = vmatpush1.msra.mxu0 0.0
        %3495 = vmatprep.subr.mxu0 0.0
        %3496 = vmatpush1.msra.mxu0 0.0
        %3497 = vmatprep.subr.mxu0 0.0
        %3498 = vmatpush1.msra.mxu0 0.0
        %3499 = vmatprep.subr.mxu0 0.0
        %3500 = vmatpush1.msra.mxu0 0.0
        %3501 = vmatprep.subr.mxu0 0.0
        %3502 = vmatpush1.msra.mxu0 0.0
        %3503 = vmatprep.subr.mxu0 0.0
        %3504 = vmatpush1.msra.mxu0 0.0
        %3505 = vmatprep.subr.mxu0 0.0
        %3506 = vmatpush1.msra.mxu0 %v3485
        %3507 = vmatprep.subr.mxu0 0.0
        %3508 = vmatpush1.msra.mxu0 %v3484
        %3509 = vmatprep.subr.mxu0 0.0
        %3510 = vmatpush1.msra.mxu0 %v3483
        %3511 = vmatprep.subr.mxu0 0.0
        %3512 = vmatpush1.msra.mxu0 %v3482
        %3513 = vmatprep.subr.mxu0 0.0
        %3514 = vmatpush1.msra.mxu0 %v3481
        %3515 = vmatprep.subr.mxu0 0.0
        %3516 = vmatpush1.msra.mxu0 %v3480
        %3517 = vmatprep.subr.mxu0 0.0
        %3518 = vmatpush1.msra.mxu0 %v3479
        %3519 = vmatprep.subr.mxu0 0.0
        %3520 = vmatpush1.msra.mxu0 %v3478
        %3521 = vmatprep.subr.mxu0 0.0
        %3522 = vmatpush2.msra.mxu0 0.0
        %3523 = vmatprep.subr.mxu0 0.0
        %3524 = vmatpush2.msra.mxu0 0.0
        %3525 = vmatprep.subr.mxu0 0.0
        %3526 = vmatpush2.msra.mxu0 0.0
        %3527 = vmatprep.subr.mxu0 0.0
        %3528 = vmatpush2.msra.mxu0 0.0
        %3529 = vmatprep.subr.mxu0 0.0
        %3530 = vmatpush2.msra.mxu0 0.0
        %3531 = vmatprep.subr.mxu0 0.0
        %3532 = vmatpush2.msra.mxu0 0.0
        %3533 = vmatprep.subr.mxu0 0.0
        %3534 = vmatpush2.msra.mxu0 0.0
        %3535 = vmatprep.subr.mxu0 0.0
        %3536 = vmatpush2.msra.mxu0 0.0
        %3537 = vmatprep.subr.mxu0 0.0
        %3538 = vmatpush2.msra.mxu0 0.0
        %3539 = vmatprep.subr.mxu0 0.0
        %3540 = vmatpush2.msra.mxu0 0.0
        %3541 = vmatprep.subr.mxu0 0.0
        %3542 = vmatpush2.msra.mxu0 0.0
        %3543 = vmatprep.subr.mxu0 0.0
        %3544 = vmatpush2.msra.mxu0 0.0
        %3545 = vmatprep.subr.mxu0 0.0
        %3546 = vmatpush2.msra.mxu0 0.0
        %3547 = vmatprep.subr.mxu0 0.0
        %3548 = vmatpush2.msra.mxu0 0.0
        %3549 = vmatprep.subr.mxu0 0.0
        %3550 = vmatpush2.msra.mxu0 0.0
        %3551 = vmatprep.subr.mxu0 0.0
        %3552 = vmatpush2.msra.mxu0 0.0
        %3553 = vmatprep.mubr.f32.mxu0 0.0
        %3554 = vmatmul.mubr.f32.gmra.mxu0 %v3487
        %v3555 = vpop.f32.mrf.mxu0
        %v3556 = vadd.f32 0.0, %v3555
        %v3557 = vpop.f32.mrf.mxu0
        %3558 = vdwg.mxu0
        %v3559 = vadd.f32 %v3359, %v3556
        %s3560 = scalar_lea.vmem %s23, 1
        %v3561 = vld [vmem:[%s3560] sm:$0x1]
        %v3563 = vlaneseq
        %v3564 = vshrl.u32 %v3563, 7
        %v3565 = vsub.s32 0, %v3564
        %v3566 = vrot.slane %v3561, %v3565
        %v3568 = vadd.f32 %v3559, %v3566
        %v3569 = vld [vmem:[%s27] sm:$0x3]
        %v3570 = vsel %vm979, %v3568, 0.0
        %3571 = vadd.xlane.f32.xlu0 %v3570
        %v3572 = vpop.xlane.xlu0 %3571
        %v3573 = vmul.f32 %v3572, %v983
        %v3574 = vsub.f32 %v3568, %v3573
        %v3575 = vmul.f32 %v3574, %v3574
        %v3576 = vsel %vm979, %v3575, 0.0
        %3577 = vadd.xlane.f32.xlu0 %v3576
        %v3578 = vpop.xlane.xlu0 %3577
        %v3579 = vmul.f32 %v3578, 0.032258064
        %v3580 = vrsqrt.pop %v3579
        %v3581 = vmul.f32 %v3579, %v3580
        %vm3582 = vcmp.eq.f32.partialorder %v3579, inf
        %v3583 = vsel %vm3582, %v3579, %v3581
        %vm3584 = vcmp.eq.f32.partialorder %v3579, 0.0
        %v3585 = vand.u32 %v3579, 2147483648
        %v3586 = vsel %vm3584, %v3585, %v3583
        %v3587 = vadd.f32 %v3586, 1e-06
        %v3588 = vrcp.pop %v3587
        %v3589 = vlaneseq
        %v3590 = vshrl.u32 %v3589, 7
        %v3591 = vsub.s32 0, %v3590
        %v3592 = vrot.slane %v3569, %v3591
        %v3593 = vmul.f32 %v3592, %v3574
        %v3594 = vmul.f32 %v3593, %v3588
        %v3595 = vlaneseq
        %v3596 = vshrl.u32 %v3595, 7
        %v3597 = vsub.s32 1, %v3596
        %v3598 = vrot.slane %v3569, %v3597
        %v3599 = vadd.f32 %v3594, %v3598
        %v3600 = vld [vmem:[%s57] sm:$0x3f]
        %v3601 = vsel %vm979, %v975, 0.0
        %3602 = vadd.xlane.f32.xlu0 %v3601
        %v3603 = vpop.xlane.xlu0 %3602
        %v3604 = vmul.f32 %v3603, %v983
        %v3605 = vsub.f32 %v975, %v3604
        %v3606 = vmul.f32 %v3605, %v3605
        %v3607 = vsel %vm979, %v3606, 0.0
        %3608 = vadd.xlane.f32.xlu0 %v3607
        %v3609 = vpop.xlane.xlu0 %3608
        %v3610 = vmul.f32 %v3609, 0.032258064
        %v3611 = vrsqrt.pop %v3610
        %v3612 = vmul.f32 %v3610, %v3611
        %vm3613 = vcmp.eq.f32.partialorder %v3610, inf
        %v3614 = vsel %vm3613, %v3610, %v3612
        %vm3615 = vcmp.eq.f32.partialorder %v3610, 0.0
        %v3616 = vand.u32 %v3610, 2147483648
        %v3617 = vsel %vm3615, %v3616, %v3614
        %v3618 = vadd.f32 %v3617, 1e-06
        %v3619 = vrcp.pop %v3618
        %v3620 = vlaneseq
        %v3621 = vshrl.u32 %v3620, 7
        %v3622 = vsub.s32 0, %v3621
        %v3623 = vrot.slane %v3600, %v3622
        %v3624 = vmul.f32 %v3623, %v3605
        %v3625 = vmul.f32 %v3624, %v3619
        %v3626 = vlaneseq
        %v3627 = vshrl.u32 %v3626, 7
        %v3628 = vsub.s32 1, %v3627
        %v3629 = vrot.slane %v3600, %v3628
        %v3630 = vadd.f32 %v3625, %v3629
        %v3631 = vld [vmem:[%s29] sm:$0xff]
        %v3632 = vld [vmem:[%s29 + $0x8] sm:$0xff]
        %v3633 = vld [vmem:[%s29 + $0x10] sm:$0xff]
        %v3634 = vld [vmem:[%s29 + $0x18] sm:$0xff]
        %v3635 = vld [vmem:[%s31] sm:$0x1]
        %v3637 = vlaneseq
        %v3638 = vshrl.u32 %v3637, 7
        %v3639 = vsub.s32 0, %v3638
        %v3640 = vrot.slane %v3635, %v3639
        %v3643 = vsel %vm979, %v3630, 0
        %3645 = vmatprep.subr.mxu0 0.0
        %3646 = vmatpush1.msra.mxu0 0.0
        %3647 = vmatprep.subr.mxu0 0.0
        %3648 = vmatpush1.msra.mxu0 0.0
        %3649 = vmatprep.subr.mxu0 0.0
        %3650 = vmatpush1.msra.mxu0 0.0
        %3651 = vmatprep.subr.mxu0 0.0
        %3652 = vmatpush1.msra.mxu0 0.0
        %3653 = vmatprep.subr.mxu0 0.0
        %3654 = vmatpush1.msra.mxu0 0.0
        %3655 = vmatprep.subr.mxu0 0.0
        %3656 = vmatpush1.msra.mxu0 0.0
        %3657 = vmatprep.subr.mxu0 0.0
        %3658 = vmatpush1.msra.mxu0 0.0
        %3659 = vmatprep.subr.mxu0 0.0
        %3660 = vmatpush1.msra.mxu0 0.0
        %3661 = vmatprep.subr.mxu0 0.0
        %3662 = vmatpush1.msra.mxu0 0.0
        %3663 = vmatprep.subr.mxu0 0.0
        %3664 = vmatpush1.msra.mxu0 0.0
        %3665 = vmatprep.subr.mxu0 0.0
        %3666 = vmatpush1.msra.mxu0 0.0
        %3667 = vmatprep.subr.mxu0 0.0
        %3668 = vmatpush1.msra.mxu0 0.0
        %3669 = vmatprep.subr.mxu0 0.0
        %3670 = vmatpush1.msra.mxu0 %v3634
        %3671 = vmatprep.subr.mxu0 0.0
        %3672 = vmatpush1.msra.mxu0 %v3633
        %3673 = vmatprep.subr.mxu0 0.0
        %3674 = vmatpush1.msra.mxu0 %v3632
        %3675 = vmatprep.subr.mxu0 0.0
        %3676 = vmatpush1.msra.mxu0 %v3631
        %3677 = vmatprep.subr.mxu0 0.0
        %3678 = vmatpush2.msra.mxu0 0.0
        %3679 = vmatprep.subr.mxu0 0.0
        %3680 = vmatpush2.msra.mxu0 0.0
        %3681 = vmatprep.subr.mxu0 0.0
        %3682 = vmatpush2.msra.mxu0 0.0
        %3683 = vmatprep.subr.mxu0 0.0
        %3684 = vmatpush2.msra.mxu0 0.0
        %3685 = vmatprep.subr.mxu0 0.0
        %3686 = vmatpush2.msra.mxu0 0.0
        %3687 = vmatprep.subr.mxu0 0.0
        %3688 = vmatpush2.msra.mxu0 0.0
        %3689 = vmatprep.subr.mxu0 0.0
        %3690 = vmatpush2.msra.mxu0 0.0
        %3691 = vmatprep.subr.mxu0 0.0
        %3692 = vmatpush2.msra.mxu0 0.0
        %3693 = vmatprep.subr.mxu0 0.0
        %3694 = vmatpush2.msra.mxu0 0.0
        %3695 = vmatprep.subr.mxu0 0.0
        %3696 = vmatpush2.msra.mxu0 0.0
        %3697 = vmatprep.subr.mxu0 0.0
        %3698 = vmatpush2.msra.mxu0 0.0
        %3699 = vmatprep.subr.mxu0 0.0
        %3700 = vmatpush2.msra.mxu0 0.0
        %3701 = vmatprep.subr.mxu0 0.0
        %3702 = vmatpush2.msra.mxu0 0.0
        %3703 = vmatprep.subr.mxu0 0.0
        %3704 = vmatpush2.msra.mxu0 0.0
        %3705 = vmatprep.subr.mxu0 0.0
        %3706 = vmatpush2.msra.mxu0 0.0
        %3707 = vmatprep.subr.mxu0 0.0
        %3708 = vmatpush2.msra.mxu0 0.0
        %3709 = vmatprep.mubr.f32.mxu0 0.0
        %3710 = vmatmul.mubr.f32.gmra.mxu0 %v3643
        %v3711 = vpop.f32.mrf.mxu0
        %v3712 = vadd.f32 %v3640, %v3711
        %v3713 = vpop.f32.mrf.mxu0
        %3714 = vdwg.mxu0
        %v3715 = vld [vmem:[%s33] sm:$0xff]
        %v3716 = vld [vmem:[%s33 + $0x8] sm:$0xff]
        %v3717 = vld [vmem:[%s33 + $0x10] sm:$0xff]
        %v3718 = vld [vmem:[%s33 + $0x18] sm:$0xff]
        %v3719 = vld [vmem:[%s35] sm:$0x1]
        %3721 = vrot.lane.b32.xlu0 %v3712, 96
        %v3722 = vpop.permute.xlu0 %3721
        %v3723 = vsel %vm1109, %v3712, 0
        %v3725 = vsel %vm1109, %v3722, 0
        %3727 = vmatprep.subr.mxu0 0.0
        %3728 = vmatpush1.xpose.msra.mxu0 0.0
        %3729 = vmatprep.subr.mxu0 0.0
        %3730 = vmatpush1.xpose.msra.mxu0 0.0
        %3731 = vmatprep.subr.mxu0 0.0
        %3732 = vmatpush1.xpose.msra.mxu0 0.0
        %3733 = vmatprep.subr.mxu0 0.0
        %3734 = vmatpush1.xpose.msra.mxu0 0.0
        %3735 = vmatprep.subr.mxu0 0.0
        %3736 = vmatpush1.xpose.msra.mxu0 0.0
        %3737 = vmatprep.subr.mxu0 0.0
        %3738 = vmatpush1.xpose.msra.mxu0 0.0
        %3739 = vmatprep.subr.mxu0 0.0
        %3740 = vmatpush1.xpose.msra.mxu0 0.0
        %3741 = vmatprep.subr.mxu0 0.0
        %3742 = vmatpush1.xpose.msra.mxu0 0.0
        %3743 = vmatprep.subr.mxu0 0.0
        %3744 = vmatpush1.xpose.msra.mxu0 0.0
        %3745 = vmatprep.subr.mxu0 0.0
        %3746 = vmatpush1.xpose.msra.mxu0 0.0
        %3747 = vmatprep.subr.mxu0 0.0
        %3748 = vmatpush1.xpose.msra.mxu0 0.0
        %3749 = vmatprep.subr.mxu0 0.0
        %3750 = vmatpush1.xpose.msra.mxu0 0.0
        %3751 = vmatprep.subr.mxu0 0.0
        %3752 = vmatpush1.xpose.msra.mxu0 0.0
        %3753 = vmatprep.subr.mxu0 0.0
        %3754 = vmatpush1.xpose.msra.mxu0 0.0
        %3755 = vmatprep.subr.mxu0 0.0
        %3756 = vmatpush1.xpose.msra.mxu0 0.0
        %3757 = vmatprep.subr.mxu0 0.0
        %3758 = vmatpush1.xpose.msra.mxu0 %v3725
        %3759 = vmatprep.subr.mxu0 0.0
        %3760 = vmatpush2.xpose.msra.mxu0 0.0
        %3761 = vmatprep.subr.mxu0 0.0
        %3762 = vmatpush2.xpose.msra.mxu0 0.0
        %3763 = vmatprep.subr.mxu0 0.0
        %3764 = vmatpush2.xpose.msra.mxu0 0.0
        %3765 = vmatprep.subr.mxu0 0.0
        %3766 = vmatpush2.xpose.msra.mxu0 0.0
        %3767 = vmatprep.subr.mxu0 0.0
        %3768 = vmatpush2.xpose.msra.mxu0 0.0
        %3769 = vmatprep.subr.mxu0 0.0
        %3770 = vmatpush2.xpose.msra.mxu0 0.0
        %3771 = vmatprep.subr.mxu0 0.0
        %3772 = vmatpush2.xpose.msra.mxu0 0.0
        %3773 = vmatprep.subr.mxu0 0.0
        %3774 = vmatpush2.xpose.msra.mxu0 0.0
        %3775 = vmatprep.subr.mxu0 0.0
        %3776 = vmatpush2.xpose.msra.mxu0 0.0
        %3777 = vmatprep.subr.mxu0 0.0
        %3778 = vmatpush2.xpose.msra.mxu0 0.0
        %3779 = vmatprep.subr.mxu0 0.0
        %3780 = vmatpush2.xpose.msra.mxu0 0.0
        %3781 = vmatprep.subr.mxu0 0.0
        %3782 = vmatpush2.xpose.msra.mxu0 0.0
        %3783 = vmatprep.subr.mxu0 0.0
        %3784 = vmatpush2.xpose.msra.mxu0 0.0
        %3785 = vmatprep.subr.mxu0 0.0
        %3786 = vmatpush2.xpose.msra.mxu0 0.0
        %3787 = vmatprep.subr.mxu0 0.0
        %3788 = vmatpush2.xpose.msra.mxu0 0.0
        %3789 = vmatprep.subr.mxu0 0.0
        %3790 = vmatpush2.xpose.msra.mxu0 0.0
        %3791 = vmatprep.mubr.f32.mxu0 0.0
        %3792 = vmatmul.mubr.f32.gmra.mxu0 %v3723
        %v3793 = vpop.f32.mrf.mxu0
        %v3794 = vadd.f32 %v977, %v3793
        %v3795 = vpop.f32.mrf.mxu0
        %3796 = vdwg.mxu0
        %v3797 = vsel %vm1109, %v3794, -inf
        %3798 = vmax.xlane.f32.xlu0 %v3797
        %v3799 = vpop.xlane.xlu0 %3798
        %v3800 = vsub.f32 %v3794, %v3799
        %v3801 = vmul.f32 %v3800, 1.442695
        %v3802 = vpow.pop %v3801
        %v3803 = vsel %vm1109, %v3802, 0.0
        %3804 = vadd.xlane.f32.xlu0 %v3803
        %v3805 = vpop.xlane.xlu0 %3804
        %v3806 = vrcp.pop %v3805
        %v3807 = vmul.f32 %v3802, %v3806
        %3808 = vrot.lane.b32.xlu0 %v3712, 64
        %v3809 = vpop.permute.xlu0 %3808
        %v3812 = vsel %vm1109, %v3807, 0
        %3814 = vmatprep.subr.mxu0 0.0
        %3815 = vmatpush1.msra.mxu0 0.0
        %3816 = vmatprep.subr.mxu0 0.0
        %3817 = vmatpush1.msra.mxu0 0.0
        %3818 = vmatprep.subr.mxu0 0.0
        %3819 = vmatpush1.msra.mxu0 0.0
        %3820 = vmatprep.subr.mxu0 0.0
        %3821 = vmatpush1.msra.mxu0 0.0
        %3822 = vmatprep.subr.mxu0 0.0
        %3823 = vmatpush1.msra.mxu0 0.0
        %3824 = vmatprep.subr.mxu0 0.0
        %3825 = vmatpush1.msra.mxu0 0.0
        %3826 = vmatprep.subr.mxu0 0.0
        %3827 = vmatpush1.msra.mxu0 0.0
        %3828 = vmatprep.subr.mxu0 0.0
        %3829 = vmatpush1.msra.mxu0 0.0
        %3830 = vmatprep.subr.mxu0 0.0
        %3831 = vmatpush1.msra.mxu0 0.0
        %3832 = vmatprep.subr.mxu0 0.0
        %3833 = vmatpush1.msra.mxu0 0.0
        %3834 = vmatprep.subr.mxu0 0.0
        %3835 = vmatpush1.msra.mxu0 0.0
        %3836 = vmatprep.subr.mxu0 0.0
        %3837 = vmatpush1.msra.mxu0 0.0
        %3838 = vmatprep.subr.mxu0 0.0
        %3839 = vmatpush1.msra.mxu0 0.0
        %3840 = vmatprep.subr.mxu0 0.0
        %3841 = vmatpush1.msra.mxu0 0.0
        %3842 = vmatprep.subr.mxu0 0.0
        %3843 = vmatpush1.msra.mxu0 0.0
        %3844 = vmatprep.subr.mxu0 0.0
        %3845 = vmatpush1.msra.mxu0 %v3809
        %3846 = vmatprep.subr.mxu0 0.0
        %3847 = vmatpush2.msra.mxu0 0.0
        %3848 = vmatprep.subr.mxu0 0.0
        %3849 = vmatpush2.msra.mxu0 0.0
        %3850 = vmatprep.subr.mxu0 0.0
        %3851 = vmatpush2.msra.mxu0 0.0
        %3852 = vmatprep.subr.mxu0 0.0
        %3853 = vmatpush2.msra.mxu0 0.0
        %3854 = vmatprep.subr.mxu0 0.0
        %3855 = vmatpush2.msra.mxu0 0.0
        %3856 = vmatprep.subr.mxu0 0.0
        %3857 = vmatpush2.msra.mxu0 0.0
        %3858 = vmatprep.subr.mxu0 0.0
        %3859 = vmatpush2.msra.mxu0 0.0
        %3860 = vmatprep.subr.mxu0 0.0
        %3861 = vmatpush2.msra.mxu0 0.0
        %3862 = vmatprep.subr.mxu0 0.0
        %3863 = vmatpush2.msra.mxu0 0.0
        %3864 = vmatprep.subr.mxu0 0.0
        %3865 = vmatpush2.msra.mxu0 0.0
        %3866 = vmatprep.subr.mxu0 0.0
        %3867 = vmatpush2.msra.mxu0 0.0
        %3868 = vmatprep.subr.mxu0 0.0
        %3869 = vmatpush2.msra.mxu0 0.0
        %3870 = vmatprep.subr.mxu0 0.0
        %3871 = vmatpush2.msra.mxu0 0.0
        %3872 = vmatprep.subr.mxu0 0.0
        %3873 = vmatpush2.msra.mxu0 0.0
        %3874 = vmatprep.subr.mxu0 0.0
        %3875 = vmatpush2.msra.mxu0 0.0
        %3876 = vmatprep.subr.mxu0 0.0
        %3877 = vmatpush2.msra.mxu0 0.0
        %3878 = vmatprep.mubr.f32.mxu0 0.0
        %3879 = vmatmul.mubr.f32.gmra.mxu0 %v3812
        %v3880 = vpop.f32.mrf.mxu0
        %v3881 = vadd.f32 0.0, %v3880
        %v3882 = vpop.f32.mrf.mxu0
        %3883 = vdwg.mxu0
        %3884 = vrot.lane.b32.xlu0 %v3712, 120
        %v3885 = vpop.permute.xlu0 %3884
        %3886 = vrot.lane.b32.xlu0 %v3712, 88
        %v3887 = vpop.permute.xlu0 %3886
        %v3888 = vsel %vm1109, %v3885, 0
        %v3890 = vsel %vm1109, %v3887, 0
        %3892 = vmatprep.subr.mxu0 0.0
        %3893 = vmatpush1.xpose.msra.mxu0 0.0
        %3894 = vmatprep.subr.mxu0 0.0
        %3895 = vmatpush1.xpose.msra.mxu0 0.0
        %3896 = vmatprep.subr.mxu0 0.0
        %3897 = vmatpush1.xpose.msra.mxu0 0.0
        %3898 = vmatprep.subr.mxu0 0.0
        %3899 = vmatpush1.xpose.msra.mxu0 0.0
        %3900 = vmatprep.subr.mxu0 0.0
        %3901 = vmatpush1.xpose.msra.mxu0 0.0
        %3902 = vmatprep.subr.mxu0 0.0
        %3903 = vmatpush1.xpose.msra.mxu0 0.0
        %3904 = vmatprep.subr.mxu0 0.0
        %3905 = vmatpush1.xpose.msra.mxu0 0.0
        %3906 = vmatprep.subr.mxu0 0.0
        %3907 = vmatpush1.xpose.msra.mxu0 0.0
        %3908 = vmatprep.subr.mxu0 0.0
        %3909 = vmatpush1.xpose.msra.mxu0 0.0
        %3910 = vmatprep.subr.mxu0 0.0
        %3911 = vmatpush1.xpose.msra.mxu0 0.0
        %3912 = vmatprep.subr.mxu0 0.0
        %3913 = vmatpush1.xpose.msra.mxu0 0.0
        %3914 = vmatprep.subr.mxu0 0.0
        %3915 = vmatpush1.xpose.msra.mxu0 0.0
        %3916 = vmatprep.subr.mxu0 0.0
        %3917 = vmatpush1.xpose.msra.mxu0 0.0
        %3918 = vmatprep.subr.mxu0 0.0
        %3919 = vmatpush1.xpose.msra.mxu0 0.0
        %3920 = vmatprep.subr.mxu0 0.0
        %3921 = vmatpush1.xpose.msra.mxu0 0.0
        %3922 = vmatprep.subr.mxu0 0.0
        %3923 = vmatpush1.xpose.msra.mxu0 %v3890
        %3924 = vmatprep.subr.mxu0 0.0
        %3925 = vmatpush2.xpose.msra.mxu0 0.0
        %3926 = vmatprep.subr.mxu0 0.0
        %3927 = vmatpush2.xpose.msra.mxu0 0.0
        %3928 = vmatprep.subr.mxu0 0.0
        %3929 = vmatpush2.xpose.msra.mxu0 0.0
        %3930 = vmatprep.subr.mxu0 0.0
        %3931 = vmatpush2.xpose.msra.mxu0 0.0
        %3932 = vmatprep.subr.mxu0 0.0
        %3933 = vmatpush2.xpose.msra.mxu0 0.0
        %3934 = vmatprep.subr.mxu0 0.0
        %3935 = vmatpush2.xpose.msra.mxu0 0.0
        %3936 = vmatprep.subr.mxu0 0.0
        %3937 = vmatpush2.xpose.msra.mxu0 0.0
        %3938 = vmatprep.subr.mxu0 0.0
        %3939 = vmatpush2.xpose.msra.mxu0 0.0
        %3940 = vmatprep.subr.mxu0 0.0
        %3941 = vmatpush2.xpose.msra.mxu0 0.0
        %3942 = vmatprep.subr.mxu0 0.0
        %3943 = vmatpush2.xpose.msra.mxu0 0.0
        %3944 = vmatprep.subr.mxu0 0.0
        %3945 = vmatpush2.xpose.msra.mxu0 0.0
        %3946 = vmatprep.subr.mxu0 0.0
        %3947 = vmatpush2.xpose.msra.mxu0 0.0
        %3948 = vmatprep.subr.mxu0 0.0
        %3949 = vmatpush2.xpose.msra.mxu0 0.0
        %3950 = vmatprep.subr.mxu0 0.0
        %3951 = vmatpush2.xpose.msra.mxu0 0.0
        %3952 = vmatprep.subr.mxu0 0.0
        %3953 = vmatpush2.xpose.msra.mxu0 0.0
        %3954 = vmatprep.subr.mxu0 0.0
        %3955 = vmatpush2.xpose.msra.mxu0 0.0
        %3956 = vmatprep.mubr.f32.mxu0 0.0
        %3957 = vmatmul.mubr.f32.gmra.mxu0 %v3888
        %v3958 = vpop.f32.mrf.mxu0
        %v3959 = vadd.f32 %v977, %v3958
        %v3960 = vpop.f32.mrf.mxu0
        %3961 = vdwg.mxu0
        %v3962 = vsel %vm1109, %v3959, -inf
        %3963 = vmax.xlane.f32.xlu0 %v3962
        %v3964 = vpop.xlane.xlu0 %3963
        %v3965 = vsub.f32 %v3959, %v3964
        %v3966 = vmul.f32 %v3965, 1.442695
        %v3967 = vpow.pop %v3966
        %v3968 = vsel %vm1109, %v3967, 0.0
        %3969 = vadd.xlane.f32.xlu0 %v3968
        %v3970 = vpop.xlane.xlu0 %3969
        %v3971 = vrcp.pop %v3970
        %v3972 = vmul.f32 %v3967, %v3971
        %3973 = vrot.lane.b32.xlu0 %v3712, 56
        %v3974 = vpop.permute.xlu0 %3973
        %v3977 = vsel %vm1109, %v3972, 0
        %3979 = vmatprep.subr.mxu0 0.0
        %3980 = vmatpush1.msra.mxu0 0.0
        %3981 = vmatprep.subr.mxu0 0.0
        %3982 = vmatpush1.msra.mxu0 0.0
        %3983 = vmatprep.subr.mxu0 0.0
        %3984 = vmatpush1.msra.mxu0 0.0
        %3985 = vmatprep.subr.mxu0 0.0
        %3986 = vmatpush1.msra.mxu0 0.0
        %3987 = vmatprep.subr.mxu0 0.0
        %3988 = vmatpush1.msra.mxu0 0.0
        %3989 = vmatprep.subr.mxu0 0.0
        %3990 = vmatpush1.msra.mxu0 0.0
        %3991 = vmatprep.subr.mxu0 0.0
        %3992 = vmatpush1.msra.mxu0 0.0
        %3993 = vmatprep.subr.mxu0 0.0
        %3994 = vmatpush1.msra.mxu0 0.0
        %3995 = vmatprep.subr.mxu0 0.0
        %3996 = vmatpush1.msra.mxu0 0.0
        %3997 = vmatprep.subr.mxu0 0.0
        %3998 = vmatpush1.msra.mxu0 0.0
        %3999 = vmatprep.subr.mxu0 0.0
        %4000 = vmatpush1.msra.mxu0 0.0
        %4001 = vmatprep.subr.mxu0 0.0
        %4002 = vmatpush1.msra.mxu0 0.0
        %4003 = vmatprep.subr.mxu0 0.0
        %4004 = vmatpush1.msra.mxu0 0.0
        %4005 = vmatprep.subr.mxu0 0.0
        %4006 = vmatpush1.msra.mxu0 0.0
        %4007 = vmatprep.subr.mxu0 0.0
        %4008 = vmatpush1.msra.mxu0 0.0
        %4009 = vmatprep.subr.mxu0 0.0
        %4010 = vmatpush1.msra.mxu0 %v3974
        %4011 = vmatprep.subr.mxu0 0.0
        %4012 = vmatpush2.msra.mxu0 0.0
        %4013 = vmatprep.subr.mxu0 0.0
        %4014 = vmatpush2.msra.mxu0 0.0
        %4015 = vmatprep.subr.mxu0 0.0
        %4016 = vmatpush2.msra.mxu0 0.0
        %4017 = vmatprep.subr.mxu0 0.0
        %4018 = vmatpush2.msra.mxu0 0.0
        %4019 = vmatprep.subr.mxu0 0.0
        %4020 = vmatpush2.msra.mxu0 0.0
        %4021 = vmatprep.subr.mxu0 0.0
        %4022 = vmatpush2.msra.mxu0 0.0
        %4023 = vmatprep.subr.mxu0 0.0
        %4024 = vmatpush2.msra.mxu0 0.0
        %4025 = vmatprep.subr.mxu0 0.0
        %4026 = vmatpush2.msra.mxu0 0.0
        %4027 = vmatprep.subr.mxu0 0.0
        %4028 = vmatpush2.msra.mxu0 0.0
        %4029 = vmatprep.subr.mxu0 0.0
        %4030 = vmatpush2.msra.mxu0 0.0
        %4031 = vmatprep.subr.mxu0 0.0
        %4032 = vmatpush2.msra.mxu0 0.0
        %4033 = vmatprep.subr.mxu0 0.0
        %4034 = vmatpush2.msra.mxu0 0.0
        %4035 = vmatprep.subr.mxu0 0.0
        %4036 = vmatpush2.msra.mxu0 0.0
        %4037 = vmatprep.subr.mxu0 0.0
        %4038 = vmatpush2.msra.mxu0 0.0
        %4039 = vmatprep.subr.mxu0 0.0
        %4040 = vmatpush2.msra.mxu0 0.0
        %4041 = vmatprep.subr.mxu0 0.0
        %4042 = vmatpush2.msra.mxu0 0.0
        %4043 = vmatprep.mubr.f32.mxu0 0.0
        %4044 = vmatmul.mubr.f32.gmra.mxu0 %v3977
        %v4045 = vpop.f32.mrf.mxu0
        %v4046 = vadd.f32 0.0, %v4045
        %v4047 = vpop.f32.mrf.mxu0
        %4048 = vdwg.mxu0
        %v4050 = vsel %vm1109, %v4046, 0
        %4052 = vmatprep.subr.mxu0 0.0
        %4053 = vmatpush1.msra.mxu0 0.0
        %4054 = vmatprep.subr.mxu0 0.0
        %4055 = vmatpush1.msra.mxu0 0.0
        %4056 = vmatprep.subr.mxu0 0.0
        %4057 = vmatpush1.msra.mxu0 0.0
        %4058 = vmatprep.subr.mxu0 0.0
        %4059 = vmatpush1.msra.mxu0 0.0
        %4060 = vmatprep.subr.mxu0 0.0
        %4061 = vmatpush1.msra.mxu0 0.0
        %4062 = vmatprep.subr.mxu0 0.0
        %4063 = vmatpush1.msra.mxu0 0.0
        %4064 = vmatprep.subr.mxu0 0.0
        %4065 = vmatpush1.msra.mxu0 0.0
        %4066 = vmatprep.subr.mxu0 0.0
        %4067 = vmatpush1.msra.mxu0 0.0
        %4068 = vmatprep.subr.mxu0 0.0
        %4069 = vmatpush1.msra.mxu0 0.0
        %4070 = vmatprep.subr.mxu0 0.0
        %4071 = vmatpush1.msra.mxu0 0.0
        %4072 = vmatprep.subr.mxu0 0.0
        %4073 = vmatpush1.msra.mxu0 0.0
        %4074 = vmatprep.subr.mxu0 0.0
        %4075 = vmatpush1.msra.mxu0 0.0
        %4076 = vmatprep.subr.mxu0 0.0
        %4077 = vmatpush1.msra.mxu0 0.0
        %4078 = vmatprep.subr.mxu0 0.0
        %4079 = vmatpush1.msra.mxu0 0.0
        %4080 = vmatprep.subr.mxu0 0.0
        %4081 = vmatpush1.msra.mxu0 0.0
        %4082 = vmatprep.subr.mxu0 0.0
        %4083 = vmatpush1.msra.mxu0 %v3716
        %4084 = vmatprep.subr.mxu0 0.0
        %4085 = vmatpush2.msra.mxu0 0.0
        %4086 = vmatprep.subr.mxu0 0.0
        %4087 = vmatpush2.msra.mxu0 0.0
        %4088 = vmatprep.subr.mxu0 0.0
        %4089 = vmatpush2.msra.mxu0 0.0
        %4090 = vmatprep.subr.mxu0 0.0
        %4091 = vmatpush2.msra.mxu0 0.0
        %4092 = vmatprep.subr.mxu0 0.0
        %4093 = vmatpush2.msra.mxu0 0.0
        %4094 = vmatprep.subr.mxu0 0.0
        %4095 = vmatpush2.msra.mxu0 0.0
        %4096 = vmatprep.subr.mxu0 0.0
        %4097 = vmatpush2.msra.mxu0 0.0
        %4098 = vmatprep.subr.mxu0 0.0
        %4099 = vmatpush2.msra.mxu0 0.0
        %4100 = vmatprep.subr.mxu0 0.0
        %4101 = vmatpush2.msra.mxu0 0.0
        %4102 = vmatprep.subr.mxu0 0.0
        %4103 = vmatpush2.msra.mxu0 0.0
        %4104 = vmatprep.subr.mxu0 0.0
        %4105 = vmatpush2.msra.mxu0 0.0
        %4106 = vmatprep.subr.mxu0 0.0
        %4107 = vmatpush2.msra.mxu0 0.0
        %4108 = vmatprep.subr.mxu0 0.0
        %4109 = vmatpush2.msra.mxu0 0.0
        %4110 = vmatprep.subr.mxu0 0.0
        %4111 = vmatpush2.msra.mxu0 0.0
        %4112 = vmatprep.subr.mxu0 0.0
        %4113 = vmatpush2.msra.mxu0 0.0
        %4114 = vmatprep.subr.mxu0 0.0
        %4115 = vmatpush2.msra.mxu0 0.0
        %4116 = vmatprep.mubr.f32.mxu0 0.0
        %4117 = vmatmul.mubr.f32.gmra.mxu0 %v4050
        %v4118 = vpop.f32.mrf.mxu0
        %v4119 = vadd.f32 0.0, %v4118
        %v4120 = vpop.f32.mrf.mxu0
        %4121 = vdwg.mxu0
        %v4123 = vsel %vm1109, %v3881, 0
        %4125 = vmatprep.subr.mxu0 0.0
        %4126 = vmatpush1.msra.mxu0 0.0
        %4127 = vmatprep.subr.mxu0 0.0
        %4128 = vmatpush1.msra.mxu0 0.0
        %4129 = vmatprep.subr.mxu0 0.0
        %4130 = vmatpush1.msra.mxu0 0.0
        %4131 = vmatprep.subr.mxu0 0.0
        %4132 = vmatpush1.msra.mxu0 0.0
        %4133 = vmatprep.subr.mxu0 0.0
        %4134 = vmatpush1.msra.mxu0 0.0
        %4135 = vmatprep.subr.mxu0 0.0
        %4136 = vmatpush1.msra.mxu0 0.0
        %4137 = vmatprep.subr.mxu0 0.0
        %4138 = vmatpush1.msra.mxu0 0.0
        %4139 = vmatprep.subr.mxu0 0.0
        %4140 = vmatpush1.msra.mxu0 0.0
        %4141 = vmatprep.subr.mxu0 0.0
        %4142 = vmatpush1.msra.mxu0 0.0
        %4143 = vmatprep.subr.mxu0 0.0
        %4144 = vmatpush1.msra.mxu0 0.0
        %4145 = vmatprep.subr.mxu0 0.0
        %4146 = vmatpush1.msra.mxu0 0.0
        %4147 = vmatprep.subr.mxu0 0.0
        %4148 = vmatpush1.msra.mxu0 0.0
        %4149 = vmatprep.subr.mxu0 0.0
        %4150 = vmatpush1.msra.mxu0 0.0
        %4151 = vmatprep.subr.mxu0 0.0
        %4152 = vmatpush1.msra.mxu0 0.0
        %4153 = vmatprep.subr.mxu0 0.0
        %4154 = vmatpush1.msra.mxu0 0.0
        %4155 = vmatprep.subr.mxu0 0.0
        %4156 = vmatpush1.msra.mxu0 %v3715
        %4157 = vmatprep.subr.mxu0 0.0
        %4158 = vmatpush2.msra.mxu0 0.0
        %4159 = vmatprep.subr.mxu0 0.0
        %4160 = vmatpush2.msra.mxu0 0.0
        %4161 = vmatprep.subr.mxu0 0.0
        %4162 = vmatpush2.msra.mxu0 0.0
        %4163 = vmatprep.subr.mxu0 0.0
        %4164 = vmatpush2.msra.mxu0 0.0
        %4165 = vmatprep.subr.mxu0 0.0
        %4166 = vmatpush2.msra.mxu0 0.0
        %4167 = vmatprep.subr.mxu0 0.0
        %4168 = vmatpush2.msra.mxu0 0.0
        %4169 = vmatprep.subr.mxu0 0.0
        %4170 = vmatpush2.msra.mxu0 0.0
        %4171 = vmatprep.subr.mxu0 0.0
        %4172 = vmatpush2.msra.mxu0 0.0
        %4173 = vmatprep.subr.mxu0 0.0
        %4174 = vmatpush2.msra.mxu0 0.0
        %4175 = vmatprep.subr.mxu0 0.0
        %4176 = vmatpush2.msra.mxu0 0.0
        %4177 = vmatprep.subr.mxu0 0.0
        %4178 = vmatpush2.msra.mxu0 0.0
        %4179 = vmatprep.subr.mxu0 0.0
        %4180 = vmatpush2.msra.mxu0 0.0
        %4181 = vmatprep.subr.mxu0 0.0
        %4182 = vmatpush2.msra.mxu0 0.0
        %4183 = vmatprep.subr.mxu0 0.0
        %4184 = vmatpush2.msra.mxu0 0.0
        %4185 = vmatprep.subr.mxu0 0.0
        %4186 = vmatpush2.msra.mxu0 0.0
        %4187 = vmatprep.subr.mxu0 0.0
        %4188 = vmatpush2.msra.mxu0 0.0
        %4189 = vmatprep.mubr.f32.mxu0 0.0
        %4190 = vmatmul.mubr.f32.gmra.mxu0 %v4123
        %v4191 = vpop.f32.mrf.mxu0
        %v4192 = vadd.f32 %v4119, %v4191
        %v4193 = vpop.f32.mrf.mxu0
        %4194 = vdwg.mxu0
        %4195 = vrot.lane.b32.xlu0 %v3712, 112
        %v4196 = vpop.permute.xlu0 %4195
        %4197 = vrot.lane.b32.xlu0 %v3712, 80
        %v4198 = vpop.permute.xlu0 %4197
        %v4199 = vsel %vm1109, %v4196, 0
        %v4201 = vsel %vm1109, %v4198, 0
        %4203 = vmatprep.subr.mxu0 0.0
        %4204 = vmatpush1.xpose.msra.mxu0 0.0
        %4205 = vmatprep.subr.mxu0 0.0
        %4206 = vmatpush1.xpose.msra.mxu0 0.0
        %4207 = vmatprep.subr.mxu0 0.0
        %4208 = vmatpush1.xpose.msra.mxu0 0.0
        %4209 = vmatprep.subr.mxu0 0.0
        %4210 = vmatpush1.xpose.msra.mxu0 0.0
        %4211 = vmatprep.subr.mxu0 0.0
        %4212 = vmatpush1.xpose.msra.mxu0 0.0
        %4213 = vmatprep.subr.mxu0 0.0
        %4214 = vmatpush1.xpose.msra.mxu0 0.0
        %4215 = vmatprep.subr.mxu0 0.0
        %4216 = vmatpush1.xpose.msra.mxu0 0.0
        %4217 = vmatprep.subr.mxu0 0.0
        %4218 = vmatpush1.xpose.msra.mxu0 0.0
        %4219 = vmatprep.subr.mxu0 0.0
        %4220 = vmatpush1.xpose.msra.mxu0 0.0
        %4221 = vmatprep.subr.mxu0 0.0
        %4222 = vmatpush1.xpose.msra.mxu0 0.0
        %4223 = vmatprep.subr.mxu0 0.0
        %4224 = vmatpush1.xpose.msra.mxu0 0.0
        %4225 = vmatprep.subr.mxu0 0.0
        %4226 = vmatpush1.xpose.msra.mxu0 0.0
        %4227 = vmatprep.subr.mxu0 0.0
        %4228 = vmatpush1.xpose.msra.mxu0 0.0
        %4229 = vmatprep.subr.mxu0 0.0
        %4230 = vmatpush1.xpose.msra.mxu0 0.0
        %4231 = vmatprep.subr.mxu0 0.0
        %4232 = vmatpush1.xpose.msra.mxu0 0.0
        %4233 = vmatprep.subr.mxu0 0.0
        %4234 = vmatpush1.xpose.msra.mxu0 %v4201
        %4235 = vmatprep.subr.mxu0 0.0
        %4236 = vmatpush2.xpose.msra.mxu0 0.0
        %4237 = vmatprep.subr.mxu0 0.0
        %4238 = vmatpush2.xpose.msra.mxu0 0.0
        %4239 = vmatprep.subr.mxu0 0.0
        %4240 = vmatpush2.xpose.msra.mxu0 0.0
        %4241 = vmatprep.subr.mxu0 0.0
        %4242 = vmatpush2.xpose.msra.mxu0 0.0
        %4243 = vmatprep.subr.mxu0 0.0
        %4244 = vmatpush2.xpose.msra.mxu0 0.0
        %4245 = vmatprep.subr.mxu0 0.0
        %4246 = vmatpush2.xpose.msra.mxu0 0.0
        %4247 = vmatprep.subr.mxu0 0.0
        %4248 = vmatpush2.xpose.msra.mxu0 0.0
        %4249 = vmatprep.subr.mxu0 0.0
        %4250 = vmatpush2.xpose.msra.mxu0 0.0
        %4251 = vmatprep.subr.mxu0 0.0
        %4252 = vmatpush2.xpose.msra.mxu0 0.0
        %4253 = vmatprep.subr.mxu0 0.0
        %4254 = vmatpush2.xpose.msra.mxu0 0.0
        %4255 = vmatprep.subr.mxu0 0.0
        %4256 = vmatpush2.xpose.msra.mxu0 0.0
        %4257 = vmatprep.subr.mxu0 0.0
        %4258 = vmatpush2.xpose.msra.mxu0 0.0
        %4259 = vmatprep.subr.mxu0 0.0
        %4260 = vmatpush2.xpose.msra.mxu0 0.0
        %4261 = vmatprep.subr.mxu0 0.0
        %4262 = vmatpush2.xpose.msra.mxu0 0.0
        %4263 = vmatprep.subr.mxu0 0.0
        %4264 = vmatpush2.xpose.msra.mxu0 0.0
        %4265 = vmatprep.subr.mxu0 0.0
        %4266 = vmatpush2.xpose.msra.mxu0 0.0
        %4267 = vmatprep.mubr.f32.mxu0 0.0
        %4268 = vmatmul.mubr.f32.gmra.mxu0 %v4199
        %v4269 = vpop.f32.mrf.mxu0
        %v4270 = vadd.f32 %v977, %v4269
        %v4271 = vpop.f32.mrf.mxu0
        %4272 = vdwg.mxu0
        %v4273 = vsel %vm1109, %v4270, -inf
        %4274 = vmax.xlane.f32.xlu0 %v4273
        %v4275 = vpop.xlane.xlu0 %4274
        %v4276 = vsub.f32 %v4270, %v4275
        %v4277 = vmul.f32 %v4276, 1.442695
        %v4278 = vpow.pop %v4277
        %v4279 = vsel %vm1109, %v4278, 0.0
        %4280 = vadd.xlane.f32.xlu0 %v4279
        %v4281 = vpop.xlane.xlu0 %4280
        %v4282 = vrcp.pop %v4281
        %v4283 = vmul.f32 %v4278, %v4282
        %4284 = vrot.lane.b32.xlu0 %v3712, 48
        %v4285 = vpop.permute.xlu0 %4284
        %v4288 = vsel %vm1109, %v4283, 0
        %4290 = vmatprep.subr.mxu0 0.0
        %4291 = vmatpush1.msra.mxu0 0.0
        %4292 = vmatprep.subr.mxu0 0.0
        %4293 = vmatpush1.msra.mxu0 0.0
        %4294 = vmatprep.subr.mxu0 0.0
        %4295 = vmatpush1.msra.mxu0 0.0
        %4296 = vmatprep.subr.mxu0 0.0
        %4297 = vmatpush1.msra.mxu0 0.0
        %4298 = vmatprep.subr.mxu0 0.0
        %4299 = vmatpush1.msra.mxu0 0.0
        %4300 = vmatprep.subr.mxu0 0.0
        %4301 = vmatpush1.msra.mxu0 0.0
        %4302 = vmatprep.subr.mxu0 0.0
        %4303 = vmatpush1.msra.mxu0 0.0
        %4304 = vmatprep.subr.mxu0 0.0
        %4305 = vmatpush1.msra.mxu0 0.0
        %4306 = vmatprep.subr.mxu0 0.0
        %4307 = vmatpush1.msra.mxu0 0.0
        %4308 = vmatprep.subr.mxu0 0.0
        %4309 = vmatpush1.msra.mxu0 0.0
        %4310 = vmatprep.subr.mxu0 0.0
        %4311 = vmatpush1.msra.mxu0 0.0
        %4312 = vmatprep.subr.mxu0 0.0
        %4313 = vmatpush1.msra.mxu0 0.0
        %4314 = vmatprep.subr.mxu0 0.0
        %4315 = vmatpush1.msra.mxu0 0.0
        %4316 = vmatprep.subr.mxu0 0.0
        %4317 = vmatpush1.msra.mxu0 0.0
        %4318 = vmatprep.subr.mxu0 0.0
        %4319 = vmatpush1.msra.mxu0 0.0
        %4320 = vmatprep.subr.mxu0 0.0
        %4321 = vmatpush1.msra.mxu0 %v4285
        %4322 = vmatprep.subr.mxu0 0.0
        %4323 = vmatpush2.msra.mxu0 0.0
        %4324 = vmatprep.subr.mxu0 0.0
        %4325 = vmatpush2.msra.mxu0 0.0
        %4326 = vmatprep.subr.mxu0 0.0
        %4327 = vmatpush2.msra.mxu0 0.0
        %4328 = vmatprep.subr.mxu0 0.0
        %4329 = vmatpush2.msra.mxu0 0.0
        %4330 = vmatprep.subr.mxu0 0.0
        %4331 = vmatpush2.msra.mxu0 0.0
        %4332 = vmatprep.subr.mxu0 0.0
        %4333 = vmatpush2.msra.mxu0 0.0
        %4334 = vmatprep.subr.mxu0 0.0
        %4335 = vmatpush2.msra.mxu0 0.0
        %4336 = vmatprep.subr.mxu0 0.0
        %4337 = vmatpush2.msra.mxu0 0.0
        %4338 = vmatprep.subr.mxu0 0.0
        %4339 = vmatpush2.msra.mxu0 0.0
        %4340 = vmatprep.subr.mxu0 0.0
        %4341 = vmatpush2.msra.mxu0 0.0
        %4342 = vmatprep.subr.mxu0 0.0
        %4343 = vmatpush2.msra.mxu0 0.0
        %4344 = vmatprep.subr.mxu0 0.0
        %4345 = vmatpush2.msra.mxu0 0.0
        %4346 = vmatprep.subr.mxu0 0.0
        %4347 = vmatpush2.msra.mxu0 0.0
        %4348 = vmatprep.subr.mxu0 0.0
        %4349 = vmatpush2.msra.mxu0 0.0
        %4350 = vmatprep.subr.mxu0 0.0
        %4351 = vmatpush2.msra.mxu0 0.0
        %4352 = vmatprep.subr.mxu0 0.0
        %4353 = vmatpush2.msra.mxu0 0.0
        %4354 = vmatprep.mubr.f32.mxu0 0.0
        %4355 = vmatmul.mubr.f32.gmra.mxu0 %v4288
        %v4356 = vpop.f32.mrf.mxu0
        %v4357 = vadd.f32 0.0, %v4356
        %v4358 = vpop.f32.mrf.mxu0
        %4359 = vdwg.mxu0
        %v4361 = vsel %vm1109, %v4357, 0
        %4363 = vmatprep.subr.mxu0 0.0
        %4364 = vmatpush1.msra.mxu0 0.0
        %4365 = vmatprep.subr.mxu0 0.0
        %4366 = vmatpush1.msra.mxu0 0.0
        %4367 = vmatprep.subr.mxu0 0.0
        %4368 = vmatpush1.msra.mxu0 0.0
        %4369 = vmatprep.subr.mxu0 0.0
        %4370 = vmatpush1.msra.mxu0 0.0
        %4371 = vmatprep.subr.mxu0 0.0
        %4372 = vmatpush1.msra.mxu0 0.0
        %4373 = vmatprep.subr.mxu0 0.0
        %4374 = vmatpush1.msra.mxu0 0.0
        %4375 = vmatprep.subr.mxu0 0.0
        %4376 = vmatpush1.msra.mxu0 0.0
        %4377 = vmatprep.subr.mxu0 0.0
        %4378 = vmatpush1.msra.mxu0 0.0
        %4379 = vmatprep.subr.mxu0 0.0
        %4380 = vmatpush1.msra.mxu0 0.0
        %4381 = vmatprep.subr.mxu0 0.0
        %4382 = vmatpush1.msra.mxu0 0.0
        %4383 = vmatprep.subr.mxu0 0.0
        %4384 = vmatpush1.msra.mxu0 0.0
        %4385 = vmatprep.subr.mxu0 0.0
        %4386 = vmatpush1.msra.mxu0 0.0
        %4387 = vmatprep.subr.mxu0 0.0
        %4388 = vmatpush1.msra.mxu0 0.0
        %4389 = vmatprep.subr.mxu0 0.0
        %4390 = vmatpush1.msra.mxu0 0.0
        %4391 = vmatprep.subr.mxu0 0.0
        %4392 = vmatpush1.msra.mxu0 0.0
        %4393 = vmatprep.subr.mxu0 0.0
        %4394 = vmatpush1.msra.mxu0 %v3717
        %4395 = vmatprep.subr.mxu0 0.0
        %4396 = vmatpush2.msra.mxu0 0.0
        %4397 = vmatprep.subr.mxu0 0.0
        %4398 = vmatpush2.msra.mxu0 0.0
        %4399 = vmatprep.subr.mxu0 0.0
        %4400 = vmatpush2.msra.mxu0 0.0
        %4401 = vmatprep.subr.mxu0 0.0
        %4402 = vmatpush2.msra.mxu0 0.0
        %4403 = vmatprep.subr.mxu0 0.0
        %4404 = vmatpush2.msra.mxu0 0.0
        %4405 = vmatprep.subr.mxu0 0.0
        %4406 = vmatpush2.msra.mxu0 0.0
        %4407 = vmatprep.subr.mxu0 0.0
        %4408 = vmatpush2.msra.mxu0 0.0
        %4409 = vmatprep.subr.mxu0 0.0
        %4410 = vmatpush2.msra.mxu0 0.0
        %4411 = vmatprep.subr.mxu0 0.0
        %4412 = vmatpush2.msra.mxu0 0.0
        %4413 = vmatprep.subr.mxu0 0.0
        %4414 = vmatpush2.msra.mxu0 0.0
        %4415 = vmatprep.subr.mxu0 0.0
        %4416 = vmatpush2.msra.mxu0 0.0
        %4417 = vmatprep.subr.mxu0 0.0
        %4418 = vmatpush2.msra.mxu0 0.0
        %4419 = vmatprep.subr.mxu0 0.0
        %4420 = vmatpush2.msra.mxu0 0.0
        %4421 = vmatprep.subr.mxu0 0.0
        %4422 = vmatpush2.msra.mxu0 0.0
        %4423 = vmatprep.subr.mxu0 0.0
        %4424 = vmatpush2.msra.mxu0 0.0
        %4425 = vmatprep.subr.mxu0 0.0
        %4426 = vmatpush2.msra.mxu0 0.0
        %4427 = vmatprep.mubr.f32.mxu0 0.0
        %4428 = vmatmul.mubr.f32.gmra.mxu0 %v4361
        %v4429 = vpop.f32.mrf.mxu0
        %v4430 = vadd.f32 0.0, %v4429
        %v4431 = vpop.f32.mrf.mxu0
        %4432 = vdwg.mxu0
        %v4433 = vadd.f32 %v4192, %v4430
        %4434 = vrot.lane.b32.xlu0 %v3712, 104
        %v4435 = vpop.permute.xlu0 %4434
        %4436 = vrot.lane.b32.xlu0 %v3712, 72
        %v4437 = vpop.permute.xlu0 %4436
        %v4438 = vsel %vm1109, %v4435, 0
        %v4440 = vsel %vm1109, %v4437, 0
        %4442 = vmatprep.subr.mxu0 0.0
        %4443 = vmatpush1.xpose.msra.mxu0 0.0
        %4444 = vmatprep.subr.mxu0 0.0
        %4445 = vmatpush1.xpose.msra.mxu0 0.0
        %4446 = vmatprep.subr.mxu0 0.0
        %4447 = vmatpush1.xpose.msra.mxu0 0.0
        %4448 = vmatprep.subr.mxu0 0.0
        %4449 = vmatpush1.xpose.msra.mxu0 0.0
        %4450 = vmatprep.subr.mxu0 0.0
        %4451 = vmatpush1.xpose.msra.mxu0 0.0
        %4452 = vmatprep.subr.mxu0 0.0
        %4453 = vmatpush1.xpose.msra.mxu0 0.0
        %4454 = vmatprep.subr.mxu0 0.0
        %4455 = vmatpush1.xpose.msra.mxu0 0.0
        %4456 = vmatprep.subr.mxu0 0.0
        %4457 = vmatpush1.xpose.msra.mxu0 0.0
        %4458 = vmatprep.subr.mxu0 0.0
        %4459 = vmatpush1.xpose.msra.mxu0 0.0
        %4460 = vmatprep.subr.mxu0 0.0
        %4461 = vmatpush1.xpose.msra.mxu0 0.0
        %4462 = vmatprep.subr.mxu0 0.0
        %4463 = vmatpush1.xpose.msra.mxu0 0.0
        %4464 = vmatprep.subr.mxu0 0.0
        %4465 = vmatpush1.xpose.msra.mxu0 0.0
        %4466 = vmatprep.subr.mxu0 0.0
        %4467 = vmatpush1.xpose.msra.mxu0 0.0
        %4468 = vmatprep.subr.mxu0 0.0
        %4469 = vmatpush1.xpose.msra.mxu0 0.0
        %4470 = vmatprep.subr.mxu0 0.0
        %4471 = vmatpush1.xpose.msra.mxu0 0.0
        %4472 = vmatprep.subr.mxu0 0.0
        %4473 = vmatpush1.xpose.msra.mxu0 %v4440
        %4474 = vmatprep.subr.mxu0 0.0
        %4475 = vmatpush2.xpose.msra.mxu0 0.0
        %4476 = vmatprep.subr.mxu0 0.0
        %4477 = vmatpush2.xpose.msra.mxu0 0.0
        %4478 = vmatprep.subr.mxu0 0.0
        %4479 = vmatpush2.xpose.msra.mxu0 0.0
        %4480 = vmatprep.subr.mxu0 0.0
        %4481 = vmatpush2.xpose.msra.mxu0 0.0
        %4482 = vmatprep.subr.mxu0 0.0
        %4483 = vmatpush2.xpose.msra.mxu0 0.0
        %4484 = vmatprep.subr.mxu0 0.0
        %4485 = vmatpush2.xpose.msra.mxu0 0.0
        %4486 = vmatprep.subr.mxu0 0.0
        %4487 = vmatpush2.xpose.msra.mxu0 0.0
        %4488 = vmatprep.subr.mxu0 0.0
        %4489 = vmatpush2.xpose.msra.mxu0 0.0
        %4490 = vmatprep.subr.mxu0 0.0
        %4491 = vmatpush2.xpose.msra.mxu0 0.0
        %4492 = vmatprep.subr.mxu0 0.0
        %4493 = vmatpush2.xpose.msra.mxu0 0.0
        %4494 = vmatprep.subr.mxu0 0.0
        %4495 = vmatpush2.xpose.msra.mxu0 0.0
        %4496 = vmatprep.subr.mxu0 0.0
        %4497 = vmatpush2.xpose.msra.mxu0 0.0
        %4498 = vmatprep.subr.mxu0 0.0
        %4499 = vmatpush2.xpose.msra.mxu0 0.0
        %4500 = vmatprep.subr.mxu0 0.0
        %4501 = vmatpush2.xpose.msra.mxu0 0.0
        %4502 = vmatprep.subr.mxu0 0.0
        %4503 = vmatpush2.xpose.msra.mxu0 0.0
        %4504 = vmatprep.subr.mxu0 0.0
        %4505 = vmatpush2.xpose.msra.mxu0 0.0
        %4506 = vmatprep.mubr.f32.mxu0 0.0
        %4507 = vmatmul.mubr.f32.gmra.mxu0 %v4438
        %v4508 = vpop.f32.mrf.mxu0
        %v4509 = vadd.f32 %v977, %v4508
        %v4510 = vpop.f32.mrf.mxu0
        %4511 = vdwg.mxu0
        %v4512 = vsel %vm1109, %v4509, -inf
        %4513 = vmax.xlane.f32.xlu0 %v4512
        %v4514 = vpop.xlane.xlu0 %4513
        %v4515 = vsub.f32 %v4509, %v4514
        %v4516 = vmul.f32 %v4515, 1.442695
        %v4517 = vpow.pop %v4516
        %v4518 = vsel %vm1109, %v4517, 0.0
        %4519 = vadd.xlane.f32.xlu0 %v4518
        %v4520 = vpop.xlane.xlu0 %4519
        %v4521 = vrcp.pop %v4520
        %v4522 = vmul.f32 %v4517, %v4521
        %4523 = vrot.lane.b32.xlu0 %v3712, 40
        %v4524 = vpop.permute.xlu0 %4523
        %v4527 = vsel %vm1109, %v4522, 0
        %4529 = vmatprep.subr.mxu0 0.0
        %4530 = vmatpush1.msra.mxu0 0.0
        %4531 = vmatprep.subr.mxu0 0.0
        %4532 = vmatpush1.msra.mxu0 0.0
        %4533 = vmatprep.subr.mxu0 0.0
        %4534 = vmatpush1.msra.mxu0 0.0
        %4535 = vmatprep.subr.mxu0 0.0
        %4536 = vmatpush1.msra.mxu0 0.0
        %4537 = vmatprep.subr.mxu0 0.0
        %4538 = vmatpush1.msra.mxu0 0.0
        %4539 = vmatprep.subr.mxu0 0.0
        %4540 = vmatpush1.msra.mxu0 0.0
        %4541 = vmatprep.subr.mxu0 0.0
        %4542 = vmatpush1.msra.mxu0 0.0
        %4543 = vmatprep.subr.mxu0 0.0
        %4544 = vmatpush1.msra.mxu0 0.0
        %4545 = vmatprep.subr.mxu0 0.0
        %4546 = vmatpush1.msra.mxu0 0.0
        %4547 = vmatprep.subr.mxu0 0.0
        %4548 = vmatpush1.msra.mxu0 0.0
        %4549 = vmatprep.subr.mxu0 0.0
        %4550 = vmatpush1.msra.mxu0 0.0
        %4551 = vmatprep.subr.mxu0 0.0
        %4552 = vmatpush1.msra.mxu0 0.0
        %4553 = vmatprep.subr.mxu0 0.0
        %4554 = vmatpush1.msra.mxu0 0.0
        %4555 = vmatprep.subr.mxu0 0.0
        %4556 = vmatpush1.msra.mxu0 0.0
        %4557 = vmatprep.subr.mxu0 0.0
        %4558 = vmatpush1.msra.mxu0 0.0
        %4559 = vmatprep.subr.mxu0 0.0
        %4560 = vmatpush1.msra.mxu0 %v4524
        %4561 = vmatprep.subr.mxu0 0.0
        %4562 = vmatpush2.msra.mxu0 0.0
        %4563 = vmatprep.subr.mxu0 0.0
        %4564 = vmatpush2.msra.mxu0 0.0
        %4565 = vmatprep.subr.mxu0 0.0
        %4566 = vmatpush2.msra.mxu0 0.0
        %4567 = vmatprep.subr.mxu0 0.0
        %4568 = vmatpush2.msra.mxu0 0.0
        %4569 = vmatprep.subr.mxu0 0.0
        %4570 = vmatpush2.msra.mxu0 0.0
        %4571 = vmatprep.subr.mxu0 0.0
        %4572 = vmatpush2.msra.mxu0 0.0
        %4573 = vmatprep.subr.mxu0 0.0
        %4574 = vmatpush2.msra.mxu0 0.0
        %4575 = vmatprep.subr.mxu0 0.0
        %4576 = vmatpush2.msra.mxu0 0.0
        %4577 = vmatprep.subr.mxu0 0.0
        %4578 = vmatpush2.msra.mxu0 0.0
        %4579 = vmatprep.subr.mxu0 0.0
        %4580 = vmatpush2.msra.mxu0 0.0
        %4581 = vmatprep.subr.mxu0 0.0
        %4582 = vmatpush2.msra.mxu0 0.0
        %4583 = vmatprep.subr.mxu0 0.0
        %4584 = vmatpush2.msra.mxu0 0.0
        %4585 = vmatprep.subr.mxu0 0.0
        %4586 = vmatpush2.msra.mxu0 0.0
        %4587 = vmatprep.subr.mxu0 0.0
        %4588 = vmatpush2.msra.mxu0 0.0
        %4589 = vmatprep.subr.mxu0 0.0
        %4590 = vmatpush2.msra.mxu0 0.0
        %4591 = vmatprep.subr.mxu0 0.0
        %4592 = vmatpush2.msra.mxu0 0.0
        %4593 = vmatprep.mubr.f32.mxu0 0.0
        %4594 = vmatmul.mubr.f32.gmra.mxu0 %v4527
        %v4595 = vpop.f32.mrf.mxu0
        %v4596 = vadd.f32 0.0, %v4595
        %v4597 = vpop.f32.mrf.mxu0
        %4598 = vdwg.mxu0
        %v4600 = vsel %vm1109, %v4596, 0
        %4602 = vmatprep.subr.mxu0 0.0
        %4603 = vmatpush1.msra.mxu0 0.0
        %4604 = vmatprep.subr.mxu0 0.0
        %4605 = vmatpush1.msra.mxu0 0.0
        %4606 = vmatprep.subr.mxu0 0.0
        %4607 = vmatpush1.msra.mxu0 0.0
        %4608 = vmatprep.subr.mxu0 0.0
        %4609 = vmatpush1.msra.mxu0 0.0
        %4610 = vmatprep.subr.mxu0 0.0
        %4611 = vmatpush1.msra.mxu0 0.0
        %4612 = vmatprep.subr.mxu0 0.0
        %4613 = vmatpush1.msra.mxu0 0.0
        %4614 = vmatprep.subr.mxu0 0.0
        %4615 = vmatpush1.msra.mxu0 0.0
        %4616 = vmatprep.subr.mxu0 0.0
        %4617 = vmatpush1.msra.mxu0 0.0
        %4618 = vmatprep.subr.mxu0 0.0
        %4619 = vmatpush1.msra.mxu0 0.0
        %4620 = vmatprep.subr.mxu0 0.0
        %4621 = vmatpush1.msra.mxu0 0.0
        %4622 = vmatprep.subr.mxu0 0.0
        %4623 = vmatpush1.msra.mxu0 0.0
        %4624 = vmatprep.subr.mxu0 0.0
        %4625 = vmatpush1.msra.mxu0 0.0
        %4626 = vmatprep.subr.mxu0 0.0
        %4627 = vmatpush1.msra.mxu0 0.0
        %4628 = vmatprep.subr.mxu0 0.0
        %4629 = vmatpush1.msra.mxu0 0.0
        %4630 = vmatprep.subr.mxu0 0.0
        %4631 = vmatpush1.msra.mxu0 0.0
        %4632 = vmatprep.subr.mxu0 0.0
        %4633 = vmatpush1.msra.mxu0 %v3718
        %4634 = vmatprep.subr.mxu0 0.0
        %4635 = vmatpush2.msra.mxu0 0.0
        %4636 = vmatprep.subr.mxu0 0.0
        %4637 = vmatpush2.msra.mxu0 0.0
        %4638 = vmatprep.subr.mxu0 0.0
        %4639 = vmatpush2.msra.mxu0 0.0
        %4640 = vmatprep.subr.mxu0 0.0
        %4641 = vmatpush2.msra.mxu0 0.0
        %4642 = vmatprep.subr.mxu0 0.0
        %4643 = vmatpush2.msra.mxu0 0.0
        %4644 = vmatprep.subr.mxu0 0.0
        %4645 = vmatpush2.msra.mxu0 0.0
        %4646 = vmatprep.subr.mxu0 0.0
        %4647 = vmatpush2.msra.mxu0 0.0
        %4648 = vmatprep.subr.mxu0 0.0
        %4649 = vmatpush2.msra.mxu0 0.0
        %4650 = vmatprep.subr.mxu0 0.0
        %4651 = vmatpush2.msra.mxu0 0.0
        %4652 = vmatprep.subr.mxu0 0.0
        %4653 = vmatpush2.msra.mxu0 0.0
        %4654 = vmatprep.subr.mxu0 0.0
        %4655 = vmatpush2.msra.mxu0 0.0
        %4656 = vmatprep.subr.mxu0 0.0
        %4657 = vmatpush2.msra.mxu0 0.0
        %4658 = vmatprep.subr.mxu0 0.0
        %4659 = vmatpush2.msra.mxu0 0.0
        %4660 = vmatprep.subr.mxu0 0.0
        %4661 = vmatpush2.msra.mxu0 0.0
        %4662 = vmatprep.subr.mxu0 0.0
        %4663 = vmatpush2.msra.mxu0 0.0
        %4664 = vmatprep.subr.mxu0 0.0
        %4665 = vmatpush2.msra.mxu0 0.0
        %4666 = vmatprep.mubr.f32.mxu0 0.0
        %4667 = vmatmul.mubr.f32.gmra.mxu0 %v4600
        %v4668 = vpop.f32.mrf.mxu0
        %v4669 = vadd.f32 0.0, %v4668
        %v4670 = vpop.f32.mrf.mxu0
        %4671 = vdwg.mxu0
        %v4672 = vadd.f32 %v4433, %v4669
        %v4674 = vlaneseq
        %v4675 = vshrl.u32 %v4674, 7
        %v4676 = vsub.s32 0, %v4675
        %v4677 = vrot.slane %v3719, %v4676
        %v4679 = vadd.f32 %v4672, %v4677
        %v4680 = vadd.f32 %v975, %v4679
        %v4681 = vsel %vm979, %v4680, 0.0
        %4682 = vadd.xlane.f32.xlu0 %v4681
        %v4683 = vpop.xlane.xlu0 %4682
        %v4684 = vmul.f32 %v4683, %v983
        %v4685 = vsub.f32 %v4680, %v4684
        %v4686 = vmul.f32 %v4685, %v4685
        %v4687 = vsel %vm979, %v4686, 0.0
        %4688 = vadd.xlane.f32.xlu0 %v4687
        %v4689 = vpop.xlane.xlu0 %4688
        %v4690 = vmul.f32 %v4689, 0.032258064
        %v4691 = vrsqrt.pop %v4690
        %v4692 = vmul.f32 %v4690, %v4691
        %vm4693 = vcmp.eq.f32.partialorder %v4690, inf
        %v4694 = vsel %vm4693, %v4690, %v4692
        %vm4695 = vcmp.eq.f32.partialorder %v4690, 0.0
        %v4696 = vand.u32 %v4690, 2147483648
        %v4697 = vsel %vm4695, %v4696, %v4694
        %v4698 = vadd.f32 %v4697, 1e-06
        %v4699 = vrcp.pop %v4698
        %v4700 = vlaneseq
        %v4701 = vshrl.u32 %v4700, 7
        %v4702 = vsub.s32 2, %v4701
        %v4703 = vrot.slane %v3600, %v4702
        %v4704 = vmul.f32 %v4703, %v4685
        %v4705 = vmul.f32 %v4704, %v4699
        %v4706 = vlaneseq
        %v4707 = vshrl.u32 %v4706, 7
        %v4708 = vsub.s32 3, %v4707
        %v4709 = vrot.slane %v3600, %v4708
        %v4710 = vadd.f32 %v4705, %v4709
        %v4711 = vld [vmem:[%s37] sm:$0xff]
        %v4712 = vld [vmem:[%s37 + $0x8] sm:$0xff]
        %v4713 = vld [vmem:[%s37 + $0x10] sm:$0xff]
        %v4714 = vld [vmem:[%s37 + $0x18] sm:$0xff]
        %v4715 = vld [vmem:[%s39] sm:$0x1]
        %v4717 = vlaneseq
        %v4718 = vshrl.u32 %v4717, 7
        %v4719 = vsub.s32 0, %v4718
        %v4720 = vrot.slane %v4715, %v4719
        %v4723 = vsel %vm979, %v4710, 0
        %4725 = vmatprep.subr.mxu0 0.0
        %4726 = vmatpush1.msra.mxu0 0.0
        %4727 = vmatprep.subr.mxu0 0.0
        %4728 = vmatpush1.msra.mxu0 0.0
        %4729 = vmatprep.subr.mxu0 0.0
        %4730 = vmatpush1.msra.mxu0 0.0
        %4731 = vmatprep.subr.mxu0 0.0
        %4732 = vmatpush1.msra.mxu0 0.0
        %4733 = vmatprep.subr.mxu0 0.0
        %4734 = vmatpush1.msra.mxu0 0.0
        %4735 = vmatprep.subr.mxu0 0.0
        %4736 = vmatpush1.msra.mxu0 0.0
        %4737 = vmatprep.subr.mxu0 0.0
        %4738 = vmatpush1.msra.mxu0 0.0
        %4739 = vmatprep.subr.mxu0 0.0
        %4740 = vmatpush1.msra.mxu0 0.0
        %4741 = vmatprep.subr.mxu0 0.0
        %4742 = vmatpush1.msra.mxu0 0.0
        %4743 = vmatprep.subr.mxu0 0.0
        %4744 = vmatpush1.msra.mxu0 0.0
        %4745 = vmatprep.subr.mxu0 0.0
        %4746 = vmatpush1.msra.mxu0 0.0
        %4747 = vmatprep.subr.mxu0 0.0
        %4748 = vmatpush1.msra.mxu0 0.0
        %4749 = vmatprep.subr.mxu0 0.0
        %4750 = vmatpush1.msra.mxu0 %v4714
        %4751 = vmatprep.subr.mxu0 0.0
        %4752 = vmatpush1.msra.mxu0 %v4713
        %4753 = vmatprep.subr.mxu0 0.0
        %4754 = vmatpush1.msra.mxu0 %v4712
        %4755 = vmatprep.subr.mxu0 0.0
        %4756 = vmatpush1.msra.mxu0 %v4711
        %4757 = vmatprep.subr.mxu0 0.0
        %4758 = vmatpush2.msra.mxu0 0.0
        %4759 = vmatprep.subr.mxu0 0.0
        %4760 = vmatpush2.msra.mxu0 0.0
        %4761 = vmatprep.subr.mxu0 0.0
        %4762 = vmatpush2.msra.mxu0 0.0
        %4763 = vmatprep.subr.mxu0 0.0
        %4764 = vmatpush2.msra.mxu0 0.0
        %4765 = vmatprep.subr.mxu0 0.0
        %4766 = vmatpush2.msra.mxu0 0.0
        %4767 = vmatprep.subr.mxu0 0.0
        %4768 = vmatpush2.msra.mxu0 0.0
        %4769 = vmatprep.subr.mxu0 0.0
        %4770 = vmatpush2.msra.mxu0 0.0
        %4771 = vmatprep.subr.mxu0 0.0
        %4772 = vmatpush2.msra.mxu0 0.0
        %4773 = vmatprep.subr.mxu0 0.0
        %4774 = vmatpush2.msra.mxu0 0.0
        %4775 = vmatprep.subr.mxu0 0.0
        %4776 = vmatpush2.msra.mxu0 0.0
        %4777 = vmatprep.subr.mxu0 0.0
        %4778 = vmatpush2.msra.mxu0 0.0
        %4779 = vmatprep.subr.mxu0 0.0
        %4780 = vmatpush2.msra.mxu0 0.0
        %4781 = vmatprep.subr.mxu0 0.0
        %4782 = vmatpush2.msra.mxu0 0.0
        %4783 = vmatprep.subr.mxu0 0.0
        %4784 = vmatpush2.msra.mxu0 0.0
        %4785 = vmatprep.subr.mxu0 0.0
        %4786 = vmatpush2.msra.mxu0 0.0
        %4787 = vmatprep.subr.mxu0 0.0
        %4788 = vmatpush2.msra.mxu0 0.0
        %4789 = vmatprep.mubr.f32.mxu0 0.0
        %4790 = vmatmul.mubr.f32.gmra.mxu0 %v4723
        %v4791 = vpop.f32.mrf.mxu0
        %v4792 = vadd.f32 %v4720, %v4791
        %v4793 = vpop.f32.mrf.mxu0
        %4794 = vdwg.mxu0
        %v4795 = vld [vmem:[%s41] sm:$0xff]
        %v4796 = vld [vmem:[%s41 + $0x8] sm:$0xff]
        %v4797 = vld [vmem:[%s41 + $0x10] sm:$0xff]
        %v4798 = vld [vmem:[%s41 + $0x18] sm:$0xff]
        %v4799 = vld [vmem:[%s43] sm:$0x1]
        %v4801 = vlaneseq
        %v4802 = vshrl.u32 %v4801, 7
        %v4803 = vsub.s32 0, %v4802
        %v4804 = vrot.slane %v4799, %v4803
        %v4807 = vsel %vm979, %v3599, 0
        %4809 = vmatprep.subr.mxu0 0.0
        %4810 = vmatpush1.msra.mxu0 0.0
        %4811 = vmatprep.subr.mxu0 0.0
        %4812 = vmatpush1.msra.mxu0 0.0
        %4813 = vmatprep.subr.mxu0 0.0
        %4814 = vmatpush1.msra.mxu0 0.0
        %4815 = vmatprep.subr.mxu0 0.0
        %4816 = vmatpush1.msra.mxu0 0.0
        %4817 = vmatprep.subr.mxu0 0.0
        %4818 = vmatpush1.msra.mxu0 0.0
        %4819 = vmatprep.subr.mxu0 0.0
        %4820 = vmatpush1.msra.mxu0 0.0
        %4821 = vmatprep.subr.mxu0 0.0
        %4822 = vmatpush1.msra.mxu0 0.0
        %4823 = vmatprep.subr.mxu0 0.0
        %4824 = vmatpush1.msra.mxu0 0.0
        %4825 = vmatprep.subr.mxu0 0.0
        %4826 = vmatpush1.msra.mxu0 0.0
        %4827 = vmatprep.subr.mxu0 0.0
        %4828 = vmatpush1.msra.mxu0 0.0
        %4829 = vmatprep.subr.mxu0 0.0
        %4830 = vmatpush1.msra.mxu0 0.0
        %4831 = vmatprep.subr.mxu0 0.0
        %4832 = vmatpush1.msra.mxu0 0.0
        %4833 = vmatprep.subr.mxu0 0.0
        %4834 = vmatpush1.msra.mxu0 %v4798
        %4835 = vmatprep.subr.mxu0 0.0
        %4836 = vmatpush1.msra.mxu0 %v4797
        %4837 = vmatprep.subr.mxu0 0.0
        %4838 = vmatpush1.msra.mxu0 %v4796
        %4839 = vmatprep.subr.mxu0 0.0
        %4840 = vmatpush1.msra.mxu0 %v4795
        %4841 = vmatprep.subr.mxu0 0.0
        %4842 = vmatpush2.msra.mxu0 0.0
        %4843 = vmatprep.subr.mxu0 0.0
        %4844 = vmatpush2.msra.mxu0 0.0
        %4845 = vmatprep.subr.mxu0 0.0
        %4846 = vmatpush2.msra.mxu0 0.0
        %4847 = vmatprep.subr.mxu0 0.0
        %4848 = vmatpush2.msra.mxu0 0.0
        %4849 = vmatprep.subr.mxu0 0.0
        %4850 = vmatpush2.msra.mxu0 0.0
        %4851 = vmatprep.subr.mxu0 0.0
        %4852 = vmatpush2.msra.mxu0 0.0
        %4853 = vmatprep.subr.mxu0 0.0
        %4854 = vmatpush2.msra.mxu0 0.0
        %4855 = vmatprep.subr.mxu0 0.0
        %4856 = vmatpush2.msra.mxu0 0.0
        %4857 = vmatprep.subr.mxu0 0.0
        %4858 = vmatpush2.msra.mxu0 0.0
        %4859 = vmatprep.subr.mxu0 0.0
        %4860 = vmatpush2.msra.mxu0 0.0
        %4861 = vmatprep.subr.mxu0 0.0
        %4862 = vmatpush2.msra.mxu0 0.0
        %4863 = vmatprep.subr.mxu0 0.0
        %4864 = vmatpush2.msra.mxu0 0.0
        %4865 = vmatprep.subr.mxu0 0.0
        %4866 = vmatpush2.msra.mxu0 0.0
        %4867 = vmatprep.subr.mxu0 0.0
        %4868 = vmatpush2.msra.mxu0 0.0
        %4869 = vmatprep.subr.mxu0 0.0
        %4870 = vmatpush2.msra.mxu0 0.0
        %4871 = vmatprep.subr.mxu0 0.0
        %4872 = vmatpush2.msra.mxu0 0.0
        %4873 = vmatprep.mubr.f32.mxu0 0.0
        %4874 = vmatmul.mubr.f32.gmra.mxu0 %v4807
        %v4875 = vpop.f32.mrf.mxu0
        %v4876 = vadd.f32 %v4804, %v4875
        %v4877 = vpop.f32.mrf.mxu0
        %4878 = vdwg.mxu0
        %v4879 = vld [vmem:[%s45] sm:$0xff]
        %v4880 = vld [vmem:[%s45 + $0x8] sm:$0xff]
        %v4881 = vld [vmem:[%s45 + $0x10] sm:$0xff]
        %v4882 = vld [vmem:[%s45 + $0x18] sm:$0xff]
        %v4883 = vld [vmem:[%s47] sm:$0x1]
        %v4885 = vsel %vm1109, %v4792, 0
        %v4888 = vsel %vm1109, %v4876, 0
        %4890 = vmatprep.subr.mxu0 0.0
        %4891 = vmatpush1.xpose.msra.mxu0 0.0
        %4892 = vmatprep.subr.mxu0 0.0
        %4893 = vmatpush1.xpose.msra.mxu0 0.0
        %4894 = vmatprep.subr.mxu0 0.0
        %4895 = vmatpush1.xpose.msra.mxu0 0.0
        %4896 = vmatprep.subr.mxu0 0.0
        %4897 = vmatpush1.xpose.msra.mxu0 0.0
        %4898 = vmatprep.subr.mxu0 0.0
        %4899 = vmatpush1.xpose.msra.mxu0 0.0
        %4900 = vmatprep.subr.mxu0 0.0
        %4901 = vmatpush1.xpose.msra.mxu0 0.0
        %4902 = vmatprep.subr.mxu0 0.0
        %4903 = vmatpush1.xpose.msra.mxu0 0.0
        %4904 = vmatprep.subr.mxu0 0.0
        %4905 = vmatpush1.xpose.msra.mxu0 0.0
        %4906 = vmatprep.subr.mxu0 0.0
        %4907 = vmatpush1.xpose.msra.mxu0 0.0
        %4908 = vmatprep.subr.mxu0 0.0
        %4909 = vmatpush1.xpose.msra.mxu0 0.0
        %4910 = vmatprep.subr.mxu0 0.0
        %4911 = vmatpush1.xpose.msra.mxu0 0.0
        %4912 = vmatprep.subr.mxu0 0.0
        %4913 = vmatpush1.xpose.msra.mxu0 0.0
        %4914 = vmatprep.subr.mxu0 0.0
        %4915 = vmatpush1.xpose.msra.mxu0 0.0
        %4916 = vmatprep.subr.mxu0 0.0
        %4917 = vmatpush1.xpose.msra.mxu0 0.0
        %4918 = vmatprep.subr.mxu0 0.0
        %4919 = vmatpush1.xpose.msra.mxu0 0.0
        %4920 = vmatprep.subr.mxu0 0.0
        %4921 = vmatpush1.xpose.msra.mxu0 %v4888
        %4922 = vmatprep.subr.mxu0 0.0
        %4923 = vmatpush2.xpose.msra.mxu0 0.0
        %4924 = vmatprep.subr.mxu0 0.0
        %4925 = vmatpush2.xpose.msra.mxu0 0.0
        %4926 = vmatprep.subr.mxu0 0.0
        %4927 = vmatpush2.xpose.msra.mxu0 0.0
        %4928 = vmatprep.subr.mxu0 0.0
        %4929 = vmatpush2.xpose.msra.mxu0 0.0
        %4930 = vmatprep.subr.mxu0 0.0
        %4931 = vmatpush2.xpose.msra.mxu0 0.0
        %4932 = vmatprep.subr.mxu0 0.0
        %4933 = vmatpush2.xpose.msra.mxu0 0.0
        %4934 = vmatprep.subr.mxu0 0.0
        %4935 = vmatpush2.xpose.msra.mxu0 0.0
        %4936 = vmatprep.subr.mxu0 0.0
        %4937 = vmatpush2.xpose.msra.mxu0 0.0
        %4938 = vmatprep.subr.mxu0 0.0
        %4939 = vmatpush2.xpose.msra.mxu0 0.0
        %4940 = vmatprep.subr.mxu0 0.0
        %4941 = vmatpush2.xpose.msra.mxu0 0.0
        %4942 = vmatprep.subr.mxu0 0.0
        %4943 = vmatpush2.xpose.msra.mxu0 0.0
        %4944 = vmatprep.subr.mxu0 0.0
        %4945 = vmatpush2.xpose.msra.mxu0 0.0
        %4946 = vmatprep.subr.mxu0 0.0
        %4947 = vmatpush2.xpose.msra.mxu0 0.0
        %4948 = vmatprep.subr.mxu0 0.0
        %4949 = vmatpush2.xpose.msra.mxu0 0.0
        %4950 = vmatprep.subr.mxu0 0.0
        %4951 = vmatpush2.xpose.msra.mxu0 0.0
        %4952 = vmatprep.subr.mxu0 0.0
        %4953 = vmatpush2.xpose.msra.mxu0 0.0
        %4954 = vmatprep.mubr.f32.mxu0 0.0
        %4955 = vmatmul.mubr.f32.gmra.mxu0 %v4885
        %v4956 = vpop.f32.mrf.mxu0
        %v4957 = vadd.f32 %v1104, %v4956
        %v4958 = vpop.f32.mrf.mxu0
        %4959 = vdwg.mxu0
        %v4960 = vsel %vm1109, %v4957, -inf
        %4961 = vmax.xlane.f32.xlu0 %v4960
        %v4962 = vpop.xlane.xlu0 %4961
        %v4963 = vsub.f32 %v4957, %v4962
        %v4964 = vmul.f32 %v4963, 1.442695
        %v4965 = vpow.pop %v4964
        %v4966 = vsel %vm1109, %v4965, 0.0
        %4967 = vadd.xlane.f32.xlu0 %v4966
        %v4968 = vpop.xlane.xlu0 %4967
        %v4969 = vrcp.pop %v4968
        %v4970 = vmul.f32 %v4965, %v4969
        %4971 = vrot.lane.b32.xlu0 %v4876, 96
        %v4972 = vpop.permute.xlu0 %4971
        %v4975 = vsel %vm1109, %v4970, 0
        %4977 = vmatprep.subr.mxu0 0.0
        %4978 = vmatpush1.msra.mxu0 0.0
        %4979 = vmatprep.subr.mxu0 0.0
        %4980 = vmatpush1.msra.mxu0 0.0
        %4981 = vmatprep.subr.mxu0 0.0
        %4982 = vmatpush1.msra.mxu0 0.0
        %4983 = vmatprep.subr.mxu0 0.0
        %4984 = vmatpush1.msra.mxu0 0.0
        %4985 = vmatprep.subr.mxu0 0.0
        %4986 = vmatpush1.msra.mxu0 0.0
        %4987 = vmatprep.subr.mxu0 0.0
        %4988 = vmatpush1.msra.mxu0 0.0
        %4989 = vmatprep.subr.mxu0 0.0
        %4990 = vmatpush1.msra.mxu0 0.0
        %4991 = vmatprep.subr.mxu0 0.0
        %4992 = vmatpush1.msra.mxu0 0.0
        %4993 = vmatprep.subr.mxu0 0.0
        %4994 = vmatpush1.msra.mxu0 0.0
        %4995 = vmatprep.subr.mxu0 0.0
        %4996 = vmatpush1.msra.mxu0 0.0
        %4997 = vmatprep.subr.mxu0 0.0
        %4998 = vmatpush1.msra.mxu0 0.0
        %4999 = vmatprep.subr.mxu0 0.0
        %5000 = vmatpush1.msra.mxu0 0.0
        %5001 = vmatprep.subr.mxu0 0.0
        %5002 = vmatpush1.msra.mxu0 0.0
        %5003 = vmatprep.subr.mxu0 0.0
        %5004 = vmatpush1.msra.mxu0 0.0
        %5005 = vmatprep.subr.mxu0 0.0
        %5006 = vmatpush1.msra.mxu0 0.0
        %5007 = vmatprep.subr.mxu0 0.0
        %5008 = vmatpush1.msra.mxu0 %v4972
        %5009 = vmatprep.subr.mxu0 0.0
        %5010 = vmatpush2.msra.mxu0 0.0
        %5011 = vmatprep.subr.mxu0 0.0
        %5012 = vmatpush2.msra.mxu0 0.0
        %5013 = vmatprep.subr.mxu0 0.0
        %5014 = vmatpush2.msra.mxu0 0.0
        %5015 = vmatprep.subr.mxu0 0.0
        %5016 = vmatpush2.msra.mxu0 0.0
        %5017 = vmatprep.subr.mxu0 0.0
        %5018 = vmatpush2.msra.mxu0 0.0
        %5019 = vmatprep.subr.mxu0 0.0
        %5020 = vmatpush2.msra.mxu0 0.0
        %5021 = vmatprep.subr.mxu0 0.0
        %5022 = vmatpush2.msra.mxu0 0.0
        %5023 = vmatprep.subr.mxu0 0.0
        %5024 = vmatpush2.msra.mxu0 0.0
        %5025 = vmatprep.subr.mxu0 0.0
        %5026 = vmatpush2.msra.mxu0 0.0
        %5027 = vmatprep.subr.mxu0 0.0
        %5028 = vmatpush2.msra.mxu0 0.0
        %5029 = vmatprep.subr.mxu0 0.0
        %5030 = vmatpush2.msra.mxu0 0.0
        %5031 = vmatprep.subr.mxu0 0.0
        %5032 = vmatpush2.msra.mxu0 0.0
        %5033 = vmatprep.subr.mxu0 0.0
        %5034 = vmatpush2.msra.mxu0 0.0
        %5035 = vmatprep.subr.mxu0 0.0
        %5036 = vmatpush2.msra.mxu0 0.0
        %5037 = vmatprep.subr.mxu0 0.0
        %5038 = vmatpush2.msra.mxu0 0.0
        %5039 = vmatprep.subr.mxu0 0.0
        %5040 = vmatpush2.msra.mxu0 0.0
        %5041 = vmatprep.mubr.f32.mxu0 0.0
        %5042 = vmatmul.mubr.f32.gmra.mxu0 %v4975
        %v5043 = vpop.f32.mrf.mxu0
        %v5044 = vadd.f32 0.0, %v5043
        %v5045 = vpop.f32.mrf.mxu0
        %5046 = vdwg.mxu0
        %5047 = vrot.lane.b32.xlu0 %v4792, 120
        %v5048 = vpop.permute.xlu0 %5047
        %5049 = vrot.lane.b32.xlu0 %v4876, 120
        %v5050 = vpop.permute.xlu0 %5049
        %v5051 = vsel %vm1109, %v5048, 0
        %v5053 = vsel %vm1109, %v5050, 0
        %5055 = vmatprep.subr.mxu0 0.0
        %5056 = vmatpush1.xpose.msra.mxu0 0.0
        %5057 = vmatprep.subr.mxu0 0.0
        %5058 = vmatpush1.xpose.msra.mxu0 0.0
        %5059 = vmatprep.subr.mxu0 0.0
        %5060 = vmatpush1.xpose.msra.mxu0 0.0
        %5061 = vmatprep.subr.mxu0 0.0
        %5062 = vmatpush1.xpose.msra.mxu0 0.0
        %5063 = vmatprep.subr.mxu0 0.0
        %5064 = vmatpush1.xpose.msra.mxu0 0.0
        %5065 = vmatprep.subr.mxu0 0.0
        %5066 = vmatpush1.xpose.msra.mxu0 0.0
        %5067 = vmatprep.subr.mxu0 0.0
        %5068 = vmatpush1.xpose.msra.mxu0 0.0
        %5069 = vmatprep.subr.mxu0 0.0
        %5070 = vmatpush1.xpose.msra.mxu0 0.0
        %5071 = vmatprep.subr.mxu0 0.0
        %5072 = vmatpush1.xpose.msra.mxu0 0.0
        %5073 = vmatprep.subr.mxu0 0.0
        %5074 = vmatpush1.xpose.msra.mxu0 0.0
        %5075 = vmatprep.subr.mxu0 0.0
        %5076 = vmatpush1.xpose.msra.mxu0 0.0
        %5077 = vmatprep.subr.mxu0 0.0
        %5078 = vmatpush1.xpose.msra.mxu0 0.0
        %5079 = vmatprep.subr.mxu0 0.0
        %5080 = vmatpush1.xpose.msra.mxu0 0.0
        %5081 = vmatprep.subr.mxu0 0.0
        %5082 = vmatpush1.xpose.msra.mxu0 0.0
        %5083 = vmatprep.subr.mxu0 0.0
        %5084 = vmatpush1.xpose.msra.mxu0 0.0
        %5085 = vmatprep.subr.mxu0 0.0
        %5086 = vmatpush1.xpose.msra.mxu0 %v5053
        %5087 = vmatprep.subr.mxu0 0.0
        %5088 = vmatpush2.xpose.msra.mxu0 0.0
        %5089 = vmatprep.subr.mxu0 0.0
        %5090 = vmatpush2.xpose.msra.mxu0 0.0
        %5091 = vmatprep.subr.mxu0 0.0
        %5092 = vmatpush2.xpose.msra.mxu0 0.0
        %5093 = vmatprep.subr.mxu0 0.0
        %5094 = vmatpush2.xpose.msra.mxu0 0.0
        %5095 = vmatprep.subr.mxu0 0.0
        %5096 = vmatpush2.xpose.msra.mxu0 0.0
        %5097 = vmatprep.subr.mxu0 0.0
        %5098 = vmatpush2.xpose.msra.mxu0 0.0
        %5099 = vmatprep.subr.mxu0 0.0
        %5100 = vmatpush2.xpose.msra.mxu0 0.0
        %5101 = vmatprep.subr.mxu0 0.0
        %5102 = vmatpush2.xpose.msra.mxu0 0.0
        %5103 = vmatprep.subr.mxu0 0.0
        %5104 = vmatpush2.xpose.msra.mxu0 0.0
        %5105 = vmatprep.subr.mxu0 0.0
        %5106 = vmatpush2.xpose.msra.mxu0 0.0
        %5107 = vmatprep.subr.mxu0 0.0
        %5108 = vmatpush2.xpose.msra.mxu0 0.0
        %5109 = vmatprep.subr.mxu0 0.0
        %5110 = vmatpush2.xpose.msra.mxu0 0.0
        %5111 = vmatprep.subr.mxu0 0.0
        %5112 = vmatpush2.xpose.msra.mxu0 0.0
        %5113 = vmatprep.subr.mxu0 0.0
        %5114 = vmatpush2.xpose.msra.mxu0 0.0
        %5115 = vmatprep.subr.mxu0 0.0
        %5116 = vmatpush2.xpose.msra.mxu0 0.0
        %5117 = vmatprep.subr.mxu0 0.0
        %5118 = vmatpush2.xpose.msra.mxu0 0.0
        %5119 = vmatprep.mubr.f32.mxu0 0.0
        %5120 = vmatmul.mubr.f32.gmra.mxu0 %v5051
        %v5121 = vpop.f32.mrf.mxu0
        %v5122 = vadd.f32 %v1104, %v5121
        %v5123 = vpop.f32.mrf.mxu0
        %5124 = vdwg.mxu0
        %v5125 = vsel %vm1109, %v5122, -inf
        %5126 = vmax.xlane.f32.xlu0 %v5125
        %v5127 = vpop.xlane.xlu0 %5126
        %v5128 = vsub.f32 %v5122, %v5127
        %v5129 = vmul.f32 %v5128, 1.442695
        %v5130 = vpow.pop %v5129
        %v5131 = vsel %vm1109, %v5130, 0.0
        %5132 = vadd.xlane.f32.xlu0 %v5131
        %v5133 = vpop.xlane.xlu0 %5132
        %v5134 = vrcp.pop %v5133
        %v5135 = vmul.f32 %v5130, %v5134
        %5136 = vrot.lane.b32.xlu0 %v4876, 88
        %v5137 = vpop.permute.xlu0 %5136
        %v5140 = vsel %vm1109, %v5135, 0
        %5142 = vmatprep.subr.mxu0 0.0
        %5143 = vmatpush1.msra.mxu0 0.0
        %5144 = vmatprep.subr.mxu0 0.0
        %5145 = vmatpush1.msra.mxu0 0.0
        %5146 = vmatprep.subr.mxu0 0.0
        %5147 = vmatpush1.msra.mxu0 0.0
        %5148 = vmatprep.subr.mxu0 0.0
        %5149 = vmatpush1.msra.mxu0 0.0
        %5150 = vmatprep.subr.mxu0 0.0
        %5151 = vmatpush1.msra.mxu0 0.0
        %5152 = vmatprep.subr.mxu0 0.0
        %5153 = vmatpush1.msra.mxu0 0.0
        %5154 = vmatprep.subr.mxu0 0.0
        %5155 = vmatpush1.msra.mxu0 0.0
        %5156 = vmatprep.subr.mxu0 0.0
        %5157 = vmatpush1.msra.mxu0 0.0
        %5158 = vmatprep.subr.mxu0 0.0
        %5159 = vmatpush1.msra.mxu0 0.0
        %5160 = vmatprep.subr.mxu0 0.0
        %5161 = vmatpush1.msra.mxu0 0.0
        %5162 = vmatprep.subr.mxu0 0.0
        %5163 = vmatpush1.msra.mxu0 0.0
        %5164 = vmatprep.subr.mxu0 0.0
        %5165 = vmatpush1.msra.mxu0 0.0
        %5166 = vmatprep.subr.mxu0 0.0
        %5167 = vmatpush1.msra.mxu0 0.0
        %5168 = vmatprep.subr.mxu0 0.0
        %5169 = vmatpush1.msra.mxu0 0.0
        %5170 = vmatprep.subr.mxu0 0.0
        %5171 = vmatpush1.msra.mxu0 0.0
        %5172 = vmatprep.subr.mxu0 0.0
        %5173 = vmatpush1.msra.mxu0 %v5137
        %5174 = vmatprep.subr.mxu0 0.0
        %5175 = vmatpush2.msra.mxu0 0.0
        %5176 = vmatprep.subr.mxu0 0.0
        %5177 = vmatpush2.msra.mxu0 0.0
        %5178 = vmatprep.subr.mxu0 0.0
        %5179 = vmatpush2.msra.mxu0 0.0
        %5180 = vmatprep.subr.mxu0 0.0
        %5181 = vmatpush2.msra.mxu0 0.0
        %5182 = vmatprep.subr.mxu0 0.0
        %5183 = vmatpush2.msra.mxu0 0.0
        %5184 = vmatprep.subr.mxu0 0.0
        %5185 = vmatpush2.msra.mxu0 0.0
        %5186 = vmatprep.subr.mxu0 0.0
        %5187 = vmatpush2.msra.mxu0 0.0
        %5188 = vmatprep.subr.mxu0 0.0
        %5189 = vmatpush2.msra.mxu0 0.0
        %5190 = vmatprep.subr.mxu0 0.0
        %5191 = vmatpush2.msra.mxu0 0.0
        %5192 = vmatprep.subr.mxu0 0.0
        %5193 = vmatpush2.msra.mxu0 0.0
        %5194 = vmatprep.subr.mxu0 0.0
        %5195 = vmatpush2.msra.mxu0 0.0
        %5196 = vmatprep.subr.mxu0 0.0
        %5197 = vmatpush2.msra.mxu0 0.0
        %5198 = vmatprep.subr.mxu0 0.0
        %5199 = vmatpush2.msra.mxu0 0.0
        %5200 = vmatprep.subr.mxu0 0.0
        %5201 = vmatpush2.msra.mxu0 0.0
        %5202 = vmatprep.subr.mxu0 0.0
        %5203 = vmatpush2.msra.mxu0 0.0
        %5204 = vmatprep.subr.mxu0 0.0
        %5205 = vmatpush2.msra.mxu0 0.0
        %5206 = vmatprep.mubr.f32.mxu0 0.0
        %5207 = vmatmul.mubr.f32.gmra.mxu0 %v5140
        %v5208 = vpop.f32.mrf.mxu0
        %v5209 = vadd.f32 0.0, %v5208
        %v5210 = vpop.f32.mrf.mxu0
        %5211 = vdwg.mxu0
        %v5213 = vsel %vm1109, %v5209, 0
        %5215 = vmatprep.subr.mxu0 0.0
        %5216 = vmatpush1.msra.mxu0 0.0
        %5217 = vmatprep.subr.mxu0 0.0
        %5218 = vmatpush1.msra.mxu0 0.0
        %5219 = vmatprep.subr.mxu0 0.0
        %5220 = vmatpush1.msra.mxu0 0.0
        %5221 = vmatprep.subr.mxu0 0.0
        %5222 = vmatpush1.msra.mxu0 0.0
        %5223 = vmatprep.subr.mxu0 0.0
        %5224 = vmatpush1.msra.mxu0 0.0
        %5225 = vmatprep.subr.mxu0 0.0
        %5226 = vmatpush1.msra.mxu0 0.0
        %5227 = vmatprep.subr.mxu0 0.0
        %5228 = vmatpush1.msra.mxu0 0.0
        %5229 = vmatprep.subr.mxu0 0.0
        %5230 = vmatpush1.msra.mxu0 0.0
        %5231 = vmatprep.subr.mxu0 0.0
        %5232 = vmatpush1.msra.mxu0 0.0
        %5233 = vmatprep.subr.mxu0 0.0
        %5234 = vmatpush1.msra.mxu0 0.0
        %5235 = vmatprep.subr.mxu0 0.0
        %5236 = vmatpush1.msra.mxu0 0.0
        %5237 = vmatprep.subr.mxu0 0.0
        %5238 = vmatpush1.msra.mxu0 0.0
        %5239 = vmatprep.subr.mxu0 0.0
        %5240 = vmatpush1.msra.mxu0 0.0
        %5241 = vmatprep.subr.mxu0 0.0
        %5242 = vmatpush1.msra.mxu0 0.0
        %5243 = vmatprep.subr.mxu0 0.0
        %5244 = vmatpush1.msra.mxu0 0.0
        %5245 = vmatprep.subr.mxu0 0.0
        %5246 = vmatpush1.msra.mxu0 %v4880
        %5247 = vmatprep.subr.mxu0 0.0
        %5248 = vmatpush2.msra.mxu0 0.0
        %5249 = vmatprep.subr.mxu0 0.0
        %5250 = vmatpush2.msra.mxu0 0.0
        %5251 = vmatprep.subr.mxu0 0.0
        %5252 = vmatpush2.msra.mxu0 0.0
        %5253 = vmatprep.subr.mxu0 0.0
        %5254 = vmatpush2.msra.mxu0 0.0
        %5255 = vmatprep.subr.mxu0 0.0
        %5256 = vmatpush2.msra.mxu0 0.0
        %5257 = vmatprep.subr.mxu0 0.0
        %5258 = vmatpush2.msra.mxu0 0.0
        %5259 = vmatprep.subr.mxu0 0.0
        %5260 = vmatpush2.msra.mxu0 0.0
        %5261 = vmatprep.subr.mxu0 0.0
        %5262 = vmatpush2.msra.mxu0 0.0
        %5263 = vmatprep.subr.mxu0 0.0
        %5264 = vmatpush2.msra.mxu0 0.0
        %5265 = vmatprep.subr.mxu0 0.0
        %5266 = vmatpush2.msra.mxu0 0.0
        %5267 = vmatprep.subr.mxu0 0.0
        %5268 = vmatpush2.msra.mxu0 0.0
        %5269 = vmatprep.subr.mxu0 0.0
        %5270 = vmatpush2.msra.mxu0 0.0
        %5271 = vmatprep.subr.mxu0 0.0
        %5272 = vmatpush2.msra.mxu0 0.0
        %5273 = vmatprep.subr.mxu0 0.0
        %5274 = vmatpush2.msra.mxu0 0.0
        %5275 = vmatprep.subr.mxu0 0.0
        %5276 = vmatpush2.msra.mxu0 0.0
        %5277 = vmatprep.subr.mxu0 0.0
        %5278 = vmatpush2.msra.mxu0 0.0
        %5279 = vmatprep.mubr.f32.mxu0 0.0
        %5280 = vmatmul.mubr.f32.gmra.mxu0 %v5213
        %v5281 = vpop.f32.mrf.mxu0
        %v5282 = vadd.f32 0.0, %v5281
        %v5283 = vpop.f32.mrf.mxu0
        %5284 = vdwg.mxu0
        %v5286 = vsel %vm1109, %v5044, 0
        %5288 = vmatprep.subr.mxu0 0.0
        %5289 = vmatpush1.msra.mxu0 0.0
        %5290 = vmatprep.subr.mxu0 0.0
        %5291 = vmatpush1.msra.mxu0 0.0
        %5292 = vmatprep.subr.mxu0 0.0
        %5293 = vmatpush1.msra.mxu0 0.0
        %5294 = vmatprep.subr.mxu0 0.0
        %5295 = vmatpush1.msra.mxu0 0.0
        %5296 = vmatprep.subr.mxu0 0.0
        %5297 = vmatpush1.msra.mxu0 0.0
        %5298 = vmatprep.subr.mxu0 0.0
        %5299 = vmatpush1.msra.mxu0 0.0
        %5300 = vmatprep.subr.mxu0 0.0
        %5301 = vmatpush1.msra.mxu0 0.0
        %5302 = vmatprep.subr.mxu0 0.0
        %5303 = vmatpush1.msra.mxu0 0.0
        %5304 = vmatprep.subr.mxu0 0.0
        %5305 = vmatpush1.msra.mxu0 0.0
        %5306 = vmatprep.subr.mxu0 0.0
        %5307 = vmatpush1.msra.mxu0 0.0
        %5308 = vmatprep.subr.mxu0 0.0
        %5309 = vmatpush1.msra.mxu0 0.0
        %5310 = vmatprep.subr.mxu0 0.0
        %5311 = vmatpush1.msra.mxu0 0.0
        %5312 = vmatprep.subr.mxu0 0.0
        %5313 = vmatpush1.msra.mxu0 0.0
        %5314 = vmatprep.subr.mxu0 0.0
        %5315 = vmatpush1.msra.mxu0 0.0
        %5316 = vmatprep.subr.mxu0 0.0
        %5317 = vmatpush1.msra.mxu0 0.0
        %5318 = vmatprep.subr.mxu0 0.0
        %5319 = vmatpush1.msra.mxu0 %v4879
        %5320 = vmatprep.subr.mxu0 0.0
        %5321 = vmatpush2.msra.mxu0 0.0
        %5322 = vmatprep.subr.mxu0 0.0
        %5323 = vmatpush2.msra.mxu0 0.0
        %5324 = vmatprep.subr.mxu0 0.0
        %5325 = vmatpush2.msra.mxu0 0.0
        %5326 = vmatprep.subr.mxu0 0.0
        %5327 = vmatpush2.msra.mxu0 0.0
        %5328 = vmatprep.subr.mxu0 0.0
        %5329 = vmatpush2.msra.mxu0 0.0
        %5330 = vmatprep.subr.mxu0 0.0
        %5331 = vmatpush2.msra.mxu0 0.0
        %5332 = vmatprep.subr.mxu0 0.0
        %5333 = vmatpush2.msra.mxu0 0.0
        %5334 = vmatprep.subr.mxu0 0.0
        %5335 = vmatpush2.msra.mxu0 0.0
        %5336 = vmatprep.subr.mxu0 0.0
        %5337 = vmatpush2.msra.mxu0 0.0
        %5338 = vmatprep.subr.mxu0 0.0
        %5339 = vmatpush2.msra.mxu0 0.0
        %5340 = vmatprep.subr.mxu0 0.0
        %5341 = vmatpush2.msra.mxu0 0.0
        %5342 = vmatprep.subr.mxu0 0.0
        %5343 = vmatpush2.msra.mxu0 0.0
        %5344 = vmatprep.subr.mxu0 0.0
        %5345 = vmatpush2.msra.mxu0 0.0
        %5346 = vmatprep.subr.mxu0 0.0
        %5347 = vmatpush2.msra.mxu0 0.0
        %5348 = vmatprep.subr.mxu0 0.0
        %5349 = vmatpush2.msra.mxu0 0.0
        %5350 = vmatprep.subr.mxu0 0.0
        %5351 = vmatpush2.msra.mxu0 0.0
        %5352 = vmatprep.mubr.f32.mxu0 0.0
        %5353 = vmatmul.mubr.f32.gmra.mxu0 %v5286
        %v5354 = vpop.f32.mrf.mxu0
        %v5355 = vadd.f32 %v5282, %v5354
        %v5356 = vpop.f32.mrf.mxu0
        %5357 = vdwg.mxu0
        %5358 = vrot.lane.b32.xlu0 %v4792, 112
        %v5359 = vpop.permute.xlu0 %5358
        %5360 = vrot.lane.b32.xlu0 %v4876, 112
        %v5361 = vpop.permute.xlu0 %5360
        %v5362 = vsel %vm1109, %v5359, 0
        %v5364 = vsel %vm1109, %v5361, 0
        %5366 = vmatprep.subr.mxu0 0.0
        %5367 = vmatpush1.xpose.msra.mxu0 0.0
        %5368 = vmatprep.subr.mxu0 0.0
        %5369 = vmatpush1.xpose.msra.mxu0 0.0
        %5370 = vmatprep.subr.mxu0 0.0
        %5371 = vmatpush1.xpose.msra.mxu0 0.0
        %5372 = vmatprep.subr.mxu0 0.0
        %5373 = vmatpush1.xpose.msra.mxu0 0.0
        %5374 = vmatprep.subr.mxu0 0.0
        %5375 = vmatpush1.xpose.msra.mxu0 0.0
        %5376 = vmatprep.subr.mxu0 0.0
        %5377 = vmatpush1.xpose.msra.mxu0 0.0
        %5378 = vmatprep.subr.mxu0 0.0
        %5379 = vmatpush1.xpose.msra.mxu0 0.0
        %5380 = vmatprep.subr.mxu0 0.0
        %5381 = vmatpush1.xpose.msra.mxu0 0.0
        %5382 = vmatprep.subr.mxu0 0.0
        %5383 = vmatpush1.xpose.msra.mxu0 0.0
        %5384 = vmatprep.subr.mxu0 0.0
        %5385 = vmatpush1.xpose.msra.mxu0 0.0
        %5386 = vmatprep.subr.mxu0 0.0
        %5387 = vmatpush1.xpose.msra.mxu0 0.0
        %5388 = vmatprep.subr.mxu0 0.0
        %5389 = vmatpush1.xpose.msra.mxu0 0.0
        %5390 = vmatprep.subr.mxu0 0.0
        %5391 = vmatpush1.xpose.msra.mxu0 0.0
        %5392 = vmatprep.subr.mxu0 0.0
        %5393 = vmatpush1.xpose.msra.mxu0 0.0
        %5394 = vmatprep.subr.mxu0 0.0
        %5395 = vmatpush1.xpose.msra.mxu0 0.0
        %5396 = vmatprep.subr.mxu0 0.0
        %5397 = vmatpush1.xpose.msra.mxu0 %v5364
        %5398 = vmatprep.subr.mxu0 0.0
        %5399 = vmatpush2.xpose.msra.mxu0 0.0
        %5400 = vmatprep.subr.mxu0 0.0
        %5401 = vmatpush2.xpose.msra.mxu0 0.0
        %5402 = vmatprep.subr.mxu0 0.0
        %5403 = vmatpush2.xpose.msra.mxu0 0.0
        %5404 = vmatprep.subr.mxu0 0.0
        %5405 = vmatpush2.xpose.msra.mxu0 0.0
        %5406 = vmatprep.subr.mxu0 0.0
        %5407 = vmatpush2.xpose.msra.mxu0 0.0
        %5408 = vmatprep.subr.mxu0 0.0
        %5409 = vmatpush2.xpose.msra.mxu0 0.0
        %5410 = vmatprep.subr.mxu0 0.0
        %5411 = vmatpush2.xpose.msra.mxu0 0.0
        %5412 = vmatprep.subr.mxu0 0.0
        %5413 = vmatpush2.xpose.msra.mxu0 0.0
        %5414 = vmatprep.subr.mxu0 0.0
        %5415 = vmatpush2.xpose.msra.mxu0 0.0
        %5416 = vmatprep.subr.mxu0 0.0
        %5417 = vmatpush2.xpose.msra.mxu0 0.0
        %5418 = vmatprep.subr.mxu0 0.0
        %5419 = vmatpush2.xpose.msra.mxu0 0.0
        %5420 = vmatprep.subr.mxu0 0.0
        %5421 = vmatpush2.xpose.msra.mxu0 0.0
        %5422 = vmatprep.subr.mxu0 0.0
        %5423 = vmatpush2.xpose.msra.mxu0 0.0
        %5424 = vmatprep.subr.mxu0 0.0
        %5425 = vmatpush2.xpose.msra.mxu0 0.0
        %5426 = vmatprep.subr.mxu0 0.0
        %5427 = vmatpush2.xpose.msra.mxu0 0.0
        %5428 = vmatprep.subr.mxu0 0.0
        %5429 = vmatpush2.xpose.msra.mxu0 0.0
        %5430 = vmatprep.mubr.f32.mxu0 0.0
        %5431 = vmatmul.mubr.f32.gmra.mxu0 %v5362
        %v5432 = vpop.f32.mrf.mxu0
        %v5433 = vadd.f32 %v1104, %v5432
        %v5434 = vpop.f32.mrf.mxu0
        %5435 = vdwg.mxu0
        %v5436 = vsel %vm1109, %v5433, -inf
        %5437 = vmax.xlane.f32.xlu0 %v5436
        %v5438 = vpop.xlane.xlu0 %5437
        %v5439 = vsub.f32 %v5433, %v5438
        %v5440 = vmul.f32 %v5439, 1.442695
        %v5441 = vpow.pop %v5440
        %v5442 = vsel %vm1109, %v5441, 0.0
        %5443 = vadd.xlane.f32.xlu0 %v5442
        %v5444 = vpop.xlane.xlu0 %5443
        %v5445 = vrcp.pop %v5444
        %v5446 = vmul.f32 %v5441, %v5445
        %5447 = vrot.lane.b32.xlu0 %v4876, 80
        %v5448 = vpop.permute.xlu0 %5447
        %v5451 = vsel %vm1109, %v5446, 0
        %5453 = vmatprep.subr.mxu0 0.0
        %5454 = vmatpush1.msra.mxu0 0.0
        %5455 = vmatprep.subr.mxu0 0.0
        %5456 = vmatpush1.msra.mxu0 0.0
        %5457 = vmatprep.subr.mxu0 0.0
        %5458 = vmatpush1.msra.mxu0 0.0
        %5459 = vmatprep.subr.mxu0 0.0
        %5460 = vmatpush1.msra.mxu0 0.0
        %5461 = vmatprep.subr.mxu0 0.0
        %5462 = vmatpush1.msra.mxu0 0.0
        %5463 = vmatprep.subr.mxu0 0.0
        %5464 = vmatpush1.msra.mxu0 0.0
        %5465 = vmatprep.subr.mxu0 0.0
        %5466 = vmatpush1.msra.mxu0 0.0
        %5467 = vmatprep.subr.mxu0 0.0
        %5468 = vmatpush1.msra.mxu0 0.0
        %5469 = vmatprep.subr.mxu0 0.0
        %5470 = vmatpush1.msra.mxu0 0.0
        %5471 = vmatprep.subr.mxu0 0.0
        %5472 = vmatpush1.msra.mxu0 0.0
        %5473 = vmatprep.subr.mxu0 0.0
        %5474 = vmatpush1.msra.mxu0 0.0
        %5475 = vmatprep.subr.mxu0 0.0
        %5476 = vmatpush1.msra.mxu0 0.0
        %5477 = vmatprep.subr.mxu0 0.0
        %5478 = vmatpush1.msra.mxu0 0.0
        %5479 = vmatprep.subr.mxu0 0.0
        %5480 = vmatpush1.msra.mxu0 0.0
        %5481 = vmatprep.subr.mxu0 0.0
        %5482 = vmatpush1.msra.mxu0 0.0
        %5483 = vmatprep.subr.mxu0 0.0
        %5484 = vmatpush1.msra.mxu0 %v5448
        %5485 = vmatprep.subr.mxu0 0.0
        %5486 = vmatpush2.msra.mxu0 0.0
        %5487 = vmatprep.subr.mxu0 0.0
        %5488 = vmatpush2.msra.mxu0 0.0
        %5489 = vmatprep.subr.mxu0 0.0
        %5490 = vmatpush2.msra.mxu0 0.0
        %5491 = vmatprep.subr.mxu0 0.0
        %5492 = vmatpush2.msra.mxu0 0.0
        %5493 = vmatprep.subr.mxu0 0.0
        %5494 = vmatpush2.msra.mxu0 0.0
        %5495 = vmatprep.subr.mxu0 0.0
        %5496 = vmatpush2.msra.mxu0 0.0
        %5497 = vmatprep.subr.mxu0 0.0
        %5498 = vmatpush2.msra.mxu0 0.0
        %5499 = vmatprep.subr.mxu0 0.0
        %5500 = vmatpush2.msra.mxu0 0.0
        %5501 = vmatprep.subr.mxu0 0.0
        %5502 = vmatpush2.msra.mxu0 0.0
        %5503 = vmatprep.subr.mxu0 0.0
        %5504 = vmatpush2.msra.mxu0 0.0
        %5505 = vmatprep.subr.mxu0 0.0
        %5506 = vmatpush2.msra.mxu0 0.0
        %5507 = vmatprep.subr.mxu0 0.0
        %5508 = vmatpush2.msra.mxu0 0.0
        %5509 = vmatprep.subr.mxu0 0.0
        %5510 = vmatpush2.msra.mxu0 0.0
        %5511 = vmatprep.subr.mxu0 0.0
        %5512 = vmatpush2.msra.mxu0 0.0
        %5513 = vmatprep.subr.mxu0 0.0
        %5514 = vmatpush2.msra.mxu0 0.0
        %5515 = vmatprep.subr.mxu0 0.0
        %5516 = vmatpush2.msra.mxu0 0.0
        %5517 = vmatprep.mubr.f32.mxu0 0.0
        %5518 = vmatmul.mubr.f32.gmra.mxu0 %v5451
        %v5519 = vpop.f32.mrf.mxu0
        %v5520 = vadd.f32 0.0, %v5519
        %v5521 = vpop.f32.mrf.mxu0
        %5522 = vdwg.mxu0
        %v5524 = vsel %vm1109, %v5520, 0
        %5526 = vmatprep.subr.mxu0 0.0
        %5527 = vmatpush1.msra.mxu0 0.0
        %5528 = vmatprep.subr.mxu0 0.0
        %5529 = vmatpush1.msra.mxu0 0.0
        %5530 = vmatprep.subr.mxu0 0.0
        %5531 = vmatpush1.msra.mxu0 0.0
        %5532 = vmatprep.subr.mxu0 0.0
        %5533 = vmatpush1.msra.mxu0 0.0
        %5534 = vmatprep.subr.mxu0 0.0
        %5535 = vmatpush1.msra.mxu0 0.0
        %5536 = vmatprep.subr.mxu0 0.0
        %5537 = vmatpush1.msra.mxu0 0.0
        %5538 = vmatprep.subr.mxu0 0.0
        %5539 = vmatpush1.msra.mxu0 0.0
        %5540 = vmatprep.subr.mxu0 0.0
        %5541 = vmatpush1.msra.mxu0 0.0
        %5542 = vmatprep.subr.mxu0 0.0
        %5543 = vmatpush1.msra.mxu0 0.0
        %5544 = vmatprep.subr.mxu0 0.0
        %5545 = vmatpush1.msra.mxu0 0.0
        %5546 = vmatprep.subr.mxu0 0.0
        %5547 = vmatpush1.msra.mxu0 0.0
        %5548 = vmatprep.subr.mxu0 0.0
        %5549 = vmatpush1.msra.mxu0 0.0
        %5550 = vmatprep.subr.mxu0 0.0
        %5551 = vmatpush1.msra.mxu0 0.0
        %5552 = vmatprep.subr.mxu0 0.0
        %5553 = vmatpush1.msra.mxu0 0.0
        %5554 = vmatprep.subr.mxu0 0.0
        %5555 = vmatpush1.msra.mxu0 0.0
        %5556 = vmatprep.subr.mxu0 0.0
        %5557 = vmatpush1.msra.mxu0 %v4881
        %5558 = vmatprep.subr.mxu0 0.0
        %5559 = vmatpush2.msra.mxu0 0.0
        %5560 = vmatprep.subr.mxu0 0.0
        %5561 = vmatpush2.msra.mxu0 0.0
        %5562 = vmatprep.subr.mxu0 0.0
        %5563 = vmatpush2.msra.mxu0 0.0
        %5564 = vmatprep.subr.mxu0 0.0
        %5565 = vmatpush2.msra.mxu0 0.0
        %5566 = vmatprep.subr.mxu0 0.0
        %5567 = vmatpush2.msra.mxu0 0.0
        %5568 = vmatprep.subr.mxu0 0.0
        %5569 = vmatpush2.msra.mxu0 0.0
        %5570 = vmatprep.subr.mxu0 0.0
        %5571 = vmatpush2.msra.mxu0 0.0
        %5572 = vmatprep.subr.mxu0 0.0
        %5573 = vmatpush2.msra.mxu0 0.0
        %5574 = vmatprep.subr.mxu0 0.0
        %5575 = vmatpush2.msra.mxu0 0.0
        %5576 = vmatprep.subr.mxu0 0.0
        %5577 = vmatpush2.msra.mxu0 0.0
        %5578 = vmatprep.subr.mxu0 0.0
        %5579 = vmatpush2.msra.mxu0 0.0
        %5580 = vmatprep.subr.mxu0 0.0
        %5581 = vmatpush2.msra.mxu0 0.0
        %5582 = vmatprep.subr.mxu0 0.0
        %5583 = vmatpush2.msra.mxu0 0.0
        %5584 = vmatprep.subr.mxu0 0.0
        %5585 = vmatpush2.msra.mxu0 0.0
        %5586 = vmatprep.subr.mxu0 0.0
        %5587 = vmatpush2.msra.mxu0 0.0
        %5588 = vmatprep.subr.mxu0 0.0
        %5589 = vmatpush2.msra.mxu0 0.0
        %5590 = vmatprep.mubr.f32.mxu0 0.0
        %5591 = vmatmul.mubr.f32.gmra.mxu0 %v5524
        %v5592 = vpop.f32.mrf.mxu0
        %v5593 = vadd.f32 0.0, %v5592
        %v5594 = vpop.f32.mrf.mxu0
        %5595 = vdwg.mxu0
        %v5596 = vadd.f32 %v5355, %v5593
        %5597 = vrot.lane.b32.xlu0 %v4792, 104
        %v5598 = vpop.permute.xlu0 %5597
        %5599 = vrot.lane.b32.xlu0 %v4876, 104
        %v5600 = vpop.permute.xlu0 %5599
        %v5601 = vsel %vm1109, %v5598, 0
        %v5603 = vsel %vm1109, %v5600, 0
        %5605 = vmatprep.subr.mxu0 0.0
        %5606 = vmatpush1.xpose.msra.mxu0 0.0
        %5607 = vmatprep.subr.mxu0 0.0
        %5608 = vmatpush1.xpose.msra.mxu0 0.0
        %5609 = vmatprep.subr.mxu0 0.0
        %5610 = vmatpush1.xpose.msra.mxu0 0.0
        %5611 = vmatprep.subr.mxu0 0.0
        %5612 = vmatpush1.xpose.msra.mxu0 0.0
        %5613 = vmatprep.subr.mxu0 0.0
        %5614 = vmatpush1.xpose.msra.mxu0 0.0
        %5615 = vmatprep.subr.mxu0 0.0
        %5616 = vmatpush1.xpose.msra.mxu0 0.0
        %5617 = vmatprep.subr.mxu0 0.0
        %5618 = vmatpush1.xpose.msra.mxu0 0.0
        %5619 = vmatprep.subr.mxu0 0.0
        %5620 = vmatpush1.xpose.msra.mxu0 0.0
        %5621 = vmatprep.subr.mxu0 0.0
        %5622 = vmatpush1.xpose.msra.mxu0 0.0
        %5623 = vmatprep.subr.mxu0 0.0
        %5624 = vmatpush1.xpose.msra.mxu0 0.0
        %5625 = vmatprep.subr.mxu0 0.0
        %5626 = vmatpush1.xpose.msra.mxu0 0.0
        %5627 = vmatprep.subr.mxu0 0.0
        %5628 = vmatpush1.xpose.msra.mxu0 0.0
        %5629 = vmatprep.subr.mxu0 0.0
        %5630 = vmatpush1.xpose.msra.mxu0 0.0
        %5631 = vmatprep.subr.mxu0 0.0
        %5632 = vmatpush1.xpose.msra.mxu0 0.0
        %5633 = vmatprep.subr.mxu0 0.0
        %5634 = vmatpush1.xpose.msra.mxu0 0.0
        %5635 = vmatprep.subr.mxu0 0.0
        %5636 = vmatpush1.xpose.msra.mxu0 %v5603
        %5637 = vmatprep.subr.mxu0 0.0
        %5638 = vmatpush2.xpose.msra.mxu0 0.0
        %5639 = vmatprep.subr.mxu0 0.0
        %5640 = vmatpush2.xpose.msra.mxu0 0.0
        %5641 = vmatprep.subr.mxu0 0.0
        %5642 = vmatpush2.xpose.msra.mxu0 0.0
        %5643 = vmatprep.subr.mxu0 0.0
        %5644 = vmatpush2.xpose.msra.mxu0 0.0
        %5645 = vmatprep.subr.mxu0 0.0
        %5646 = vmatpush2.xpose.msra.mxu0 0.0
        %5647 = vmatprep.subr.mxu0 0.0
        %5648 = vmatpush2.xpose.msra.mxu0 0.0
        %5649 = vmatprep.subr.mxu0 0.0
        %5650 = vmatpush2.xpose.msra.mxu0 0.0
        %5651 = vmatprep.subr.mxu0 0.0
        %5652 = vmatpush2.xpose.msra.mxu0 0.0
        %5653 = vmatprep.subr.mxu0 0.0
        %5654 = vmatpush2.xpose.msra.mxu0 0.0
        %5655 = vmatprep.subr.mxu0 0.0
        %5656 = vmatpush2.xpose.msra.mxu0 0.0
        %5657 = vmatprep.subr.mxu0 0.0
        %5658 = vmatpush2.xpose.msra.mxu0 0.0
        %5659 = vmatprep.subr.mxu0 0.0
        %5660 = vmatpush2.xpose.msra.mxu0 0.0
        %5661 = vmatprep.subr.mxu0 0.0
        %5662 = vmatpush2.xpose.msra.mxu0 0.0
        %5663 = vmatprep.subr.mxu0 0.0
        %5664 = vmatpush2.xpose.msra.mxu0 0.0
        %5665 = vmatprep.subr.mxu0 0.0
        %5666 = vmatpush2.xpose.msra.mxu0 0.0
        %5667 = vmatprep.subr.mxu0 0.0
        %5668 = vmatpush2.xpose.msra.mxu0 0.0
        %5669 = vmatprep.mubr.f32.mxu0 0.0
        %5670 = vmatmul.mubr.f32.gmra.mxu0 %v5601
        %v5671 = vpop.f32.mrf.mxu0
        %v5672 = vadd.f32 %v1104, %v5671
        %v5673 = vpop.f32.mrf.mxu0
        %5674 = vdwg.mxu0
        %v5675 = vsel %vm1109, %v5672, -inf
        %5676 = vmax.xlane.f32.xlu0 %v5675
        %v5677 = vpop.xlane.xlu0 %5676
        %v5678 = vsub.f32 %v5672, %v5677
        %v5679 = vmul.f32 %v5678, 1.442695
        %v5680 = vpow.pop %v5679
        %v5681 = vsel %vm1109, %v5680, 0.0
        %5682 = vadd.xlane.f32.xlu0 %v5681
        %v5683 = vpop.xlane.xlu0 %5682
        %v5684 = vrcp.pop %v5683
        %v5685 = vmul.f32 %v5680, %v5684
        %5686 = vrot.lane.b32.xlu0 %v4876, 72
        %v5687 = vpop.permute.xlu0 %5686
        %v5690 = vsel %vm1109, %v5685, 0
        %5692 = vmatprep.subr.mxu0 0.0
        %5693 = vmatpush1.msra.mxu0 0.0
        %5694 = vmatprep.subr.mxu0 0.0
        %5695 = vmatpush1.msra.mxu0 0.0
        %5696 = vmatprep.subr.mxu0 0.0
        %5697 = vmatpush1.msra.mxu0 0.0
        %5698 = vmatprep.subr.mxu0 0.0
        %5699 = vmatpush1.msra.mxu0 0.0
        %5700 = vmatprep.subr.mxu0 0.0
        %5701 = vmatpush1.msra.mxu0 0.0
        %5702 = vmatprep.subr.mxu0 0.0
        %5703 = vmatpush1.msra.mxu0 0.0
        %5704 = vmatprep.subr.mxu0 0.0
        %5705 = vmatpush1.msra.mxu0 0.0
        %5706 = vmatprep.subr.mxu0 0.0
        %5707 = vmatpush1.msra.mxu0 0.0
        %5708 = vmatprep.subr.mxu0 0.0
        %5709 = vmatpush1.msra.mxu0 0.0
        %5710 = vmatprep.subr.mxu0 0.0
        %5711 = vmatpush1.msra.mxu0 0.0
        %5712 = vmatprep.subr.mxu0 0.0
        %5713 = vmatpush1.msra.mxu0 0.0
        %5714 = vmatprep.subr.mxu0 0.0
        %5715 = vmatpush1.msra.mxu0 0.0
        %5716 = vmatprep.subr.mxu0 0.0
        %5717 = vmatpush1.msra.mxu0 0.0
        %5718 = vmatprep.subr.mxu0 0.0
        %5719 = vmatpush1.msra.mxu0 0.0
        %5720 = vmatprep.subr.mxu0 0.0
        %5721 = vmatpush1.msra.mxu0 0.0
        %5722 = vmatprep.subr.mxu0 0.0
        %5723 = vmatpush1.msra.mxu0 %v5687
        %5724 = vmatprep.subr.mxu0 0.0
        %5725 = vmatpush2.msra.mxu0 0.0
        %5726 = vmatprep.subr.mxu0 0.0
        %5727 = vmatpush2.msra.mxu0 0.0
        %5728 = vmatprep.subr.mxu0 0.0
        %5729 = vmatpush2.msra.mxu0 0.0
        %5730 = vmatprep.subr.mxu0 0.0
        %5731 = vmatpush2.msra.mxu0 0.0
        %5732 = vmatprep.subr.mxu0 0.0
        %5733 = vmatpush2.msra.mxu0 0.0
        %5734 = vmatprep.subr.mxu0 0.0
        %5735 = vmatpush2.msra.mxu0 0.0
        %5736 = vmatprep.subr.mxu0 0.0
        %5737 = vmatpush2.msra.mxu0 0.0
        %5738 = vmatprep.subr.mxu0 0.0
        %5739 = vmatpush2.msra.mxu0 0.0
        %5740 = vmatprep.subr.mxu0 0.0
        %5741 = vmatpush2.msra.mxu0 0.0
        %5742 = vmatprep.subr.mxu0 0.0
        %5743 = vmatpush2.msra.mxu0 0.0
        %5744 = vmatprep.subr.mxu0 0.0
        %5745 = vmatpush2.msra.mxu0 0.0
        %5746 = vmatprep.subr.mxu0 0.0
        %5747 = vmatpush2.msra.mxu0 0.0
        %5748 = vmatprep.subr.mxu0 0.0
        %5749 = vmatpush2.msra.mxu0 0.0
        %5750 = vmatprep.subr.mxu0 0.0
        %5751 = vmatpush2.msra.mxu0 0.0
        %5752 = vmatprep.subr.mxu0 0.0
        %5753 = vmatpush2.msra.mxu0 0.0
        %5754 = vmatprep.subr.mxu0 0.0
        %5755 = vmatpush2.msra.mxu0 0.0
        %5756 = vmatprep.mubr.f32.mxu0 0.0
        %5757 = vmatmul.mubr.f32.gmra.mxu0 %v5690
        %v5758 = vpop.f32.mrf.mxu0
        %v5759 = vadd.f32 0.0, %v5758
        %v5760 = vpop.f32.mrf.mxu0
        %5761 = vdwg.mxu0
        %v5763 = vsel %vm1109, %v5759, 0
        %5765 = vmatprep.subr.mxu0 0.0
        %5766 = vmatpush1.msra.mxu0 0.0
        %5767 = vmatprep.subr.mxu0 0.0
        %5768 = vmatpush1.msra.mxu0 0.0
        %5769 = vmatprep.subr.mxu0 0.0
        %5770 = vmatpush1.msra.mxu0 0.0
        %5771 = vmatprep.subr.mxu0 0.0
        %5772 = vmatpush1.msra.mxu0 0.0
        %5773 = vmatprep.subr.mxu0 0.0
        %5774 = vmatpush1.msra.mxu0 0.0
        %5775 = vmatprep.subr.mxu0 0.0
        %5776 = vmatpush1.msra.mxu0 0.0
        %5777 = vmatprep.subr.mxu0 0.0
        %5778 = vmatpush1.msra.mxu0 0.0
        %5779 = vmatprep.subr.mxu0 0.0
        %5780 = vmatpush1.msra.mxu0 0.0
        %5781 = vmatprep.subr.mxu0 0.0
        %5782 = vmatpush1.msra.mxu0 0.0
        %5783 = vmatprep.subr.mxu0 0.0
        %5784 = vmatpush1.msra.mxu0 0.0
        %5785 = vmatprep.subr.mxu0 0.0
        %5786 = vmatpush1.msra.mxu0 0.0
        %5787 = vmatprep.subr.mxu0 0.0
        %5788 = vmatpush1.msra.mxu0 0.0
        %5789 = vmatprep.subr.mxu0 0.0
        %5790 = vmatpush1.msra.mxu0 0.0
        %5791 = vmatprep.subr.mxu0 0.0
        %5792 = vmatpush1.msra.mxu0 0.0
        %5793 = vmatprep.subr.mxu0 0.0
        %5794 = vmatpush1.msra.mxu0 0.0
        %5795 = vmatprep.subr.mxu0 0.0
        %5796 = vmatpush1.msra.mxu0 %v4882
        %5797 = vmatprep.subr.mxu0 0.0
        %5798 = vmatpush2.msra.mxu0 0.0
        %5799 = vmatprep.subr.mxu0 0.0
        %5800 = vmatpush2.msra.mxu0 0.0
        %5801 = vmatprep.subr.mxu0 0.0
        %5802 = vmatpush2.msra.mxu0 0.0
        %5803 = vmatprep.subr.mxu0 0.0
        %5804 = vmatpush2.msra.mxu0 0.0
        %5805 = vmatprep.subr.mxu0 0.0
        %5806 = vmatpush2.msra.mxu0 0.0
        %5807 = vmatprep.subr.mxu0 0.0
        %5808 = vmatpush2.msra.mxu0 0.0
        %5809 = vmatprep.subr.mxu0 0.0
        %5810 = vmatpush2.msra.mxu0 0.0
        %5811 = vmatprep.subr.mxu0 0.0
        %5812 = vmatpush2.msra.mxu0 0.0
        %5813 = vmatprep.subr.mxu0 0.0
        %5814 = vmatpush2.msra.mxu0 0.0
        %5815 = vmatprep.subr.mxu0 0.0
        %5816 = vmatpush2.msra.mxu0 0.0
        %5817 = vmatprep.subr.mxu0 0.0
        %5818 = vmatpush2.msra.mxu0 0.0
        %5819 = vmatprep.subr.mxu0 0.0
        %5820 = vmatpush2.msra.mxu0 0.0
        %5821 = vmatprep.subr.mxu0 0.0
        %5822 = vmatpush2.msra.mxu0 0.0
        %5823 = vmatprep.subr.mxu0 0.0
        %5824 = vmatpush2.msra.mxu0 0.0
        %5825 = vmatprep.subr.mxu0 0.0
        %5826 = vmatpush2.msra.mxu0 0.0
        %5827 = vmatprep.subr.mxu0 0.0
        %5828 = vmatpush2.msra.mxu0 0.0
        %5829 = vmatprep.mubr.f32.mxu0 0.0
        %5830 = vmatmul.mubr.f32.gmra.mxu0 %v5763
        %v5831 = vpop.f32.mrf.mxu0
        %v5832 = vadd.f32 0.0, %v5831
        %v5833 = vpop.f32.mrf.mxu0
        %5834 = vdwg.mxu0
        %v5835 = vadd.f32 %v5596, %v5832
        %v5837 = vlaneseq
        %v5838 = vshrl.u32 %v5837, 7
        %v5839 = vsub.s32 0, %v5838
        %v5840 = vrot.slane %v4883, %v5839
        %v5842 = vadd.f32 %v5835, %v5840
        %v5843 = vadd.f32 %v4680, %v5842
        %v5844 = vsel %vm979, %v5843, 0.0
        %5845 = vadd.xlane.f32.xlu0 %v5844
        %v5846 = vpop.xlane.xlu0 %5845
        %v5847 = vmul.f32 %v5846, %v983
        %v5848 = vsub.f32 %v5843, %v5847
        %v5849 = vmul.f32 %v5848, %v5848
        %v5850 = vsel %vm979, %v5849, 0.0
        %5851 = vadd.xlane.f32.xlu0 %v5850
        %v5852 = vpop.xlane.xlu0 %5851
        %v5853 = vmul.f32 %v5852, 0.032258064
        %v5854 = vrsqrt.pop %v5853
        %v5855 = vmul.f32 %v5853, %v5854
        %vm5856 = vcmp.eq.f32.partialorder %v5853, inf
        %v5857 = vsel %vm5856, %v5853, %v5855
        %vm5858 = vcmp.eq.f32.partialorder %v5853, 0.0
        %v5859 = vand.u32 %v5853, 2147483648
        %v5860 = vsel %vm5858, %v5859, %v5857
        %v5861 = vadd.f32 %v5860, 1e-06
        %v5862 = vrcp.pop %v5861
        %v5863 = vlaneseq
        %v5864 = vshrl.u32 %v5863, 7
        %v5865 = vsub.s32 4, %v5864
        %v5866 = vrot.slane %v3600, %v5865
        %v5867 = vmul.f32 %v5866, %v5848
        %v5868 = vmul.f32 %v5867, %v5862
        %v5869 = vlaneseq
        %v5870 = vshrl.u32 %v5869, 7
        %v5871 = vsub.s32 5, %v5870
        %v5872 = vrot.slane %v3600, %v5871
        %v5873 = vadd.f32 %v5868, %v5872
        %v5874 = vld [vmem:[%s49] sm:$0xff]
        %v5875 = vld [vmem:[%s49 + $0x8] sm:$0xff]
        %v5876 = vld [vmem:[%s49 + $0x10] sm:$0xff]
        %v5877 = vld [vmem:[%s49 + $0x18] sm:$0xff]
        %v5878 = vld [vmem:[%s51] sm:$0x1]
        %v5880 = vlaneseq
        %v5881 = vshrl.u32 %v5880, 7
        %v5882 = vsub.s32 0, %v5881
        %v5883 = vrot.slane %v5878, %v5882
        %v5886 = vsel %vm979, %v5873, 0
        %5888 = vmatprep.subr.mxu0 0.0
        %5889 = vmatpush1.msra.mxu0 0.0
        %5890 = vmatprep.subr.mxu0 0.0
        %5891 = vmatpush1.msra.mxu0 0.0
        %5892 = vmatprep.subr.mxu0 0.0
        %5893 = vmatpush1.msra.mxu0 0.0
        %5894 = vmatprep.subr.mxu0 0.0
        %5895 = vmatpush1.msra.mxu0 0.0
        %5896 = vmatprep.subr.mxu0 0.0
        %5897 = vmatpush1.msra.mxu0 0.0
        %5898 = vmatprep.subr.mxu0 0.0
        %5899 = vmatpush1.msra.mxu0 0.0
        %5900 = vmatprep.subr.mxu0 0.0
        %5901 = vmatpush1.msra.mxu0 0.0
        %5902 = vmatprep.subr.mxu0 0.0
        %5903 = vmatpush1.msra.mxu0 0.0
        %5904 = vmatprep.subr.mxu0 0.0
        %5905 = vmatpush1.msra.mxu0 0.0
        %5906 = vmatprep.subr.mxu0 0.0
        %5907 = vmatpush1.msra.mxu0 0.0
        %5908 = vmatprep.subr.mxu0 0.0
        %5909 = vmatpush1.msra.mxu0 0.0
        %5910 = vmatprep.subr.mxu0 0.0
        %5911 = vmatpush1.msra.mxu0 0.0
        %5912 = vmatprep.subr.mxu0 0.0
        %5913 = vmatpush1.msra.mxu0 %v5877
        %5914 = vmatprep.subr.mxu0 0.0
        %5915 = vmatpush1.msra.mxu0 %v5876
        %5916 = vmatprep.subr.mxu0 0.0
        %5917 = vmatpush1.msra.mxu0 %v5875
        %5918 = vmatprep.subr.mxu0 0.0
        %5919 = vmatpush1.msra.mxu0 %v5874
        %5920 = vmatprep.subr.mxu0 0.0
        %5921 = vmatpush2.msra.mxu0 0.0
        %5922 = vmatprep.subr.mxu0 0.0
        %5923 = vmatpush2.msra.mxu0 0.0
        %5924 = vmatprep.subr.mxu0 0.0
        %5925 = vmatpush2.msra.mxu0 0.0
        %5926 = vmatprep.subr.mxu0 0.0
        %5927 = vmatpush2.msra.mxu0 0.0
        %5928 = vmatprep.subr.mxu0 0.0
        %5929 = vmatpush2.msra.mxu0 0.0
        %5930 = vmatprep.subr.mxu0 0.0
        %5931 = vmatpush2.msra.mxu0 0.0
        %5932 = vmatprep.subr.mxu0 0.0
        %5933 = vmatpush2.msra.mxu0 0.0
        %5934 = vmatprep.subr.mxu0 0.0
        %5935 = vmatpush2.msra.mxu0 0.0
        %5936 = vmatprep.subr.mxu0 0.0
        %5937 = vmatpush2.msra.mxu0 0.0
        %5938 = vmatprep.subr.mxu0 0.0
        %5939 = vmatpush2.msra.mxu0 0.0
        %5940 = vmatprep.subr.mxu0 0.0
        %5941 = vmatpush2.msra.mxu0 0.0
        %5942 = vmatprep.subr.mxu0 0.0
        %5943 = vmatpush2.msra.mxu0 0.0
        %5944 = vmatprep.subr.mxu0 0.0
        %5945 = vmatpush2.msra.mxu0 0.0
        %5946 = vmatprep.subr.mxu0 0.0
        %5947 = vmatpush2.msra.mxu0 0.0
        %5948 = vmatprep.subr.mxu0 0.0
        %5949 = vmatpush2.msra.mxu0 0.0
        %5950 = vmatprep.subr.mxu0 0.0
        %5951 = vmatpush2.msra.mxu0 0.0
        %5952 = vmatprep.mubr.f32.mxu0 0.0
        %5953 = vmatmul.mubr.f32.gmra.mxu0 %v5886
        %v5954 = vpop.f32.mrf.mxu0
        %v5955 = vadd.f32 %v5883, %v5954
        %v5956 = vpop.f32.mrf.mxu0
        %5957 = vdwg.mxu0
        %v5958 = vmax.f32 %v5955, 0.0
        %v5959 = vld [vmem:[%s53] sm:$0xff]
        %v5960 = vld [vmem:[%s53 + $0x8] sm:$0xff]
        %v5961 = vld [vmem:[%s53 + $0x10] sm:$0xff]
        %v5962 = vld [vmem:[%s53 + $0x18] sm:$0xff]
        %v5963 = vld [vmem:[%s53 + $0x20] sm:$0xff]
        %v5964 = vld [vmem:[%s53 + $0x28] sm:$0xff]
        %v5965 = vld [vmem:[%s53 + $0x30] sm:$0xff]
        %v5966 = vld [vmem:[%s53 + $0x38] sm:$0xff]
        %v5968 = vsel %vm2191, %v5958, 0
        %5970 = vmatprep.subr.mxu0 0.0
        %5971 = vmatpush1.msra.mxu0 0.0
        %5972 = vmatprep.subr.mxu0 0.0
        %5973 = vmatpush1.msra.mxu0 0.0
        %5974 = vmatprep.subr.mxu0 0.0
        %5975 = vmatpush1.msra.mxu0 0.0
        %5976 = vmatprep.subr.mxu0 0.0
        %5977 = vmatpush1.msra.mxu0 0.0
        %5978 = vmatprep.subr.mxu0 0.0
        %5979 = vmatpush1.msra.mxu0 0.0
        %5980 = vmatprep.subr.mxu0 0.0
        %5981 = vmatpush1.msra.mxu0 0.0
        %5982 = vmatprep.subr.mxu0 0.0
        %5983 = vmatpush1.msra.mxu0 0.0
        %5984 = vmatprep.subr.mxu0 0.0
        %5985 = vmatpush1.msra.mxu0 0.0
        %5986 = vmatprep.subr.mxu0 0.0
        %5987 = vmatpush1.msra.mxu0 %v5966
        %5988 = vmatprep.subr.mxu0 0.0
        %5989 = vmatpush1.msra.mxu0 %v5965
        %5990 = vmatprep.subr.mxu0 0.0
        %5991 = vmatpush1.msra.mxu0 %v5964
        %5992 = vmatprep.subr.mxu0 0.0
        %5993 = vmatpush1.msra.mxu0 %v5963
        %5994 = vmatprep.subr.mxu0 0.0
        %5995 = vmatpush1.msra.mxu0 %v5962
        %5996 = vmatprep.subr.mxu0 0.0
        %5997 = vmatpush1.msra.mxu0 %v5961
        %5998 = vmatprep.subr.mxu0 0.0
        %5999 = vmatpush1.msra.mxu0 %v5960
        %6000 = vmatprep.subr.mxu0 0.0
        %6001 = vmatpush1.msra.mxu0 %v5959
        %6002 = vmatprep.subr.mxu0 0.0
        %6003 = vmatpush2.msra.mxu0 0.0
        %6004 = vmatprep.subr.mxu0 0.0
        %6005 = vmatpush2.msra.mxu0 0.0
        %6006 = vmatprep.subr.mxu0 0.0
        %6007 = vmatpush2.msra.mxu0 0.0
        %6008 = vmatprep.subr.mxu0 0.0
        %6009 = vmatpush2.msra.mxu0 0.0
        %6010 = vmatprep.subr.mxu0 0.0
        %6011 = vmatpush2.msra.mxu0 0.0
        %6012 = vmatprep.subr.mxu0 0.0
        %6013 = vmatpush2.msra.mxu0 0.0
        %6014 = vmatprep.subr.mxu0 0.0
        %6015 = vmatpush2.msra.mxu0 0.0
        %6016 = vmatprep.subr.mxu0 0.0
        %6017 = vmatpush2.msra.mxu0 0.0
        %6018 = vmatprep.subr.mxu0 0.0
        %6019 = vmatpush2.msra.mxu0 0.0
        %6020 = vmatprep.subr.mxu0 0.0
        %6021 = vmatpush2.msra.mxu0 0.0
        %6022 = vmatprep.subr.mxu0 0.0
        %6023 = vmatpush2.msra.mxu0 0.0
        %6024 = vmatprep.subr.mxu0 0.0
        %6025 = vmatpush2.msra.mxu0 0.0
        %6026 = vmatprep.subr.mxu0 0.0
        %6027 = vmatpush2.msra.mxu0 0.0
        %6028 = vmatprep.subr.mxu0 0.0
        %6029 = vmatpush2.msra.mxu0 0.0
        %6030 = vmatprep.subr.mxu0 0.0
        %6031 = vmatpush2.msra.mxu0 0.0
        %6032 = vmatprep.subr.mxu0 0.0
        %6033 = vmatpush2.msra.mxu0 0.0
        %6034 = vmatprep.mubr.f32.mxu0 0.0
        %6035 = vmatmul.mubr.f32.gmra.mxu0 %v5968
        %v6036 = vpop.f32.mrf.mxu0
        %v6037 = vadd.f32 0.0, %v6036
        %v6038 = vpop.f32.mrf.mxu0
        %6039 = vdwg.mxu0
        %v6040 = vadd.f32 %v5843, %v6037
        %v6041 = vld [vmem:[%s55] sm:$0x1]
        %v6043 = vlaneseq
        %v6044 = vshrl.u32 %v6043, 7
        %v6045 = vsub.s32 0, %v6044
        %v6046 = vrot.slane %v6041, %v6045
        %v6048 = vadd.f32 %v6040, %v6046
        %s6049 = scalar_lea.vmem %s57, 8
        %v6050 = vld [vmem:[%s6049] sm:$0x3f]
        %v6051 = vsel %vm979, %v6048, 0.0
        %6052 = vadd.xlane.f32.xlu0 %v6051
        %v6053 = vpop.xlane.xlu0 %6052
        %v6054 = vmul.f32 %v6053, %v983
        %v6055 = vsub.f32 %v6048, %v6054
        %v6056 = vmul.f32 %v6055, %v6055
        %v6057 = vsel %vm979, %v6056, 0.0
        %6058 = vadd.xlane.f32.xlu0 %v6057
        %v6059 = vpop.xlane.xlu0 %6058
        %v6060 = vmul.f32 %v6059, 0.032258064
        %v6061 = vrsqrt.pop %v6060
        %v6062 = vmul.f32 %v6060, %v6061
        %vm6063 = vcmp.eq.f32.partialorder %v6060, inf
        %v6064 = vsel %vm6063, %v6060, %v6062
        %vm6065 = vcmp.eq.f32.partialorder %v6060, 0.0
        %v6066 = vand.u32 %v6060, 2147483648
        %v6067 = vsel %vm6065, %v6066, %v6064
        %v6068 = vadd.f32 %v6067, 1e-06
        %v6069 = vrcp.pop %v6068
        %v6070 = vlaneseq
        %v6071 = vshrl.u32 %v6070, 7
        %v6072 = vsub.s32 0, %v6071
        %v6073 = vrot.slane %v6050, %v6072
        %v6074 = vmul.f32 %v6073, %v6055
        %v6075 = vmul.f32 %v6074, %v6069
        %v6076 = vlaneseq
        %v6077 = vshrl.u32 %v6076, 7
        %v6078 = vsub.s32 1, %v6077
        %v6079 = vrot.slane %v6050, %v6078
        %v6080 = vadd.f32 %v6075, %v6079
        %s6081 = scalar_lea.vmem %s29, 32
        %v6082 = vld [vmem:[%s6081] sm:$0xff]
        %v6083 = vld [vmem:[%s6081 + $0x8] sm:$0xff]
        %v6084 = vld [vmem:[%s6081 + $0x10] sm:$0xff]
        %v6085 = vld [vmem:[%s6081 + $0x18] sm:$0xff]
        %s6086 = scalar_lea.vmem %s31, 1
        %v6087 = vld [vmem:[%s6086] sm:$0x1]
        %v6089 = vlaneseq
        %v6090 = vshrl.u32 %v6089, 7
        %v6091 = vsub.s32 0, %v6090
        %v6092 = vrot.slane %v6087, %v6091
        %v6095 = vsel %vm979, %v6080, 0
        %6097 = vmatprep.subr.mxu0 0.0
        %6098 = vmatpush1.msra.mxu0 0.0
        %6099 = vmatprep.subr.mxu0 0.0
        %6100 = vmatpush1.msra.mxu0 0.0
        %6101 = vmatprep.subr.mxu0 0.0
        %6102 = vmatpush1.msra.mxu0 0.0
        %6103 = vmatprep.subr.mxu0 0.0
        %6104 = vmatpush1.msra.mxu0 0.0
        %6105 = vmatprep.subr.mxu0 0.0
        %6106 = vmatpush1.msra.mxu0 0.0
        %6107 = vmatprep.subr.mxu0 0.0
        %6108 = vmatpush1.msra.mxu0 0.0
        %6109 = vmatprep.subr.mxu0 0.0
        %6110 = vmatpush1.msra.mxu0 0.0
        %6111 = vmatprep.subr.mxu0 0.0
        %6112 = vmatpush1.msra.mxu0 0.0
        %6113 = vmatprep.subr.mxu0 0.0
        %6114 = vmatpush1.msra.mxu0 0.0
        %6115 = vmatprep.subr.mxu0 0.0
        %6116 = vmatpush1.msra.mxu0 0.0
        %6117 = vmatprep.subr.mxu0 0.0
        %6118 = vmatpush1.msra.mxu0 0.0
        %6119 = vmatprep.subr.mxu0 0.0
        %6120 = vmatpush1.msra.mxu0 0.0
        %6121 = vmatprep.subr.mxu0 0.0
        %6122 = vmatpush1.msra.mxu0 %v6085
        %6123 = vmatprep.subr.mxu0 0.0
        %6124 = vmatpush1.msra.mxu0 %v6084
        %6125 = vmatprep.subr.mxu0 0.0
        %6126 = vmatpush1.msra.mxu0 %v6083
        %6127 = vmatprep.subr.mxu0 0.0
        %6128 = vmatpush1.msra.mxu0 %v6082
        %6129 = vmatprep.subr.mxu0 0.0
        %6130 = vmatpush2.msra.mxu0 0.0
        %6131 = vmatprep.subr.mxu0 0.0
        %6132 = vmatpush2.msra.mxu0 0.0
        %6133 = vmatprep.subr.mxu0 0.0
        %6134 = vmatpush2.msra.mxu0 0.0
        %6135 = vmatprep.subr.mxu0 0.0
        %6136 = vmatpush2.msra.mxu0 0.0
        %6137 = vmatprep.subr.mxu0 0.0
        %6138 = vmatpush2.msra.mxu0 0.0
        %6139 = vmatprep.subr.mxu0 0.0
        %6140 = vmatpush2.msra.mxu0 0.0
        %6141 = vmatprep.subr.mxu0 0.0
        %6142 = vmatpush2.msra.mxu0 0.0
        %6143 = vmatprep.subr.mxu0 0.0
        %6144 = vmatpush2.msra.mxu0 0.0
        %6145 = vmatprep.subr.mxu0 0.0
        %6146 = vmatpush2.msra.mxu0 0.0
        %6147 = vmatprep.subr.mxu0 0.0
        %6148 = vmatpush2.msra.mxu0 0.0
        %6149 = vmatprep.subr.mxu0 0.0
        %6150 = vmatpush2.msra.mxu0 0.0
        %6151 = vmatprep.subr.mxu0 0.0
        %6152 = vmatpush2.msra.mxu0 0.0
        %6153 = vmatprep.subr.mxu0 0.0
        %6154 = vmatpush2.msra.mxu0 0.0
        %6155 = vmatprep.subr.mxu0 0.0
        %6156 = vmatpush2.msra.mxu0 0.0
        %6157 = vmatprep.subr.mxu0 0.0
        %6158 = vmatpush2.msra.mxu0 0.0
        %6159 = vmatprep.subr.mxu0 0.0
        %6160 = vmatpush2.msra.mxu0 0.0
        %6161 = vmatprep.mubr.f32.mxu0 0.0
        %6162 = vmatmul.mubr.f32.gmra.mxu0 %v6095
        %v6163 = vpop.f32.mrf.mxu0
        %v6164 = vadd.f32 %v6092, %v6163
        %v6165 = vpop.f32.mrf.mxu0
        %6166 = vdwg.mxu0
        %s6167 = scalar_lea.vmem %s33, 32
        %v6168 = vld [vmem:[%s6167] sm:$0xff]
        %v6169 = vld [vmem:[%s6167 + $0x8] sm:$0xff]
        %v6170 = vld [vmem:[%s6167 + $0x10] sm:$0xff]
        %v6171 = vld [vmem:[%s6167 + $0x18] sm:$0xff]
        %s6172 = scalar_lea.vmem %s35, 1
        %v6173 = vld [vmem:[%s6172] sm:$0x1]
        %6175 = vrot.lane.b32.xlu0 %v6164, 96
        %v6176 = vpop.permute.xlu0 %6175
        %v6177 = vsel %vm1109, %v6164, 0
        %v6179 = vsel %vm1109, %v6176, 0
        %6181 = vmatprep.subr.mxu0 0.0
        %6182 = vmatpush1.xpose.msra.mxu0 0.0
        %6183 = vmatprep.subr.mxu0 0.0
        %6184 = vmatpush1.xpose.msra.mxu0 0.0
        %6185 = vmatprep.subr.mxu0 0.0
        %6186 = vmatpush1.xpose.msra.mxu0 0.0
        %6187 = vmatprep.subr.mxu0 0.0
        %6188 = vmatpush1.xpose.msra.mxu0 0.0
        %6189 = vmatprep.subr.mxu0 0.0
        %6190 = vmatpush1.xpose.msra.mxu0 0.0
        %6191 = vmatprep.subr.mxu0 0.0
        %6192 = vmatpush1.xpose.msra.mxu0 0.0
        %6193 = vmatprep.subr.mxu0 0.0
        %6194 = vmatpush1.xpose.msra.mxu0 0.0
        %6195 = vmatprep.subr.mxu0 0.0
        %6196 = vmatpush1.xpose.msra.mxu0 0.0
        %6197 = vmatprep.subr.mxu0 0.0
        %6198 = vmatpush1.xpose.msra.mxu0 0.0
        %6199 = vmatprep.subr.mxu0 0.0
        %6200 = vmatpush1.xpose.msra.mxu0 0.0
        %6201 = vmatprep.subr.mxu0 0.0
        %6202 = vmatpush1.xpose.msra.mxu0 0.0
        %6203 = vmatprep.subr.mxu0 0.0
        %6204 = vmatpush1.xpose.msra.mxu0 0.0
        %6205 = vmatprep.subr.mxu0 0.0
        %6206 = vmatpush1.xpose.msra.mxu0 0.0
        %6207 = vmatprep.subr.mxu0 0.0
        %6208 = vmatpush1.xpose.msra.mxu0 0.0
        %6209 = vmatprep.subr.mxu0 0.0
        %6210 = vmatpush1.xpose.msra.mxu0 0.0
        %6211 = vmatprep.subr.mxu0 0.0
        %6212 = vmatpush1.xpose.msra.mxu0 %v6179
        %6213 = vmatprep.subr.mxu0 0.0
        %6214 = vmatpush2.xpose.msra.mxu0 0.0
        %6215 = vmatprep.subr.mxu0 0.0
        %6216 = vmatpush2.xpose.msra.mxu0 0.0
        %6217 = vmatprep.subr.mxu0 0.0
        %6218 = vmatpush2.xpose.msra.mxu0 0.0
        %6219 = vmatprep.subr.mxu0 0.0
        %6220 = vmatpush2.xpose.msra.mxu0 0.0
        %6221 = vmatprep.subr.mxu0 0.0
        %6222 = vmatpush2.xpose.msra.mxu0 0.0
        %6223 = vmatprep.subr.mxu0 0.0
        %6224 = vmatpush2.xpose.msra.mxu0 0.0
        %6225 = vmatprep.subr.mxu0 0.0
        %6226 = vmatpush2.xpose.msra.mxu0 0.0
        %6227 = vmatprep.subr.mxu0 0.0
        %6228 = vmatpush2.xpose.msra.mxu0 0.0
        %6229 = vmatprep.subr.mxu0 0.0
        %6230 = vmatpush2.xpose.msra.mxu0 0.0
        %6231 = vmatprep.subr.mxu0 0.0
        %6232 = vmatpush2.xpose.msra.mxu0 0.0
        %6233 = vmatprep.subr.mxu0 0.0
        %6234 = vmatpush2.xpose.msra.mxu0 0.0
        %6235 = vmatprep.subr.mxu0 0.0
        %6236 = vmatpush2.xpose.msra.mxu0 0.0
        %6237 = vmatprep.subr.mxu0 0.0
        %6238 = vmatpush2.xpose.msra.mxu0 0.0
        %6239 = vmatprep.subr.mxu0 0.0
        %6240 = vmatpush2.xpose.msra.mxu0 0.0
        %6241 = vmatprep.subr.mxu0 0.0
        %6242 = vmatpush2.xpose.msra.mxu0 0.0
        %6243 = vmatprep.subr.mxu0 0.0
        %6244 = vmatpush2.xpose.msra.mxu0 0.0
        %6245 = vmatprep.mubr.f32.mxu0 0.0
        %6246 = vmatmul.mubr.f32.gmra.mxu0 %v6177
        %v6247 = vpop.f32.mrf.mxu0
        %v6248 = vadd.f32 %v977, %v6247
        %v6249 = vpop.f32.mrf.mxu0
        %6250 = vdwg.mxu0
        %v6251 = vsel %vm1109, %v6248, -inf
        %6252 = vmax.xlane.f32.xlu0 %v6251
        %v6253 = vpop.xlane.xlu0 %6252
        %v6254 = vsub.f32 %v6248, %v6253
        %v6255 = vmul.f32 %v6254, 1.442695
        %v6256 = vpow.pop %v6255
        %v6257 = vsel %vm1109, %v6256, 0.0
        %6258 = vadd.xlane.f32.xlu0 %v6257
        %v6259 = vpop.xlane.xlu0 %6258
        %v6260 = vrcp.pop %v6259
        %v6261 = vmul.f32 %v6256, %v6260
        %6262 = vrot.lane.b32.xlu0 %v6164, 64
        %v6263 = vpop.permute.xlu0 %6262
        %v6266 = vsel %vm1109, %v6261, 0
        %6268 = vmatprep.subr.mxu0 0.0
        %6269 = vmatpush1.msra.mxu0 0.0
        %6270 = vmatprep.subr.mxu0 0.0
        %6271 = vmatpush1.msra.mxu0 0.0
        %6272 = vmatprep.subr.mxu0 0.0
        %6273 = vmatpush1.msra.mxu0 0.0
        %6274 = vmatprep.subr.mxu0 0.0
        %6275 = vmatpush1.msra.mxu0 0.0
        %6276 = vmatprep.subr.mxu0 0.0
        %6277 = vmatpush1.msra.mxu0 0.0
        %6278 = vmatprep.subr.mxu0 0.0
        %6279 = vmatpush1.msra.mxu0 0.0
        %6280 = vmatprep.subr.mxu0 0.0
        %6281 = vmatpush1.msra.mxu0 0.0
        %6282 = vmatprep.subr.mxu0 0.0
        %6283 = vmatpush1.msra.mxu0 0.0
        %6284 = vmatprep.subr.mxu0 0.0
        %6285 = vmatpush1.msra.mxu0 0.0
        %6286 = vmatprep.subr.mxu0 0.0
        %6287 = vmatpush1.msra.mxu0 0.0
        %6288 = vmatprep.subr.mxu0 0.0
        %6289 = vmatpush1.msra.mxu0 0.0
        %6290 = vmatprep.subr.mxu0 0.0
        %6291 = vmatpush1.msra.mxu0 0.0
        %6292 = vmatprep.subr.mxu0 0.0
        %6293 = vmatpush1.msra.mxu0 0.0
        %6294 = vmatprep.subr.mxu0 0.0
        %6295 = vmatpush1.msra.mxu0 0.0
        %6296 = vmatprep.subr.mxu0 0.0
        %6297 = vmatpush1.msra.mxu0 0.0
        %6298 = vmatprep.subr.mxu0 0.0
        %6299 = vmatpush1.msra.mxu0 %v6263
        %6300 = vmatprep.subr.mxu0 0.0
        %6301 = vmatpush2.msra.mxu0 0.0
        %6302 = vmatprep.subr.mxu0 0.0
        %6303 = vmatpush2.msra.mxu0 0.0
        %6304 = vmatprep.subr.mxu0 0.0
        %6305 = vmatpush2.msra.mxu0 0.0
        %6306 = vmatprep.subr.mxu0 0.0
        %6307 = vmatpush2.msra.mxu0 0.0
        %6308 = vmatprep.subr.mxu0 0.0
        %6309 = vmatpush2.msra.mxu0 0.0
        %6310 = vmatprep.subr.mxu0 0.0
        %6311 = vmatpush2.msra.mxu0 0.0
        %6312 = vmatprep.subr.mxu0 0.0
        %6313 = vmatpush2.msra.mxu0 0.0
        %6314 = vmatprep.subr.mxu0 0.0
        %6315 = vmatpush2.msra.mxu0 0.0
        %6316 = vmatprep.subr.mxu0 0.0
        %6317 = vmatpush2.msra.mxu0 0.0
        %6318 = vmatprep.subr.mxu0 0.0
        %6319 = vmatpush2.msra.mxu0 0.0
        %6320 = vmatprep.subr.mxu0 0.0
        %6321 = vmatpush2.msra.mxu0 0.0
        %6322 = vmatprep.subr.mxu0 0.0
        %6323 = vmatpush2.msra.mxu0 0.0
        %6324 = vmatprep.subr.mxu0 0.0
        %6325 = vmatpush2.msra.mxu0 0.0
        %6326 = vmatprep.subr.mxu0 0.0
        %6327 = vmatpush2.msra.mxu0 0.0
        %6328 = vmatprep.subr.mxu0 0.0
        %6329 = vmatpush2.msra.mxu0 0.0
        %6330 = vmatprep.subr.mxu0 0.0
        %6331 = vmatpush2.msra.mxu0 0.0
        %6332 = vmatprep.mubr.f32.mxu0 0.0
        %6333 = vmatmul.mubr.f32.gmra.mxu0 %v6266
        %v6334 = vpop.f32.mrf.mxu0
        %v6335 = vadd.f32 0.0, %v6334
        %v6336 = vpop.f32.mrf.mxu0
        %6337 = vdwg.mxu0
        %6338 = vrot.lane.b32.xlu0 %v6164, 120
        %v6339 = vpop.permute.xlu0 %6338
        %6340 = vrot.lane.b32.xlu0 %v6164, 88
        %v6341 = vpop.permute.xlu0 %6340
        %v6342 = vsel %vm1109, %v6339, 0
        %v6344 = vsel %vm1109, %v6341, 0
        %6346 = vmatprep.subr.mxu0 0.0
        %6347 = vmatpush1.xpose.msra.mxu0 0.0
        %6348 = vmatprep.subr.mxu0 0.0
        %6349 = vmatpush1.xpose.msra.mxu0 0.0
        %6350 = vmatprep.subr.mxu0 0.0
        %6351 = vmatpush1.xpose.msra.mxu0 0.0
        %6352 = vmatprep.subr.mxu0 0.0
        %6353 = vmatpush1.xpose.msra.mxu0 0.0
        %6354 = vmatprep.subr.mxu0 0.0
        %6355 = vmatpush1.xpose.msra.mxu0 0.0
        %6356 = vmatprep.subr.mxu0 0.0
        %6357 = vmatpush1.xpose.msra.mxu0 0.0
        %6358 = vmatprep.subr.mxu0 0.0
        %6359 = vmatpush1.xpose.msra.mxu0 0.0
        %6360 = vmatprep.subr.mxu0 0.0
        %6361 = vmatpush1.xpose.msra.mxu0 0.0
        %6362 = vmatprep.subr.mxu0 0.0
        %6363 = vmatpush1.xpose.msra.mxu0 0.0
        %6364 = vmatprep.subr.mxu0 0.0
        %6365 = vmatpush1.xpose.msra.mxu0 0.0
        %6366 = vmatprep.subr.mxu0 0.0
        %6367 = vmatpush1.xpose.msra.mxu0 0.0
        %6368 = vmatprep.subr.mxu0 0.0
        %6369 = vmatpush1.xpose.msra.mxu0 0.0
        %6370 = vmatprep.subr.mxu0 0.0
        %6371 = vmatpush1.xpose.msra.mxu0 0.0
        %6372 = vmatprep.subr.mxu0 0.0
        %6373 = vmatpush1.xpose.msra.mxu0 0.0
        %6374 = vmatprep.subr.mxu0 0.0
        %6375 = vmatpush1.xpose.msra.mxu0 0.0
        %6376 = vmatprep.subr.mxu0 0.0
        %6377 = vmatpush1.xpose.msra.mxu0 %v6344
        %6378 = vmatprep.subr.mxu0 0.0
        %6379 = vmatpush2.xpose.msra.mxu0 0.0
        %6380 = vmatprep.subr.mxu0 0.0
        %6381 = vmatpush2.xpose.msra.mxu0 0.0
        %6382 = vmatprep.subr.mxu0 0.0
        %6383 = vmatpush2.xpose.msra.mxu0 0.0
        %6384 = vmatprep.subr.mxu0 0.0
        %6385 = vmatpush2.xpose.msra.mxu0 0.0
        %6386 = vmatprep.subr.mxu0 0.0
        %6387 = vmatpush2.xpose.msra.mxu0 0.0
        %6388 = vmatprep.subr.mxu0 0.0
        %6389 = vmatpush2.xpose.msra.mxu0 0.0
        %6390 = vmatprep.subr.mxu0 0.0
        %6391 = vmatpush2.xpose.msra.mxu0 0.0
        %6392 = vmatprep.subr.mxu0 0.0
        %6393 = vmatpush2.xpose.msra.mxu0 0.0
        %6394 = vmatprep.subr.mxu0 0.0
        %6395 = vmatpush2.xpose.msra.mxu0 0.0
        %6396 = vmatprep.subr.mxu0 0.0
        %6397 = vmatpush2.xpose.msra.mxu0 0.0
        %6398 = vmatprep.subr.mxu0 0.0
        %6399 = vmatpush2.xpose.msra.mxu0 0.0
        %6400 = vmatprep.subr.mxu0 0.0
        %6401 = vmatpush2.xpose.msra.mxu0 0.0
        %6402 = vmatprep.subr.mxu0 0.0
        %6403 = vmatpush2.xpose.msra.mxu0 0.0
        %6404 = vmatprep.subr.mxu0 0.0
        %6405 = vmatpush2.xpose.msra.mxu0 0.0
        %6406 = vmatprep.subr.mxu0 0.0
        %6407 = vmatpush2.xpose.msra.mxu0 0.0
        %6408 = vmatprep.subr.mxu0 0.0
        %6409 = vmatpush2.xpose.msra.mxu0 0.0
        %6410 = vmatprep.mubr.f32.mxu0 0.0
        %6411 = vmatmul.mubr.f32.gmra.mxu0 %v6342
        %v6412 = vpop.f32.mrf.mxu0
        %v6413 = vadd.f32 %v977, %v6412
        %v6414 = vpop.f32.mrf.mxu0
        %6415 = vdwg.mxu0
        %v6416 = vsel %vm1109, %v6413, -inf
        %6417 = vmax.xlane.f32.xlu0 %v6416
        %v6418 = vpop.xlane.xlu0 %6417
        %v6419 = vsub.f32 %v6413, %v6418
        %v6420 = vmul.f32 %v6419, 1.442695
        %v6421 = vpow.pop %v6420
        %v6422 = vsel %vm1109, %v6421, 0.0
        %6423 = vadd.xlane.f32.xlu0 %v6422
        %v6424 = vpop.xlane.xlu0 %6423
        %v6425 = vrcp.pop %v6424
        %v6426 = vmul.f32 %v6421, %v6425
        %6427 = vrot.lane.b32.xlu0 %v6164, 56
        %v6428 = vpop.permute.xlu0 %6427
        %v6431 = vsel %vm1109, %v6426, 0
        %6433 = vmatprep.subr.mxu0 0.0
        %6434 = vmatpush1.msra.mxu0 0.0
        %6435 = vmatprep.subr.mxu0 0.0
        %6436 = vmatpush1.msra.mxu0 0.0
        %6437 = vmatprep.subr.mxu0 0.0
        %6438 = vmatpush1.msra.mxu0 0.0
        %6439 = vmatprep.subr.mxu0 0.0
        %6440 = vmatpush1.msra.mxu0 0.0
        %6441 = vmatprep.subr.mxu0 0.0
        %6442 = vmatpush1.msra.mxu0 0.0
        %6443 = vmatprep.subr.mxu0 0.0
        %6444 = vmatpush1.msra.mxu0 0.0
        %6445 = vmatprep.subr.mxu0 0.0
        %6446 = vmatpush1.msra.mxu0 0.0
        %6447 = vmatprep.subr.mxu0 0.0
        %6448 = vmatpush1.msra.mxu0 0.0
        %6449 = vmatprep.subr.mxu0 0.0
        %6450 = vmatpush1.msra.mxu0 0.0
        %6451 = vmatprep.subr.mxu0 0.0
        %6452 = vmatpush1.msra.mxu0 0.0
        %6453 = vmatprep.subr.mxu0 0.0
        %6454 = vmatpush1.msra.mxu0 0.0
        %6455 = vmatprep.subr.mxu0 0.0
        %6456 = vmatpush1.msra.mxu0 0.0
        %6457 = vmatprep.subr.mxu0 0.0
        %6458 = vmatpush1.msra.mxu0 0.0
        %6459 = vmatprep.subr.mxu0 0.0
        %6460 = vmatpush1.msra.mxu0 0.0
        %6461 = vmatprep.subr.mxu0 0.0
        %6462 = vmatpush1.msra.mxu0 0.0
        %6463 = vmatprep.subr.mxu0 0.0
        %6464 = vmatpush1.msra.mxu0 %v6428
        %6465 = vmatprep.subr.mxu0 0.0
        %6466 = vmatpush2.msra.mxu0 0.0
        %6467 = vmatprep.subr.mxu0 0.0
        %6468 = vmatpush2.msra.mxu0 0.0
        %6469 = vmatprep.subr.mxu0 0.0
        %6470 = vmatpush2.msra.mxu0 0.0
        %6471 = vmatprep.subr.mxu0 0.0
        %6472 = vmatpush2.msra.mxu0 0.0
        %6473 = vmatprep.subr.mxu0 0.0
        %6474 = vmatpush2.msra.mxu0 0.0
        %6475 = vmatprep.subr.mxu0 0.0
        %6476 = vmatpush2.msra.mxu0 0.0
        %6477 = vmatprep.subr.mxu0 0.0
        %6478 = vmatpush2.msra.mxu0 0.0
        %6479 = vmatprep.subr.mxu0 0.0
        %6480 = vmatpush2.msra.mxu0 0.0
        %6481 = vmatprep.subr.mxu0 0.0
        %6482 = vmatpush2.msra.mxu0 0.0
        %6483 = vmatprep.subr.mxu0 0.0
        %6484 = vmatpush2.msra.mxu0 0.0
        %6485 = vmatprep.subr.mxu0 0.0
        %6486 = vmatpush2.msra.mxu0 0.0
        %6487 = vmatprep.subr.mxu0 0.0
        %6488 = vmatpush2.msra.mxu0 0.0
        %6489 = vmatprep.subr.mxu0 0.0
        %6490 = vmatpush2.msra.mxu0 0.0
        %6491 = vmatprep.subr.mxu0 0.0
        %6492 = vmatpush2.msra.mxu0 0.0
        %6493 = vmatprep.subr.mxu0 0.0
        %6494 = vmatpush2.msra.mxu0 0.0
        %6495 = vmatprep.subr.mxu0 0.0
        %6496 = vmatpush2.msra.mxu0 0.0
        %6497 = vmatprep.mubr.f32.mxu0 0.0
        %6498 = vmatmul.mubr.f32.gmra.mxu0 %v6431
        %v6499 = vpop.f32.mrf.mxu0
        %v6500 = vadd.f32 0.0, %v6499
        %v6501 = vpop.f32.mrf.mxu0
        %6502 = vdwg.mxu0
        %v6504 = vsel %vm1109, %v6500, 0
        %6506 = vmatprep.subr.mxu0 0.0
        %6507 = vmatpush1.msra.mxu0 0.0
        %6508 = vmatprep.subr.mxu0 0.0
        %6509 = vmatpush1.msra.mxu0 0.0
        %6510 = vmatprep.subr.mxu0 0.0
        %6511 = vmatpush1.msra.mxu0 0.0
        %6512 = vmatprep.subr.mxu0 0.0
        %6513 = vmatpush1.msra.mxu0 0.0
        %6514 = vmatprep.subr.mxu0 0.0
        %6515 = vmatpush1.msra.mxu0 0.0
        %6516 = vmatprep.subr.mxu0 0.0
        %6517 = vmatpush1.msra.mxu0 0.0
        %6518 = vmatprep.subr.mxu0 0.0
        %6519 = vmatpush1.msra.mxu0 0.0
        %6520 = vmatprep.subr.mxu0 0.0
        %6521 = vmatpush1.msra.mxu0 0.0
        %6522 = vmatprep.subr.mxu0 0.0
        %6523 = vmatpush1.msra.mxu0 0.0
        %6524 = vmatprep.subr.mxu0 0.0
        %6525 = vmatpush1.msra.mxu0 0.0
        %6526 = vmatprep.subr.mxu0 0.0
        %6527 = vmatpush1.msra.mxu0 0.0
        %6528 = vmatprep.subr.mxu0 0.0
        %6529 = vmatpush1.msra.mxu0 0.0
        %6530 = vmatprep.subr.mxu0 0.0
        %6531 = vmatpush1.msra.mxu0 0.0
        %6532 = vmatprep.subr.mxu0 0.0
        %6533 = vmatpush1.msra.mxu0 0.0
        %6534 = vmatprep.subr.mxu0 0.0
        %6535 = vmatpush1.msra.mxu0 0.0
        %6536 = vmatprep.subr.mxu0 0.0
        %6537 = vmatpush1.msra.mxu0 %v6169
        %6538 = vmatprep.subr.mxu0 0.0
        %6539 = vmatpush2.msra.mxu0 0.0
        %6540 = vmatprep.subr.mxu0 0.0
        %6541 = vmatpush2.msra.mxu0 0.0
        %6542 = vmatprep.subr.mxu0 0.0
        %6543 = vmatpush2.msra.mxu0 0.0
        %6544 = vmatprep.subr.mxu0 0.0
        %6545 = vmatpush2.msra.mxu0 0.0
        %6546 = vmatprep.subr.mxu0 0.0
        %6547 = vmatpush2.msra.mxu0 0.0
        %6548 = vmatprep.subr.mxu0 0.0
        %6549 = vmatpush2.msra.mxu0 0.0
        %6550 = vmatprep.subr.mxu0 0.0
        %6551 = vmatpush2.msra.mxu0 0.0
        %6552 = vmatprep.subr.mxu0 0.0
        %6553 = vmatpush2.msra.mxu0 0.0
        %6554 = vmatprep.subr.mxu0 0.0
        %6555 = vmatpush2.msra.mxu0 0.0
        %6556 = vmatprep.subr.mxu0 0.0
        %6557 = vmatpush2.msra.mxu0 0.0
        %6558 = vmatprep.subr.mxu0 0.0
        %6559 = vmatpush2.msra.mxu0 0.0
        %6560 = vmatprep.subr.mxu0 0.0
        %6561 = vmatpush2.msra.mxu0 0.0
        %6562 = vmatprep.subr.mxu0 0.0
        %6563 = vmatpush2.msra.mxu0 0.0
        %6564 = vmatprep.subr.mxu0 0.0
        %6565 = vmatpush2.msra.mxu0 0.0
        %6566 = vmatprep.subr.mxu0 0.0
        %6567 = vmatpush2.msra.mxu0 0.0
        %6568 = vmatprep.subr.mxu0 0.0
        %6569 = vmatpush2.msra.mxu0 0.0
        %6570 = vmatprep.mubr.f32.mxu0 0.0
        %6571 = vmatmul.mubr.f32.gmra.mxu0 %v6504
        %v6572 = vpop.f32.mrf.mxu0
        %v6573 = vadd.f32 0.0, %v6572
        %v6574 = vpop.f32.mrf.mxu0
        %6575 = vdwg.mxu0
        %v6577 = vsel %vm1109, %v6335, 0
        %6579 = vmatprep.subr.mxu0 0.0
        %6580 = vmatpush1.msra.mxu0 0.0
        %6581 = vmatprep.subr.mxu0 0.0
        %6582 = vmatpush1.msra.mxu0 0.0
        %6583 = vmatprep.subr.mxu0 0.0
        %6584 = vmatpush1.msra.mxu0 0.0
        %6585 = vmatprep.subr.mxu0 0.0
        %6586 = vmatpush1.msra.mxu0 0.0
        %6587 = vmatprep.subr.mxu0 0.0
        %6588 = vmatpush1.msra.mxu0 0.0
        %6589 = vmatprep.subr.mxu0 0.0
        %6590 = vmatpush1.msra.mxu0 0.0
        %6591 = vmatprep.subr.mxu0 0.0
        %6592 = vmatpush1.msra.mxu0 0.0
        %6593 = vmatprep.subr.mxu0 0.0
        %6594 = vmatpush1.msra.mxu0 0.0
        %6595 = vmatprep.subr.mxu0 0.0
        %6596 = vmatpush1.msra.mxu0 0.0
        %6597 = vmatprep.subr.mxu0 0.0
        %6598 = vmatpush1.msra.mxu0 0.0
        %6599 = vmatprep.subr.mxu0 0.0
        %6600 = vmatpush1.msra.mxu0 0.0
        %6601 = vmatprep.subr.mxu0 0.0
        %6602 = vmatpush1.msra.mxu0 0.0
        %6603 = vmatprep.subr.mxu0 0.0
        %6604 = vmatpush1.msra.mxu0 0.0
        %6605 = vmatprep.subr.mxu0 0.0
        %6606 = vmatpush1.msra.mxu0 0.0
        %6607 = vmatprep.subr.mxu0 0.0
        %6608 = vmatpush1.msra.mxu0 0.0
        %6609 = vmatprep.subr.mxu0 0.0
        %6610 = vmatpush1.msra.mxu0 %v6168
        %6611 = vmatprep.subr.mxu0 0.0
        %6612 = vmatpush2.msra.mxu0 0.0
        %6613 = vmatprep.subr.mxu0 0.0
        %6614 = vmatpush2.msra.mxu0 0.0
        %6615 = vmatprep.subr.mxu0 0.0
        %6616 = vmatpush2.msra.mxu0 0.0
        %6617 = vmatprep.subr.mxu0 0.0
        %6618 = vmatpush2.msra.mxu0 0.0
        %6619 = vmatprep.subr.mxu0 0.0
        %6620 = vmatpush2.msra.mxu0 0.0
        %6621 = vmatprep.subr.mxu0 0.0
        %6622 = vmatpush2.msra.mxu0 0.0
        %6623 = vmatprep.subr.mxu0 0.0
        %6624 = vmatpush2.msra.mxu0 0.0
        %6625 = vmatprep.subr.mxu0 0.0
        %6626 = vmatpush2.msra.mxu0 0.0
        %6627 = vmatprep.subr.mxu0 0.0
        %6628 = vmatpush2.msra.mxu0 0.0
        %6629 = vmatprep.subr.mxu0 0.0
        %6630 = vmatpush2.msra.mxu0 0.0
        %6631 = vmatprep.subr.mxu0 0.0
        %6632 = vmatpush2.msra.mxu0 0.0
        %6633 = vmatprep.subr.mxu0 0.0
        %6634 = vmatpush2.msra.mxu0 0.0
        %6635 = vmatprep.subr.mxu0 0.0
        %6636 = vmatpush2.msra.mxu0 0.0
        %6637 = vmatprep.subr.mxu0 0.0
        %6638 = vmatpush2.msra.mxu0 0.0
        %6639 = vmatprep.subr.mxu0 0.0
        %6640 = vmatpush2.msra.mxu0 0.0
        %6641 = vmatprep.subr.mxu0 0.0
        %6642 = vmatpush2.msra.mxu0 0.0
        %6643 = vmatprep.mubr.f32.mxu0 0.0
        %6644 = vmatmul.mubr.f32.gmra.mxu0 %v6577
        %v6645 = vpop.f32.mrf.mxu0
        %v6646 = vadd.f32 %v6573, %v6645
        %v6647 = vpop.f32.mrf.mxu0
        %6648 = vdwg.mxu0
        %6649 = vrot.lane.b32.xlu0 %v6164, 112
        %v6650 = vpop.permute.xlu0 %6649
        %6651 = vrot.lane.b32.xlu0 %v6164, 80
        %v6652 = vpop.permute.xlu0 %6651
        %v6653 = vsel %vm1109, %v6650, 0
        %v6655 = vsel %vm1109, %v6652, 0
        %6657 = vmatprep.subr.mxu0 0.0
        %6658 = vmatpush1.xpose.msra.mxu0 0.0
        %6659 = vmatprep.subr.mxu0 0.0
        %6660 = vmatpush1.xpose.msra.mxu0 0.0
        %6661 = vmatprep.subr.mxu0 0.0
        %6662 = vmatpush1.xpose.msra.mxu0 0.0
        %6663 = vmatprep.subr.mxu0 0.0
        %6664 = vmatpush1.xpose.msra.mxu0 0.0
        %6665 = vmatprep.subr.mxu0 0.0
        %6666 = vmatpush1.xpose.msra.mxu0 0.0
        %6667 = vmatprep.subr.mxu0 0.0
        %6668 = vmatpush1.xpose.msra.mxu0 0.0
        %6669 = vmatprep.subr.mxu0 0.0
        %6670 = vmatpush1.xpose.msra.mxu0 0.0
        %6671 = vmatprep.subr.mxu0 0.0
        %6672 = vmatpush1.xpose.msra.mxu0 0.0
        %6673 = vmatprep.subr.mxu0 0.0
        %6674 = vmatpush1.xpose.msra.mxu0 0.0
        %6675 = vmatprep.subr.mxu0 0.0
        %6676 = vmatpush1.xpose.msra.mxu0 0.0
        %6677 = vmatprep.subr.mxu0 0.0
        %6678 = vmatpush1.xpose.msra.mxu0 0.0
        %6679 = vmatprep.subr.mxu0 0.0
        %6680 = vmatpush1.xpose.msra.mxu0 0.0
        %6681 = vmatprep.subr.mxu0 0.0
        %6682 = vmatpush1.xpose.msra.mxu0 0.0
        %6683 = vmatprep.subr.mxu0 0.0
        %6684 = vmatpush1.xpose.msra.mxu0 0.0
        %6685 = vmatprep.subr.mxu0 0.0
        %6686 = vmatpush1.xpose.msra.mxu0 0.0
        %6687 = vmatprep.subr.mxu0 0.0
        %6688 = vmatpush1.xpose.msra.mxu0 %v6655
        %6689 = vmatprep.subr.mxu0 0.0
        %6690 = vmatpush2.xpose.msra.mxu0 0.0
        %6691 = vmatprep.subr.mxu0 0.0
        %6692 = vmatpush2.xpose.msra.mxu0 0.0
        %6693 = vmatprep.subr.mxu0 0.0
        %6694 = vmatpush2.xpose.msra.mxu0 0.0
        %6695 = vmatprep.subr.mxu0 0.0
        %6696 = vmatpush2.xpose.msra.mxu0 0.0
        %6697 = vmatprep.subr.mxu0 0.0
        %6698 = vmatpush2.xpose.msra.mxu0 0.0
        %6699 = vmatprep.subr.mxu0 0.0
        %6700 = vmatpush2.xpose.msra.mxu0 0.0
        %6701 = vmatprep.subr.mxu0 0.0
        %6702 = vmatpush2.xpose.msra.mxu0 0.0
        %6703 = vmatprep.subr.mxu0 0.0
        %6704 = vmatpush2.xpose.msra.mxu0 0.0
        %6705 = vmatprep.subr.mxu0 0.0
        %6706 = vmatpush2.xpose.msra.mxu0 0.0
        %6707 = vmatprep.subr.mxu0 0.0
        %6708 = vmatpush2.xpose.msra.mxu0 0.0
        %6709 = vmatprep.subr.mxu0 0.0
        %6710 = vmatpush2.xpose.msra.mxu0 0.0
        %6711 = vmatprep.subr.mxu0 0.0
        %6712 = vmatpush2.xpose.msra.mxu0 0.0
        %6713 = vmatprep.subr.mxu0 0.0
        %6714 = vmatpush2.xpose.msra.mxu0 0.0
        %6715 = vmatprep.subr.mxu0 0.0
        %6716 = vmatpush2.xpose.msra.mxu0 0.0
        %6717 = vmatprep.subr.mxu0 0.0
        %6718 = vmatpush2.xpose.msra.mxu0 0.0
        %6719 = vmatprep.subr.mxu0 0.0
        %6720 = vmatpush2.xpose.msra.mxu0 0.0
        %6721 = vmatprep.mubr.f32.mxu0 0.0
        %6722 = vmatmul.mubr.f32.gmra.mxu0 %v6653
        %v6723 = vpop.f32.mrf.mxu0
        %v6724 = vadd.f32 %v977, %v6723
        %v6725 = vpop.f32.mrf.mxu0
        %6726 = vdwg.mxu0
        %v6727 = vsel %vm1109, %v6724, -inf
        %6728 = vmax.xlane.f32.xlu0 %v6727
        %v6729 = vpop.xlane.xlu0 %6728
        %v6730 = vsub.f32 %v6724, %v6729
        %v6731 = vmul.f32 %v6730, 1.442695
        %v6732 = vpow.pop %v6731
        %v6733 = vsel %vm1109, %v6732, 0.0
        %6734 = vadd.xlane.f32.xlu0 %v6733
        %v6735 = vpop.xlane.xlu0 %6734
        %v6736 = vrcp.pop %v6735
        %v6737 = vmul.f32 %v6732, %v6736
        %6738 = vrot.lane.b32.xlu0 %v6164, 48
        %v6739 = vpop.permute.xlu0 %6738
        %v6742 = vsel %vm1109, %v6737, 0
        %6744 = vmatprep.subr.mxu0 0.0
        %6745 = vmatpush1.msra.mxu0 0.0
        %6746 = vmatprep.subr.mxu0 0.0
        %6747 = vmatpush1.msra.mxu0 0.0
        %6748 = vmatprep.subr.mxu0 0.0
        %6749 = vmatpush1.msra.mxu0 0.0
        %6750 = vmatprep.subr.mxu0 0.0
        %6751 = vmatpush1.msra.mxu0 0.0
        %6752 = vmatprep.subr.mxu0 0.0
        %6753 = vmatpush1.msra.mxu0 0.0
        %6754 = vmatprep.subr.mxu0 0.0
        %6755 = vmatpush1.msra.mxu0 0.0
        %6756 = vmatprep.subr.mxu0 0.0
        %6757 = vmatpush1.msra.mxu0 0.0
        %6758 = vmatprep.subr.mxu0 0.0
        %6759 = vmatpush1.msra.mxu0 0.0
        %6760 = vmatprep.subr.mxu0 0.0
        %6761 = vmatpush1.msra.mxu0 0.0
        %6762 = vmatprep.subr.mxu0 0.0
        %6763 = vmatpush1.msra.mxu0 0.0
        %6764 = vmatprep.subr.mxu0 0.0
        %6765 = vmatpush1.msra.mxu0 0.0
        %6766 = vmatprep.subr.mxu0 0.0
        %6767 = vmatpush1.msra.mxu0 0.0
        %6768 = vmatprep.subr.mxu0 0.0
        %6769 = vmatpush1.msra.mxu0 0.0
        %6770 = vmatprep.subr.mxu0 0.0
        %6771 = vmatpush1.msra.mxu0 0.0
        %6772 = vmatprep.subr.mxu0 0.0
        %6773 = vmatpush1.msra.mxu0 0.0
        %6774 = vmatprep.subr.mxu0 0.0
        %6775 = vmatpush1.msra.mxu0 %v6739
        %6776 = vmatprep.subr.mxu0 0.0
        %6777 = vmatpush2.msra.mxu0 0.0
        %6778 = vmatprep.subr.mxu0 0.0
        %6779 = vmatpush2.msra.mxu0 0.0
        %6780 = vmatprep.subr.mxu0 0.0
        %6781 = vmatpush2.msra.mxu0 0.0
        %6782 = vmatprep.subr.mxu0 0.0
        %6783 = vmatpush2.msra.mxu0 0.0
        %6784 = vmatprep.subr.mxu0 0.0
        %6785 = vmatpush2.msra.mxu0 0.0
        %6786 = vmatprep.subr.mxu0 0.0
        %6787 = vmatpush2.msra.mxu0 0.0
        %6788 = vmatprep.subr.mxu0 0.0
        %6789 = vmatpush2.msra.mxu0 0.0
        %6790 = vmatprep.subr.mxu0 0.0
        %6791 = vmatpush2.msra.mxu0 0.0
        %6792 = vmatprep.subr.mxu0 0.0
        %6793 = vmatpush2.msra.mxu0 0.0
        %6794 = vmatprep.subr.mxu0 0.0
        %6795 = vmatpush2.msra.mxu0 0.0
        %6796 = vmatprep.subr.mxu0 0.0
        %6797 = vmatpush2.msra.mxu0 0.0
        %6798 = vmatprep.subr.mxu0 0.0
        %6799 = vmatpush2.msra.mxu0 0.0
        %6800 = vmatprep.subr.mxu0 0.0
        %6801 = vmatpush2.msra.mxu0 0.0
        %6802 = vmatprep.subr.mxu0 0.0
        %6803 = vmatpush2.msra.mxu0 0.0
        %6804 = vmatprep.subr.mxu0 0.0
        %6805 = vmatpush2.msra.mxu0 0.0
        %6806 = vmatprep.subr.mxu0 0.0
        %6807 = vmatpush2.msra.mxu0 0.0
        %6808 = vmatprep.mubr.f32.mxu0 0.0
        %6809 = vmatmul.mubr.f32.gmra.mxu0 %v6742
        %v6810 = vpop.f32.mrf.mxu0
        %v6811 = vadd.f32 0.0, %v6810
        %v6812 = vpop.f32.mrf.mxu0
        %6813 = vdwg.mxu0
        %v6815 = vsel %vm1109, %v6811, 0
        %6817 = vmatprep.subr.mxu0 0.0
        %6818 = vmatpush1.msra.mxu0 0.0
        %6819 = vmatprep.subr.mxu0 0.0
        %6820 = vmatpush1.msra.mxu0 0.0
        %6821 = vmatprep.subr.mxu0 0.0
        %6822 = vmatpush1.msra.mxu0 0.0
        %6823 = vmatprep.subr.mxu0 0.0
        %6824 = vmatpush1.msra.mxu0 0.0
        %6825 = vmatprep.subr.mxu0 0.0
        %6826 = vmatpush1.msra.mxu0 0.0
        %6827 = vmatprep.subr.mxu0 0.0
        %6828 = vmatpush1.msra.mxu0 0.0
        %6829 = vmatprep.subr.mxu0 0.0
        %6830 = vmatpush1.msra.mxu0 0.0
        %6831 = vmatprep.subr.mxu0 0.0
        %6832 = vmatpush1.msra.mxu0 0.0
        %6833 = vmatprep.subr.mxu0 0.0
        %6834 = vmatpush1.msra.mxu0 0.0
        %6835 = vmatprep.subr.mxu0 0.0
        %6836 = vmatpush1.msra.mxu0 0.0
        %6837 = vmatprep.subr.mxu0 0.0
        %6838 = vmatpush1.msra.mxu0 0.0
        %6839 = vmatprep.subr.mxu0 0.0
        %6840 = vmatpush1.msra.mxu0 0.0
        %6841 = vmatprep.subr.mxu0 0.0
        %6842 = vmatpush1.msra.mxu0 0.0
        %6843 = vmatprep.subr.mxu0 0.0
        %6844 = vmatpush1.msra.mxu0 0.0
        %6845 = vmatprep.subr.mxu0 0.0
        %6846 = vmatpush1.msra.mxu0 0.0
        %6847 = vmatprep.subr.mxu0 0.0
        %6848 = vmatpush1.msra.mxu0 %v6170
        %6849 = vmatprep.subr.mxu0 0.0
        %6850 = vmatpush2.msra.mxu0 0.0
        %6851 = vmatprep.subr.mxu0 0.0
        %6852 = vmatpush2.msra.mxu0 0.0
        %6853 = vmatprep.subr.mxu0 0.0
        %6854 = vmatpush2.msra.mxu0 0.0
        %6855 = vmatprep.subr.mxu0 0.0
        %6856 = vmatpush2.msra.mxu0 0.0
        %6857 = vmatprep.subr.mxu0 0.0
        %6858 = vmatpush2.msra.mxu0 0.0
        %6859 = vmatprep.subr.mxu0 0.0
        %6860 = vmatpush2.msra.mxu0 0.0
        %6861 = vmatprep.subr.mxu0 0.0
        %6862 = vmatpush2.msra.mxu0 0.0
        %6863 = vmatprep.subr.mxu0 0.0
        %6864 = vmatpush2.msra.mxu0 0.0
        %6865 = vmatprep.subr.mxu0 0.0
        %6866 = vmatpush2.msra.mxu0 0.0
        %6867 = vmatprep.subr.mxu0 0.0
        %6868 = vmatpush2.msra.mxu0 0.0
        %6869 = vmatprep.subr.mxu0 0.0
        %6870 = vmatpush2.msra.mxu0 0.0
        %6871 = vmatprep.subr.mxu0 0.0
        %6872 = vmatpush2.msra.mxu0 0.0
        %6873 = vmatprep.subr.mxu0 0.0
        %6874 = vmatpush2.msra.mxu0 0.0
        %6875 = vmatprep.subr.mxu0 0.0
        %6876 = vmatpush2.msra.mxu0 0.0
        %6877 = vmatprep.subr.mxu0 0.0
        %6878 = vmatpush2.msra.mxu0 0.0
        %6879 = vmatprep.subr.mxu0 0.0
        %6880 = vmatpush2.msra.mxu0 0.0
        %6881 = vmatprep.mubr.f32.mxu0 0.0
        %6882 = vmatmul.mubr.f32.gmra.mxu0 %v6815
        %v6883 = vpop.f32.mrf.mxu0
        %v6884 = vadd.f32 0.0, %v6883
        %v6885 = vpop.f32.mrf.mxu0
        %6886 = vdwg.mxu0
        %v6887 = vadd.f32 %v6646, %v6884
        %6888 = vrot.lane.b32.xlu0 %v6164, 104
        %v6889 = vpop.permute.xlu0 %6888
        %6890 = vrot.lane.b32.xlu0 %v6164, 72
        %v6891 = vpop.permute.xlu0 %6890
        %v6892 = vsel %vm1109, %v6889, 0
        %v6894 = vsel %vm1109, %v6891, 0
        %6896 = vmatprep.subr.mxu0 0.0
        %6897 = vmatpush1.xpose.msra.mxu0 0.0
        %6898 = vmatprep.subr.mxu0 0.0
        %6899 = vmatpush1.xpose.msra.mxu0 0.0
        %6900 = vmatprep.subr.mxu0 0.0
        %6901 = vmatpush1.xpose.msra.mxu0 0.0
        %6902 = vmatprep.subr.mxu0 0.0
        %6903 = vmatpush1.xpose.msra.mxu0 0.0
        %6904 = vmatprep.subr.mxu0 0.0
        %6905 = vmatpush1.xpose.msra.mxu0 0.0
        %6906 = vmatprep.subr.mxu0 0.0
        %6907 = vmatpush1.xpose.msra.mxu0 0.0
        %6908 = vmatprep.subr.mxu0 0.0
        %6909 = vmatpush1.xpose.msra.mxu0 0.0
        %6910 = vmatprep.subr.mxu0 0.0
        %6911 = vmatpush1.xpose.msra.mxu0 0.0
        %6912 = vmatprep.subr.mxu0 0.0
        %6913 = vmatpush1.xpose.msra.mxu0 0.0
        %6914 = vmatprep.subr.mxu0 0.0
        %6915 = vmatpush1.xpose.msra.mxu0 0.0
        %6916 = vmatprep.subr.mxu0 0.0
        %6917 = vmatpush1.xpose.msra.mxu0 0.0
        %6918 = vmatprep.subr.mxu0 0.0
        %6919 = vmatpush1.xpose.msra.mxu0 0.0
        %6920 = vmatprep.subr.mxu0 0.0
        %6921 = vmatpush1.xpose.msra.mxu0 0.0
        %6922 = vmatprep.subr.mxu0 0.0
        %6923 = vmatpush1.xpose.msra.mxu0 0.0
        %6924 = vmatprep.subr.mxu0 0.0
        %6925 = vmatpush1.xpose.msra.mxu0 0.0
        %6926 = vmatprep.subr.mxu0 0.0
        %6927 = vmatpush1.xpose.msra.mxu0 %v6894
        %6928 = vmatprep.subr.mxu0 0.0
        %6929 = vmatpush2.xpose.msra.mxu0 0.0
        %6930 = vmatprep.subr.mxu0 0.0
        %6931 = vmatpush2.xpose.msra.mxu0 0.0
        %6932 = vmatprep.subr.mxu0 0.0
        %6933 = vmatpush2.xpose.msra.mxu0 0.0
        %6934 = vmatprep.subr.mxu0 0.0
        %6935 = vmatpush2.xpose.msra.mxu0 0.0
        %6936 = vmatprep.subr.mxu0 0.0
        %6937 = vmatpush2.xpose.msra.mxu0 0.0
        %6938 = vmatprep.subr.mxu0 0.0
        %6939 = vmatpush2.xpose.msra.mxu0 0.0
        %6940 = vmatprep.subr.mxu0 0.0
        %6941 = vmatpush2.xpose.msra.mxu0 0.0
        %6942 = vmatprep.subr.mxu0 0.0
        %6943 = vmatpush2.xpose.msra.mxu0 0.0
        %6944 = vmatprep.subr.mxu0 0.0
        %6945 = vmatpush2.xpose.msra.mxu0 0.0
        %6946 = vmatprep.subr.mxu0 0.0
        %6947 = vmatpush2.xpose.msra.mxu0 0.0
        %6948 = vmatprep.subr.mxu0 0.0
        %6949 = vmatpush2.xpose.msra.mxu0 0.0
        %6950 = vmatprep.subr.mxu0 0.0
        %6951 = vmatpush2.xpose.msra.mxu0 0.0
        %6952 = vmatprep.subr.mxu0 0.0
        %6953 = vmatpush2.xpose.msra.mxu0 0.0
        %6954 = vmatprep.subr.mxu0 0.0
        %6955 = vmatpush2.xpose.msra.mxu0 0.0
        %6956 = vmatprep.subr.mxu0 0.0
        %6957 = vmatpush2.xpose.msra.mxu0 0.0
        %6958 = vmatprep.subr.mxu0 0.0
        %6959 = vmatpush2.xpose.msra.mxu0 0.0
        %6960 = vmatprep.mubr.f32.mxu0 0.0
        %6961 = vmatmul.mubr.f32.gmra.mxu0 %v6892
        %v6962 = vpop.f32.mrf.mxu0
        %v6963 = vadd.f32 %v977, %v6962
        %v6964 = vpop.f32.mrf.mxu0
        %6965 = vdwg.mxu0
        %v6966 = vsel %vm1109, %v6963, -inf
        %6967 = vmax.xlane.f32.xlu0 %v6966
        %v6968 = vpop.xlane.xlu0 %6967
        %v6969 = vsub.f32 %v6963, %v6968
        %v6970 = vmul.f32 %v6969, 1.442695
        %v6971 = vpow.pop %v6970
        %v6972 = vsel %vm1109, %v6971, 0.0
        %6973 = vadd.xlane.f32.xlu0 %v6972
        %v6974 = vpop.xlane.xlu0 %6973
        %v6975 = vrcp.pop %v6974
        %v6976 = vmul.f32 %v6971, %v6975
        %6977 = vrot.lane.b32.xlu0 %v6164, 40
        %v6978 = vpop.permute.xlu0 %6977
        %v6981 = vsel %vm1109, %v6976, 0
        %6983 = vmatprep.subr.mxu0 0.0
        %6984 = vmatpush1.msra.mxu0 0.0
        %6985 = vmatprep.subr.mxu0 0.0
        %6986 = vmatpush1.msra.mxu0 0.0
        %6987 = vmatprep.subr.mxu0 0.0
        %6988 = vmatpush1.msra.mxu0 0.0
        %6989 = vmatprep.subr.mxu0 0.0
        %6990 = vmatpush1.msra.mxu0 0.0
        %6991 = vmatprep.subr.mxu0 0.0
        %6992 = vmatpush1.msra.mxu0 0.0
        %6993 = vmatprep.subr.mxu0 0.0
        %6994 = vmatpush1.msra.mxu0 0.0
        %6995 = vmatprep.subr.mxu0 0.0
        %6996 = vmatpush1.msra.mxu0 0.0
        %6997 = vmatprep.subr.mxu0 0.0
        %6998 = vmatpush1.msra.mxu0 0.0
        %6999 = vmatprep.subr.mxu0 0.0
        %7000 = vmatpush1.msra.mxu0 0.0
        %7001 = vmatprep.subr.mxu0 0.0
        %7002 = vmatpush1.msra.mxu0 0.0
        %7003 = vmatprep.subr.mxu0 0.0
        %7004 = vmatpush1.msra.mxu0 0.0
        %7005 = vmatprep.subr.mxu0 0.0
        %7006 = vmatpush1.msra.mxu0 0.0
        %7007 = vmatprep.subr.mxu0 0.0
        %7008 = vmatpush1.msra.mxu0 0.0
        %7009 = vmatprep.subr.mxu0 0.0
        %7010 = vmatpush1.msra.mxu0 0.0
        %7011 = vmatprep.subr.mxu0 0.0
        %7012 = vmatpush1.msra.mxu0 0.0
        %7013 = vmatprep.subr.mxu0 0.0
        %7014 = vmatpush1.msra.mxu0 %v6978
        %7015 = vmatprep.subr.mxu0 0.0
        %7016 = vmatpush2.msra.mxu0 0.0
        %7017 = vmatprep.subr.mxu0 0.0
        %7018 = vmatpush2.msra.mxu0 0.0
        %7019 = vmatprep.subr.mxu0 0.0
        %7020 = vmatpush2.msra.mxu0 0.0
        %7021 = vmatprep.subr.mxu0 0.0
        %7022 = vmatpush2.msra.mxu0 0.0
        %7023 = vmatprep.subr.mxu0 0.0
        %7024 = vmatpush2.msra.mxu0 0.0
        %7025 = vmatprep.subr.mxu0 0.0
        %7026 = vmatpush2.msra.mxu0 0.0
        %7027 = vmatprep.subr.mxu0 0.0
        %7028 = vmatpush2.msra.mxu0 0.0
        %7029 = vmatprep.subr.mxu0 0.0
        %7030 = vmatpush2.msra.mxu0 0.0
        %7031 = vmatprep.subr.mxu0 0.0
        %7032 = vmatpush2.msra.mxu0 0.0
        %7033 = vmatprep.subr.mxu0 0.0
        %7034 = vmatpush2.msra.mxu0 0.0
        %7035 = vmatprep.subr.mxu0 0.0
        %7036 = vmatpush2.msra.mxu0 0.0
        %7037 = vmatprep.subr.mxu0 0.0
        %7038 = vmatpush2.msra.mxu0 0.0
        %7039 = vmatprep.subr.mxu0 0.0
        %7040 = vmatpush2.msra.mxu0 0.0
        %7041 = vmatprep.subr.mxu0 0.0
        %7042 = vmatpush2.msra.mxu0 0.0
        %7043 = vmatprep.subr.mxu0 0.0
        %7044 = vmatpush2.msra.mxu0 0.0
        %7045 = vmatprep.subr.mxu0 0.0
        %7046 = vmatpush2.msra.mxu0 0.0
        %7047 = vmatprep.mubr.f32.mxu0 0.0
        %7048 = vmatmul.mubr.f32.gmra.mxu0 %v6981
        %v7049 = vpop.f32.mrf.mxu0
        %v7050 = vadd.f32 0.0, %v7049
        %v7051 = vpop.f32.mrf.mxu0
        %7052 = vdwg.mxu0
        %v7054 = vsel %vm1109, %v7050, 0
        %7056 = vmatprep.subr.mxu0 0.0
        %7057 = vmatpush1.msra.mxu0 0.0
        %7058 = vmatprep.subr.mxu0 0.0
        %7059 = vmatpush1.msra.mxu0 0.0
        %7060 = vmatprep.subr.mxu0 0.0
        %7061 = vmatpush1.msra.mxu0 0.0
        %7062 = vmatprep.subr.mxu0 0.0
        %7063 = vmatpush1.msra.mxu0 0.0
        %7064 = vmatprep.subr.mxu0 0.0
        %7065 = vmatpush1.msra.mxu0 0.0
        %7066 = vmatprep.subr.mxu0 0.0
        %7067 = vmatpush1.msra.mxu0 0.0
        %7068 = vmatprep.subr.mxu0 0.0
        %7069 = vmatpush1.msra.mxu0 0.0
        %7070 = vmatprep.subr.mxu0 0.0
        %7071 = vmatpush1.msra.mxu0 0.0
        %7072 = vmatprep.subr.mxu0 0.0
        %7073 = vmatpush1.msra.mxu0 0.0
        %7074 = vmatprep.subr.mxu0 0.0
        %7075 = vmatpush1.msra.mxu0 0.0
        %7076 = vmatprep.subr.mxu0 0.0
        %7077 = vmatpush1.msra.mxu0 0.0
        %7078 = vmatprep.subr.mxu0 0.0
        %7079 = vmatpush1.msra.mxu0 0.0
        %7080 = vmatprep.subr.mxu0 0.0
        %7081 = vmatpush1.msra.mxu0 0.0
        %7082 = vmatprep.subr.mxu0 0.0
        %7083 = vmatpush1.msra.mxu0 0.0
        %7084 = vmatprep.subr.mxu0 0.0
        %7085 = vmatpush1.msra.mxu0 0.0
        %7086 = vmatprep.subr.mxu0 0.0
        %7087 = vmatpush1.msra.mxu0 %v6171
        %7088 = vmatprep.subr.mxu0 0.0
        %7089 = vmatpush2.msra.mxu0 0.0
        %7090 = vmatprep.subr.mxu0 0.0
        %7091 = vmatpush2.msra.mxu0 0.0
        %7092 = vmatprep.subr.mxu0 0.0
        %7093 = vmatpush2.msra.mxu0 0.0
        %7094 = vmatprep.subr.mxu0 0.0
        %7095 = vmatpush2.msra.mxu0 0.0
        %7096 = vmatprep.subr.mxu0 0.0
        %7097 = vmatpush2.msra.mxu0 0.0
        %7098 = vmatprep.subr.mxu0 0.0
        %7099 = vmatpush2.msra.mxu0 0.0
        %7100 = vmatprep.subr.mxu0 0.0
        %7101 = vmatpush2.msra.mxu0 0.0
        %7102 = vmatprep.subr.mxu0 0.0
        %7103 = vmatpush2.msra.mxu0 0.0
        %7104 = vmatprep.subr.mxu0 0.0
        %7105 = vmatpush2.msra.mxu0 0.0
        %7106 = vmatprep.subr.mxu0 0.0
        %7107 = vmatpush2.msra.mxu0 0.0
        %7108 = vmatprep.subr.mxu0 0.0
        %7109 = vmatpush2.msra.mxu0 0.0
        %7110 = vmatprep.subr.mxu0 0.0
        %7111 = vmatpush2.msra.mxu0 0.0
        %7112 = vmatprep.subr.mxu0 0.0
        %7113 = vmatpush2.msra.mxu0 0.0
        %7114 = vmatprep.subr.mxu0 0.0
        %7115 = vmatpush2.msra.mxu0 0.0
        %7116 = vmatprep.subr.mxu0 0.0
        %7117 = vmatpush2.msra.mxu0 0.0
        %7118 = vmatprep.subr.mxu0 0.0
        %7119 = vmatpush2.msra.mxu0 0.0
        %7120 = vmatprep.mubr.f32.mxu0 0.0
        %7121 = vmatmul.mubr.f32.gmra.mxu0 %v7054
        %v7122 = vpop.f32.mrf.mxu0
        %v7123 = vadd.f32 0.0, %v7122
        %v7124 = vpop.f32.mrf.mxu0
        %7125 = vdwg.mxu0
        %v7126 = vadd.f32 %v6887, %v7123
        %v7128 = vlaneseq
        %v7129 = vshrl.u32 %v7128, 7
        %v7130 = vsub.s32 0, %v7129
        %v7131 = vrot.slane %v6173, %v7130
        %v7133 = vadd.f32 %v7126, %v7131
        %v7134 = vadd.f32 %v6048, %v7133
        %v7135 = vsel %vm979, %v7134, 0.0
        %7136 = vadd.xlane.f32.xlu0 %v7135
        %v7137 = vpop.xlane.xlu0 %7136
        %v7138 = vmul.f32 %v7137, %v983
        %v7139 = vsub.f32 %v7134, %v7138
        %v7140 = vmul.f32 %v7139, %v7139
        %v7141 = vsel %vm979, %v7140, 0.0
        %7142 = vadd.xlane.f32.xlu0 %v7141
        %v7143 = vpop.xlane.xlu0 %7142
        %v7144 = vmul.f32 %v7143, 0.032258064
        %v7145 = vrsqrt.pop %v7144
        %v7146 = vmul.f32 %v7144, %v7145
        %vm7147 = vcmp.eq.f32.partialorder %v7144, inf
        %v7148 = vsel %vm7147, %v7144, %v7146
        %vm7149 = vcmp.eq.f32.partialorder %v7144, 0.0
        %v7150 = vand.u32 %v7144, 2147483648
        %v7151 = vsel %vm7149, %v7150, %v7148
        %v7152 = vadd.f32 %v7151, 1e-06
        %v7153 = vrcp.pop %v7152
        %v7154 = vlaneseq
        %v7155 = vshrl.u32 %v7154, 7
        %v7156 = vsub.s32 2, %v7155
        %v7157 = vrot.slane %v6050, %v7156
        %v7158 = vmul.f32 %v7157, %v7139
        %v7159 = vmul.f32 %v7158, %v7153
        %v7160 = vlaneseq
        %v7161 = vshrl.u32 %v7160, 7
        %v7162 = vsub.s32 3, %v7161
        %v7163 = vrot.slane %v6050, %v7162
        %v7164 = vadd.f32 %v7159, %v7163
        %s7165 = scalar_lea.vmem %s37, 32
        %v7166 = vld [vmem:[%s7165] sm:$0xff]
        %v7167 = vld [vmem:[%s7165 + $0x8] sm:$0xff]
        %v7168 = vld [vmem:[%s7165 + $0x10] sm:$0xff]
        %v7169 = vld [vmem:[%s7165 + $0x18] sm:$0xff]
        %s7170 = scalar_lea.vmem %s39, 1
        %v7171 = vld [vmem:[%s7170] sm:$0x1]
        %v7173 = vlaneseq
        %v7174 = vshrl.u32 %v7173, 7
        %v7175 = vsub.s32 0, %v7174
        %v7176 = vrot.slane %v7171, %v7175
        %v7179 = vsel %vm979, %v7164, 0
        %7181 = vmatprep.subr.mxu0 0.0
        %7182 = vmatpush1.msra.mxu0 0.0
        %7183 = vmatprep.subr.mxu0 0.0
        %7184 = vmatpush1.msra.mxu0 0.0
        %7185 = vmatprep.subr.mxu0 0.0
        %7186 = vmatpush1.msra.mxu0 0.0
        %7187 = vmatprep.subr.mxu0 0.0
        %7188 = vmatpush1.msra.mxu0 0.0
        %7189 = vmatprep.subr.mxu0 0.0
        %7190 = vmatpush1.msra.mxu0 0.0
        %7191 = vmatprep.subr.mxu0 0.0
        %7192 = vmatpush1.msra.mxu0 0.0
        %7193 = vmatprep.subr.mxu0 0.0
        %7194 = vmatpush1.msra.mxu0 0.0
        %7195 = vmatprep.subr.mxu0 0.0
        %7196 = vmatpush1.msra.mxu0 0.0
        %7197 = vmatprep.subr.mxu0 0.0
        %7198 = vmatpush1.msra.mxu0 0.0
        %7199 = vmatprep.subr.mxu0 0.0
        %7200 = vmatpush1.msra.mxu0 0.0
        %7201 = vmatprep.subr.mxu0 0.0
        %7202 = vmatpush1.msra.mxu0 0.0
        %7203 = vmatprep.subr.mxu0 0.0
        %7204 = vmatpush1.msra.mxu0 0.0
        %7205 = vmatprep.subr.mxu0 0.0
        %7206 = vmatpush1.msra.mxu0 %v7169
        %7207 = vmatprep.subr.mxu0 0.0
        %7208 = vmatpush1.msra.mxu0 %v7168
        %7209 = vmatprep.subr.mxu0 0.0
        %7210 = vmatpush1.msra.mxu0 %v7167
        %7211 = vmatprep.subr.mxu0 0.0
        %7212 = vmatpush1.msra.mxu0 %v7166
        %7213 = vmatprep.subr.mxu0 0.0
        %7214 = vmatpush2.msra.mxu0 0.0
        %7215 = vmatprep.subr.mxu0 0.0
        %7216 = vmatpush2.msra.mxu0 0.0
        %7217 = vmatprep.subr.mxu0 0.0
        %7218 = vmatpush2.msra.mxu0 0.0
        %7219 = vmatprep.subr.mxu0 0.0
        %7220 = vmatpush2.msra.mxu0 0.0
        %7221 = vmatprep.subr.mxu0 0.0
        %7222 = vmatpush2.msra.mxu0 0.0
        %7223 = vmatprep.subr.mxu0 0.0
        %7224 = vmatpush2.msra.mxu0 0.0
        %7225 = vmatprep.subr.mxu0 0.0
        %7226 = vmatpush2.msra.mxu0 0.0
        %7227 = vmatprep.subr.mxu0 0.0
        %7228 = vmatpush2.msra.mxu0 0.0
        %7229 = vmatprep.subr.mxu0 0.0
        %7230 = vmatpush2.msra.mxu0 0.0
        %7231 = vmatprep.subr.mxu0 0.0
        %7232 = vmatpush2.msra.mxu0 0.0
        %7233 = vmatprep.subr.mxu0 0.0
        %7234 = vmatpush2.msra.mxu0 0.0
        %7235 = vmatprep.subr.mxu0 0.0
        %7236 = vmatpush2.msra.mxu0 0.0
        %7237 = vmatprep.subr.mxu0 0.0
        %7238 = vmatpush2.msra.mxu0 0.0
        %7239 = vmatprep.subr.mxu0 0.0
        %7240 = vmatpush2.msra.mxu0 0.0
        %7241 = vmatprep.subr.mxu0 0.0
        %7242 = vmatpush2.msra.mxu0 0.0
        %7243 = vmatprep.subr.mxu0 0.0
        %7244 = vmatpush2.msra.mxu0 0.0
        %7245 = vmatprep.mubr.f32.mxu0 0.0
        %7246 = vmatmul.mubr.f32.gmra.mxu0 %v7179
        %v7247 = vpop.f32.mrf.mxu0
        %v7248 = vadd.f32 %v7176, %v7247
        %v7249 = vpop.f32.mrf.mxu0
        %7250 = vdwg.mxu0
        %s7251 = scalar_lea.vmem %s41, 32
        %v7252 = vld [vmem:[%s7251] sm:$0xff]
        %v7253 = vld [vmem:[%s7251 + $0x8] sm:$0xff]
        %v7254 = vld [vmem:[%s7251 + $0x10] sm:$0xff]
        %v7255 = vld [vmem:[%s7251 + $0x18] sm:$0xff]
        %s7256 = scalar_lea.vmem %s43, 1
        %v7257 = vld [vmem:[%s7256] sm:$0x1]
        %v7259 = vlaneseq
        %v7260 = vshrl.u32 %v7259, 7
        %v7261 = vsub.s32 0, %v7260
        %v7262 = vrot.slane %v7257, %v7261
        %7264 = vmatprep.subr.mxu0 0.0
        %7265 = vmatpush1.msra.mxu0 0.0
        %7266 = vmatprep.subr.mxu0 0.0
        %7267 = vmatpush1.msra.mxu0 0.0
        %7268 = vmatprep.subr.mxu0 0.0
        %7269 = vmatpush1.msra.mxu0 0.0
        %7270 = vmatprep.subr.mxu0 0.0
        %7271 = vmatpush1.msra.mxu0 0.0
        %7272 = vmatprep.subr.mxu0 0.0
        %7273 = vmatpush1.msra.mxu0 0.0
        %7274 = vmatprep.subr.mxu0 0.0
        %7275 = vmatpush1.msra.mxu0 0.0
        %7276 = vmatprep.subr.mxu0 0.0
        %7277 = vmatpush1.msra.mxu0 0.0
        %7278 = vmatprep.subr.mxu0 0.0
        %7279 = vmatpush1.msra.mxu0 0.0
        %7280 = vmatprep.subr.mxu0 0.0
        %7281 = vmatpush1.msra.mxu0 0.0
        %7282 = vmatprep.subr.mxu0 0.0
        %7283 = vmatpush1.msra.mxu0 0.0
        %7284 = vmatprep.subr.mxu0 0.0
        %7285 = vmatpush1.msra.mxu0 0.0
        %7286 = vmatprep.subr.mxu0 0.0
        %7287 = vmatpush1.msra.mxu0 0.0
        %7288 = vmatprep.subr.mxu0 0.0
        %7289 = vmatpush1.msra.mxu0 %v7255
        %7290 = vmatprep.subr.mxu0 0.0
        %7291 = vmatpush1.msra.mxu0 %v7254
        %7292 = vmatprep.subr.mxu0 0.0
        %7293 = vmatpush1.msra.mxu0 %v7253
        %7294 = vmatprep.subr.mxu0 0.0
        %7295 = vmatpush1.msra.mxu0 %v7252
        %7296 = vmatprep.subr.mxu0 0.0
        %7297 = vmatpush2.msra.mxu0 0.0
        %7298 = vmatprep.subr.mxu0 0.0
        %7299 = vmatpush2.msra.mxu0 0.0
        %7300 = vmatprep.subr.mxu0 0.0
        %7301 = vmatpush2.msra.mxu0 0.0
        %7302 = vmatprep.subr.mxu0 0.0
        %7303 = vmatpush2.msra.mxu0 0.0
        %7304 = vmatprep.subr.mxu0 0.0
        %7305 = vmatpush2.msra.mxu0 0.0
        %7306 = vmatprep.subr.mxu0 0.0
        %7307 = vmatpush2.msra.mxu0 0.0
        %7308 = vmatprep.subr.mxu0 0.0
        %7309 = vmatpush2.msra.mxu0 0.0
        %7310 = vmatprep.subr.mxu0 0.0
        %7311 = vmatpush2.msra.mxu0 0.0
        %7312 = vmatprep.subr.mxu0 0.0
        %7313 = vmatpush2.msra.mxu0 0.0
        %7314 = vmatprep.subr.mxu0 0.0
        %7315 = vmatpush2.msra.mxu0 0.0
        %7316 = vmatprep.subr.mxu0 0.0
        %7317 = vmatpush2.msra.mxu0 0.0
        %7318 = vmatprep.subr.mxu0 0.0
        %7319 = vmatpush2.msra.mxu0 0.0
        %7320 = vmatprep.subr.mxu0 0.0
        %7321 = vmatpush2.msra.mxu0 0.0
        %7322 = vmatprep.subr.mxu0 0.0
        %7323 = vmatpush2.msra.mxu0 0.0
        %7324 = vmatprep.subr.mxu0 0.0
        %7325 = vmatpush2.msra.mxu0 0.0
        %7326 = vmatprep.subr.mxu0 0.0
        %7327 = vmatpush2.msra.mxu0 0.0
        %7328 = vmatprep.mubr.f32.mxu0 0.0
        %7329 = vmatmul.mubr.f32.gmra.mxu0 %v4807
        %v7330 = vpop.f32.mrf.mxu0
        %v7331 = vadd.f32 %v7262, %v7330
        %v7332 = vpop.f32.mrf.mxu0
        %7333 = vdwg.mxu0
        %s7334 = scalar_lea.vmem %s45, 32
        %v7335 = vld [vmem:[%s7334] sm:$0xff]
        %v7336 = vld [vmem:[%s7334 + $0x8] sm:$0xff]
        %v7337 = vld [vmem:[%s7334 + $0x10] sm:$0xff]
        %v7338 = vld [vmem:[%s7334 + $0x18] sm:$0xff]
        %s7339 = scalar_lea.vmem %s47, 1
        %v7340 = vld [vmem:[%s7339] sm:$0x1]
        %v7342 = vsel %vm1109, %v7248, 0
        %v7345 = vsel %vm1109, %v7331, 0
        %7347 = vmatprep.subr.mxu0 0.0
        %7348 = vmatpush1.xpose.msra.mxu0 0.0
        %7349 = vmatprep.subr.mxu0 0.0
        %7350 = vmatpush1.xpose.msra.mxu0 0.0
        %7351 = vmatprep.subr.mxu0 0.0
        %7352 = vmatpush1.xpose.msra.mxu0 0.0
        %7353 = vmatprep.subr.mxu0 0.0
        %7354 = vmatpush1.xpose.msra.mxu0 0.0
        %7355 = vmatprep.subr.mxu0 0.0
        %7356 = vmatpush1.xpose.msra.mxu0 0.0
        %7357 = vmatprep.subr.mxu0 0.0
        %7358 = vmatpush1.xpose.msra.mxu0 0.0
        %7359 = vmatprep.subr.mxu0 0.0
        %7360 = vmatpush1.xpose.msra.mxu0 0.0
        %7361 = vmatprep.subr.mxu0 0.0
        %7362 = vmatpush1.xpose.msra.mxu0 0.0
        %7363 = vmatprep.subr.mxu0 0.0
        %7364 = vmatpush1.xpose.msra.mxu0 0.0
        %7365 = vmatprep.subr.mxu0 0.0
        %7366 = vmatpush1.xpose.msra.mxu0 0.0
        %7367 = vmatprep.subr.mxu0 0.0
        %7368 = vmatpush1.xpose.msra.mxu0 0.0
        %7369 = vmatprep.subr.mxu0 0.0
        %7370 = vmatpush1.xpose.msra.mxu0 0.0
        %7371 = vmatprep.subr.mxu0 0.0
        %7372 = vmatpush1.xpose.msra.mxu0 0.0
        %7373 = vmatprep.subr.mxu0 0.0
        %7374 = vmatpush1.xpose.msra.mxu0 0.0
        %7375 = vmatprep.subr.mxu0 0.0
        %7376 = vmatpush1.xpose.msra.mxu0 0.0
        %7377 = vmatprep.subr.mxu0 0.0
        %7378 = vmatpush1.xpose.msra.mxu0 %v7345
        %7379 = vmatprep.subr.mxu0 0.0
        %7380 = vmatpush2.xpose.msra.mxu0 0.0
        %7381 = vmatprep.subr.mxu0 0.0
        %7382 = vmatpush2.xpose.msra.mxu0 0.0
        %7383 = vmatprep.subr.mxu0 0.0
        %7384 = vmatpush2.xpose.msra.mxu0 0.0
        %7385 = vmatprep.subr.mxu0 0.0
        %7386 = vmatpush2.xpose.msra.mxu0 0.0
        %7387 = vmatprep.subr.mxu0 0.0
        %7388 = vmatpush2.xpose.msra.mxu0 0.0
        %7389 = vmatprep.subr.mxu0 0.0
        %7390 = vmatpush2.xpose.msra.mxu0 0.0
        %7391 = vmatprep.subr.mxu0 0.0
        %7392 = vmatpush2.xpose.msra.mxu0 0.0
        %7393 = vmatprep.subr.mxu0 0.0
        %7394 = vmatpush2.xpose.msra.mxu0 0.0
        %7395 = vmatprep.subr.mxu0 0.0
        %7396 = vmatpush2.xpose.msra.mxu0 0.0
        %7397 = vmatprep.subr.mxu0 0.0
        %7398 = vmatpush2.xpose.msra.mxu0 0.0
        %7399 = vmatprep.subr.mxu0 0.0
        %7400 = vmatpush2.xpose.msra.mxu0 0.0
        %7401 = vmatprep.subr.mxu0 0.0
        %7402 = vmatpush2.xpose.msra.mxu0 0.0
        %7403 = vmatprep.subr.mxu0 0.0
        %7404 = vmatpush2.xpose.msra.mxu0 0.0
        %7405 = vmatprep.subr.mxu0 0.0
        %7406 = vmatpush2.xpose.msra.mxu0 0.0
        %7407 = vmatprep.subr.mxu0 0.0
        %7408 = vmatpush2.xpose.msra.mxu0 0.0
        %7409 = vmatprep.subr.mxu0 0.0
        %7410 = vmatpush2.xpose.msra.mxu0 0.0
        %7411 = vmatprep.mubr.f32.mxu0 0.0
        %7412 = vmatmul.mubr.f32.gmra.mxu0 %v7342
        %v7413 = vpop.f32.mrf.mxu0
        %v7414 = vadd.f32 %v1104, %v7413
        %v7415 = vpop.f32.mrf.mxu0
        %7416 = vdwg.mxu0
        %v7417 = vsel %vm1109, %v7414, -inf
        %7418 = vmax.xlane.f32.xlu0 %v7417
        %v7419 = vpop.xlane.xlu0 %7418
        %v7420 = vsub.f32 %v7414, %v7419
        %v7421 = vmul.f32 %v7420, 1.442695
        %v7422 = vpow.pop %v7421
        %v7423 = vsel %vm1109, %v7422, 0.0
        %7424 = vadd.xlane.f32.xlu0 %v7423
        %v7425 = vpop.xlane.xlu0 %7424
        %v7426 = vrcp.pop %v7425
        %v7427 = vmul.f32 %v7422, %v7426
        %7428 = vrot.lane.b32.xlu0 %v7331, 96
        %v7429 = vpop.permute.xlu0 %7428
        %v7432 = vsel %vm1109, %v7427, 0
        %7434 = vmatprep.subr.mxu0 0.0
        %7435 = vmatpush1.msra.mxu0 0.0
        %7436 = vmatprep.subr.mxu0 0.0
        %7437 = vmatpush1.msra.mxu0 0.0
        %7438 = vmatprep.subr.mxu0 0.0
        %7439 = vmatpush1.msra.mxu0 0.0
        %7440 = vmatprep.subr.mxu0 0.0
        %7441 = vmatpush1.msra.mxu0 0.0
        %7442 = vmatprep.subr.mxu0 0.0
        %7443 = vmatpush1.msra.mxu0 0.0
        %7444 = vmatprep.subr.mxu0 0.0
        %7445 = vmatpush1.msra.mxu0 0.0
        %7446 = vmatprep.subr.mxu0 0.0
        %7447 = vmatpush1.msra.mxu0 0.0
        %7448 = vmatprep.subr.mxu0 0.0
        %7449 = vmatpush1.msra.mxu0 0.0
        %7450 = vmatprep.subr.mxu0 0.0
        %7451 = vmatpush1.msra.mxu0 0.0
        %7452 = vmatprep.subr.mxu0 0.0
        %7453 = vmatpush1.msra.mxu0 0.0
        %7454 = vmatprep.subr.mxu0 0.0
        %7455 = vmatpush1.msra.mxu0 0.0
        %7456 = vmatprep.subr.mxu0 0.0
        %7457 = vmatpush1.msra.mxu0 0.0
        %7458 = vmatprep.subr.mxu0 0.0
        %7459 = vmatpush1.msra.mxu0 0.0
        %7460 = vmatprep.subr.mxu0 0.0
        %7461 = vmatpush1.msra.mxu0 0.0
        %7462 = vmatprep.subr.mxu0 0.0
        %7463 = vmatpush1.msra.mxu0 0.0
        %7464 = vmatprep.subr.mxu0 0.0
        %7465 = vmatpush1.msra.mxu0 %v7429
        %7466 = vmatprep.subr.mxu0 0.0
        %7467 = vmatpush2.msra.mxu0 0.0
        %7468 = vmatprep.subr.mxu0 0.0
        %7469 = vmatpush2.msra.mxu0 0.0
        %7470 = vmatprep.subr.mxu0 0.0
        %7471 = vmatpush2.msra.mxu0 0.0
        %7472 = vmatprep.subr.mxu0 0.0
        %7473 = vmatpush2.msra.mxu0 0.0
        %7474 = vmatprep.subr.mxu0 0.0
        %7475 = vmatpush2.msra.mxu0 0.0
        %7476 = vmatprep.subr.mxu0 0.0
        %7477 = vmatpush2.msra.mxu0 0.0
        %7478 = vmatprep.subr.mxu0 0.0
        %7479 = vmatpush2.msra.mxu0 0.0
        %7480 = vmatprep.subr.mxu0 0.0
        %7481 = vmatpush2.msra.mxu0 0.0
        %7482 = vmatprep.subr.mxu0 0.0
        %7483 = vmatpush2.msra.mxu0 0.0
        %7484 = vmatprep.subr.mxu0 0.0
        %7485 = vmatpush2.msra.mxu0 0.0
        %7486 = vmatprep.subr.mxu0 0.0
        %7487 = vmatpush2.msra.mxu0 0.0
        %7488 = vmatprep.subr.mxu0 0.0
        %7489 = vmatpush2.msra.mxu0 0.0
        %7490 = vmatprep.subr.mxu0 0.0
        %7491 = vmatpush2.msra.mxu0 0.0
        %7492 = vmatprep.subr.mxu0 0.0
        %7493 = vmatpush2.msra.mxu0 0.0
        %7494 = vmatprep.subr.mxu0 0.0
        %7495 = vmatpush2.msra.mxu0 0.0
        %7496 = vmatprep.subr.mxu0 0.0
        %7497 = vmatpush2.msra.mxu0 0.0
        %7498 = vmatprep.mubr.f32.mxu0 0.0
        %7499 = vmatmul.mubr.f32.gmra.mxu0 %v7432
        %v7500 = vpop.f32.mrf.mxu0
        %v7501 = vadd.f32 0.0, %v7500
        %v7502 = vpop.f32.mrf.mxu0
        %7503 = vdwg.mxu0
        %7504 = vrot.lane.b32.xlu0 %v7248, 120
        %v7505 = vpop.permute.xlu0 %7504
        %7506 = vrot.lane.b32.xlu0 %v7331, 120
        %v7507 = vpop.permute.xlu0 %7506
        %v7508 = vsel %vm1109, %v7505, 0
        %v7510 = vsel %vm1109, %v7507, 0
        %7512 = vmatprep.subr.mxu0 0.0
        %7513 = vmatpush1.xpose.msra.mxu0 0.0
        %7514 = vmatprep.subr.mxu0 0.0
        %7515 = vmatpush1.xpose.msra.mxu0 0.0
        %7516 = vmatprep.subr.mxu0 0.0
        %7517 = vmatpush1.xpose.msra.mxu0 0.0
        %7518 = vmatprep.subr.mxu0 0.0
        %7519 = vmatpush1.xpose.msra.mxu0 0.0
        %7520 = vmatprep.subr.mxu0 0.0
        %7521 = vmatpush1.xpose.msra.mxu0 0.0
        %7522 = vmatprep.subr.mxu0 0.0
        %7523 = vmatpush1.xpose.msra.mxu0 0.0
        %7524 = vmatprep.subr.mxu0 0.0
        %7525 = vmatpush1.xpose.msra.mxu0 0.0
        %7526 = vmatprep.subr.mxu0 0.0
        %7527 = vmatpush1.xpose.msra.mxu0 0.0
        %7528 = vmatprep.subr.mxu0 0.0
        %7529 = vmatpush1.xpose.msra.mxu0 0.0
        %7530 = vmatprep.subr.mxu0 0.0
        %7531 = vmatpush1.xpose.msra.mxu0 0.0
        %7532 = vmatprep.subr.mxu0 0.0
        %7533 = vmatpush1.xpose.msra.mxu0 0.0
        %7534 = vmatprep.subr.mxu0 0.0
        %7535 = vmatpush1.xpose.msra.mxu0 0.0
        %7536 = vmatprep.subr.mxu0 0.0
        %7537 = vmatpush1.xpose.msra.mxu0 0.0
        %7538 = vmatprep.subr.mxu0 0.0
        %7539 = vmatpush1.xpose.msra.mxu0 0.0
        %7540 = vmatprep.subr.mxu0 0.0
        %7541 = vmatpush1.xpose.msra.mxu0 0.0
        %7542 = vmatprep.subr.mxu0 0.0
        %7543 = vmatpush1.xpose.msra.mxu0 %v7510
        %7544 = vmatprep.subr.mxu0 0.0
        %7545 = vmatpush2.xpose.msra.mxu0 0.0
        %7546 = vmatprep.subr.mxu0 0.0
        %7547 = vmatpush2.xpose.msra.mxu0 0.0
        %7548 = vmatprep.subr.mxu0 0.0
        %7549 = vmatpush2.xpose.msra.mxu0 0.0
        %7550 = vmatprep.subr.mxu0 0.0
        %7551 = vmatpush2.xpose.msra.mxu0 0.0
        %7552 = vmatprep.subr.mxu0 0.0
        %7553 = vmatpush2.xpose.msra.mxu0 0.0
        %7554 = vmatprep.subr.mxu0 0.0
        %7555 = vmatpush2.xpose.msra.mxu0 0.0
        %7556 = vmatprep.subr.mxu0 0.0
        %7557 = vmatpush2.xpose.msra.mxu0 0.0
        %7558 = vmatprep.subr.mxu0 0.0
        %7559 = vmatpush2.xpose.msra.mxu0 0.0
        %7560 = vmatprep.subr.mxu0 0.0
        %7561 = vmatpush2.xpose.msra.mxu0 0.0
        %7562 = vmatprep.subr.mxu0 0.0
        %7563 = vmatpush2.xpose.msra.mxu0 0.0
        %7564 = vmatprep.subr.mxu0 0.0
        %7565 = vmatpush2.xpose.msra.mxu0 0.0
        %7566 = vmatprep.subr.mxu0 0.0
        %7567 = vmatpush2.xpose.msra.mxu0 0.0
        %7568 = vmatprep.subr.mxu0 0.0
        %7569 = vmatpush2.xpose.msra.mxu0 0.0
        %7570 = vmatprep.subr.mxu0 0.0
        %7571 = vmatpush2.xpose.msra.mxu0 0.0
        %7572 = vmatprep.subr.mxu0 0.0
        %7573 = vmatpush2.xpose.msra.mxu0 0.0
        %7574 = vmatprep.subr.mxu0 0.0
        %7575 = vmatpush2.xpose.msra.mxu0 0.0
        %7576 = vmatprep.mubr.f32.mxu0 0.0
        %7577 = vmatmul.mubr.f32.gmra.mxu0 %v7508
        %v7578 = vpop.f32.mrf.mxu0
        %v7579 = vadd.f32 %v1104, %v7578
        %v7580 = vpop.f32.mrf.mxu0
        %7581 = vdwg.mxu0
        %v7582 = vsel %vm1109, %v7579, -inf
        %7583 = vmax.xlane.f32.xlu0 %v7582
        %v7584 = vpop.xlane.xlu0 %7583
        %v7585 = vsub.f32 %v7579, %v7584
        %v7586 = vmul.f32 %v7585, 1.442695
        %v7587 = vpow.pop %v7586
        %v7588 = vsel %vm1109, %v7587, 0.0
        %7589 = vadd.xlane.f32.xlu0 %v7588
        %v7590 = vpop.xlane.xlu0 %7589
        %v7591 = vrcp.pop %v7590
        %v7592 = vmul.f32 %v7587, %v7591
        %7593 = vrot.lane.b32.xlu0 %v7331, 88
        %v7594 = vpop.permute.xlu0 %7593
        %v7597 = vsel %vm1109, %v7592, 0
        %7599 = vmatprep.subr.mxu0 0.0
        %7600 = vmatpush1.msra.mxu0 0.0
        %7601 = vmatprep.subr.mxu0 0.0
        %7602 = vmatpush1.msra.mxu0 0.0
        %7603 = vmatprep.subr.mxu0 0.0
        %7604 = vmatpush1.msra.mxu0 0.0
        %7605 = vmatprep.subr.mxu0 0.0
        %7606 = vmatpush1.msra.mxu0 0.0
        %7607 = vmatprep.subr.mxu0 0.0
        %7608 = vmatpush1.msra.mxu0 0.0
        %7609 = vmatprep.subr.mxu0 0.0
        %7610 = vmatpush1.msra.mxu0 0.0
        %7611 = vmatprep.subr.mxu0 0.0
        %7612 = vmatpush1.msra.mxu0 0.0
        %7613 = vmatprep.subr.mxu0 0.0
        %7614 = vmatpush1.msra.mxu0 0.0
        %7615 = vmatprep.subr.mxu0 0.0
        %7616 = vmatpush1.msra.mxu0 0.0
        %7617 = vmatprep.subr.mxu0 0.0
        %7618 = vmatpush1.msra.mxu0 0.0
        %7619 = vmatprep.subr.mxu0 0.0
        %7620 = vmatpush1.msra.mxu0 0.0
        %7621 = vmatprep.subr.mxu0 0.0
        %7622 = vmatpush1.msra.mxu0 0.0
        %7623 = vmatprep.subr.mxu0 0.0
        %7624 = vmatpush1.msra.mxu0 0.0
        %7625 = vmatprep.subr.mxu0 0.0
        %7626 = vmatpush1.msra.mxu0 0.0
        %7627 = vmatprep.subr.mxu0 0.0
        %7628 = vmatpush1.msra.mxu0 0.0
        %7629 = vmatprep.subr.mxu0 0.0
        %7630 = vmatpush1.msra.mxu0 %v7594
        %7631 = vmatprep.subr.mxu0 0.0
        %7632 = vmatpush2.msra.mxu0 0.0
        %7633 = vmatprep.subr.mxu0 0.0
        %7634 = vmatpush2.msra.mxu0 0.0
        %7635 = vmatprep.subr.mxu0 0.0
        %7636 = vmatpush2.msra.mxu0 0.0
        %7637 = vmatprep.subr.mxu0 0.0
        %7638 = vmatpush2.msra.mxu0 0.0
        %7639 = vmatprep.subr.mxu0 0.0
        %7640 = vmatpush2.msra.mxu0 0.0
        %7641 = vmatprep.subr.mxu0 0.0
        %7642 = vmatpush2.msra.mxu0 0.0
        %7643 = vmatprep.subr.mxu0 0.0
        %7644 = vmatpush2.msra.mxu0 0.0
        %7645 = vmatprep.subr.mxu0 0.0
        %7646 = vmatpush2.msra.mxu0 0.0
        %7647 = vmatprep.subr.mxu0 0.0
        %7648 = vmatpush2.msra.mxu0 0.0
        %7649 = vmatprep.subr.mxu0 0.0
        %7650 = vmatpush2.msra.mxu0 0.0
        %7651 = vmatprep.subr.mxu0 0.0
        %7652 = vmatpush2.msra.mxu0 0.0
        %7653 = vmatprep.subr.mxu0 0.0
        %7654 = vmatpush2.msra.mxu0 0.0
        %7655 = vmatprep.subr.mxu0 0.0
        %7656 = vmatpush2.msra.mxu0 0.0
        %7657 = vmatprep.subr.mxu0 0.0
        %7658 = vmatpush2.msra.mxu0 0.0
        %7659 = vmatprep.subr.mxu0 0.0
        %7660 = vmatpush2.msra.mxu0 0.0
        %7661 = vmatprep.subr.mxu0 0.0
        %7662 = vmatpush2.msra.mxu0 0.0
        %7663 = vmatprep.mubr.f32.mxu0 0.0
        %7664 = vmatmul.mubr.f32.gmra.mxu0 %v7597
        %v7665 = vpop.f32.mrf.mxu0
        %v7666 = vadd.f32 0.0, %v7665
        %v7667 = vpop.f32.mrf.mxu0
        %7668 = vdwg.mxu0
        %v7670 = vsel %vm1109, %v7666, 0
        %7672 = vmatprep.subr.mxu0 0.0
        %7673 = vmatpush1.msra.mxu0 0.0
        %7674 = vmatprep.subr.mxu0 0.0
        %7675 = vmatpush1.msra.mxu0 0.0
        %7676 = vmatprep.subr.mxu0 0.0
        %7677 = vmatpush1.msra.mxu0 0.0
        %7678 = vmatprep.subr.mxu0 0.0
        %7679 = vmatpush1.msra.mxu0 0.0
        %7680 = vmatprep.subr.mxu0 0.0
        %7681 = vmatpush1.msra.mxu0 0.0
        %7682 = vmatprep.subr.mxu0 0.0
        %7683 = vmatpush1.msra.mxu0 0.0
        %7684 = vmatprep.subr.mxu0 0.0
        %7685 = vmatpush1.msra.mxu0 0.0
        %7686 = vmatprep.subr.mxu0 0.0
        %7687 = vmatpush1.msra.mxu0 0.0
        %7688 = vmatprep.subr.mxu0 0.0
        %7689 = vmatpush1.msra.mxu0 0.0
        %7690 = vmatprep.subr.mxu0 0.0
        %7691 = vmatpush1.msra.mxu0 0.0
        %7692 = vmatprep.subr.mxu0 0.0
        %7693 = vmatpush1.msra.mxu0 0.0
        %7694 = vmatprep.subr.mxu0 0.0
        %7695 = vmatpush1.msra.mxu0 0.0
        %7696 = vmatprep.subr.mxu0 0.0
        %7697 = vmatpush1.msra.mxu0 0.0
        %7698 = vmatprep.subr.mxu0 0.0
        %7699 = vmatpush1.msra.mxu0 0.0
        %7700 = vmatprep.subr.mxu0 0.0
        %7701 = vmatpush1.msra.mxu0 0.0
        %7702 = vmatprep.subr.mxu0 0.0
        %7703 = vmatpush1.msra.mxu0 %v7336
        %7704 = vmatprep.subr.mxu0 0.0
        %7705 = vmatpush2.msra.mxu0 0.0
        %7706 = vmatprep.subr.mxu0 0.0
        %7707 = vmatpush2.msra.mxu0 0.0
        %7708 = vmatprep.subr.mxu0 0.0
        %7709 = vmatpush2.msra.mxu0 0.0
        %7710 = vmatprep.subr.mxu0 0.0
        %7711 = vmatpush2.msra.mxu0 0.0
        %7712 = vmatprep.subr.mxu0 0.0
        %7713 = vmatpush2.msra.mxu0 0.0
        %7714 = vmatprep.subr.mxu0 0.0
        %7715 = vmatpush2.msra.mxu0 0.0
        %7716 = vmatprep.subr.mxu0 0.0
        %7717 = vmatpush2.msra.mxu0 0.0
        %7718 = vmatprep.subr.mxu0 0.0
        %7719 = vmatpush2.msra.mxu0 0.0
        %7720 = vmatprep.subr.mxu0 0.0
        %7721 = vmatpush2.msra.mxu0 0.0
        %7722 = vmatprep.subr.mxu0 0.0
        %7723 = vmatpush2.msra.mxu0 0.0
        %7724 = vmatprep.subr.mxu0 0.0
        %7725 = vmatpush2.msra.mxu0 0.0
        %7726 = vmatprep.subr.mxu0 0.0
        %7727 = vmatpush2.msra.mxu0 0.0
        %7728 = vmatprep.subr.mxu0 0.0
        %7729 = vmatpush2.msra.mxu0 0.0
        %7730 = vmatprep.subr.mxu0 0.0
        %7731 = vmatpush2.msra.mxu0 0.0
        %7732 = vmatprep.subr.mxu0 0.0
        %7733 = vmatpush2.msra.mxu0 0.0
        %7734 = vmatprep.subr.mxu0 0.0
        %7735 = vmatpush2.msra.mxu0 0.0
        %7736 = vmatprep.mubr.f32.mxu0 0.0
        %7737 = vmatmul.mubr.f32.gmra.mxu0 %v7670
        %v7738 = vpop.f32.mrf.mxu0
        %v7739 = vadd.f32 0.0, %v7738
        %v7740 = vpop.f32.mrf.mxu0
        %7741 = vdwg.mxu0
        %v7743 = vsel %vm1109, %v7501, 0
        %7745 = vmatprep.subr.mxu0 0.0
        %7746 = vmatpush1.msra.mxu0 0.0
        %7747 = vmatprep.subr.mxu0 0.0
        %7748 = vmatpush1.msra.mxu0 0.0
        %7749 = vmatprep.subr.mxu0 0.0
        %7750 = vmatpush1.msra.mxu0 0.0
        %7751 = vmatprep.subr.mxu0 0.0
        %7752 = vmatpush1.msra.mxu0 0.0
        %7753 = vmatprep.subr.mxu0 0.0
        %7754 = vmatpush1.msra.mxu0 0.0
        %7755 = vmatprep.subr.mxu0 0.0
        %7756 = vmatpush1.msra.mxu0 0.0
        %7757 = vmatprep.subr.mxu0 0.0
        %7758 = vmatpush1.msra.mxu0 0.0
        %7759 = vmatprep.subr.mxu0 0.0
        %7760 = vmatpush1.msra.mxu0 0.0
        %7761 = vmatprep.subr.mxu0 0.0
        %7762 = vmatpush1.msra.mxu0 0.0
        %7763 = vmatprep.subr.mxu0 0.0
        %7764 = vmatpush1.msra.mxu0 0.0
        %7765 = vmatprep.subr.mxu0 0.0
        %7766 = vmatpush1.msra.mxu0 0.0
        %7767 = vmatprep.subr.mxu0 0.0
        %7768 = vmatpush1.msra.mxu0 0.0
        %7769 = vmatprep.subr.mxu0 0.0
        %7770 = vmatpush1.msra.mxu0 0.0
        %7771 = vmatprep.subr.mxu0 0.0
        %7772 = vmatpush1.msra.mxu0 0.0
        %7773 = vmatprep.subr.mxu0 0.0
        %7774 = vmatpush1.msra.mxu0 0.0
        %7775 = vmatprep.subr.mxu0 0.0
        %7776 = vmatpush1.msra.mxu0 %v7335
        %7777 = vmatprep.subr.mxu0 0.0
        %7778 = vmatpush2.msra.mxu0 0.0
        %7779 = vmatprep.subr.mxu0 0.0
        %7780 = vmatpush2.msra.mxu0 0.0
        %7781 = vmatprep.subr.mxu0 0.0
        %7782 = vmatpush2.msra.mxu0 0.0
        %7783 = vmatprep.subr.mxu0 0.0
        %7784 = vmatpush2.msra.mxu0 0.0
        %7785 = vmatprep.subr.mxu0 0.0
        %7786 = vmatpush2.msra.mxu0 0.0
        %7787 = vmatprep.subr.mxu0 0.0
        %7788 = vmatpush2.msra.mxu0 0.0
        %7789 = vmatprep.subr.mxu0 0.0
        %7790 = vmatpush2.msra.mxu0 0.0
        %7791 = vmatprep.subr.mxu0 0.0
        %7792 = vmatpush2.msra.mxu0 0.0
        %7793 = vmatprep.subr.mxu0 0.0
        %7794 = vmatpush2.msra.mxu0 0.0
        %7795 = vmatprep.subr.mxu0 0.0
        %7796 = vmatpush2.msra.mxu0 0.0
        %7797 = vmatprep.subr.mxu0 0.0
        %7798 = vmatpush2.msra.mxu0 0.0
        %7799 = vmatprep.subr.mxu0 0.0
        %7800 = vmatpush2.msra.mxu0 0.0
        %7801 = vmatprep.subr.mxu0 0.0
        %7802 = vmatpush2.msra.mxu0 0.0
        %7803 = vmatprep.subr.mxu0 0.0
        %7804 = vmatpush2.msra.mxu0 0.0
        %7805 = vmatprep.subr.mxu0 0.0
        %7806 = vmatpush2.msra.mxu0 0.0
        %7807 = vmatprep.subr.mxu0 0.0
        %7808 = vmatpush2.msra.mxu0 0.0
        %7809 = vmatprep.mubr.f32.mxu0 0.0
        %7810 = vmatmul.mubr.f32.gmra.mxu0 %v7743
        %v7811 = vpop.f32.mrf.mxu0
        %v7812 = vadd.f32 %v7739, %v7811
        %v7813 = vpop.f32.mrf.mxu0
        %7814 = vdwg.mxu0
        %7815 = vrot.lane.b32.xlu0 %v7248, 112
        %v7816 = vpop.permute.xlu0 %7815
        %7817 = vrot.lane.b32.xlu0 %v7331, 112
        %v7818 = vpop.permute.xlu0 %7817
        %v7819 = vsel %vm1109, %v7816, 0
        %v7821 = vsel %vm1109, %v7818, 0
        %7823 = vmatprep.subr.mxu0 0.0
        %7824 = vmatpush1.xpose.msra.mxu0 0.0
        %7825 = vmatprep.subr.mxu0 0.0
        %7826 = vmatpush1.xpose.msra.mxu0 0.0
        %7827 = vmatprep.subr.mxu0 0.0
        %7828 = vmatpush1.xpose.msra.mxu0 0.0
        %7829 = vmatprep.subr.mxu0 0.0
        %7830 = vmatpush1.xpose.msra.mxu0 0.0
        %7831 = vmatprep.subr.mxu0 0.0
        %7832 = vmatpush1.xpose.msra.mxu0 0.0
        %7833 = vmatprep.subr.mxu0 0.0
        %7834 = vmatpush1.xpose.msra.mxu0 0.0
        %7835 = vmatprep.subr.mxu0 0.0
        %7836 = vmatpush1.xpose.msra.mxu0 0.0
        %7837 = vmatprep.subr.mxu0 0.0
        %7838 = vmatpush1.xpose.msra.mxu0 0.0
        %7839 = vmatprep.subr.mxu0 0.0
        %7840 = vmatpush1.xpose.msra.mxu0 0.0
        %7841 = vmatprep.subr.mxu0 0.0
        %7842 = vmatpush1.xpose.msra.mxu0 0.0
        %7843 = vmatprep.subr.mxu0 0.0
        %7844 = vmatpush1.xpose.msra.mxu0 0.0
        %7845 = vmatprep.subr.mxu0 0.0
        %7846 = vmatpush1.xpose.msra.mxu0 0.0
        %7847 = vmatprep.subr.mxu0 0.0
        %7848 = vmatpush1.xpose.msra.mxu0 0.0
        %7849 = vmatprep.subr.mxu0 0.0
        %7850 = vmatpush1.xpose.msra.mxu0 0.0
        %7851 = vmatprep.subr.mxu0 0.0
        %7852 = vmatpush1.xpose.msra.mxu0 0.0
        %7853 = vmatprep.subr.mxu0 0.0
        %7854 = vmatpush1.xpose.msra.mxu0 %v7821
        %7855 = vmatprep.subr.mxu0 0.0
        %7856 = vmatpush2.xpose.msra.mxu0 0.0
        %7857 = vmatprep.subr.mxu0 0.0
        %7858 = vmatpush2.xpose.msra.mxu0 0.0
        %7859 = vmatprep.subr.mxu0 0.0
        %7860 = vmatpush2.xpose.msra.mxu0 0.0
        %7861 = vmatprep.subr.mxu0 0.0
        %7862 = vmatpush2.xpose.msra.mxu0 0.0
        %7863 = vmatprep.subr.mxu0 0.0
        %7864 = vmatpush2.xpose.msra.mxu0 0.0
        %7865 = vmatprep.subr.mxu0 0.0
        %7866 = vmatpush2.xpose.msra.mxu0 0.0
        %7867 = vmatprep.subr.mxu0 0.0
        %7868 = vmatpush2.xpose.msra.mxu0 0.0
        %7869 = vmatprep.subr.mxu0 0.0
        %7870 = vmatpush2.xpose.msra.mxu0 0.0
        %7871 = vmatprep.subr.mxu0 0.0
        %7872 = vmatpush2.xpose.msra.mxu0 0.0
        %7873 = vmatprep.subr.mxu0 0.0
        %7874 = vmatpush2.xpose.msra.mxu0 0.0
        %7875 = vmatprep.subr.mxu0 0.0
        %7876 = vmatpush2.xpose.msra.mxu0 0.0
        %7877 = vmatprep.subr.mxu0 0.0
        %7878 = vmatpush2.xpose.msra.mxu0 0.0
        %7879 = vmatprep.subr.mxu0 0.0
        %7880 = vmatpush2.xpose.msra.mxu0 0.0
        %7881 = vmatprep.subr.mxu0 0.0
        %7882 = vmatpush2.xpose.msra.mxu0 0.0
        %7883 = vmatprep.subr.mxu0 0.0
        %7884 = vmatpush2.xpose.msra.mxu0 0.0
        %7885 = vmatprep.subr.mxu0 0.0
        %7886 = vmatpush2.xpose.msra.mxu0 0.0
        %7887 = vmatprep.mubr.f32.mxu0 0.0
        %7888 = vmatmul.mubr.f32.gmra.mxu0 %v7819
        %v7889 = vpop.f32.mrf.mxu0
        %v7890 = vadd.f32 %v1104, %v7889
        %v7891 = vpop.f32.mrf.mxu0
        %7892 = vdwg.mxu0
        %v7893 = vsel %vm1109, %v7890, -inf
        %7894 = vmax.xlane.f32.xlu0 %v7893
        %v7895 = vpop.xlane.xlu0 %7894
        %v7896 = vsub.f32 %v7890, %v7895
        %v7897 = vmul.f32 %v7896, 1.442695
        %v7898 = vpow.pop %v7897
        %v7899 = vsel %vm1109, %v7898, 0.0
        %7900 = vadd.xlane.f32.xlu0 %v7899
        %v7901 = vpop.xlane.xlu0 %7900
        %v7902 = vrcp.pop %v7901
        %v7903 = vmul.f32 %v7898, %v7902
        %7904 = vrot.lane.b32.xlu0 %v7331, 80
        %v7905 = vpop.permute.xlu0 %7904
        %v7908 = vsel %vm1109, %v7903, 0
        %7910 = vmatprep.subr.mxu0 0.0
        %7911 = vmatpush1.msra.mxu0 0.0
        %7912 = vmatprep.subr.mxu0 0.0
        %7913 = vmatpush1.msra.mxu0 0.0
        %7914 = vmatprep.subr.mxu0 0.0
        %7915 = vmatpush1.msra.mxu0 0.0
        %7916 = vmatprep.subr.mxu0 0.0
        %7917 = vmatpush1.msra.mxu0 0.0
        %7918 = vmatprep.subr.mxu0 0.0
        %7919 = vmatpush1.msra.mxu0 0.0
        %7920 = vmatprep.subr.mxu0 0.0
        %7921 = vmatpush1.msra.mxu0 0.0
        %7922 = vmatprep.subr.mxu0 0.0
        %7923 = vmatpush1.msra.mxu0 0.0
        %7924 = vmatprep.subr.mxu0 0.0
        %7925 = vmatpush1.msra.mxu0 0.0
        %7926 = vmatprep.subr.mxu0 0.0
        %7927 = vmatpush1.msra.mxu0 0.0
        %7928 = vmatprep.subr.mxu0 0.0
        %7929 = vmatpush1.msra.mxu0 0.0
        %7930 = vmatprep.subr.mxu0 0.0
        %7931 = vmatpush1.msra.mxu0 0.0
        %7932 = vmatprep.subr.mxu0 0.0
        %7933 = vmatpush1.msra.mxu0 0.0
        %7934 = vmatprep.subr.mxu0 0.0
        %7935 = vmatpush1.msra.mxu0 0.0
        %7936 = vmatprep.subr.mxu0 0.0
        %7937 = vmatpush1.msra.mxu0 0.0
        %7938 = vmatprep.subr.mxu0 0.0
        %7939 = vmatpush1.msra.mxu0 0.0
        %7940 = vmatprep.subr.mxu0 0.0
        %7941 = vmatpush1.msra.mxu0 %v7905
        %7942 = vmatprep.subr.mxu0 0.0
        %7943 = vmatpush2.msra.mxu0 0.0
        %7944 = vmatprep.subr.mxu0 0.0
        %7945 = vmatpush2.msra.mxu0 0.0
        %7946 = vmatprep.subr.mxu0 0.0
        %7947 = vmatpush2.msra.mxu0 0.0
        %7948 = vmatprep.subr.mxu0 0.0
        %7949 = vmatpush2.msra.mxu0 0.0
        %7950 = vmatprep.subr.mxu0 0.0
        %7951 = vmatpush2.msra.mxu0 0.0
        %7952 = vmatprep.subr.mxu0 0.0
        %7953 = vmatpush2.msra.mxu0 0.0
        %7954 = vmatprep.subr.mxu0 0.0
        %7955 = vmatpush2.msra.mxu0 0.0
        %7956 = vmatprep.subr.mxu0 0.0
        %7957 = vmatpush2.msra.mxu0 0.0
        %7958 = vmatprep.subr.mxu0 0.0
        %7959 = vmatpush2.msra.mxu0 0.0
        %7960 = vmatprep.subr.mxu0 0.0
        %7961 = vmatpush2.msra.mxu0 0.0
        %7962 = vmatprep.subr.mxu0 0.0
        %7963 = vmatpush2.msra.mxu0 0.0
        %7964 = vmatprep.subr.mxu0 0.0
        %7965 = vmatpush2.msra.mxu0 0.0
        %7966 = vmatprep.subr.mxu0 0.0
        %7967 = vmatpush2.msra.mxu0 0.0
        %7968 = vmatprep.subr.mxu0 0.0
        %7969 = vmatpush2.msra.mxu0 0.0
        %7970 = vmatprep.subr.mxu0 0.0
        %7971 = vmatpush2.msra.mxu0 0.0
        %7972 = vmatprep.subr.mxu0 0.0
        %7973 = vmatpush2.msra.mxu0 0.0
        %7974 = vmatprep.mubr.f32.mxu0 0.0
        %7975 = vmatmul.mubr.f32.gmra.mxu0 %v7908
        %v7976 = vpop.f32.mrf.mxu0
        %v7977 = vadd.f32 0.0, %v7976
        %v7978 = vpop.f32.mrf.mxu0
        %7979 = vdwg.mxu0
        %v7981 = vsel %vm1109, %v7977, 0
        %7983 = vmatprep.subr.mxu0 0.0
        %7984 = vmatpush1.msra.mxu0 0.0
        %7985 = vmatprep.subr.mxu0 0.0
        %7986 = vmatpush1.msra.mxu0 0.0
        %7987 = vmatprep.subr.mxu0 0.0
        %7988 = vmatpush1.msra.mxu0 0.0
        %7989 = vmatprep.subr.mxu0 0.0
        %7990 = vmatpush1.msra.mxu0 0.0
        %7991 = vmatprep.subr.mxu0 0.0
        %7992 = vmatpush1.msra.mxu0 0.0
        %7993 = vmatprep.subr.mxu0 0.0
        %7994 = vmatpush1.msra.mxu0 0.0
        %7995 = vmatprep.subr.mxu0 0.0
        %7996 = vmatpush1.msra.mxu0 0.0
        %7997 = vmatprep.subr.mxu0 0.0
        %7998 = vmatpush1.msra.mxu0 0.0
        %7999 = vmatprep.subr.mxu0 0.0
        %8000 = vmatpush1.msra.mxu0 0.0
        %8001 = vmatprep.subr.mxu0 0.0
        %8002 = vmatpush1.msra.mxu0 0.0
        %8003 = vmatprep.subr.mxu0 0.0
        %8004 = vmatpush1.msra.mxu0 0.0
        %8005 = vmatprep.subr.mxu0 0.0
        %8006 = vmatpush1.msra.mxu0 0.0
        %8007 = vmatprep.subr.mxu0 0.0
        %8008 = vmatpush1.msra.mxu0 0.0
        %8009 = vmatprep.subr.mxu0 0.0
        %8010 = vmatpush1.msra.mxu0 0.0
        %8011 = vmatprep.subr.mxu0 0.0
        %8012 = vmatpush1.msra.mxu0 0.0
        %8013 = vmatprep.subr.mxu0 0.0
        %8014 = vmatpush1.msra.mxu0 %v7337
        %8015 = vmatprep.subr.mxu0 0.0
        %8016 = vmatpush2.msra.mxu0 0.0
        %8017 = vmatprep.subr.mxu0 0.0
        %8018 = vmatpush2.msra.mxu0 0.0
        %8019 = vmatprep.subr.mxu0 0.0
        %8020 = vmatpush2.msra.mxu0 0.0
        %8021 = vmatprep.subr.mxu0 0.0
        %8022 = vmatpush2.msra.mxu0 0.0
        %8023 = vmatprep.subr.mxu0 0.0
        %8024 = vmatpush2.msra.mxu0 0.0
        %8025 = vmatprep.subr.mxu0 0.0
        %8026 = vmatpush2.msra.mxu0 0.0
        %8027 = vmatprep.subr.mxu0 0.0
        %8028 = vmatpush2.msra.mxu0 0.0
        %8029 = vmatprep.subr.mxu0 0.0
        %8030 = vmatpush2.msra.mxu0 0.0
        %8031 = vmatprep.subr.mxu0 0.0
        %8032 = vmatpush2.msra.mxu0 0.0
        %8033 = vmatprep.subr.mxu0 0.0
        %8034 = vmatpush2.msra.mxu0 0.0
        %8035 = vmatprep.subr.mxu0 0.0
        %8036 = vmatpush2.msra.mxu0 0.0
        %8037 = vmatprep.subr.mxu0 0.0
        %8038 = vmatpush2.msra.mxu0 0.0
        %8039 = vmatprep.subr.mxu0 0.0
        %8040 = vmatpush2.msra.mxu0 0.0
        %8041 = vmatprep.subr.mxu0 0.0
        %8042 = vmatpush2.msra.mxu0 0.0
        %8043 = vmatprep.subr.mxu0 0.0
        %8044 = vmatpush2.msra.mxu0 0.0
        %8045 = vmatprep.subr.mxu0 0.0
        %8046 = vmatpush2.msra.mxu0 0.0
        %8047 = vmatprep.mubr.f32.mxu0 0.0
        %8048 = vmatmul.mubr.f32.gmra.mxu0 %v7981
        %v8049 = vpop.f32.mrf.mxu0
        %v8050 = vadd.f32 0.0, %v8049
        %v8051 = vpop.f32.mrf.mxu0
        %8052 = vdwg.mxu0
        %v8053 = vadd.f32 %v7812, %v8050
        %8054 = vrot.lane.b32.xlu0 %v7248, 104
        %v8055 = vpop.permute.xlu0 %8054
        %8056 = vrot.lane.b32.xlu0 %v7331, 104
        %v8057 = vpop.permute.xlu0 %8056
        %v8058 = vsel %vm1109, %v8055, 0
        %v8060 = vsel %vm1109, %v8057, 0
        %8062 = vmatprep.subr.mxu0 0.0
        %8063 = vmatpush1.xpose.msra.mxu0 0.0
        %8064 = vmatprep.subr.mxu0 0.0
        %8065 = vmatpush1.xpose.msra.mxu0 0.0
        %8066 = vmatprep.subr.mxu0 0.0
        %8067 = vmatpush1.xpose.msra.mxu0 0.0
        %8068 = vmatprep.subr.mxu0 0.0
        %8069 = vmatpush1.xpose.msra.mxu0 0.0
        %8070 = vmatprep.subr.mxu0 0.0
        %8071 = vmatpush1.xpose.msra.mxu0 0.0
        %8072 = vmatprep.subr.mxu0 0.0
        %8073 = vmatpush1.xpose.msra.mxu0 0.0
        %8074 = vmatprep.subr.mxu0 0.0
        %8075 = vmatpush1.xpose.msra.mxu0 0.0
        %8076 = vmatprep.subr.mxu0 0.0
        %8077 = vmatpush1.xpose.msra.mxu0 0.0
        %8078 = vmatprep.subr.mxu0 0.0
        %8079 = vmatpush1.xpose.msra.mxu0 0.0
        %8080 = vmatprep.subr.mxu0 0.0
        %8081 = vmatpush1.xpose.msra.mxu0 0.0
        %8082 = vmatprep.subr.mxu0 0.0
        %8083 = vmatpush1.xpose.msra.mxu0 0.0
        %8084 = vmatprep.subr.mxu0 0.0
        %8085 = vmatpush1.xpose.msra.mxu0 0.0
        %8086 = vmatprep.subr.mxu0 0.0
        %8087 = vmatpush1.xpose.msra.mxu0 0.0
        %8088 = vmatprep.subr.mxu0 0.0
        %8089 = vmatpush1.xpose.msra.mxu0 0.0
        %8090 = vmatprep.subr.mxu0 0.0
        %8091 = vmatpush1.xpose.msra.mxu0 0.0
        %8092 = vmatprep.subr.mxu0 0.0
        %8093 = vmatpush1.xpose.msra.mxu0 %v8060
        %8094 = vmatprep.subr.mxu0 0.0
        %8095 = vmatpush2.xpose.msra.mxu0 0.0
        %8096 = vmatprep.subr.mxu0 0.0
        %8097 = vmatpush2.xpose.msra.mxu0 0.0
        %8098 = vmatprep.subr.mxu0 0.0
        %8099 = vmatpush2.xpose.msra.mxu0 0.0
        %8100 = vmatprep.subr.mxu0 0.0
        %8101 = vmatpush2.xpose.msra.mxu0 0.0
        %8102 = vmatprep.subr.mxu0 0.0
        %8103 = vmatpush2.xpose.msra.mxu0 0.0
        %8104 = vmatprep.subr.mxu0 0.0
        %8105 = vmatpush2.xpose.msra.mxu0 0.0
        %8106 = vmatprep.subr.mxu0 0.0
        %8107 = vmatpush2.xpose.msra.mxu0 0.0
        %8108 = vmatprep.subr.mxu0 0.0
        %8109 = vmatpush2.xpose.msra.mxu0 0.0
        %8110 = vmatprep.subr.mxu0 0.0
        %8111 = vmatpush2.xpose.msra.mxu0 0.0
        %8112 = vmatprep.subr.mxu0 0.0
        %8113 = vmatpush2.xpose.msra.mxu0 0.0
        %8114 = vmatprep.subr.mxu0 0.0
        %8115 = vmatpush2.xpose.msra.mxu0 0.0
        %8116 = vmatprep.subr.mxu0 0.0
        %8117 = vmatpush2.xpose.msra.mxu0 0.0
        %8118 = vmatprep.subr.mxu0 0.0
        %8119 = vmatpush2.xpose.msra.mxu0 0.0
        %8120 = vmatprep.subr.mxu0 0.0
        %8121 = vmatpush2.xpose.msra.mxu0 0.0
        %8122 = vmatprep.subr.mxu0 0.0
        %8123 = vmatpush2.xpose.msra.mxu0 0.0
        %8124 = vmatprep.subr.mxu0 0.0
        %8125 = vmatpush2.xpose.msra.mxu0 0.0
        %8126 = vmatprep.mubr.f32.mxu0 0.0
        %8127 = vmatmul.mubr.f32.gmra.mxu0 %v8058
        %v8128 = vpop.f32.mrf.mxu0
        %v8129 = vadd.f32 %v1104, %v8128
        %v8130 = vpop.f32.mrf.mxu0
        %8131 = vdwg.mxu0
        %v8132 = vsel %vm1109, %v8129, -inf
        %8133 = vmax.xlane.f32.xlu0 %v8132
        %v8134 = vpop.xlane.xlu0 %8133
        %v8135 = vsub.f32 %v8129, %v8134
        %v8136 = vmul.f32 %v8135, 1.442695
        %v8137 = vpow.pop %v8136
        %v8138 = vsel %vm1109, %v8137, 0.0
        %8139 = vadd.xlane.f32.xlu0 %v8138
        %v8140 = vpop.xlane.xlu0 %8139
        %v8141 = vrcp.pop %v8140
        %v8142 = vmul.f32 %v8137, %v8141
        %8143 = vrot.lane.b32.xlu0 %v7331, 72
        %v8144 = vpop.permute.xlu0 %8143
        %v8147 = vsel %vm1109, %v8142, 0
        %8149 = vmatprep.subr.mxu0 0.0
        %8150 = vmatpush1.msra.mxu0 0.0
        %8151 = vmatprep.subr.mxu0 0.0
        %8152 = vmatpush1.msra.mxu0 0.0
        %8153 = vmatprep.subr.mxu0 0.0
        %8154 = vmatpush1.msra.mxu0 0.0
        %8155 = vmatprep.subr.mxu0 0.0
        %8156 = vmatpush1.msra.mxu0 0.0
        %8157 = vmatprep.subr.mxu0 0.0
        %8158 = vmatpush1.msra.mxu0 0.0
        %8159 = vmatprep.subr.mxu0 0.0
        %8160 = vmatpush1.msra.mxu0 0.0
        %8161 = vmatprep.subr.mxu0 0.0
        %8162 = vmatpush1.msra.mxu0 0.0
        %8163 = vmatprep.subr.mxu0 0.0
        %8164 = vmatpush1.msra.mxu0 0.0
        %8165 = vmatprep.subr.mxu0 0.0
        %8166 = vmatpush1.msra.mxu0 0.0
        %8167 = vmatprep.subr.mxu0 0.0
        %8168 = vmatpush1.msra.mxu0 0.0
        %8169 = vmatprep.subr.mxu0 0.0
        %8170 = vmatpush1.msra.mxu0 0.0
        %8171 = vmatprep.subr.mxu0 0.0
        %8172 = vmatpush1.msra.mxu0 0.0
        %8173 = vmatprep.subr.mxu0 0.0
        %8174 = vmatpush1.msra.mxu0 0.0
        %8175 = vmatprep.subr.mxu0 0.0
        %8176 = vmatpush1.msra.mxu0 0.0
        %8177 = vmatprep.subr.mxu0 0.0
        %8178 = vmatpush1.msra.mxu0 0.0
        %8179 = vmatprep.subr.mxu0 0.0
        %8180 = vmatpush1.msra.mxu0 %v8144
        %8181 = vmatprep.subr.mxu0 0.0
        %8182 = vmatpush2.msra.mxu0 0.0
        %8183 = vmatprep.subr.mxu0 0.0
        %8184 = vmatpush2.msra.mxu0 0.0
        %8185 = vmatprep.subr.mxu0 0.0
        %8186 = vmatpush2.msra.mxu0 0.0
        %8187 = vmatprep.subr.mxu0 0.0
        %8188 = vmatpush2.msra.mxu0 0.0
        %8189 = vmatprep.subr.mxu0 0.0
        %8190 = vmatpush2.msra.mxu0 0.0
        %8191 = vmatprep.subr.mxu0 0.0
        %8192 = vmatpush2.msra.mxu0 0.0
        %8193 = vmatprep.subr.mxu0 0.0
        %8194 = vmatpush2.msra.mxu0 0.0
        %8195 = vmatprep.subr.mxu0 0.0
        %8196 = vmatpush2.msra.mxu0 0.0
        %8197 = vmatprep.subr.mxu0 0.0
        %8198 = vmatpush2.msra.mxu0 0.0
        %8199 = vmatprep.subr.mxu0 0.0
        %8200 = vmatpush2.msra.mxu0 0.0
        %8201 = vmatprep.subr.mxu0 0.0
        %8202 = vmatpush2.msra.mxu0 0.0
        %8203 = vmatprep.subr.mxu0 0.0
        %8204 = vmatpush2.msra.mxu0 0.0
        %8205 = vmatprep.subr.mxu0 0.0
        %8206 = vmatpush2.msra.mxu0 0.0
        %8207 = vmatprep.subr.mxu0 0.0
        %8208 = vmatpush2.msra.mxu0 0.0
        %8209 = vmatprep.subr.mxu0 0.0
        %8210 = vmatpush2.msra.mxu0 0.0
        %8211 = vmatprep.subr.mxu0 0.0
        %8212 = vmatpush2.msra.mxu0 0.0
        %8213 = vmatprep.mubr.f32.mxu0 0.0
        %8214 = vmatmul.mubr.f32.gmra.mxu0 %v8147
        %v8215 = vpop.f32.mrf.mxu0
        %v8216 = vadd.f32 0.0, %v8215
        %v8217 = vpop.f32.mrf.mxu0
        %8218 = vdwg.mxu0
        %v8220 = vsel %vm1109, %v8216, 0
        %8222 = vmatprep.subr.mxu0 0.0
        %8223 = vmatpush1.msra.mxu0 0.0
        %8224 = vmatprep.subr.mxu0 0.0
        %8225 = vmatpush1.msra.mxu0 0.0
        %8226 = vmatprep.subr.mxu0 0.0
        %8227 = vmatpush1.msra.mxu0 0.0
        %8228 = vmatprep.subr.mxu0 0.0
        %8229 = vmatpush1.msra.mxu0 0.0
        %8230 = vmatprep.subr.mxu0 0.0
        %8231 = vmatpush1.msra.mxu0 0.0
        %8232 = vmatprep.subr.mxu0 0.0
        %8233 = vmatpush1.msra.mxu0 0.0
        %8234 = vmatprep.subr.mxu0 0.0
        %8235 = vmatpush1.msra.mxu0 0.0
        %8236 = vmatprep.subr.mxu0 0.0
        %8237 = vmatpush1.msra.mxu0 0.0
        %8238 = vmatprep.subr.mxu0 0.0
        %8239 = vmatpush1.msra.mxu0 0.0
        %8240 = vmatprep.subr.mxu0 0.0
        %8241 = vmatpush1.msra.mxu0 0.0
        %8242 = vmatprep.subr.mxu0 0.0
        %8243 = vmatpush1.msra.mxu0 0.0
        %8244 = vmatprep.subr.mxu0 0.0
        %8245 = vmatpush1.msra.mxu0 0.0
        %8246 = vmatprep.subr.mxu0 0.0
        %8247 = vmatpush1.msra.mxu0 0.0
        %8248 = vmatprep.subr.mxu0 0.0
        %8249 = vmatpush1.msra.mxu0 0.0
        %8250 = vmatprep.subr.mxu0 0.0
        %8251 = vmatpush1.msra.mxu0 0.0
        %8252 = vmatprep.subr.mxu0 0.0
        %8253 = vmatpush1.msra.mxu0 %v7338
        %8254 = vmatprep.subr.mxu0 0.0
        %8255 = vmatpush2.msra.mxu0 0.0
        %8256 = vmatprep.subr.mxu0 0.0
        %8257 = vmatpush2.msra.mxu0 0.0
        %8258 = vmatprep.subr.mxu0 0.0
        %8259 = vmatpush2.msra.mxu0 0.0
        %8260 = vmatprep.subr.mxu0 0.0
        %8261 = vmatpush2.msra.mxu0 0.0
        %8262 = vmatprep.subr.mxu0 0.0
        %8263 = vmatpush2.msra.mxu0 0.0
        %8264 = vmatprep.subr.mxu0 0.0
        %8265 = vmatpush2.msra.mxu0 0.0
        %8266 = vmatprep.subr.mxu0 0.0
        %8267 = vmatpush2.msra.mxu0 0.0
        %8268 = vmatprep.subr.mxu0 0.0
        %8269 = vmatpush2.msra.mxu0 0.0
        %8270 = vmatprep.subr.mxu0 0.0
        %8271 = vmatpush2.msra.mxu0 0.0
        %8272 = vmatprep.subr.mxu0 0.0
        %8273 = vmatpush2.msra.mxu0 0.0
        %8274 = vmatprep.subr.mxu0 0.0
        %8275 = vmatpush2.msra.mxu0 0.0
        %8276 = vmatprep.subr.mxu0 0.0
        %8277 = vmatpush2.msra.mxu0 0.0
        %8278 = vmatprep.subr.mxu0 0.0
        %8279 = vmatpush2.msra.mxu0 0.0
        %8280 = vmatprep.subr.mxu0 0.0
        %8281 = vmatpush2.msra.mxu0 0.0
        %8282 = vmatprep.subr.mxu0 0.0
        %8283 = vmatpush2.msra.mxu0 0.0
        %8284 = vmatprep.subr.mxu0 0.0
        %8285 = vmatpush2.msra.mxu0 0.0
        %8286 = vmatprep.mubr.f32.mxu0 0.0
        %8287 = vmatmul.mubr.f32.gmra.mxu0 %v8220
        %v8288 = vpop.f32.mrf.mxu0
        %v8289 = vadd.f32 0.0, %v8288
        %v8290 = vpop.f32.mrf.mxu0
        %8291 = vdwg.mxu0
        %v8292 = vadd.f32 %v8053, %v8289
        %v8294 = vlaneseq
        %v8295 = vshrl.u32 %v8294, 7
        %v8296 = vsub.s32 0, %v8295
        %v8297 = vrot.slane %v7340, %v8296
        %v8299 = vadd.f32 %v8292, %v8297
        %v8300 = vadd.f32 %v7134, %v8299
        %v8301 = vsel %vm979, %v8300, 0.0
        %8302 = vadd.xlane.f32.xlu0 %v8301
        %v8303 = vpop.xlane.xlu0 %8302
        %v8304 = vmul.f32 %v8303, %v983
        %v8305 = vsub.f32 %v8300, %v8304
        %v8306 = vmul.f32 %v8305, %v8305
        %v8307 = vsel %vm979, %v8306, 0.0
        %8308 = vadd.xlane.f32.xlu0 %v8307
        %v8309 = vpop.xlane.xlu0 %8308
        %v8310 = vmul.f32 %v8309, 0.032258064
        %v8311 = vrsqrt.pop %v8310
        %v8312 = vmul.f32 %v8310, %v8311
        %vm8313 = vcmp.eq.f32.partialorder %v8310, inf
        %v8314 = vsel %vm8313, %v8310, %v8312
        %vm8315 = vcmp.eq.f32.partialorder %v8310, 0.0
        %v8316 = vand.u32 %v8310, 2147483648
        %v8317 = vsel %vm8315, %v8316, %v8314
        %v8318 = vadd.f32 %v8317, 1e-06
        %v8319 = vrcp.pop %v8318
        %v8320 = vlaneseq
        %v8321 = vshrl.u32 %v8320, 7
        %v8322 = vsub.s32 4, %v8321
        %v8323 = vrot.slane %v6050, %v8322
        %v8324 = vmul.f32 %v8323, %v8305
        %v8325 = vmul.f32 %v8324, %v8319
        %v8326 = vlaneseq
        %v8327 = vshrl.u32 %v8326, 7
        %v8328 = vsub.s32 5, %v8327
        %v8329 = vrot.slane %v6050, %v8328
        %v8330 = vadd.f32 %v8325, %v8329
        %s8331 = scalar_lea.vmem %s49, 32
        %v8332 = vld [vmem:[%s8331] sm:$0xff]
        %v8333 = vld [vmem:[%s8331 + $0x8] sm:$0xff]
        %v8334 = vld [vmem:[%s8331 + $0x10] sm:$0xff]
        %v8335 = vld [vmem:[%s8331 + $0x18] sm:$0xff]
        %s8336 = scalar_lea.vmem %s51, 1
        %v8337 = vld [vmem:[%s8336] sm:$0x1]
        %v8339 = vlaneseq
        %v8340 = vshrl.u32 %v8339, 7
        %v8341 = vsub.s32 0, %v8340
        %v8342 = vrot.slane %v8337, %v8341
        %v8345 = vsel %vm979, %v8330, 0
        %8347 = vmatprep.subr.mxu0 0.0
        %8348 = vmatpush1.msra.mxu0 0.0
        %8349 = vmatprep.subr.mxu0 0.0
        %8350 = vmatpush1.msra.mxu0 0.0
        %8351 = vmatprep.subr.mxu0 0.0
        %8352 = vmatpush1.msra.mxu0 0.0
        %8353 = vmatprep.subr.mxu0 0.0
        %8354 = vmatpush1.msra.mxu0 0.0
        %8355 = vmatprep.subr.mxu0 0.0
        %8356 = vmatpush1.msra.mxu0 0.0
        %8357 = vmatprep.subr.mxu0 0.0
        %8358 = vmatpush1.msra.mxu0 0.0
        %8359 = vmatprep.subr.mxu0 0.0
        %8360 = vmatpush1.msra.mxu0 0.0
        %8361 = vmatprep.subr.mxu0 0.0
        %8362 = vmatpush1.msra.mxu0 0.0
        %8363 = vmatprep.subr.mxu0 0.0
        %8364 = vmatpush1.msra.mxu0 0.0
        %8365 = vmatprep.subr.mxu0 0.0
        %8366 = vmatpush1.msra.mxu0 0.0
        %8367 = vmatprep.subr.mxu0 0.0
        %8368 = vmatpush1.msra.mxu0 0.0
        %8369 = vmatprep.subr.mxu0 0.0
        %8370 = vmatpush1.msra.mxu0 0.0
        %8371 = vmatprep.subr.mxu0 0.0
        %8372 = vmatpush1.msra.mxu0 %v8335
        %8373 = vmatprep.subr.mxu0 0.0
        %8374 = vmatpush1.msra.mxu0 %v8334
        %8375 = vmatprep.subr.mxu0 0.0
        %8376 = vmatpush1.msra.mxu0 %v8333
        %8377 = vmatprep.subr.mxu0 0.0
        %8378 = vmatpush1.msra.mxu0 %v8332
        %8379 = vmatprep.subr.mxu0 0.0
        %8380 = vmatpush2.msra.mxu0 0.0
        %8381 = vmatprep.subr.mxu0 0.0
        %8382 = vmatpush2.msra.mxu0 0.0
        %8383 = vmatprep.subr.mxu0 0.0
        %8384 = vmatpush2.msra.mxu0 0.0
        %8385 = vmatprep.subr.mxu0 0.0
        %8386 = vmatpush2.msra.mxu0 0.0
        %8387 = vmatprep.subr.mxu0 0.0
        %8388 = vmatpush2.msra.mxu0 0.0
        %8389 = vmatprep.subr.mxu0 0.0
        %8390 = vmatpush2.msra.mxu0 0.0
        %8391 = vmatprep.subr.mxu0 0.0
        %8392 = vmatpush2.msra.mxu0 0.0
        %8393 = vmatprep.subr.mxu0 0.0
        %8394 = vmatpush2.msra.mxu0 0.0
        %8395 = vmatprep.subr.mxu0 0.0
        %8396 = vmatpush2.msra.mxu0 0.0
        %8397 = vmatprep.subr.mxu0 0.0
        %8398 = vmatpush2.msra.mxu0 0.0
        %8399 = vmatprep.subr.mxu0 0.0
        %8400 = vmatpush2.msra.mxu0 0.0
        %8401 = vmatprep.subr.mxu0 0.0
        %8402 = vmatpush2.msra.mxu0 0.0
        %8403 = vmatprep.subr.mxu0 0.0
        %8404 = vmatpush2.msra.mxu0 0.0
        %8405 = vmatprep.subr.mxu0 0.0
        %8406 = vmatpush2.msra.mxu0 0.0
        %8407 = vmatprep.subr.mxu0 0.0
        %8408 = vmatpush2.msra.mxu0 0.0
        %8409 = vmatprep.subr.mxu0 0.0
        %8410 = vmatpush2.msra.mxu0 0.0
        %8411 = vmatprep.mubr.f32.mxu0 0.0
        %8412 = vmatmul.mubr.f32.gmra.mxu0 %v8345
        %v8413 = vpop.f32.mrf.mxu0
        %v8414 = vadd.f32 %v8342, %v8413
        %v8415 = vpop.f32.mrf.mxu0
        %8416 = vdwg.mxu0
        %v8417 = vmax.f32 %v8414, 0.0
        %s8418 = scalar_lea.vmem %s53, 64
        %v8419 = vld [vmem:[%s8418] sm:$0xff]
        %v8420 = vld [vmem:[%s8418 + $0x8] sm:$0xff]
        %v8421 = vld [vmem:[%s8418 + $0x10] sm:$0xff]
        %v8422 = vld [vmem:[%s8418 + $0x18] sm:$0xff]
        %v8423 = vld [vmem:[%s8418 + $0x20] sm:$0xff]
        %v8424 = vld [vmem:[%s8418 + $0x28] sm:$0xff]
        %v8425 = vld [vmem:[%s8418 + $0x30] sm:$0xff]
        %v8426 = vld [vmem:[%s8418 + $0x38] sm:$0xff]
        %v8428 = vsel %vm2191, %v8417, 0
        %8430 = vmatprep.subr.mxu0 0.0
        %8431 = vmatpush1.msra.mxu0 0.0
        %8432 = vmatprep.subr.mxu0 0.0
        %8433 = vmatpush1.msra.mxu0 0.0
        %8434 = vmatprep.subr.mxu0 0.0
        %8435 = vmatpush1.msra.mxu0 0.0
        %8436 = vmatprep.subr.mxu0 0.0
        %8437 = vmatpush1.msra.mxu0 0.0
        %8438 = vmatprep.subr.mxu0 0.0
        %8439 = vmatpush1.msra.mxu0 0.0
        %8440 = vmatprep.subr.mxu0 0.0
        %8441 = vmatpush1.msra.mxu0 0.0
        %8442 = vmatprep.subr.mxu0 0.0
        %8443 = vmatpush1.msra.mxu0 0.0
        %8444 = vmatprep.subr.mxu0 0.0
        %8445 = vmatpush1.msra.mxu0 0.0
        %8446 = vmatprep.subr.mxu0 0.0
        %8447 = vmatpush1.msra.mxu0 %v8426
        %8448 = vmatprep.subr.mxu0 0.0
        %8449 = vmatpush1.msra.mxu0 %v8425
        %8450 = vmatprep.subr.mxu0 0.0
        %8451 = vmatpush1.msra.mxu0 %v8424
        %8452 = vmatprep.subr.mxu0 0.0
        %8453 = vmatpush1.msra.mxu0 %v8423
        %8454 = vmatprep.subr.mxu0 0.0
        %8455 = vmatpush1.msra.mxu0 %v8422
        %8456 = vmatprep.subr.mxu0 0.0
        %8457 = vmatpush1.msra.mxu0 %v8421
        %8458 = vmatprep.subr.mxu0 0.0
        %8459 = vmatpush1.msra.mxu0 %v8420
        %8460 = vmatprep.subr.mxu0 0.0
        %8461 = vmatpush1.msra.mxu0 %v8419
        %8462 = vmatprep.subr.mxu0 0.0
        %8463 = vmatpush2.msra.mxu0 0.0
        %8464 = vmatprep.subr.mxu0 0.0
        %8465 = vmatpush2.msra.mxu0 0.0
        %8466 = vmatprep.subr.mxu0 0.0
        %8467 = vmatpush2.msra.mxu0 0.0
        %8468 = vmatprep.subr.mxu0 0.0
        %8469 = vmatpush2.msra.mxu0 0.0
        %8470 = vmatprep.subr.mxu0 0.0
        %8471 = vmatpush2.msra.mxu0 0.0
        %8472 = vmatprep.subr.mxu0 0.0
        %8473 = vmatpush2.msra.mxu0 0.0
        %8474 = vmatprep.subr.mxu0 0.0
        %8475 = vmatpush2.msra.mxu0 0.0
        %8476 = vmatprep.subr.mxu0 0.0
        %8477 = vmatpush2.msra.mxu0 0.0
        %8478 = vmatprep.subr.mxu0 0.0
        %8479 = vmatpush2.msra.mxu0 0.0
        %8480 = vmatprep.subr.mxu0 0.0
        %8481 = vmatpush2.msra.mxu0 0.0
        %8482 = vmatprep.subr.mxu0 0.0
        %8483 = vmatpush2.msra.mxu0 0.0
        %8484 = vmatprep.subr.mxu0 0.0
        %8485 = vmatpush2.msra.mxu0 0.0
        %8486 = vmatprep.subr.mxu0 0.0
        %8487 = vmatpush2.msra.mxu0 0.0
        %8488 = vmatprep.subr.mxu0 0.0
        %8489 = vmatpush2.msra.mxu0 0.0
        %8490 = vmatprep.subr.mxu0 0.0
        %8491 = vmatpush2.msra.mxu0 0.0
        %8492 = vmatprep.subr.mxu0 0.0
        %8493 = vmatpush2.msra.mxu0 0.0
        %8494 = vmatprep.mubr.f32.mxu0 0.0
        %8495 = vmatmul.mubr.f32.gmra.mxu0 %v8428
        %v8496 = vpop.f32.mrf.mxu0
        %v8497 = vadd.f32 0.0, %v8496
        %v8498 = vpop.f32.mrf.mxu0
        %8499 = vdwg.mxu0
        %v8500 = vadd.f32 %v8300, %v8497
        %s8501 = scalar_lea.vmem %s55, 1
        %v8502 = vld [vmem:[%s8501] sm:$0x1]
        %v8504 = vlaneseq
        %v8505 = vshrl.u32 %v8504, 7
        %v8506 = vsub.s32 0, %v8505
        %v8507 = vrot.slane %v8502, %v8506
        %v8509 = vadd.f32 %v8500, %v8507
        %v8510 = vld [vmem:[%s59] sm:$0x3]
        %v8511 = vsel %vm979, %v8509, 0.0
        %8512 = vadd.xlane.f32.xlu0 %v8511
        %v8513 = vpop.xlane.xlu0 %8512
        %v8514 = vmul.f32 %v8513, %v983
        %v8515 = vsub.f32 %v8509, %v8514
        %v8516 = vmul.f32 %v8515, %v8515
        %v8517 = vsel %vm979, %v8516, 0.0
        %8518 = vadd.xlane.f32.xlu0 %v8517
        %v8519 = vpop.xlane.xlu0 %8518
        %v8520 = vmul.f32 %v8519, 0.032258064
        %v8521 = vrsqrt.pop %v8520
        %v8522 = vmul.f32 %v8520, %v8521
        %vm8523 = vcmp.eq.f32.partialorder %v8520, inf
        %v8524 = vsel %vm8523, %v8520, %v8522
        %vm8525 = vcmp.eq.f32.partialorder %v8520, 0.0
        %v8526 = vand.u32 %v8520, 2147483648
        %v8527 = vsel %vm8525, %v8526, %v8524
        %v8528 = vadd.f32 %v8527, 1e-06
        %v8529 = vrcp.pop %v8528
        %v8530 = vlaneseq
        %v8531 = vshrl.u32 %v8530, 7
        %v8532 = vsub.s32 0, %v8531
        %v8533 = vrot.slane %v8510, %v8532
        %v8534 = vmul.f32 %v8533, %v8515
        %v8535 = vmul.f32 %v8534, %v8529
        %v8536 = vlaneseq
        %v8537 = vshrl.u32 %v8536, 7
        %v8538 = vsub.s32 1, %v8537
        %v8539 = vrot.slane %v8510, %v8538
        %v8540 = vadd.f32 %v8535, %v8539
        %8541 = vst.msk [vmem:[%s958] sm:$0xff] %vm979, %v8540
        %s8542 = sand.u32 %s733, 1
        %s8543 = scalar_lea.sflag [#allocation3], %s8542
        %s8544 = sand.u32 %s733, 1
        %s8545 = smul.addr %s8544, 8
        %s8546 = scalar_lea.vmem [#allocation2], %s8545
        // Predicated region
        $region141: #{transformer_forward.1} parent=139 // pred_check
          %p8547 = pneg %p743
        $region142: #{transformer_forward.1} parent=139 // pred_check_branch
          %8549 = sbr.rel (%p8547) target = $region144
        $region143: #{transformer_forward.1} parent=139 // pred_region
          %s8551 = ssub.s32 128, 128
          %8552 = vsyncadd %s8543, %s8551
          %s8553 = smul.addr %s75, 128
          %s8554 = scalar_lea.hbm %s61, %s8553
          %s8556 = sshll.u32 %s8546, 4
          %s8557 = int_to_ptr.vmem [resolvable:$true] %s8556
          %8559 = dma.vmem_to_hbm [thread:$0]  %s8557, 128, %s8554, %s8543
        $region144: #{transformer_forward.1} parent=139 // pred_fallthru
          _
      $region140: #{transformer_forward.1} parent=5 // pred_fallthru
        _
      %p8560 = scmp.le.s32.totalorder 2, %s70
      // Predicated region
      $region145: #{transformer_forward.1} parent=5 // pred_check
        %p8561 = pneg %p8560
      $region146: #{transformer_forward.1} parent=5 // pred_check_branch
        %8563 = sbr.rel (%p8561) target = $region148
      $region147: #{transformer_forward.1} parent=5 // pred_region
        %s8564 = ssub.s32 %s70, 2
        // Predicated region
        $region149: #{transformer_forward.1} parent=147 // pred_check
          %p8565 = pneg %p749
        $region150: #{transformer_forward.1} parent=147 // pred_check_branch
          %8567 = sbr.rel (%p8565) target = $region152
        $region151: #{transformer_forward.1} parent=147 // pred_region
          %s8568 = sand.u32 %s734, 1
          %s8569 = scalar_lea.sflag [#allocation3], %s8568
          %s8570 = sand.u32 %s734, 1
          %s8571 = smul.addr %s8570, 8
          %s8572 = scalar_lea.vmem [#allocation2], %s8571
          %8573 = dma.done %s8569, 128
        $region152: #{transformer_forward.1} parent=147 // pred_fallthru
          _
      $region148: #{transformer_forward.1} parent=5 // pred_fallthru
        _
    $region6: #{transformer_forward.1} parent=1 // loop_footer
      %s74 = sadd.s32 1, %s70
    $region7: #{transformer_forward.1} parent=1 // loop_footer_branch
      %69 = sbr.rel target = $region3
    $region8: #{transformer_forward.1} parent=1 // loop_exit
      _
    %8574 = vsyncpa [#allocation3], 1
    %s8575 = scalar_lea.sflag [#allocation3], 1
    %8576 = vsyncpa %s8575, 1

</llo_original>
